<compile_context>
chip_gen: v7x
topology: tpu7x:2x2x1
jax: 0.10.0
libtpu: 0.0.40
codegen_flags: <defaults>
</compile_context>

<pallas_src>
import numpy as np
import jax
import jax.numpy as jnp
from jax.experimental import pallas as pl
from jax.experimental.pallas import tpu as pltpu

BN_EPS = 1e-5
_LANE = 128            # TPU lane width; output channels are padded to this


def _round_up(v, m):
    return ((v + m - 1) // m) * m


_NUM_TC = None


def _num_tensorcores():
    """Number of TensorCores on this chip (guarded query; defaults to 1)."""
    global _NUM_TC
    if _NUM_TC is None:
        n = 1
        try:
            info = pltpu.get_tpu_info()
            for attr in ("num_cores", "core_count", "num_tensorcores",
                         "tensor_core_count", "cores_per_chip"):
                v = getattr(info, attr, None)
                if isinstance(v, int) and v > 0:
                    n = v
                    break
        except Exception:
            pass
        _NUM_TC = n
    return _NUM_TC


def _pick_tm(m, tm_max=512):
    """Largest multiple-of-8 row tile dividing m (<= tm_max).  The single-block
    grid is only halved when the chip has >1 TensorCore (v7x); on 1-TC chips an
    extra grid step is pure launch overhead."""
    cands = [d for d in range(8, min(m, tm_max) + 1, 8) if m % d == 0]
    if not cands:
        return min(_round_up(m, 8), tm_max)   # generic fallback (needs row pad)
    tm = cands[-1]
    if tm == m and _num_tensorcores() > 1 and m >= 16 and (m // 2) % 8 == 0:
        tm = m // 2
    return tm


# ----------------------------------------------------------------------------- Pallas kernels
def _make_matmul_kernel(act, has_alpha, out_dtype):
    """y = act(x @ w + b); x/w bf16, f32 accumulation/epilogue, out_dtype store."""
    def kernel(*refs):
        if has_alpha:
            x_ref, w_ref, b_ref, a_ref, o_ref = refs
        else:
            x_ref, w_ref, b_ref, o_ref = refs
        z = jnp.dot(x_ref[...], w_ref[...], preferred_element_type=jnp.float32)
        z = z + b_ref[...]
        if act == "relu":
            z = jnp.maximum(z, 0.0)
        elif act == "prelu":
            z = jnp.where(z >= 0.0, z, a_ref[0] * z)     # alpha: SMEM scalar
        o_ref[...] = z.astype(out_dtype)
    return kernel


def matmul_act(x, w, b, alpha=None, act="none", out_dtype=jnp.float32, tm_max=512):
    """Pallas-backed y = act(x @ w + b), tiled over rows, lane-dense output."""
    M, K = x.shape
    K2, N = w.shape
    assert K == K2
    Np = _round_up(N, _LANE)
    if Np != N:                                    # lane-dense output padding
        w = jnp.pad(w, ((0, 0), (0, Np - N)))
    b2 = jnp.pad(jnp.asarray(b, jnp.float32).reshape(-1), (0, Np - N)).reshape(1, Np)

    tm = _pick_tm(M, tm_max)
    m_pad = _round_up(M, tm)
    xb = x.astype(jnp.bfloat16)
    if m_pad != M:                                 # not hit for this net's shapes
        xb = jnp.pad(xb, ((0, m_pad - M), (0, 0)))
    wb = w.astype(jnp.bfloat16)

    has_alpha = (act == "prelu")
    in_specs = [
        pl.BlockSpec((tm, K), lambda i: (i, 0)),       # activations: tiled rows
        pl.BlockSpec((K, Np), lambda i: (0, 0)),       # weights: resident
        pl.BlockSpec((1, Np), lambda i: (0, 0)),       # f32 bias row
    ]
    args = [xb, wb, b2]
    if has_alpha:
        in_specs.append(pl.BlockSpec(memory_space=pltpu.MemorySpace.SMEM))
        args.append(jnp.asarray(alpha, jnp.float32).reshape(1,))

    out = pl.pallas_call(
        _make_matmul_kernel(act, has_alpha, out_dtype),
        out_shape=jax.ShapeDtypeStruct((m_pad, Np), out_dtype),
        grid=(m_pad // tm,),
        in_specs=in_specs,
        out_specs=pl.BlockSpec((tm, Np), lambda i: (i, 0)),
        compiler_params=pltpu.CompilerParams(dimension_semantics=("parallel",)),
    )(*args)
    return out[:M, :N]


def _make_phase_kernel(act, n_ph, has_alpha, out_dtype):
    """Fused per-stride-phase matmuls for ConvTranspose2d.  Each phase has its
    own patch/weight refs at its natural (static) K -- no K padding, no zero
    matmuls.  PReLU alpha is read from SMEM once (hoisted out of the loop)."""
    def kernel(*refs):
        xs = refs[0:n_ph]
        ws = refs[n_ph:2 * n_ph]
        b_ref = refs[2 * n_ph]
        o_ref = refs[-1]
        bias = b_ref[...]
        if has_alpha:
            alpha = refs[2 * n_ph + 1][0]
        for p in range(n_ph):                      # static unrolled loop
            z = jnp.dot(xs[p][...], ws[p][...], preferred_element_type=jnp.float32)
            z = z + bias
            if act == "relu":
                z = jnp.maximum(z, 0.0)
            elif act == "prelu":
                z = jnp.where(z >= 0.0, z, alpha * z)
            o_ref[p] = z.astype(out_dtype)
    return kernel


# ----------------------------------------------------------------------------- conv glue
def _extract_patches(x, k, stride=1):
    # x: (N, Hp, Wp, C) already padded -> (N, Ho, Wo, k*k*C), ordering (kh, kw, cin)
    n, hp, wp, c = x.shape
    ho = (hp - k) // stride + 1
    wo = (wp - k) // stride + 1
    cols = []
    for kh in range(k):
        for kw in range(k):
            cols.append(x[:, kh:kh + (ho - 1) * stride + 1:stride,
                           kw:kw + (wo - 1) * stride + 1:stride, :])
    return jnp.concatenate(cols, axis=-1)


def conv2d(x, w_oihw, b, stride=1, padding=0, act="none", alpha=None,
           out_dtype=jnp.bfloat16, tm_max=512):
    # x: NHWC; w: (Cout, Cin, KH, KW) as in PyTorch nn.Conv2d
    # TODO(synk): 3x3 im2col is materialized in XLA (bf16); fusing it into the
    # kernel with halo row-blocks would cut activation reads ~9x further.
    n, h, w_, c = x.shape
    cout, cin, kh, kw = w_oihw.shape
    xp = jnp.pad(x.astype(jnp.bfloat16),
                 ((0, 0), (padding, padding), (padding, padding), (0, 0)))
    if kh == 1 and kw == 1 and stride == 1:
        patches = xp                               # 1x1 conv: no duplication
    else:
        patches = _extract_patches(xp, kh, stride)
    _, ho, wo, pk = patches.shape
    wm = jnp.transpose(w_oihw, (2, 3, 1, 0)).reshape(kh * kw * cin, cout)
    y = matmul_act(patches.reshape(-1, pk), wm, b, alpha, act,
                   out_dtype=out_dtype, tm_max=tm_max)
    return y.reshape(n, ho, wo, cout)


def _phase_taps(k, stride, pb, r):
    """Kernel taps (flipped tap index, input offset) feeding outputs ≡ r (mod stride)."""
    taps = []
    for t in range(k):
        if (r + t - pb) % stride == 0:
            taps.append((t, (r + t - pb) // stride))
    return taps


def _shift2d(x, dh, dw, hq, wq):
    """out[n,q,r,c] = x[n,q+dh,r+dw,c] where in-bounds, else 0; shape (n,hq,wq,c)."""
    n, h, w_, c = x.shape
    out = jnp.zeros((n, hq, wq, c), x.dtype)
    q0, q1 = max(0, -dh), min(hq, h - dh)
    r0, r1 = max(0, -dw), min(wq, w_ - dw)
    if q0 < q1 and r0 < r1:
        out = out.at[:, q0:q1, r0:r1, :].set(
            x[:, q0 + dh:q1 + dh, r0 + dw:r1 + dw, :])
    return out


def _act_of_bias(b, act, alpha, out_dtype):
    """Value of act(bias) for output positions that see no input (per channel)."""
    bias_f = jnp.asarray(b, jnp.float32).reshape(-1)
    if act == "relu":
        fill = jnp.maximum(bias_f, 0.0)
    elif act == "prelu":
        a = jnp.asarray(alpha, jnp.float32).reshape(())
        fill = jnp.where(bias_f >= 0.0, bias_f, a * bias_f)
    else:
        fill = bias_f
    return fill.astype(out_dtype)


def conv_transpose2d_single_tap(x, w_iohw, b, stride, padding, output_padding,
                                act="none", alpha=None,
                                out_dtype=jnp.bfloat16, tm_max=512):
    """ConvTranspose2d with kernel <= stride: each output pixel sees at most one
    kernel tap, so the whole layer is ONE matmul x @ [k*k tap matrices] (fused
    bias + activation in the kernel); the sub-pixel phase interleave and the
    bias-only phases/edges are handled in JAX on the small result."""
    n, h, w_, cin = x.shape
    cin2, cout, kh, kw = w_iohw.shape
    assert cin == cin2 and kh == kw and kh <= stride
    s = stride
    hout = (h - 1) * s - 2 * padding + kh + output_padding
    wout = (w_ - 1) * s - 2 * padding + kw + output_padding
    pb = kh - 1 - padding
    assert hout % s == 0 and wout % s == 0
    hq, wq = hout // s, wout // s

    # flipped kernel laid out (KH, KW, Cin, Cout)
    wf = jnp.transpose(w_iohw[:, :, ::-1, ::-1], (2, 3, 0, 1))
    taps_h = [_phase_taps(kh, s, pb, r) for r in range(s)]   # each [] or [(t, d)]
    taps_w = [_phase_taps(kw, s, pb, r) for r in range(s)]

    # one matmul over all k*k taps: (M, Cin) @ (Cin, k*k*Cout)
    xb = x.astype(jnp.bfloat16).reshape(n * h * w_, cin)
    w_cat = jnp.transpose(wf, (2, 0, 1, 3)).reshape(cin, kh * kw * cout)
    b_rep = jnp.tile(jnp.asarray(b, jnp.float32).reshape(-1), kh * kw)
    y = matmul_act(xb, w_cat, b_rep, alpha, act, out_dtype=out_dtype, tm_max=tm_max)
    y = y.reshape(n, h, w_, kh * kw, cout)

    fill = _act_of_bias(b, act, alpha, out_dtype)
    blocks = []
    for rh in range(s):
        for rw in range(s):
            blk = jnp.broadcast_to(fill, (n, hq, wq, cout)).astype(out_dtype)
            if taps_h[rh] and taps_w[rw]:
                (th, dh), (tw, dw) = taps_h[rh][0], taps_w[rw][0]
                q0, q1 = max(0, -dh), min(hq, h - dh)
                r0, r1 = max(0, -dw), min(wq, w_ - dw)
                if q0 < q1 and r0 < r1:
                    blk = blk.at[:, q0:q1, r0:r1, :].set(
                        y[:, q0 + dh:q1 + dh, r0 + dw:r1 + dw, th * kw + tw, :])
            blocks.append(blk)
    yout = jnp.stack(blocks, 0).reshape(s, s, n, hq, wq, cout)
    # interleave phases: out[n, q*s+rh, r*s+rw, c] = yout[rh, rw, n, q, r, c]
    yout = jnp.transpose(yout, (2, 3, 0, 4, 1, 5)).reshape(n, hout, wout, cout)
    return yout


def conv_transpose2d_phases(x, w_iohw, b, stride, padding, output_padding,
                            act="none", alpha=None,
                            out_dtype=jnp.bfloat16, tm_max=512):
    """General ConvTranspose2d via sub-pixel (stride-phase) decomposition.

    Each stride phase becomes a dense matmul at its *natural* K (its own patch
    and weight inputs) inside one fused Pallas call; phases with no kernel taps
    are not computed at all (filled with act(bias) in JAX)."""
    n, h, w_, cin = x.shape
    cin2, cout, kh, kw = w_iohw.shape
    assert cin == cin2 and kh == kw
    s = stride
    hout = (h - 1) * s - 2 * padding + kh + output_padding
    wout = (w_ - 1) * s - 2 * padding + kw + output_padding
    pb = kh - 1 - padding
    assert hout % s == 0 and wout % s == 0
    hq, wq = hout // s, wout // s

    wf = jnp.transpose(w_iohw[:, :, ::-1, ::-1], (2, 3, 0, 1))
    taps_h = [_phase_taps(kh, s, pb, r) for r in range(s)]
    taps_w = [_phase_taps(kw, s, pb, r) for r in range(s)]

    coutp = _round_up(cout, _LANE)
    xb = x.astype(jnp.bfloat16)
    M = n * hq * wq
    tm = _pick_tm(M, tm_max)
    m_pad = _round_up(M, tm)

    patch_list, wmat_list, kp_list, active = [], [], [], []
    for rh in range(s):
        for rw in range(s):
            tl_h, tl_w = taps_h[rh], taps_w[rw]
            if not (tl_h and tl_w):                 # bias-only phase: skip Pallas
                active.append(False)
                continue
            cols, wrows = [], []
            for (th, dh) in tl_h:
                for (tw, dw) in tl_w:
                    cols.append(_shift2d(xb, dh, dw, hq, wq))
                    wrows.append(wf[th, tw])                    # (Cin, Cout)
            kp = len(cols) * cin
            pat = jnp.concatenate(cols, axis=-1).reshape(M, kp)
            wm = jnp.concatenate(wrows, axis=0)
            if coutp > cout:
                wm = jnp.pad(wm, ((0, 0), (0, coutp - cout)))   # lane-dense pad
            if m_pad != M:
                pat = jnp.pad(pat, ((0, m_pad - M), (0, 0)))
            patch_list.append(pat)
            wmat_list.append(wm.astype(jnp.bfloat16))
            kp_list.append(kp)
            active.append(True)

    n_ph = len(patch_list)
    assert n_ph > 0
    bias = jnp.pad(jnp.asarray(b, jnp.float32).reshape(-1),
                   (0, coutp - cout)).reshape(1, coutp)
    has_alpha = (act == "prelu")

    in_specs, args = [], []
    for p in range(n_ph):
        in_specs.append(pl.BlockSpec((tm, kp_list[p]), lambda i: (i, 0)))
        args.append(patch_list[p])
    for p in range(n_ph):
        in_specs.append(pl.BlockSpec((kp_list[p], coutp), lambda i: (0, 0)))
        args.append(wmat_list[p])
    in_specs.append(pl.BlockSpec((1, coutp), lambda i: (0, 0)))
    args.append(bias)
    if has_alpha:
        in_specs.append(pl.BlockSpec(memory_space=pltpu.MemorySpace.SMEM))
        args.append(jnp.asarray(alpha, jnp.float32).reshape(1,))

    out = pl.pallas_call(
        _make_phase_kernel(act, n_ph, has_alpha, out_dtype),
        out_shape=jax.ShapeDtypeStruct((n_ph, m_pad, coutp), out_dtype),
        grid=(m_pad // tm,),
        in_specs=in_specs,
        out_specs=pl.BlockSpec((n_ph, tm, coutp), lambda i: (0, i, 0)),
        compiler_params=pltpu.CompilerParams(dimension_semantics=("parallel",)),
    )(*args)

    fill = _act_of_bias(b, act, alpha, out_dtype)
    blocks, ap = [], 0
    for idx in range(s * s):
        if active[idx]:
            blocks.append(out[ap, :M, :cout].reshape(n, hq, wq, cout))
            ap += 1
        else:
            blocks.append(jnp.broadcast_to(fill, (n, hq, wq, cout)))
    y = jnp.stack(blocks, 0).reshape(s, s, n, hq, wq, cout)
    y = jnp.transpose(y, (2, 3, 0, 4, 1, 5)).reshape(n, hout, wout, cout)
    return y


# ----------------------------------------------------------------------------- resize / pooling glue
def _bilinear_matrix(in_size, out_size):
    m = np.zeros((out_size, in_size), np.float32)
    if out_size == 1:
        m[0, 0] = 1.0
    else:
        for i in range(out_size):
            src = i * (in_size - 1) / (out_size - 1) if in_size > 1 else 0.0
            lo = int(np.floor(src))
            hi = min(lo + 1, in_size - 1)
            frac = src - lo
            m[i, lo] += 1.0 - frac
            m[i, hi] += frac
    return jnp.asarray(m)


def bilinear_upsample(x, oh, ow):
    # F.upsample(..., mode='bilinear', align_corners=True)
    n, h, w, c = x.shape
    if (h, w) == (oh, ow):
        return x
    mh = _bilinear_matrix(h, oh)
    mw = _bilinear_matrix(w, ow)
    return jnp.einsum('ph,nhwc,qw->npqc', mh, x, mw)


def _adaptive_pool_matrix(in_size, out_size):
    m = np.zeros((out_size, in_size), np.float32)
    for i in range(out_size):
        s = (i * in_size) // out_size
        e = -(-((i + 1) * in_size) // out_size)  # ceil
        m[i, s:e] = 1.0 / (e - s)
    return jnp.asarray(m)


def adaptive_avg_pool(x, out_size):
    mh = _adaptive_pool_matrix(x.shape[1], out_size)
    mw = _adaptive_pool_matrix(x.shape[2], out_size)
    return jnp.einsum('ph,nhwc,qw->npqc', mh, x, mw)


# ----------------------------------------------------------------------------- parameters
def init_params(key, in_ch=4, psp_size=128, sizes=(1, 2, 3, 6)):
    keys = jax.random.split(key, 10)

    def conv_w(k, cout, cin, kh, kw):            # nn.Conv2d init in __init__: N(0, sqrt(1/n))
        n = kh * kw * cin
        return jax.random.normal(k, (cout, cin, kh, kw), jnp.float32) * np.sqrt(1.0 / n)

    def convt_w(k, cin, cout, kh, kw):           # deterministic synthetic init for ConvTranspose2d
        n = kh * kw * cin
        return jax.random.normal(k, (cin, cout, kh, kw), jnp.float32) * np.sqrt(1.0 / n)

    p = {}
    p['enc_w'] = conv_w(keys[0], psp_size, in_ch, 3, 3)
    p['enc_b'] = jnp.zeros((psp_size,), jnp.float32)
    p['stage_ws'] = [conv_w(keys[1 + i], psp_size, psp_size, 1, 1) for i in range(len(sizes))]
    p['bottleneck_w'] = conv_w(keys[5], 64, psp_size * (len(sizes) + 1), 1, 1)
    p['bottleneck_b'] = jnp.zeros((64,), jnp.float32)
    p['convp1_w'] = convt_w(keys[6], 64, 32, 3, 3)
    p['convp1_b'] = jnp.zeros((32,), jnp.float32)
    p['convp2_w'] = conv_w(keys[7], 32, 32, 3, 3)
    p['convp2_b'] = jnp.zeros((32,), jnp.float32)
    p['convp3_w'] = conv_w(keys[8], 32, 32, 3, 3)
    p['convp3_b'] = jnp.zeros((32,), jnp.float32)
    p['final_w'] = convt_w(keys[9], 32, 3, 3, 3)
    p['final_b'] = jnp.zeros((3,), jnp.float32)
    p['prelu1'] = jnp.full((1,), 0.25, jnp.float32)  # nn.PReLU() default init
    p['prelu2'] = jnp.full((1,), 0.25, jnp.float32)
    p['prelu3'] = jnp.full((1,), 0.25, jnp.float32)
    return p


# ----------------------------------------------------------------------------- ContextNet forward
def context_net_forward(x_nchw, params, input_target_size=(16, 16), sizes=(1, 2, 3, 6)):
    x = jnp.transpose(x_nchw, (0, 2, 3, 1)).astype(jnp.float32)   # NCHW -> NHWC

    # p = F.upsample(input, size=input_target_size, mode='bilinear', align_corners=True)
    x = bilinear_upsample(x, input_target_size[0], input_target_size[1])

    # encoder stand-in: Conv2d(in_ch, psp_size, 3, stride=2, padding=1) + ReLU
    x = conv2d(x, params['enc_w'], params['enc_b'], stride=2, padding=1,
               act="relu", out_dtype=jnp.bfloat16)

    # PSPModule(psp_size, 64, sizes) -- the per-size 1x1 convs act on 1..36-pixel
    # pooled maps; they run as plain einsums (a pallas_call would be all launch
    # overhead + >90% padded rows).  Concat kept in bf16.
    n, h, w, c = x.shape
    priors = []
    for size, sw in zip(sizes, params['stage_ws']):
        pr = adaptive_avg_pool(x, size)
        pr = jnp.einsum('nhwc,cf->nhwf', pr, jnp.transpose(sw[:, :, 0, 0]))   # 1x1, bias=False
        pr = bilinear_upsample(pr, h, w)
        priors.append(pr.astype(jnp.bfloat16))
    priors.append(x.astype(jnp.bfloat16))
    cat = jnp.concatenate(priors, axis=-1)
    x = conv2d(cat, params['bottleneck_w'], params['bottleneck_b'],
               act="relu", out_dtype=jnp.bfloat16)                # 1x1 + ReLU

    # drop_2 (Dropout2d p=0.15): identity in eval mode
    bn_scale = np.float32(1.0 / np.sqrt(1.0 + BN_EPS))  # BN eval w/ init stats, folded into conv

    # convp1: ConvTranspose2d(64,32,3,stride=4,pad=1,out_pad=3) + BN + PReLU
    # stride > k  ->  single-matmul sub-pixel path (no zero phases, no K pad)
    x = conv_transpose2d_single_tap(
        x, params['convp1_w'] * bn_scale, params['convp1_b'] * bn_scale,
        stride=4, padding=1, output_padding=3,
        act="prelu", alpha=params['prelu1'], out_dtype=jnp.bfloat16)

    # convp2 / convp3: Conv2d(32,32,3,pad=1) + BN + PReLU
    x = conv2d(x, params['convp2_w'] * bn_scale, params['convp2_b'] * bn_scale,
               stride=1, padding=1, act="prelu", alpha=params['prelu2'],
               out_dtype=jnp.bfloat16)
    x = conv2d(x, params['convp3_w'] * bn_scale, params['convp3_b'] * bn_scale,
               stride=1, padding=1, act="prelu", alpha=params['prelu3'],
               out_dtype=jnp.bfloat16)

    # final: ConvTranspose2d(32,3,3,stride=2,pad=1,out_pad=1); fused per-phase-K
    # Pallas matmuls storing bf16; 3-channel log_softmax(dim=1) in f32 in JAX.
    x = conv_transpose2d_phases(x, params['final_w'], params['final_b'],
                                stride=2, padding=1, output_padding=1,
                                act="none", out_dtype=jnp.bfloat16)
    x = jax.nn.log_softmax(x.astype(jnp.float32), axis=-1)

    return jnp.transpose(x, (0, 3, 1, 2))   # NHWC -> NCHW


# ----------------------------------------------------------------------------- pure-JAX f32 reference
def _ref_conv2d(x, w_oihw, b, stride=1, padding=0):
    w = jnp.transpose(w_oihw, (2, 3, 1, 0))     # HWIO
    y = jax.lax.conv_general_dilated(
        x, w, window_strides=(stride, stride),
        padding=((padding, padding), (padding, padding)),
        dimension_numbers=('NHWC', 'HWIO', 'NHWC'))
    return y + b.reshape(1, 1, 1, -1)


def _ref_conv_transpose2d(x, w_iohw, b, stride, padding, output_padding):
    k = w_iohw.shape[2]
    wf = jnp.transpose(w_iohw[:, :, ::-1, ::-1], (2, 3, 0, 1))   # HWIO, flipped
    lo = k - 1 - padding
    hi = k - 1 - padding + output_padding
    y = jax.lax.conv_general_dilated(
        x, wf, window_strides=(1, 1), padding=((lo, hi), (lo, hi)),
        lhs_dilation=(stride, stride),
        dimension_numbers=('NHWC', 'HWIO', 'NHWC'))
    return y + b.reshape(1, 1, 1, -1)


def _prelu(z, alpha):
    a = jnp.asarray(alpha, jnp.float32).reshape(())
    return jnp.where(z >= 0.0, z, a * z)


def reference_forward(x_nchw, params, input_target_size=(16, 16), sizes=(1, 2, 3, 6)):
    """Pure-JAX f32 reference with the same eval-mode semantics (tolerance check)."""
    x = jnp.transpose(x_nchw, (0, 2, 3, 1)).astype(jnp.float32)
    x = bilinear_upsample(x, input_target_size[0], input_target_size[1])
    x = jax.nn.relu(_ref_conv2d(x, params['enc_w'], params['enc_b'], stride=2, padding=1))

    n, h, w, c = x.shape
    priors = []
    for size, sw in zip(sizes, params['stage_ws']):
        pr = adaptive_avg_pool(x, size)
        pr = jnp.einsum('nhwc,cf->nhwf', pr, jnp.transpose(sw[:, :, 0, 0]))
        priors.append(bilinear_upsample(pr, h, w))
    priors.append(x)
    cat = jnp.concatenate(priors, axis=-1)
    x = jax.nn.relu(_ref_conv2d(cat, params['bottleneck_w'], params['bottleneck_b']))

    bn_scale = np.float32(1.0 / np.sqrt(1.0 + BN_EPS))
    x = _prelu(_ref_conv_transpose2d(x, params['convp1_w'] * bn_scale,
                                     params['convp1_b'] * bn_scale, 4, 1, 3),
               params['prelu1'])
    x = _prelu(_ref_conv2d(x, params['convp2_w'] * bn_scale,
                           params['convp2_b'] * bn_scale, 1, 1), params['prelu2'])
    x = _prelu(_ref_conv2d(x, params['convp3_w'] * bn_scale,
                           params['convp3_b'] * bn_scale, 1, 1), params['prelu3'])
    x = _ref_conv_transpose2d(x, params['final_w'], params['final_b'], 2, 1, 1)
    x = jax.nn.log_softmax(x, axis=-1)
    return jnp.transpose(x, (0, 3, 1, 2))


# ----------------------------------------------------------------------------- main
if __name__ == "__main__":
    key = jax.random.PRNGKey(0)
    pkey, xkey = jax.random.split(key)
    params = init_params(pkey, in_ch=4, psp_size=128, sizes=(1, 2, 3, 6))

    # small deterministic input, NCHW like the PyTorch module
    x = jax.random.normal(xkey, (2, 4, 16, 16), jnp.float32)

    fwd = jax.jit(lambda xx, pp: context_net_forward(
        xx, pp, input_target_size=(16, 16), sizes=(1, 2, 3, 6)))
    out = jax.block_until_ready(fwd(x, params))

    assert out.shape == (2, 3, 64, 64), out.shape
    # log_softmax sanity: exp sums to 1 across channel dim (computed in f32)
    s = jnp.exp(out).sum(axis=1)
    assert bool(jnp.allclose(s, 1.0, atol=1e-4)), "log_softmax check failed"

    # tolerance check vs the pure-JAX f32 reference (bf16 matmuls => loose bound)
    ref = jax.block_until_ready(jax.jit(reference_forward)(x, params))
    err = float(jnp.max(jnp.abs(out - ref)))
    assert err < 0.1, f"mismatch vs f32 reference: max abs diff {err}"

    print("KERNEL_OK")
</pallas_src>

<mosaic_0001>
module attributes {stable_mosaic.version = 11 : i64} {
  func.func @kernel(%arg0: i32, %arg1: memref<128x36xbf16, #tpu.memory_space<vmem>>, %arg2: memref<36x128xbf16, #tpu.memory_space<vmem>>, %arg3: memref<1x128xf32, #tpu.memory_space<vmem>>, %arg4: memref<128x128xbf16, #tpu.memory_space<vmem>>) attributes {dimension_semantics = [#tpu.dimension_semantics<parallel>], iteration_bounds = array<i64: 1>, scalar_prefetch = 0 : i64, scratch_operands = 0 : i64, tpu.core_type = #tpu.core_type<tc>, window_params = [{transform_indices = @transform_0, window_bounds = array<i64: 128, 36>}, {pipeline_mode = #tpu.pipeline_mode<synchronous>, transform_indices = @transform_1, window_bounds = array<i64: 36, 128>}, {pipeline_mode = #tpu.pipeline_mode<synchronous>, transform_indices = @transform_2, window_bounds = array<i64: 1, 128>}, {transform_indices = @transform_3, window_bounds = array<i64: 128, 128>}]} {
    %c0 = arith.constant 0 : index
    %c0_0 = arith.constant 0 : index
    %0 = vector.load %arg1[%c0, %c0_0] : memref<128x36xbf16, #tpu.memory_space<vmem>>, vector<128x36xbf16>
    %c0_1 = arith.constant 0 : index
    %c0_2 = arith.constant 0 : index
    %1 = vector.load %arg2[%c0_1, %c0_2] : memref<36x128xbf16, #tpu.memory_space<vmem>>, vector<36x128xbf16>
    %cst = arith.constant dense<0.000000e+00> : vector<128x128xf32>
    %2 = tpu.matmul %0, %1, %cst {dimension_numbers = #tpu.dot_dimension_numbers<[1], [0], [0], [1], [0, 0, 1, 1], [], []>} : vector<128x36xbf16>, vector<36x128xbf16>, vector<128x128xf32> -> vector<128x128xf32>
    %c0_3 = arith.constant 0 : index
    %c0_4 = arith.constant 0 : index
    %3 = vector.load %arg3[%c0_3, %c0_4] : memref<1x128xf32, #tpu.memory_space<vmem>>, vector<1x128xf32>
    %4 = vector.broadcast %3 : vector<1x128xf32> to vector<128x128xf32>
    %5 = arith.addf %2, %4 : vector<128x128xf32>
    %cst_5 = arith.constant 0.000000e+00 : f32
    %6 = vector.broadcast %cst_5 : f32 to vector<128x128xf32>
    %7 = arith.maximumf %5, %6 : vector<128x128xf32>
    %8 = arith.truncf %7 : vector<128x128xf32> to vector<128x128xbf16>
    %c0_6 = arith.constant 0 : index
    %c0_7 = arith.constant 0 : index
    %9 = vector.load %arg4[%c0_6, %c0_7] : memref<128x128xbf16, #tpu.memory_space<vmem>>, vector<128x128xbf16>
    tpu.vector_store %arg4[%c0_6, %c0_7], %8 {strides = array<i32>} : memref<128x128xbf16, #tpu.memory_space<vmem>>, vector<128x128xbf16>,
    return
  }
  func.func @transform_0(%arg0: i32) -> (i32, i32) {
    %c0_i32 = arith.constant 0 : i32
    %c0_i32_0 = arith.constant 0 : i32
    return %arg0, %c0_i32 : i32, i32
  }
  func.func @transform_1(%arg0: i32) -> (i32, i32) {
    %c0_i32 = arith.constant 0 : i32
    %c0_i32_0 = arith.constant 0 : i32
    %c0_i32_1 = arith.constant 0 : i32
    return %c0_i32, %c0_i32_0 : i32, i32
  }
  func.func @transform_2(%arg0: i32) -> (i32, i32) {
    %c0_i32 = arith.constant 0 : i32
    %c0_i32_0 = arith.constant 0 : i32
    %c0_i32_1 = arith.constant 0 : i32
    return %c0_i32, %c0_i32_0 : i32, i32
  }
  func.func @transform_3(%arg0: i32) -> (i32, i32) {
    %c0_i32 = arith.constant 0 : i32
    %c0_i32_0 = arith.constant 0 : i32
    return %arg0, %c0_i32 : i32, i32
  }
}

module attributes {stable_mosaic.version = 11 : i64} {
  func.func @kernel(%arg0: i32, %arg1: memref<128x640xbf16, #tpu.memory_space<vmem>>, %arg2: memref<640x128xbf16, #tpu.memory_space<vmem>>, %arg3: memref<1x128xf32, #tpu.memory_space<vmem>>, %arg4: memref<128x128xbf16, #tpu.memory_space<vmem>>) attributes {dimension_semantics = [#tpu.dimension_semantics<parallel>], iteration_bounds = array<i64: 1>, scalar_prefetch = 0 : i64, scratch_operands = 0 : i64, tpu.core_type = #tpu.core_type<tc>, window_params = [{transform_indices = @transform_0, window_bounds = array<i64: 128, 640>}, {pipeline_mode = #tpu.pipeline_mode<synchronous>, transform_indices = @transform_1, window_bounds = array<i64: 640, 128>}, {pipeline_mode = #tpu.pipeline_mode<synchronous>, transform_indices = @transform_2, window_bounds = array<i64: 1, 128>}, {transform_indices = @transform_3, window_bounds = array<i64: 128, 128>}]} {
    %c0 = arith.constant 0 : index
    %c0_0 = arith.constant 0 : index
    %0 = vector.load %arg1[%c0, %c0_0] : memref<128x640xbf16, #tpu.memory_space<vmem>>, vector<128x640xbf16>
    %c0_1 = arith.constant 0 : index
    %c0_2 = arith.constant 0 : index
    %1 = vector.load %arg2[%c0_1, %c0_2] : memref<640x128xbf16, #tpu.memory_space<vmem>>, vector<640x128xbf16>
    %cst = arith.constant dense<0.000000e+00> : vector<128x128xf32>
    %2 = tpu.matmul %0, %1, %cst {dimension_numbers = #tpu.dot_dimension_numbers<[1], [0], [0], [1], [0, 0, 1, 1], [], []>} : vector<128x640xbf16>, vector<640x128xbf16>, vector<128x128xf32> -> vector<128x128xf32>
    %c0_3 = arith.constant 0 : index
    %c0_4 = arith.constant 0 : index
    %3 = vector.load %arg3[%c0_3, %c0_4] : memref<1x128xf32, #tpu.memory_space<vmem>>, vector<1x128xf32>
    %4 = vector.broadcast %3 : vector<1x128xf32> to vector<128x128xf32>
    %5 = arith.addf %2, %4 : vector<128x128xf32>
    %cst_5 = arith.constant 0.000000e+00 : f32
    %6 = vector.broadcast %cst_5 : f32 to vector<128x128xf32>
    %7 = arith.maximumf %5, %6 : vector<128x128xf32>
    %8 = arith.truncf %7 : vector<128x128xf32> to vector<128x128xbf16>
    %c0_6 = arith.constant 0 : index
    %c0_7 = arith.constant 0 : index
    %9 = vector.load %arg4[%c0_6, %c0_7] : memref<128x128xbf16, #tpu.memory_space<vmem>>, vector<128x128xbf16>
    tpu.vector_store %arg4[%c0_6, %c0_7], %8 {strides = array<i32>} : memref<128x128xbf16, #tpu.memory_space<vmem>>, vector<128x128xbf16>,
    return
  }
  func.func @transform_0(%arg0: i32) -> (i32, i32) {
    %c0_i32 = arith.constant 0 : i32
    %c0_i32_0 = arith.constant 0 : i32
    return %arg0, %c0_i32 : i32, i32
  }
  func.func @transform_1(%arg0: i32) -> (i32, i32) {
    %c0_i32 = arith.constant 0 : i32
    %c0_i32_0 = arith.constant 0 : i32
    %c0_i32_1 = arith.constant 0 : i32
    return %c0_i32, %c0_i32_0 : i32, i32
  }
  func.func @transform_2(%arg0: i32) -> (i32, i32) {
    %c0_i32 = arith.constant 0 : i32
    %c0_i32_0 = arith.constant 0 : i32
    %c0_i32_1 = arith.constant 0 : i32
    return %c0_i32, %c0_i32_0 : i32, i32
  }
  func.func @transform_3(%arg0: i32) -> (i32, i32) {
    %c0_i32 = arith.constant 0 : i32
    %c0_i32_0 = arith.constant 0 : i32
    return %arg0, %c0_i32 : i32, i32
  }
}

module attributes {stable_mosaic.version = 11 : i64} {
  func.func @kernel(%arg0: i32, %arg1: memref<128x64xbf16, #tpu.memory_space<vmem>>, %arg2: memref<64x384xbf16, #tpu.memory_space<vmem>>, %arg3: memref<1x384xf32, #tpu.memory_space<vmem>>, %arg4: memref<1xf32, #tpu.memory_space<smem>>, %arg5: memref<128x384xbf16, #tpu.memory_space<vmem>>) attributes {dimension_semantics = [#tpu.dimension_semantics<parallel>], iteration_bounds = array<i64: 1>, scalar_prefetch = 0 : i64, scratch_operands = 0 : i64, tpu.core_type = #tpu.core_type<tc>, window_params = [{transform_indices = @transform_0, window_bounds = array<i64: 128, 64>}, {pipeline_mode = #tpu.pipeline_mode<synchronous>, transform_indices = @transform_1, window_bounds = array<i64: 64, 384>}, {pipeline_mode = #tpu.pipeline_mode<synchronous>, transform_indices = @transform_2, window_bounds = array<i64: 1, 384>}, {transform_indices = @transform_3, window_bounds = array<i64: 1>}, {transform_indices = @transform_4, window_bounds = array<i64: 128, 384>}]} {
    %c0 = arith.constant 0 : index
    %c0_0 = arith.constant 0 : index
    %0 = vector.load %arg1[%c0, %c0_0] : memref<128x64xbf16, #tpu.memory_space<vmem>>, vector<128x64xbf16>
    %c0_1 = arith.constant 0 : index
    %c0_2 = arith.constant 0 : index
    %1 = vector.load %arg2[%c0_1, %c0_2] : memref<64x384xbf16, #tpu.memory_space<vmem>>, vector<64x384xbf16>
    %cst = arith.constant dense<0.000000e+00> : vector<128x384xf32>
    %2 = tpu.matmul %0, %1, %cst {dimension_numbers = #tpu.dot_dimension_numbers<[1], [0], [0], [1], [0, 0, 1, 1], [], []>} : vector<128x64xbf16>, vector<64x384xbf16>, vector<128x384xf32> -> vector<128x384xf32>
    %c0_3 = arith.constant 0 : index
    %c0_4 = arith.constant 0 : index
    %3 = vector.load %arg3[%c0_3, %c0_4] : memref<1x384xf32, #tpu.memory_space<vmem>>, vector<1x384xf32>
    %4 = vector.broadcast %3 : vector<1x384xf32> to vector<128x384xf32>
    %5 = arith.addf %2, %4 : vector<128x384xf32>
    %cst_5 = arith.constant 0.000000e+00 : f32
    %6 = vector.broadcast %cst_5 : f32 to vector<128x384xf32>
    %7 = arith.cmpf oge, %5, %6 : vector<128x384xf32>
    %c0_6 = arith.constant 0 : index
    %8 = memref.load %arg4[%c0_6] : memref<1xf32, #tpu.memory_space<smem>>
    %9 = vector.broadcast %8 : f32 to vector<128x384xf32>
    %10 = arith.mulf %9, %5 : vector<128x384xf32>
    %11 = arith.select %7, %5, %10 : vector<128x384xi1>, vector<128x384xf32>
    %12 = arith.truncf %11 : vector<128x384xf32> to vector<128x384xbf16>
    %c0_7 = arith.constant 0 : index
    %c0_8 = arith.constant 0 : index
    %13 = vector.load %arg5[%c0_7, %c0_8] : memref<128x384xbf16, #tpu.memory_space<vmem>>, vector<128x384xbf16>
    tpu.vector_store %arg5[%c0_7, %c0_8], %12 {strides = array<i32>} : memref<128x384xbf16, #tpu.memory_space<vmem>>, vector<128x384xbf16>,
    return
  }
  func.func @transform_0(%arg0: i32) -> (i32, i32) {
    %c0_i32 = arith.constant 0 : i32
    %c0_i32_0 = arith.constant 0 : i32
    return %arg0, %c0_i32 : i32, i32
  }
  func.func @transform_1(%arg0: i32) -> (i32, i32) {
    %c0_i32 = arith.constant 0 : i32
    %c0_i32_0 = arith.constant 0 : i32
    %c0_i32_1 = arith.constant 0 : i32
    return %c0_i32, %c0_i32_0 : i32, i32
  }
  func.func @transform_2(%arg0: i32) -> (i32, i32) {
    %c0_i32 = arith.constant 0 : i32
    %c0_i32_0 = arith.constant 0 : i32
    %c0_i32_1 = arith.constant 0 : i32
    return %c0_i32, %c0_i32_0 : i32, i32
  }
  func.func @transform_3(%arg0: i32) -> i32 {
    %c0_i32 = arith.constant 0 : i32
    %c0_i32_0 = arith.constant 0 : i32
    return %c0_i32 : i32
  }
  func.func @transform_4(%arg0: i32) -> (i32, i32) {
    %c0_i32 = arith.constant 0 : i32
    %c0_i32_0 = arith.constant 0 : i32
    return %arg0, %c0_i32 : i32, i32
  }
}

module attributes {stable_mosaic.version = 11 : i64} {
  func.func @kernel(%arg0: i32, %arg1: memref<512x288xbf16, #tpu.memory_space<vmem>>, %arg2: memref<288x128xbf16, #tpu.memory_space<vmem>>, %arg3: memref<1x128xf32, #tpu.memory_space<vmem>>, %arg4: memref<1xf32, #tpu.memory_space<smem>>, %arg5: memref<512x128xbf16, #tpu.memory_space<vmem>>) attributes {dimension_semantics = [#tpu.dimension_semantics<parallel>], iteration_bounds = array<i64: 4>, scalar_prefetch = 0 : i64, scratch_operands = 0 : i64, tpu.core_type = #tpu.core_type<tc>, window_params = [{transform_indices = @transform_0, window_bounds = array<i64: 512, 288>}, {pipeline_mode = #tpu.pipeline_mode<synchronous>, transform_indices = @transform_1, window_bounds = array<i64: 288, 128>}, {pipeline_mode = #tpu.pipeline_mode<synchronous>, transform_indices = @transform_2, window_bounds = array<i64: 1, 128>}, {transform_indices = @transform_3, window_bounds = array<i64: 1>}, {transform_indices = @transform_4, window_bounds = array<i64: 512, 128>}]} {
    %c0 = arith.constant 0 : index
    %c0_0 = arith.constant 0 : index
    %0 = vector.load %arg1[%c0, %c0_0] : memref<512x288xbf16, #tpu.memory_space<vmem>>, vector<512x288xbf16>
    %c0_1 = arith.constant 0 : index
    %c0_2 = arith.constant 0 : index
    %1 = vector.load %arg2[%c0_1, %c0_2] : memref<288x128xbf16, #tpu.memory_space<vmem>>, vector<288x128xbf16>
    %cst = arith.constant dense<0.000000e+00> : vector<512x128xf32>
    %2 = tpu.matmul %0, %1, %cst {dimension_numbers = #tpu.dot_dimension_numbers<[1], [0], [0], [1], [0, 0, 1, 1], [], []>} : vector<512x288xbf16>, vector<288x128xbf16>, vector<512x128xf32> -> vector<512x128xf32>
    %c0_3 = arith.constant 0 : index
    %c0_4 = arith.constant 0 : index
    %3 = vector.load %arg3[%c0_3, %c0_4] : memref<1x128xf32, #tpu.memory_space<vmem>>, vector<1x128xf32>
    %4 = vector.broadcast %3 : vector<1x128xf32> to vector<512x128xf32>
    %5 = arith.addf %2, %4 : vector<512x128xf32>
    %cst_5 = arith.constant 0.000000e+00 : f32
    %6 = vector.broadcast %cst_5 : f32 to vector<512x128xf32>
    %7 = arith.cmpf oge, %5, %6 : vector<512x128xf32>
    %c0_6 = arith.constant 0 : index
    %8 = memref.load %arg4[%c0_6] : memref<1xf32, #tpu.memory_space<smem>>
    %9 = vector.broadcast %8 : f32 to vector<512x128xf32>
    %10 = arith.mulf %9, %5 : vector<512x128xf32>
    %11 = arith.select %7, %5, %10 : vector<512x128xi1>, vector<512x128xf32>
    %12 = arith.truncf %11 : vector<512x128xf32> to vector<512x128xbf16>
    %c0_7 = arith.constant 0 : index
    %c0_8 = arith.constant 0 : index
    %13 = vector.load %arg5[%c0_7, %c0_8] : memref<512x128xbf16, #tpu.memory_space<vmem>>, vector<512x128xbf16>
    tpu.vector_store %arg5[%c0_7, %c0_8], %12 {strides = array<i32>} : memref<512x128xbf16, #tpu.memory_space<vmem>>, vector<512x128xbf16>,
    return
  }
  func.func @transform_0(%arg0: i32) -> (i32, i32) {
    %c0_i32 = arith.constant 0 : i32
    %c0_i32_0 = arith.constant 0 : i32
    return %arg0, %c0_i32 : i32, i32
  }
  func.func @transform_1(%arg0: i32) -> (i32, i32) {
    %c0_i32 = arith.constant 0 : i32
    %c0_i32_0 = arith.constant 0 : i32
    %c0_i32_1 = arith.constant 0 : i32
    return %c0_i32, %c0_i32_0 : i32, i32
  }
  func.func @transform_2(%arg0: i32) -> (i32, i32) {
    %c0_i32 = arith.constant 0 : i32
    %c0_i32_0 = arith.constant 0 : i32
    %c0_i32_1 = arith.constant 0 : i32
    return %c0_i32, %c0_i32_0 : i32, i32
  }
  func.func @transform_3(%arg0: i32) -> i32 {
    %c0_i32 = arith.constant 0 : i32
    %c0_i32_0 = arith.constant 0 : i32
    return %c0_i32 : i32
  }
  func.func @transform_4(%arg0: i32) -> (i32, i32) {
    %c0_i32 = arith.constant 0 : i32
    %c0_i32_0 = arith.constant 0 : i32
    return %arg0, %c0_i32 : i32, i32
  }
}

module attributes {stable_mosaic.version = 11 : i64} {
  func.func @kernel(%arg0: i32, %arg1: memref<512x32xbf16, #tpu.memory_space<vmem>>, %arg2: memref<512x64xbf16, #tpu.memory_space<vmem>>, %arg3: memref<512x64xbf16, #tpu.memory_space<vmem>>, %arg4: memref<512x128xbf16, #tpu.memory_space<vmem>>, %arg5: memref<32x128xbf16, #tpu.memory_space<vmem>>, %arg6: memref<64x128xbf16, #tpu.memory_space<vmem>>, %arg7: memref<64x128xbf16, #tpu.memory_space<vmem>>, %arg8: memref<128x128xbf16, #tpu.memory_space<vmem>>, %arg9: memref<1x128xf32, #tpu.memory_space<vmem>>, %arg10: memref<4x512x128xbf16, #tpu.memory_space<vmem>>) attributes {dimension_semantics = [#tpu.dimension_semantics<parallel>], iteration_bounds = array<i64: 4>, scalar_prefetch = 0 : i64, scratch_operands = 0 : i64, tpu.core_type = #tpu.core_type<tc>, window_params = [{transform_indices = @transform_0, window_bounds = array<i64: 512, 32>}, {transform_indices = @transform_1, window_bounds = array<i64: 512, 64>}, {transform_indices = @transform_2, window_bounds = array<i64: 512, 64>}, {transform_indices = @transform_3, window_bounds = array<i64: 512, 128>}, {pipeline_mode = #tpu.pipeline_mode<synchronous>, transform_indices = @transform_4, window_bounds = array<i64: 32, 128>}, {pipeline_mode = #tpu.pipeline_mode<synchronous>, transform_indices = @transform_5, window_bounds = array<i64: 64, 128>}, {pipeline_mode = #tpu.pipeline_mode<synchronous>, transform_indices = @transform_6, window_bounds = array<i64: 64, 128>}, {pipeline_mode = #tpu.pipeline_mode<synchronous>, transform_indices = @transform_7, window_bounds = array<i64: 128, 128>}, {pipeline_mode = #tpu.pipeline_mode<synchronous>, transform_indices = @transform_8, window_bounds = array<i64: 1, 128>}, {transform_indices = @transform_9, window_bounds = array<i64: 4, 512, 128>}]} {
    %c0 = arith.constant 0 : index
    %c0_0 = arith.constant 0 : index
    %0 = vector.load %arg9[%c0, %c0_0] : memref<1x128xf32, #tpu.memory_space<vmem>>, vector<1x128xf32>
    %c0_1 = arith.constant 0 : index
    %c0_2 = arith.constant 0 : index
    %1 = vector.load %arg1[%c0_1, %c0_2] : memref<512x32xbf16, #tpu.memory_space<vmem>>, vector<512x32xbf16>
    %c0_3 = arith.constant 0 : index
    %c0_4 = arith.constant 0 : index
    %2 = vector.load %arg5[%c0_3, %c0_4] : memref<32x128xbf16, #tpu.memory_space<vmem>>, vector<32x128xbf16>
    %cst = arith.constant dense<0.000000e+00> : vector<512x128xf32>
    %3 = tpu.matmul %1, %2, %cst {dimension_numbers = #tpu.dot_dimension_numbers<[1], [0], [0], [1], [0, 0, 1, 1], [], []>} : vector<512x32xbf16>, vector<32x128xbf16>, vector<512x128xf32> -> vector<512x128xf32>
    %4 = vector.broadcast %0 : vector<1x128xf32> to vector<512x128xf32>
    %5 = arith.addf %3, %4 : vector<512x128xf32>
    %6 = arith.truncf %5 : vector<512x128xf32> to vector<512x128xbf16>
    %c0_5 = arith.constant 0 : index
    %c0_6 = arith.constant 0 : index
    %c0_7 = arith.constant 0 : index
    %7 = vector.load %arg10[%c0_5, %c0_6, %c0_7] : memref<4x512x128xbf16, #tpu.memory_space<vmem>>, vector<1x512x128xbf16>
    %8 = vector.shape_cast %7 : vector<1x512x128xbf16> to vector<512x128xbf16>
    %9 = vector.shape_cast %6 : vector<512x128xbf16> to vector<1x512x128xbf16>
    tpu.vector_store %arg10[%c0_5, %c0_6, %c0_7], %9 {strides = array<i32>} : memref<4x512x128xbf16, #tpu.memory_space<vmem>>, vector<1x512x128xbf16>,
    %c0_8 = arith.constant 0 : index
    %c0_9 = arith.constant 0 : index
    %10 = vector.load %arg2[%c0_8, %c0_9] : memref<512x64xbf16, #tpu.memory_space<vmem>>, vector<512x64xbf16>
    %c0_10 = arith.constant 0 : index
    %c0_11 = arith.constant 0 : index
    %11 = vector.load %arg6[%c0_10, %c0_11] : memref<64x128xbf16, #tpu.memory_space<vmem>>, vector<64x128xbf16>
    %cst_12 = arith.constant dense<0.000000e+00> : vector<512x128xf32>
    %12 = tpu.matmul %10, %11, %cst_12 {dimension_numbers = #tpu.dot_dimension_numbers<[1], [0], [0], [1], [0, 0, 1, 1], [], []>} : vector<512x64xbf16>, vector<64x128xbf16>, vector<512x128xf32> -> vector<512x128xf32>
    %13 = vector.broadcast %0 : vector<1x128xf32> to vector<512x128xf32>
    %14 = arith.addf %12, %13 : vector<512x128xf32>
    %15 = arith.truncf %14 : vector<512x128xf32> to vector<512x128xbf16>
    %c1 = arith.constant 1 : index
    %c0_13 = arith.constant 0 : index
    %c0_14 = arith.constant 0 : index
    %16 = vector.load %arg10[%c1, %c0_13, %c0_14] : memref<4x512x128xbf16, #tpu.memory_space<vmem>>, vector<1x512x128xbf16>
    %17 = vector.shape_cast %16 : vector<1x512x128xbf16> to vector<512x128xbf16>
    %18 = vector.shape_cast %15 : vector<512x128xbf16> to vector<1x512x128xbf16>
    tpu.vector_store %arg10[%c1, %c0_13, %c0_14], %18 {strides = array<i32>} : memref<4x512x128xbf16, #tpu.memory_space<vmem>>, vector<1x512x128xbf16>,
    %c0_15 = arith.constant 0 : index
    %c0_16 = arith.constant 0 : index
    %19 = vector.load %arg3[%c0_15, %c0_16] : memref<512x64xbf16, #tpu.memory_space<vmem>>, vector<512x64xbf16>
    %c0_17 = arith.constant 0 : index
    %c0_18 = arith.constant 0 : index
    %20 = vector.load %arg7[%c0_17, %c0_18] : memref<64x128xbf16, #tpu.memory_space<vmem>>, vector<64x128xbf16>
    %cst_19 = arith.constant dense<0.000000e+00> : vector<512x128xf32>
    %21 = tpu.matmul %19, %20, %cst_19 {dimension_numbers = #tpu.dot_dimension_numbers<[1], [0], [0], [1], [0, 0, 1, 1], [], []>} : vector<512x64xbf16>, vector<64x128xbf16>, vector<512x128xf32> -> vector<512x128xf32>
    %22 = vector.broadcast %0 : vector<1x128xf32> to vector<512x128xf32>
    %23 = arith.addf %21, %22 : vector<512x128xf32>
    %24 = arith.truncf %23 : vector<512x128xf32> to vector<512x128xbf16>
    %c2 = arith.constant 2 : index
    %c0_20 = arith.constant 0 : index
    %c0_21 = arith.constant 0 : index
    %25 = vector.load %arg10[%c2, %c0_20, %c0_21] : memref<4x512x128xbf16, #tpu.memory_space<vmem>>, vector<1x512x128xbf16>
    %26 = vector.shape_cast %25 : vector<1x512x128xbf16> to vector<512x128xbf16>
    %27 = vector.shape_cast %24 : vector<512x128xbf16> to vector<1x512x128xbf16>
    tpu.vector_store %arg10[%c2, %c0_20, %c0_21], %27 {strides = array<i32>} : memref<4x512x128xbf16, #tpu.memory_space<vmem>>, vector<1x512x128xbf16>,
    %c0_22 = arith.constant 0 : index
    %c0_23 = arith.constant 0 : index
    %28 = vector.load %arg4[%c0_22, %c0_23] : memref<512x128xbf16, #tpu.memory_space<vmem>>, vector<512x128xbf16>
    %c0_24 = arith.constant 0 : index
    %c0_25 = arith.constant 0 : index
    %29 = vector.load %arg8[%c0_24, %c0_25] : memref<128x128xbf16, #tpu.memory_space<vmem>>, vector<128x128xbf16>
    %cst_26 = arith.constant dense<0.000000e+00> : vector<512x128xf32>
    %30 = tpu.matmul %28, %29, %cst_26 {dimension_numbers = #tpu.dot_dimension_numbers<[1], [0], [0], [1], [0, 0, 1, 1], [], []>} : vector<512x128xbf16>, vector<128x128xbf16>, vector<512x128xf32> -> vector<512x128xf32>
    %31 = vector.broadcast %0 : vector<1x128xf32> to vector<512x128xf32>
    %32 = arith.addf %30, %31 : vector<512x128xf32>
    %33 = arith.truncf %32 : vector<512x128xf32> to vector<512x128xbf16>
    %c3 = arith.constant 3 : index
    %c0_27 = arith.constant 0 : index
    %c0_28 = arith.constant 0 : index
    %34 = vector.load %arg10[%c3, %c0_27, %c0_28] : memref<4x512x128xbf16, #tpu.memory_space<vmem>>, vector<1x512x128xbf16>
    %35 = vector.shape_cast %34 : vector<1x512x128xbf16> to vector<512x128xbf16>
    %36 = vector.shape_cast %33 : vector<512x128xbf16> to vector<1x512x128xbf16>
    tpu.vector_store %arg10[%c3, %c0_27, %c0_28], %36 {strides = array<i32>} : memref<4x512x128xbf16, #tpu.memory_space<vmem>>, vector<1x512x128xbf16>,
    return
  }
  func.func @transform_0(%arg0: i32) -> (i32, i32) {
    %c0_i32 = arith.constant 0 : i32
    %c0_i32_0 = arith.constant 0 : i32
    return %arg0, %c0_i32 : i32, i32
  }
  func.func @transform_1(%arg0: i32) -> (i32, i32) {
    %c0_i32 = arith.constant 0 : i32
    %c0_i32_0 = arith.constant 0 : i32
    return %arg0, %c0_i32 : i32, i32
  }
  func.func @transform_2(%arg0: i32) -> (i32, i32) {
    %c0_i32 = arith.constant 0 : i32
    %c0_i32_0 = arith.constant 0 : i32
    return %arg0, %c0_i32 : i32, i32
  }
  func.func @transform_3(%arg0: i32) -> (i32, i32) {
    %c0_i32 = arith.constant 0 : i32
    %c0_i32_0 = arith.constant 0 : i32
    return %arg0, %c0_i32 : i32, i32
  }
  func.func @transform_4(%arg0: i32) -> (i32, i32) {
    %c0_i32 = arith.constant 0 : i32
    %c0_i32_0 = arith.constant 0 : i32
    %c0_i32_1 = arith.constant 0 : i32
    return %c0_i32, %c0_i32_0 : i32, i32
  }
  func.func @transform_5(%arg0: i32) -> (i32, i32) {
    %c0_i32 = arith.constant 0 : i32
    %c0_i32_0 = arith.constant 0 : i32
    %c0_i32_1 = arith.constant 0 : i32
    return %c0_i32, %c0_i32_0 : i32, i32
  }
  func.func @transform_6(%arg0: i32) -> (i32, i32) {
    %c0_i32 = arith.constant 0 : i32
    %c0_i32_0 = arith.constant 0 : i32
    %c0_i32_1 = arith.constant 0 : i32
    return %c0_i32, %c0_i32_0 : i32, i32
  }
  func.func @transform_7(%arg0: i32) -> (i32, i32) {
    %c0_i32 = arith.constant 0 : i32
    %c0_i32_0 = arith.constant 0 : i32
    %c0_i32_1 = arith.constant 0 : i32
    return %c0_i32, %c0_i32_0 : i32, i32
  }
  func.func @transform_8(%arg0: i32) -> (i32, i32) {
    %c0_i32 = arith.constant 0 : i32
    %c0_i32_0 = arith.constant 0 : i32
    %c0_i32_1 = arith.constant 0 : i32
    return %c0_i32, %c0_i32_0 : i32, i32
  }
  func.func @transform_9(%arg0: i32) -> (i32, i32, i32) {
    %c0_i32 = arith.constant 0 : i32
    %c0_i32_0 = arith.constant 0 : i32
    %c0_i32_1 = arith.constant 0 : i32
    return %c0_i32, %arg0, %c0_i32_0 : i32, i32, i32
  }
}

</mosaic_0001>

<llo_original>
// kernel: tile.8
$region0: #{tile.8}
  #allocation0 [shape = 's32[1]{0}', space=sflag, size = 0x4, scoped, tag = 'scoped memory for tile.8']
  %s0 = inlined_call_operand.vmem [shape: f32[32], index: 0, kind: input, shape index: {}]
  %s1 = inlined_call_operand.vmem [shape: f32[9,32], index: 1, kind: output, shape index: {}]
  // Predicated region
  $region2: #{tile.8} parent=0 // pred_check
    _
  $region3: #{tile.8} parent=0 // pred_check_branch
    %3 = sbr.rel (0) target = $region5
  $region4: #{tile.8} parent=0 // pred_region
    _
  $region5: #{tile.8} parent=0 // pred_fallthru
    _
  %v4 = vld [vmem:[%s0] ss:$0 sm:$0xff]
  %5 = vst [vmem:[%s1] sm:$0xff] %v4
  %s6 = scalar_lea.vmem %s1, 8
  %7 = vst [vmem:[%s6] sm:$0xff] %v4

// kernel: tile.9
$region0: #{tile.9}
  %s0 = inlined_call_operand.vmem [shape: f32[9,32], index: 0, kind: input, shape index: {}]
  %s1 = inlined_call_operand.vmem [shape: f32[288], index: 1, kind: output, shape index: {}]
  $region1: #{tile.9} parent=0
    #allocation0 [shape = 'u8[4096]{0}', space=vmem, size = 0x1000, scoped, tag = 'scoped mem for output reshape']
    %v2 = vld [vmem:[%s0] ss:$4 sm:$0x7]
    %vm3 = vcmask 261120
    %4 = vst.msk [vmem:[#allocation0] sm:$0x7] %vm3, %v2
    %s5 = scalar_lea.vmem %s0, 3
    %s6 = smov 3
    %v7 = vld [vmem:[%s5] ss:$4 sm:%s6]
    %8 = vrot.lane.b32.xlu0 %v7, 96
    %v9 = vpop.permute.xlu0 %8
    %vm10 = vcmask 1048320
    %11 = vst.msk [vmem:[#allocation0] sm:$0x3] %vm10, %v9
    %s12 = scalar_lea.vmem %s0, 2
    %s13 = smov 3
    %v14 = vld [vmem:[%s12] ss:$4 sm:%s13]
    %15 = vrot.lane.b32.xlu0 %v14, 64
    %v16 = vpop.permute.xlu0 %15
    %vm17 = vcmask 785920
    %18 = vst.msk [vmem:[#allocation0] sm:$0x3] %vm17, %v16
    %s19 = scalar_lea.vmem %s0, 1
    %s20 = smov 3
    %v21 = vld [vmem:[%s19] ss:$4 sm:%s20]
    %22 = vrot.lane.b32.xlu0 %v21, 32
    %v23 = vpop.permute.xlu0 %22
    %vm24 = vcmask 523520
    %25 = vst.msk [vmem:[#allocation0] sm:$0x3] %vm24, %v23
    %s27 = sshllo.u32 0, 4
    %v29 = vld [vmem:[#allocation0] sm:%s27]
    %s30 = sshllo.u32 0, 4
    %31 = vst [vmem:[%s1] sm:%s30] %v29

// kernel: _lambda_.6
$region0: #{_lambda_.6}
  #allocation0 [shape = 'u32[]', space=smem, size = 0x4, offset = 0x4, fixed_abs, tag = 'smem constant byte address 0x4 - core index']
  #allocation1 [shape = 'u32[144,128]{1,0:T(1,128)}', space=vmem, size = 0x12000, scoped, tag = 'internal scratch']
  %s0 = inlined_call_operand.vmem [shape: bf16[128,36], index: 0, kind: input, shape index: {}]
  %s1 = inlined_call_operand.vmem [shape: bf16[36,128], index: 1, kind: input, shape index: {}]
  %s2 = inlined_call_operand.hbm [shape: f32[1,128], index: 2, kind: input, shape index: {}]
  %s3 = inlined_call_operand.vmem [shape: bf16[128,128], index: 3, kind: output, shape index: {}]
  %s4 = sld [smem:[#allocation0]]
  $region26: #{_lambda_.6} parent=0
    _
  %s6 = ssub.s32 1, %s4
  %s7 = scalar_select 0, %s6, %s4
  $region1: #{_lambda_.6} parent=0
    #allocation2 [shape = 'u8[512]{0}', space=vmem, size = 0x400, scoped, tag = 'input window, operand 2, single buffered']
    #allocation3 [shape = 's32[1]{0}', space=sflag, size = 0x4, scoped, tag = 'scoped memory for _lambda_.6']
    %8 = vsyncpa [#allocation3], 0
    // Predicated region
    $region2: #{_lambda_.6} parent=1 // pred_check
      _
    $region3: #{_lambda_.6} parent=1 // pred_check_branch
      %10 = sbr.rel (0) target = $region5
    $region4: #{_lambda_.6} parent=1 // pred_region
      _
    $region5: #{_lambda_.6} parent=1 // pred_fallthru
      _
    // Predicated region
    $region6: #{_lambda_.6} parent=1 // pred_check
      _
    $region7: #{_lambda_.6} parent=1 // pred_check_branch
      %12 = sbr.rel (0) target = $region9
    $region8: #{_lambda_.6} parent=1 // pred_region
      _
    $region9: #{_lambda_.6} parent=1 // pred_fallthru
      _
    // Predicated region
    $region10: #{_lambda_.6} parent=1 // pred_check
      _
    $region11: #{_lambda_.6} parent=1 // pred_check_branch
      %14 = sbr.rel (0) target = $region13
    $region12: #{_lambda_.6} parent=1 // pred_region
      %s16 = ssub.s32 16, 16
      %17 = vsyncadd [#allocation3], %s16
      %s19 = sshll.u32 [#allocation2], 4
      %s20 = int_to_ptr.vmem [resolvable:$true] %s19
      %22 = dma.hbm_to_vmem [thread:$0]  %s2, 16, %s20, [#allocation3]
    $region13: #{_lambda_.6} parent=1 // pred_fallthru
      _
    // Predicated region
    $region14: #{_lambda_.6} parent=1 // pred_check
      _
    $region15: #{_lambda_.6} parent=1 // pred_check_branch
      %24 = sbr.rel (0) target = $region17
    $region16: #{_lambda_.6} parent=1 // pred_region
      %25 = dma.done [#allocation3], 16
    $region17: #{_lambda_.6} parent=1 // pred_fallthru
      _
    %v27 = vld [vmem:[%s0] sm:$0xf]
    %v28 = vld [vmem:[%s0 + $0x4] sm:$0xf]
    %v29 = vld [vmem:[%s0 + $0x8] sm:$0xf]
    %v30 = vld [vmem:[%s0 + $0xc] sm:$0xf]
    %v31 = vld [vmem:[%s0 + $0x10] sm:$0xf]
    %v32 = vld [vmem:[%s0 + $0x14] sm:$0xf]
    %v33 = vld [vmem:[%s0 + $0x18] sm:$0xf]
    %v34 = vld [vmem:[%s0 + $0x1c] sm:$0xf]
    %v35 = vld [vmem:[%s0 + $0x20] sm:$0xf]
    %v36 = vld [vmem:[%s0 + $0x24] sm:$0xf]
    %v37 = vld [vmem:[%s0 + $0x28] sm:$0xf]
    %v38 = vld [vmem:[%s0 + $0x2c] sm:$0xf]
    %v39 = vld [vmem:[%s0 + $0x30] sm:$0xf]
    %v40 = vld [vmem:[%s0 + $0x34] sm:$0xf]
    %v41 = vld [vmem:[%s0 + $0x38] sm:$0xf]
    %v42 = vld [vmem:[%s0 + $0x3c] sm:$0xf]
    %v43 = vld [vmem:[%s1] sm:$0xf]
    %v44 = vld [vmem:[%s1 + $0x4] sm:$0xf]
    %v45 = vld [vmem:[%s1 + $0x8] sm:$0xf]
    %v46 = vld [vmem:[%s1 + $0xc] sm:$0xf]
    %v47 = vld [vmem:[%s1 + $0x10] sm:$0x3]
    %v48 = vld [vmem:[#allocation2] sm:$0x1]
    %v50 = vlaneseq
    %v51 = vshrl.u32 %v50, 7
    %v52 = vsub.s32 0, %v51
    %v53 = vrot.slane %v48, %v52
    %v71 = vunpack.c.l.b16 %v27
    %v72 = vunpack.c.l.b16 %v28
    %v73 = vunpack.c.l.b16 %v29
    %v74 = vunpack.c.l.b16 %v30
    %v75 = vunpack.c.l.b16 %v31
    %v76 = vunpack.c.l.b16 %v32
    %v77 = vunpack.c.l.b16 %v33
    %v78 = vunpack.c.l.b16 %v34
    %v79 = vunpack.c.l.b16 %v35
    %v80 = vunpack.c.l.b16 %v36
    %v81 = vunpack.c.l.b16 %v37
    %v82 = vunpack.c.l.b16 %v38
    %v83 = vunpack.c.l.b16 %v39
    %v84 = vunpack.c.l.b16 %v40
    %v85 = vunpack.c.l.b16 %v41
    %v86 = vunpack.c.l.b16 %v42
    %v87 = vpack.c.b16 %v72, %v71
    %v88 = vpack.c.b16 %v74, %v73
    %v89 = vpack.c.b16 %v76, %v75
    %v90 = vpack.c.b16 %v78, %v77
    %v91 = vpack.c.b16 %v80, %v79
    %v92 = vpack.c.b16 %v82, %v81
    %v93 = vpack.c.b16 %v84, %v83
    %v94 = vpack.c.b16 %v86, %v85
    %v100 = vunpack.c.l.b16 %v43
    %v101 = vunpack.c.l.b16 %v44
    %v102 = vunpack.c.l.b16 %v45
    %v103 = vunpack.c.l.b16 %v46
    %v104 = vunpack.c.l.b16 %v47
    %v105 = vpack.c.b16 %v101, %v100
    %v106 = vpack.c.b16 %v103, %v102
    %v107 = vpack.c.b16 %v104, %v104
    %vm110 = vcmask 293888
    %v112 = vsel %vm110, %v87, 0
    %v115 = vsel %vm110, %v88, 0
    %v118 = vsel %vm110, %v89, 0
    %v121 = vsel %vm110, %v90, 0
    %v124 = vsel %vm110, %v91, 0
    %v127 = vsel %vm110, %v92, 0
    %v130 = vsel %vm110, %v93, 0
    %v133 = vsel %vm110, %v94, 0
    %vm135 = vcmask 1041408
    %v137 = vsel %vm135, %v107, 0
    %139 = vmatprep.subr.bf16.mxu0 0
    %140 = vmatpush1.bf16.msra.mxu0 %v105
    %141 = vmatprep.subr.bf16.mxu0 0
    %142 = vmatpush1.bf16.msra.mxu0 %v106
    %143 = vmatprep.subr.bf16.mxu0 0
    %144 = vmatpush1.bf16.msra.mxu0 %v137
    %145 = vmatprep.subr.bf16.mxu0 0
    %146 = vmatpush1.bf16.msra.mxu0 0
    %147 = vmatprep.subr.bf16.mxu0 0
    %148 = vmatpush1.bf16.msra.mxu0 0
    %149 = vmatprep.subr.bf16.mxu0 0
    %150 = vmatpush1.bf16.msra.mxu0 0
    %151 = vmatprep.subr.bf16.mxu0 0
    %152 = vmatpush1.bf16.msra.mxu0 0
    %153 = vmatprep.subr.bf16.mxu0 0
    %154 = vmatpush1.bf16.msra.mxu0 0
    %155 = vmatprep.subr.bf16.mxu0 0
    %156 = vmatpush1.bf16.msra.mxu0 0
    %157 = vmatprep.subr.bf16.mxu0 0
    %158 = vmatpush1.bf16.msra.mxu0 0
    %159 = vmatprep.subr.bf16.mxu0 0
    %160 = vmatpush1.bf16.msra.mxu0 0
    %161 = vmatprep.subr.bf16.mxu0 0
    %162 = vmatpush1.bf16.msra.mxu0 0
    %163 = vmatprep.subr.bf16.mxu0 0
    %164 = vmatpush1.bf16.msra.mxu0 0
    %165 = vmatprep.subr.bf16.mxu0 0
    %166 = vmatpush1.bf16.msra.mxu0 0
    %167 = vmatprep.subr.bf16.mxu0 0
    %168 = vmatpush1.bf16.msra.mxu0 0
    %169 = vmatprep.subr.bf16.mxu0 0
    %170 = vmatpush1.bf16.msra.mxu0 0
    %171 = vmatprep.mubr.bf16.mxu0 0
    %172 = vmatmul.mubr.bf16.gmra.mrb[0].mxu0 %v112
    %v173 = vpop.f32.mrb[0].mxu0
    %v174 = vadd.f32 %v53, %v173
    %v175 = vpop.f32.mrb[0].mxu0
    %v176 = vpop.f32.mrb[0].mxu0
    %v177 = vadd.f32 %v53, %v176
    %v178 = vpop.f32.mrb[0].mxu0
    %179 = vmatprep.mubr.bf16.mxu0 0
    %180 = vmatmul.mubr.bf16.gmra.mrb[0].mxu0 %v115
    %v181 = vpop.f32.mrb[0].mxu0
    %v182 = vadd.f32 %v53, %v181
    %v183 = vpop.f32.mrb[0].mxu0
    %v184 = vpop.f32.mrb[0].mxu0
    %v185 = vadd.f32 %v53, %v184
    %v186 = vpop.f32.mrb[0].mxu0
    %187 = vmatprep.mubr.bf16.mxu0 0
    %188 = vmatmul.mubr.bf16.gmra.mrb[0].mxu0 %v118
    %v189 = vpop.f32.mrb[0].mxu0
    %v190 = vadd.f32 %v53, %v189
    %v191 = vpop.f32.mrb[0].mxu0
    %v192 = vpop.f32.mrb[0].mxu0
    %v193 = vadd.f32 %v53, %v192
    %v194 = vpop.f32.mrb[0].mxu0
    %195 = vmatprep.mubr.bf16.mxu0 0
    %196 = vmatmul.mubr.bf16.gmra.mrb[0].mxu0 %v121
    %v197 = vpop.f32.mrb[0].mxu0
    %v198 = vadd.f32 %v53, %v197
    %v199 = vpop.f32.mrb[0].mxu0
    %v200 = vpop.f32.mrb[0].mxu0
    %v201 = vadd.f32 %v53, %v200
    %v202 = vpop.f32.mrb[0].mxu0
    %203 = vmatprep.mubr.bf16.mxu0 0
    %204 = vmatmul.mubr.bf16.gmra.mrb[0].mxu0 %v124
    %v205 = vpop.f32.mrb[0].mxu0
    %v206 = vadd.f32 %v53, %v205
    %v207 = vpop.f32.mrb[0].mxu0
    %v208 = vpop.f32.mrb[0].mxu0
    %v209 = vadd.f32 %v53, %v208
    %v210 = vpop.f32.mrb[0].mxu0
    %211 = vmatprep.mubr.bf16.mxu0 0
    %212 = vmatmul.mubr.bf16.gmra.mrb[0].mxu0 %v127
    %v213 = vpop.f32.mrb[0].mxu0
    %v214 = vadd.f32 %v53, %v213
    %v215 = vpop.f32.mrb[0].mxu0
    %v216 = vpop.f32.mrb[0].mxu0
    %v217 = vadd.f32 %v53, %v216
    %v218 = vpop.f32.mrb[0].mxu0
    %219 = vmatprep.mubr.bf16.mxu0 0
    %220 = vmatmul.mubr.bf16.gmra.mrb[0].mxu0 %v130
    %v221 = vpop.f32.mrb[0].mxu0
    %v222 = vadd.f32 %v53, %v221
    %v223 = vpop.f32.mrb[0].mxu0
    %v224 = vpop.f32.mrb[0].mxu0
    %v225 = vadd.f32 %v53, %v224
    %v226 = vpop.f32.mrb[0].mxu0
    %227 = vmatprep.mubr.bf16.mxu0 0
    %228 = vmatmul.mubr.bf16.gmra.mrb[0].mxu0 %v133
    %v229 = vpop.f32.mrb[0].mxu0
    %v230 = vadd.f32 %v53, %v229
    %v231 = vpop.f32.mrb[0].mxu0
    %v232 = vpop.f32.mrb[0].mxu0
    %v233 = vadd.f32 %v53, %v232
    %v234 = vpop.f32.mrb[0].mxu0
    %235 = vdwg.mxu0
    %v236 = vmax.f32 %v174, 0.0
    %v237 = vmax.f32 %v177, 0.0
    %v238 = vmax.f32 %v182, 0.0
    %v239 = vmax.f32 %v185, 0.0
    %v240 = vmax.f32 %v190, 0.0
    %v241 = vmax.f32 %v193, 0.0
    %v242 = vmax.f32 %v198, 0.0
    %v243 = vmax.f32 %v201, 0.0
    %v244 = vmax.f32 %v206, 0.0
    %v245 = vmax.f32 %v209, 0.0
    %v246 = vmax.f32 %v214, 0.0
    %v247 = vmax.f32 %v217, 0.0
    %v248 = vmax.f32 %v222, 0.0
    %v249 = vmax.f32 %v225, 0.0
    %v250 = vmax.f32 %v230, 0.0
    %v251 = vmax.f32 %v233, 0.0
    %v252 = vpack.c.bf16 %v237, %v236
    %v253 = vpack.c.bf16 %v239, %v238
    %v254 = vpack.c.bf16 %v241, %v240
    %v255 = vpack.c.bf16 %v243, %v242
    %v256 = vpack.c.bf16 %v245, %v244
    %v257 = vpack.c.bf16 %v247, %v246
    %v258 = vpack.c.bf16 %v249, %v248
    %v259 = vpack.c.bf16 %v251, %v250
    %v268 = vunpack.c.l.b16 %v252
    %v269 = vunpack.c.h.b16 %v252
    %v270 = vunpack.c.l.b16 %v253
    %v271 = vunpack.c.h.b16 %v253
    %v272 = vunpack.c.l.b16 %v254
    %v273 = vunpack.c.h.b16 %v254
    %v274 = vunpack.c.l.b16 %v255
    %v275 = vunpack.c.h.b16 %v255
    %v276 = vunpack.c.l.b16 %v256
    %v277 = vunpack.c.h.b16 %v256
    %v278 = vunpack.c.l.b16 %v257
    %v279 = vunpack.c.h.b16 %v257
    %v280 = vunpack.c.l.b16 %v258
    %v281 = vunpack.c.h.b16 %v258
    %v282 = vunpack.c.l.b16 %v259
    %v283 = vunpack.c.h.b16 %v259
    %v284 = vpack.c.b16 %v268, %v268
    %v285 = vpack.c.b16 %v269, %v269
    %v286 = vpack.c.b16 %v270, %v270
    %v287 = vpack.c.b16 %v271, %v271
    %v288 = vpack.c.b16 %v272, %v272
    %v289 = vpack.c.b16 %v273, %v273
    %v290 = vpack.c.b16 %v274, %v274
    %v291 = vpack.c.b16 %v275, %v275
    %v292 = vpack.c.b16 %v276, %v276
    %v293 = vpack.c.b16 %v277, %v277
    %v294 = vpack.c.b16 %v278, %v278
    %v295 = vpack.c.b16 %v279, %v279
    %v296 = vpack.c.b16 %v280, %v280
    %v297 = vpack.c.b16 %v281, %v281
    %v298 = vpack.c.b16 %v282, %v282
    %v299 = vpack.c.b16 %v283, %v283
    %316 = vst [vmem:[%s3] sm:$0xf] %v284
    %317 = vst [vmem:[%s3 + $0x4] sm:$0xf] %v285
    %318 = vst [vmem:[%s3 + $0x8] sm:$0xf] %v286
    %319 = vst [vmem:[%s3 + $0xc] sm:$0xf] %v287
    %320 = vst [vmem:[%s3 + $0x10] sm:$0xf] %v288
    %321 = vst [vmem:[%s3 + $0x14] sm:$0xf] %v289
    %322 = vst [vmem:[%s3 + $0x18] sm:$0xf] %v290
    %323 = vst [vmem:[%s3 + $0x1c] sm:$0xf] %v291
    %324 = vst [vmem:[%s3 + $0x20] sm:$0xf] %v292
    %325 = vst [vmem:[%s3 + $0x24] sm:$0xf] %v293
    %326 = vst [vmem:[%s3 + $0x28] sm:$0xf] %v294
    %327 = vst [vmem:[%s3 + $0x2c] sm:$0xf] %v295
    %328 = vst [vmem:[%s3 + $0x30] sm:$0xf] %v296
    %329 = vst [vmem:[%s3 + $0x34] sm:$0xf] %v297
    %330 = vst [vmem:[%s3 + $0x38] sm:$0xf] %v298
    %331 = vst [vmem:[%s3 + $0x3c] sm:$0xf] %v299
    // Predicated region
    $region18: #{_lambda_.6} parent=1 // pred_check
      _
    $region19: #{_lambda_.6} parent=1 // pred_check_branch
      %333 = sbr.rel (0) target = $region21
    $region20: #{_lambda_.6} parent=1 // pred_region
      _
    $region21: #{_lambda_.6} parent=1 // pred_fallthru
      _
    // Predicated region
    $region22: #{_lambda_.6} parent=1 // pred_check
      _
    $region23: #{_lambda_.6} parent=1 // pred_check_branch
      %335 = sbr.rel (0) target = $region25
    $region24: #{_lambda_.6} parent=1 // pred_region
      _
    $region25: #{_lambda_.6} parent=1 // pred_fallthru
      _
    %336 = vsyncpa [#allocation3], 1

// kernel: _lambda_.7
$region0: #{_lambda_.7}
  #allocation0 [shape = 'u32[]', space=smem, size = 0x4, offset = 0x4, fixed_abs, tag = 'smem constant byte address 0x4 - core index']
  #allocation1 [shape = 'u32[144,128]{1,0:T(1,128)}', space=vmem, size = 0x12000, scoped, tag = 'internal scratch']
  %s0 = inlined_call_operand.vmem [shape: bf16[128,640], index: 0, kind: input, shape index: {}]
  %s1 = inlined_call_operand.vmem [shape: bf16[640,128], index: 1, kind: input, shape index: {}]
  %s2 = inlined_call_operand.vmem [shape: f32[1,128], index: 2, kind: input, shape index: {}]
  %s3 = inlined_call_operand.vmem [shape: bf16[128,128], index: 3, kind: output, shape index: {}]
  %s4 = sld [smem:[#allocation0]]
  $region22: #{_lambda_.7} parent=0
    _
  %s6 = ssub.s32 1, %s4
  %s7 = scalar_select 0, %s6, %s4
  // Predicated region
  $region2: #{_lambda_.7} parent=0 // pred_check
    _
  $region3: #{_lambda_.7} parent=0 // pred_check_branch
    %9 = sbr.rel (0) target = $region5
  $region4: #{_lambda_.7} parent=0 // pred_region
    _
  $region5: #{_lambda_.7} parent=0 // pred_fallthru
    _
  // Predicated region
  $region6: #{_lambda_.7} parent=0 // pred_check
    _
  $region7: #{_lambda_.7} parent=0 // pred_check_branch
    %11 = sbr.rel (0) target = $region9
  $region8: #{_lambda_.7} parent=0 // pred_region
    _
  $region9: #{_lambda_.7} parent=0 // pred_fallthru
    _
  // Predicated region
  $region10: #{_lambda_.7} parent=0 // pred_check
    _
  $region11: #{_lambda_.7} parent=0 // pred_check_branch
    %13 = sbr.rel (0) target = $region13
  $region12: #{_lambda_.7} parent=0 // pred_region
    _
  $region13: #{_lambda_.7} parent=0 // pred_fallthru
    _
  %v15 = vld [vmem:[%s0] sm:$0xff]
  %v16 = vld [vmem:[%s0 + $0x8] sm:$0xff]
  %v17 = vld [vmem:[%s0 + $0x10] sm:$0xf]
  %v18 = vld [vmem:[%s0 + $0x14] sm:$0xff]
  %v19 = vld [vmem:[%s0 + $0x1c] sm:$0xff]
  %v20 = vld [vmem:[%s0 + $0x24] sm:$0xf]
  %v21 = vld [vmem:[%s0 + $0x28] sm:$0xff]
  %v22 = vld [vmem:[%s0 + $0x30] sm:$0xff]
  %v23 = vld [vmem:[%s0 + $0x38] sm:$0xf]
  %v24 = vld [vmem:[%s0 + $0x3c] sm:$0xff]
  %v25 = vld [vmem:[%s0 + $0x44] sm:$0xff]
  %v26 = vld [vmem:[%s0 + $0x4c] sm:$0xf]
  %v27 = vld [vmem:[%s0 + $0x50] sm:$0xff]
  %v28 = vld [vmem:[%s0 + $0x58] sm:$0xff]
  %v29 = vld [vmem:[%s0 + $0x60] sm:$0xf]
  %v30 = vld [vmem:[%s0 + $0x64] sm:$0xff]
  %v31 = vld [vmem:[%s0 + $0x6c] sm:$0xff]
  %v32 = vld [vmem:[%s0 + $0x74] sm:$0xf]
  %v33 = vld [vmem:[%s0 + $0x78] sm:$0xff]
  %v34 = vld [vmem:[%s0 + $0x80] sm:$0xff]
  %v35 = vld [vmem:[%s0 + $0x88] sm:$0xf]
  %v36 = vld [vmem:[%s0 + $0x8c] sm:$0xff]
  %v37 = vld [vmem:[%s0 + $0x94] sm:$0xff]
  %v38 = vld [vmem:[%s0 + $0x9c] sm:$0xf]
  %v39 = vld [vmem:[%s0 + $0xa0] sm:$0xff]
  %v40 = vld [vmem:[%s0 + $0xa8] sm:$0xff]
  %v41 = vld [vmem:[%s0 + $0xb0] sm:$0xf]
  %v42 = vld [vmem:[%s0 + $0xb4] sm:$0xff]
  %v43 = vld [vmem:[%s0 + $0xbc] sm:$0xff]
  %v44 = vld [vmem:[%s0 + $0xc4] sm:$0xf]
  %v45 = vld [vmem:[%s0 + $0xc8] sm:$0xff]
  %v46 = vld [vmem:[%s0 + $0xd0] sm:$0xff]
  %v47 = vld [vmem:[%s0 + $0xd8] sm:$0xf]
  %v48 = vld [vmem:[%s0 + $0xdc] sm:$0xff]
  %v49 = vld [vmem:[%s0 + $0xe4] sm:$0xff]
  %v50 = vld [vmem:[%s0 + $0xec] sm:$0xf]
  %v51 = vld [vmem:[%s0 + $0xf0] sm:$0xff]
  %v52 = vld [vmem:[%s0 + $0xf8] sm:$0xff]
  %v53 = vld [vmem:[%s0 + $0x100] sm:$0xf]
  %v54 = vld [vmem:[%s0 + $0x104] sm:$0xff]
  %v55 = vld [vmem:[%s0 + $0x10c] sm:$0xff]
  %v56 = vld [vmem:[%s0 + $0x114] sm:$0xf]
  %v57 = vld [vmem:[%s0 + $0x118] sm:$0xff]
  %v58 = vld [vmem:[%s0 + $0x120] sm:$0xff]
  %v59 = vld [vmem:[%s0 + $0x128] sm:$0xf]
  %v60 = vld [vmem:[%s0 + $0x12c] sm:$0xff]
  %v61 = vld [vmem:[%s0 + $0x134] sm:$0xff]
  %v62 = vld [vmem:[%s0 + $0x13c] sm:$0xf]
  %v63 = vld [vmem:[%s1] sm:$0xf]
  %v64 = vld [vmem:[%s1 + $0x4] sm:$0xf]
  %v65 = vld [vmem:[%s1 + $0x8] sm:$0xf]
  %v66 = vld [vmem:[%s1 + $0xc] sm:$0xf]
  %v67 = vld [vmem:[%s1 + $0x10] sm:$0xf]
  %v68 = vld [vmem:[%s1 + $0x14] sm:$0xf]
  %v69 = vld [vmem:[%s1 + $0x18] sm:$0xf]
  %v70 = vld [vmem:[%s1 + $0x1c] sm:$0xf]
  %v71 = vld [vmem:[%s1 + $0x20] sm:$0xf]
  %v72 = vld [vmem:[%s1 + $0x24] sm:$0xf]
  %v73 = vld [vmem:[%s1 + $0x28] sm:$0xf]
  %v74 = vld [vmem:[%s1 + $0x2c] sm:$0xf]
  %v75 = vld [vmem:[%s1 + $0x30] sm:$0xf]
  %v76 = vld [vmem:[%s1 + $0x34] sm:$0xf]
  %v77 = vld [vmem:[%s1 + $0x38] sm:$0xf]
  %v78 = vld [vmem:[%s1 + $0x3c] sm:$0xf]
  %v79 = vld [vmem:[%s1 + $0x40] sm:$0xf]
  %v80 = vld [vmem:[%s1 + $0x44] sm:$0xf]
  %v81 = vld [vmem:[%s1 + $0x48] sm:$0xf]
  %v82 = vld [vmem:[%s1 + $0x4c] sm:$0xf]
  %v83 = vld [vmem:[%s1 + $0x50] sm:$0xf]
  %v84 = vld [vmem:[%s1 + $0x54] sm:$0xf]
  %v85 = vld [vmem:[%s1 + $0x58] sm:$0xf]
  %v86 = vld [vmem:[%s1 + $0x5c] sm:$0xf]
  %v87 = vld [vmem:[%s1 + $0x60] sm:$0xf]
  %v88 = vld [vmem:[%s1 + $0x64] sm:$0xf]
  %v89 = vld [vmem:[%s1 + $0x68] sm:$0xf]
  %v90 = vld [vmem:[%s1 + $0x6c] sm:$0xf]
  %v91 = vld [vmem:[%s1 + $0x70] sm:$0xf]
  %v92 = vld [vmem:[%s1 + $0x74] sm:$0xf]
  %v93 = vld [vmem:[%s1 + $0x78] sm:$0xf]
  %v94 = vld [vmem:[%s1 + $0x7c] sm:$0xf]
  %v95 = vld [vmem:[%s1 + $0x80] sm:$0xf]
  %v96 = vld [vmem:[%s1 + $0x84] sm:$0xf]
  %v97 = vld [vmem:[%s1 + $0x88] sm:$0xf]
  %v98 = vld [vmem:[%s1 + $0x8c] sm:$0xf]
  %v99 = vld [vmem:[%s1 + $0x90] sm:$0xf]
  %v100 = vld [vmem:[%s1 + $0x94] sm:$0xf]
  %v101 = vld [vmem:[%s1 + $0x98] sm:$0xf]
  %v102 = vld [vmem:[%s1 + $0x9c] sm:$0xf]
  %v103 = vld [vmem:[%s1 + $0xa0] sm:$0xf]
  %v104 = vld [vmem:[%s1 + $0xa4] sm:$0xf]
  %v105 = vld [vmem:[%s1 + $0xa8] sm:$0xf]
  %v106 = vld [vmem:[%s1 + $0xac] sm:$0xf]
  %v107 = vld [vmem:[%s1 + $0xb0] sm:$0xf]
  %v108 = vld [vmem:[%s1 + $0xb4] sm:$0xf]
  %v109 = vld [vmem:[%s1 + $0xb8] sm:$0xf]
  %v110 = vld [vmem:[%s1 + $0xbc] sm:$0xf]
  %v111 = vld [vmem:[%s1 + $0xc0] sm:$0xf]
  %v112 = vld [vmem:[%s1 + $0xc4] sm:$0xf]
  %v113 = vld [vmem:[%s1 + $0xc8] sm:$0xf]
  %v114 = vld [vmem:[%s1 + $0xcc] sm:$0xf]
  %v115 = vld [vmem:[%s1 + $0xd0] sm:$0xf]
  %v116 = vld [vmem:[%s1 + $0xd4] sm:$0xf]
  %v117 = vld [vmem:[%s1 + $0xd8] sm:$0xf]
  %v118 = vld [vmem:[%s1 + $0xdc] sm:$0xf]
  %v119 = vld [vmem:[%s1 + $0xe0] sm:$0xf]
  %v120 = vld [vmem:[%s1 + $0xe4] sm:$0xf]
  %v121 = vld [vmem:[%s1 + $0xe8] sm:$0xf]
  %v122 = vld [vmem:[%s1 + $0xec] sm:$0xf]
  %v123 = vld [vmem:[%s1 + $0xf0] sm:$0xf]
  %v124 = vld [vmem:[%s1 + $0xf4] sm:$0xf]
  %v125 = vld [vmem:[%s1 + $0xf8] sm:$0xf]
  %v126 = vld [vmem:[%s1 + $0xfc] sm:$0xf]
  %v127 = vld [vmem:[%s1 + $0x100] sm:$0xf]
  %v128 = vld [vmem:[%s1 + $0x104] sm:$0xf]
  %v129 = vld [vmem:[%s1 + $0x108] sm:$0xf]
  %v130 = vld [vmem:[%s1 + $0x10c] sm:$0xf]
  %v131 = vld [vmem:[%s1 + $0x110] sm:$0xf]
  %v132 = vld [vmem:[%s1 + $0x114] sm:$0xf]
  %v133 = vld [vmem:[%s1 + $0x118] sm:$0xf]
  %v134 = vld [vmem:[%s1 + $0x11c] sm:$0xf]
  %v135 = vld [vmem:[%s1 + $0x120] sm:$0xf]
  %v136 = vld [vmem:[%s1 + $0x124] sm:$0xf]
  %v137 = vld [vmem:[%s1 + $0x128] sm:$0xf]
  %v138 = vld [vmem:[%s1 + $0x12c] sm:$0xf]
  %v139 = vld [vmem:[%s1 + $0x130] sm:$0xf]
  %v140 = vld [vmem:[%s1 + $0x134] sm:$0xf]
  %v141 = vld [vmem:[%s1 + $0x138] sm:$0xf]
  %v142 = vld [vmem:[%s1 + $0x13c] sm:$0xf]
  %v143 = vld [vmem:[%s2] sm:$0x1]
  %v145 = vlaneseq
  %v146 = vshrl.u32 %v145, 7
  %v147 = vsub.s32 0, %v146
  %v148 = vrot.slane %v143, %v147
  %v198 = vunpack.c.l.b16 %v15
  %v199 = vunpack.c.h.b16 %v15
  %v200 = vunpack.c.l.b16 %v16
  %v201 = vunpack.c.h.b16 %v16
  %v202 = vunpack.c.l.b16 %v17
  %v203 = vunpack.c.l.b16 %v18
  %v204 = vunpack.c.h.b16 %v18
  %v205 = vunpack.c.l.b16 %v19
  %v206 = vunpack.c.h.b16 %v19
  %v207 = vunpack.c.l.b16 %v20
  %v208 = vunpack.c.l.b16 %v21
  %v209 = vunpack.c.h.b16 %v21
  %v210 = vunpack.c.l.b16 %v22
  %v211 = vunpack.c.h.b16 %v22
  %v212 = vunpack.c.l.b16 %v23
  %v213 = vunpack.c.l.b16 %v24
  %v214 = vunpack.c.h.b16 %v24
  %v215 = vunpack.c.l.b16 %v25
  %v216 = vunpack.c.h.b16 %v25
  %v217 = vunpack.c.l.b16 %v26
  %v218 = vunpack.c.l.b16 %v27
  %v219 = vunpack.c.h.b16 %v27
  %v220 = vunpack.c.l.b16 %v28
  %v221 = vunpack.c.h.b16 %v28
  %v222 = vunpack.c.l.b16 %v29
  %v223 = vunpack.c.l.b16 %v30
  %v224 = vunpack.c.h.b16 %v30
  %v225 = vunpack.c.l.b16 %v31
  %v226 = vunpack.c.h.b16 %v31
  %v227 = vunpack.c.l.b16 %v32
  %v228 = vunpack.c.l.b16 %v33
  %v229 = vunpack.c.h.b16 %v33
  %v230 = vunpack.c.l.b16 %v34
  %v231 = vunpack.c.h.b16 %v34
  %v232 = vunpack.c.l.b16 %v35
  %v233 = vunpack.c.l.b16 %v36
  %v234 = vunpack.c.h.b16 %v36
  %v235 = vunpack.c.l.b16 %v37
  %v236 = vunpack.c.h.b16 %v37
  %v237 = vunpack.c.l.b16 %v38
  %v238 = vunpack.c.l.b16 %v39
  %v239 = vunpack.c.h.b16 %v39
  %v240 = vunpack.c.l.b16 %v40
  %v241 = vunpack.c.h.b16 %v40
  %v242 = vunpack.c.l.b16 %v41
  %v243 = vunpack.c.l.b16 %v42
  %v244 = vunpack.c.h.b16 %v42
  %v245 = vunpack.c.l.b16 %v43
  %v246 = vunpack.c.h.b16 %v43
  %v247 = vunpack.c.l.b16 %v44
  %v248 = vunpack.c.l.b16 %v45
  %v249 = vunpack.c.h.b16 %v45
  %v250 = vunpack.c.l.b16 %v46
  %v251 = vunpack.c.h.b16 %v46
  %v252 = vunpack.c.l.b16 %v47
  %v253 = vunpack.c.l.b16 %v48
  %v254 = vunpack.c.h.b16 %v48
  %v255 = vunpack.c.l.b16 %v49
  %v256 = vunpack.c.h.b16 %v49
  %v257 = vunpack.c.l.b16 %v50
  %v258 = vunpack.c.l.b16 %v51
  %v259 = vunpack.c.h.b16 %v51
  %v260 = vunpack.c.l.b16 %v52
  %v261 = vunpack.c.h.b16 %v52
  %v262 = vunpack.c.l.b16 %v53
  %v263 = vunpack.c.l.b16 %v54
  %v264 = vunpack.c.h.b16 %v54
  %v265 = vunpack.c.l.b16 %v55
  %v266 = vunpack.c.h.b16 %v55
  %v267 = vunpack.c.l.b16 %v56
  %v268 = vunpack.c.l.b16 %v57
  %v269 = vunpack.c.h.b16 %v57
  %v270 = vunpack.c.l.b16 %v58
  %v271 = vunpack.c.h.b16 %v58
  %v272 = vunpack.c.l.b16 %v59
  %v273 = vunpack.c.l.b16 %v60
  %v274 = vunpack.c.h.b16 %v60
  %v275 = vunpack.c.l.b16 %v61
  %v276 = vunpack.c.h.b16 %v61
  %v277 = vunpack.c.l.b16 %v62
  %v278 = vpack.c.b16 %v203, %v198
  %v279 = vpack.c.b16 %v204, %v199
  %v280 = vpack.c.b16 %v205, %v200
  %v281 = vpack.c.b16 %v206, %v201
  %v282 = vpack.c.b16 %v207, %v202
  %v283 = vpack.c.b16 %v213, %v208
  %v284 = vpack.c.b16 %v214, %v209
  %v285 = vpack.c.b16 %v215, %v210
  %v286 = vpack.c.b16 %v216, %v211
  %v287 = vpack.c.b16 %v217, %v212
  %v288 = vpack.c.b16 %v223, %v218
  %v289 = vpack.c.b16 %v224, %v219
  %v290 = vpack.c.b16 %v225, %v220
  %v291 = vpack.c.b16 %v226, %v221
  %v292 = vpack.c.b16 %v227, %v222
  %v293 = vpack.c.b16 %v233, %v228
  %v294 = vpack.c.b16 %v234, %v229
  %v295 = vpack.c.b16 %v235, %v230
  %v296 = vpack.c.b16 %v236, %v231
  %v297 = vpack.c.b16 %v237, %v232
  %v298 = vpack.c.b16 %v243, %v238
  %v299 = vpack.c.b16 %v244, %v239
  %v300 = vpack.c.b16 %v245, %v240
  %v301 = vpack.c.b16 %v246, %v241
  %v302 = vpack.c.b16 %v247, %v242
  %v303 = vpack.c.b16 %v253, %v248
  %v304 = vpack.c.b16 %v254, %v249
  %v305 = vpack.c.b16 %v255, %v250
  %v306 = vpack.c.b16 %v256, %v251
  %v307 = vpack.c.b16 %v257, %v252
  %v308 = vpack.c.b16 %v263, %v258
  %v309 = vpack.c.b16 %v264, %v259
  %v310 = vpack.c.b16 %v265, %v260
  %v311 = vpack.c.b16 %v266, %v261
  %v312 = vpack.c.b16 %v267, %v262
  %v313 = vpack.c.b16 %v273, %v268
  %v314 = vpack.c.b16 %v274, %v269
  %v315 = vpack.c.b16 %v275, %v270
  %v316 = vpack.c.b16 %v276, %v271
  %v317 = vpack.c.b16 %v277, %v272
  %v438 = vunpack.c.l.b16 %v63
  %v439 = vunpack.c.l.b16 %v64
  %v440 = vunpack.c.l.b16 %v65
  %v441 = vunpack.c.l.b16 %v66
  %v442 = vunpack.c.l.b16 %v67
  %v443 = vunpack.c.l.b16 %v68
  %v444 = vunpack.c.l.b16 %v69
  %v445 = vunpack.c.l.b16 %v70
  %v446 = vunpack.c.l.b16 %v71
  %v447 = vunpack.c.l.b16 %v72
  %v448 = vunpack.c.l.b16 %v73
  %v449 = vunpack.c.l.b16 %v74
  %v450 = vunpack.c.l.b16 %v75
  %v451 = vunpack.c.l.b16 %v76
  %v452 = vunpack.c.l.b16 %v77
  %v453 = vunpack.c.l.b16 %v78
  %v454 = vunpack.c.l.b16 %v79
  %v455 = vunpack.c.l.b16 %v80
  %v456 = vunpack.c.l.b16 %v81
  %v457 = vunpack.c.l.b16 %v82
  %v458 = vunpack.c.l.b16 %v83
  %v459 = vunpack.c.l.b16 %v84
  %v460 = vunpack.c.l.b16 %v85
  %v461 = vunpack.c.l.b16 %v86
  %v462 = vunpack.c.l.b16 %v87
  %v463 = vunpack.c.l.b16 %v88
  %v464 = vunpack.c.l.b16 %v89
  %v465 = vunpack.c.l.b16 %v90
  %v466 = vunpack.c.l.b16 %v91
  %v467 = vunpack.c.l.b16 %v92
  %v468 = vunpack.c.l.b16 %v93
  %v469 = vunpack.c.l.b16 %v94
  %v470 = vunpack.c.l.b16 %v95
  %v471 = vunpack.c.l.b16 %v96
  %v472 = vunpack.c.l.b16 %v97
  %v473 = vunpack.c.l.b16 %v98
  %v474 = vunpack.c.l.b16 %v99
  %v475 = vunpack.c.l.b16 %v100
  %v476 = vunpack.c.l.b16 %v101
  %v477 = vunpack.c.l.b16 %v102
  %v478 = vunpack.c.l.b16 %v103
  %v479 = vunpack.c.l.b16 %v104
  %v480 = vunpack.c.l.b16 %v105
  %v481 = vunpack.c.l.b16 %v106
  %v482 = vunpack.c.l.b16 %v107
  %v483 = vunpack.c.l.b16 %v108
  %v484 = vunpack.c.l.b16 %v109
  %v485 = vunpack.c.l.b16 %v110
  %v486 = vunpack.c.l.b16 %v111
  %v487 = vunpack.c.l.b16 %v112
  %v488 = vunpack.c.l.b16 %v113
  %v489 = vunpack.c.l.b16 %v114
  %v490 = vunpack.c.l.b16 %v115
  %v491 = vunpack.c.l.b16 %v116
  %v492 = vunpack.c.l.b16 %v117
  %v493 = vunpack.c.l.b16 %v118
  %v494 = vunpack.c.l.b16 %v119
  %v495 = vunpack.c.l.b16 %v120
  %v496 = vunpack.c.l.b16 %v121
  %v497 = vunpack.c.l.b16 %v122
  %v498 = vunpack.c.l.b16 %v123
  %v499 = vunpack.c.l.b16 %v124
  %v500 = vunpack.c.l.b16 %v125
  %v501 = vunpack.c.l.b16 %v126
  %v502 = vunpack.c.l.b16 %v127
  %v503 = vunpack.c.l.b16 %v128
  %v504 = vunpack.c.l.b16 %v129
  %v505 = vunpack.c.l.b16 %v130
  %v506 = vunpack.c.l.b16 %v131
  %v507 = vunpack.c.l.b16 %v132
  %v508 = vunpack.c.l.b16 %v133
  %v509 = vunpack.c.l.b16 %v134
  %v510 = vunpack.c.l.b16 %v135
  %v511 = vunpack.c.l.b16 %v136
  %v512 = vunpack.c.l.b16 %v137
  %v513 = vunpack.c.l.b16 %v138
  %v514 = vunpack.c.l.b16 %v139
  %v515 = vunpack.c.l.b16 %v140
  %v516 = vunpack.c.l.b16 %v141
  %v517 = vunpack.c.l.b16 %v142
  %v518 = vpack.c.b16 %v439, %v438
  %v519 = vpack.c.b16 %v441, %v440
  %v520 = vpack.c.b16 %v443, %v442
  %v521 = vpack.c.b16 %v445, %v444
  %v522 = vpack.c.b16 %v447, %v446
  %v523 = vpack.c.b16 %v449, %v448
  %v524 = vpack.c.b16 %v451, %v450
  %v525 = vpack.c.b16 %v453, %v452
  %v526 = vpack.c.b16 %v455, %v454
  %v527 = vpack.c.b16 %v457, %v456
  %v528 = vpack.c.b16 %v459, %v458
  %v529 = vpack.c.b16 %v461, %v460
  %v530 = vpack.c.b16 %v463, %v462
  %v531 = vpack.c.b16 %v465, %v464
  %v532 = vpack.c.b16 %v467, %v466
  %v533 = vpack.c.b16 %v469, %v468
  %v534 = vpack.c.b16 %v471, %v470
  %v535 = vpack.c.b16 %v473, %v472
  %v536 = vpack.c.b16 %v475, %v474
  %v537 = vpack.c.b16 %v477, %v476
  %v538 = vpack.c.b16 %v479, %v478
  %v539 = vpack.c.b16 %v481, %v480
  %v540 = vpack.c.b16 %v483, %v482
  %v541 = vpack.c.b16 %v485, %v484
  %v542 = vpack.c.b16 %v487, %v486
  %v543 = vpack.c.b16 %v489, %v488
  %v544 = vpack.c.b16 %v491, %v490
  %v545 = vpack.c.b16 %v493, %v492
  %v546 = vpack.c.b16 %v495, %v494
  %v547 = vpack.c.b16 %v497, %v496
  %v548 = vpack.c.b16 %v499, %v498
  %v549 = vpack.c.b16 %v501, %v500
  %v550 = vpack.c.b16 %v503, %v502
  %v551 = vpack.c.b16 %v505, %v504
  %v552 = vpack.c.b16 %v507, %v506
  %v553 = vpack.c.b16 %v509, %v508
  %v554 = vpack.c.b16 %v511, %v510
  %v555 = vpack.c.b16 %v513, %v512
  %v556 = vpack.c.b16 %v515, %v514
  %v557 = vpack.c.b16 %v517, %v516
  %598 = vmatprep.subr.bf16.mxu0 0
  %599 = vmatpush1.bf16.msra.mxu0 %v518
  %600 = vmatprep.subr.bf16.mxu0 0
  %601 = vmatpush1.bf16.msra.mxu0 %v519
  %602 = vmatprep.subr.bf16.mxu0 0
  %603 = vmatpush1.bf16.msra.mxu0 %v520
  %604 = vmatprep.subr.bf16.mxu0 0
  %605 = vmatpush1.bf16.msra.mxu0 %v521
  %606 = vmatprep.subr.bf16.mxu0 0
  %607 = vmatpush1.bf16.msra.mxu0 %v522
  %608 = vmatprep.subr.bf16.mxu0 0
  %609 = vmatpush1.bf16.msra.mxu0 %v523
  %610 = vmatprep.subr.bf16.mxu0 0
  %611 = vmatpush1.bf16.msra.mxu0 %v524
  %612 = vmatprep.subr.bf16.mxu0 0
  %613 = vmatpush1.bf16.msra.mxu0 %v525
  %614 = vmatprep.subr.bf16.mxu0 0
  %615 = vmatpush1.bf16.msra.mxu0 %v526
  %616 = vmatprep.subr.bf16.mxu0 0
  %617 = vmatpush1.bf16.msra.mxu0 %v527
  %618 = vmatprep.subr.bf16.mxu0 0
  %619 = vmatpush1.bf16.msra.mxu0 %v528
  %620 = vmatprep.subr.bf16.mxu0 0
  %621 = vmatpush1.bf16.msra.mxu0 %v529
  %622 = vmatprep.subr.bf16.mxu0 0
  %623 = vmatpush1.bf16.msra.mxu0 %v530
  %624 = vmatprep.subr.bf16.mxu0 0
  %625 = vmatpush1.bf16.msra.mxu0 %v531
  %626 = vmatprep.subr.bf16.mxu0 0
  %627 = vmatpush1.bf16.msra.mxu0 %v532
  %628 = vmatprep.subr.bf16.mxu0 0
  %629 = vmatpush1.bf16.msra.mxu0 %v533
  %630 = vmatprep.mubr.bf16.mxu0 %v279
  %631 = vmatmul.mubr.bf16.gmra.mrb[0].mxu0 %v278
  %v632 = vpop.f32.mrb[0].mxu0
  %v633 = vadd.f32 %v148, %v632
  %v634 = vpop.f32.mrb[0].mxu0
  %v635 = vpop.f32.mrb[0].mxu0
  %v636 = vadd.f32 %v148, %v635
  %v637 = vpop.f32.mrb[0].mxu0
  %638 = vmatprep.mubr.bf16.mxu0 %v284
  %639 = vmatmul.mubr.bf16.gmra.mrb[0].mxu0 %v283
  %v640 = vpop.f32.mrb[0].mxu0
  %v641 = vadd.f32 %v148, %v640
  %v642 = vpop.f32.mrb[0].mxu0
  %v643 = vpop.f32.mrb[0].mxu0
  %v644 = vadd.f32 %v148, %v643
  %v645 = vpop.f32.mrb[0].mxu0
  %646 = vmatprep.mubr.bf16.mxu0 %v289
  %647 = vmatmul.mubr.bf16.gmra.mrb[0].mxu0 %v288
  %v648 = vpop.f32.mrb[0].mxu0
  %v649 = vadd.f32 %v148, %v648
  %v650 = vpop.f32.mrb[0].mxu0
  %v651 = vpop.f32.mrb[0].mxu0
  %v652 = vadd.f32 %v148, %v651
  %v653 = vpop.f32.mrb[0].mxu0
  %654 = vmatprep.mubr.bf16.mxu0 %v294
  %655 = vmatmul.mubr.bf16.gmra.mrb[0].mxu0 %v293
  %v656 = vpop.f32.mrb[0].mxu0
  %v657 = vadd.f32 %v148, %v656
  %v658 = vpop.f32.mrb[0].mxu0
  %v659 = vpop.f32.mrb[0].mxu0
  %v660 = vadd.f32 %v148, %v659
  %v661 = vpop.f32.mrb[0].mxu0
  %662 = vmatprep.mubr.bf16.mxu0 %v299
  %663 = vmatmul.mubr.bf16.gmra.mrb[0].mxu0 %v298
  %v664 = vpop.f32.mrb[0].mxu0
  %v665 = vadd.f32 %v148, %v664
  %v666 = vpop.f32.mrb[0].mxu0
  %v667 = vpop.f32.mrb[0].mxu0
  %v668 = vadd.f32 %v148, %v667
  %v669 = vpop.f32.mrb[0].mxu0
  %670 = vmatprep.mubr.bf16.mxu0 %v304
  %671 = vmatmul.mubr.bf16.gmra.mrb[0].mxu0 %v303
  %v672 = vpop.f32.mrb[0].mxu0
  %v673 = vadd.f32 %v148, %v672
  %v674 = vpop.f32.mrb[0].mxu0
  %v675 = vpop.f32.mrb[0].mxu0
  %v676 = vadd.f32 %v148, %v675
  %v677 = vpop.f32.mrb[0].mxu0
  %678 = vmatprep.mubr.bf16.mxu0 %v309
  %679 = vmatmul.mubr.bf16.gmra.mrb[0].mxu0 %v308
  %v680 = vpop.f32.mrb[0].mxu0
  %v681 = vadd.f32 %v148, %v680
  %v682 = vpop.f32.mrb[0].mxu0
  %v683 = vpop.f32.mrb[0].mxu0
  %v684 = vadd.f32 %v148, %v683
  %v685 = vpop.f32.mrb[0].mxu0
  %686 = vmatprep.mubr.bf16.mxu0 %v314
  %687 = vmatmul.mubr.bf16.gmra.mrb[0].mxu0 %v313
  %v688 = vpop.f32.mrb[0].mxu0
  %v689 = vadd.f32 %v148, %v688
  %v690 = vpop.f32.mrb[0].mxu0
  %v691 = vpop.f32.mrb[0].mxu0
  %v692 = vadd.f32 %v148, %v691
  %v693 = vpop.f32.mrb[0].mxu0
  %694 = vdwg.mxu0
  %695 = vmatprep.subr.bf16.mxu0 0
  %696 = vmatpush1.bf16.msra.mxu0 %v534
  %697 = vmatprep.subr.bf16.mxu0 0
  %698 = vmatpush1.bf16.msra.mxu0 %v535
  %699 = vmatprep.subr.bf16.mxu0 0
  %700 = vmatpush1.bf16.msra.mxu0 %v536
  %701 = vmatprep.subr.bf16.mxu0 0
  %702 = vmatpush1.bf16.msra.mxu0 %v537
  %703 = vmatprep.subr.bf16.mxu0 0
  %704 = vmatpush1.bf16.msra.mxu0 %v538
  %705 = vmatprep.subr.bf16.mxu0 0
  %706 = vmatpush1.bf16.msra.mxu0 %v539
  %707 = vmatprep.subr.bf16.mxu0 0
  %708 = vmatpush1.bf16.msra.mxu0 %v540
  %709 = vmatprep.subr.bf16.mxu0 0
  %710 = vmatpush1.bf16.msra.mxu0 %v541
  %711 = vmatprep.subr.bf16.mxu0 0
  %712 = vmatpush1.bf16.msra.mxu0 %v542
  %713 = vmatprep.subr.bf16.mxu0 0
  %714 = vmatpush1.bf16.msra.mxu0 %v543
  %715 = vmatprep.subr.bf16.mxu0 0
  %716 = vmatpush1.bf16.msra.mxu0 %v544
  %717 = vmatprep.subr.bf16.mxu0 0
  %718 = vmatpush1.bf16.msra.mxu0 %v545
  %719 = vmatprep.subr.bf16.mxu0 0
  %720 = vmatpush1.bf16.msra.mxu0 %v546
  %721 = vmatprep.subr.bf16.mxu0 0
  %722 = vmatpush1.bf16.msra.mxu0 %v547
  %723 = vmatprep.subr.bf16.mxu0 0
  %724 = vmatpush1.bf16.msra.mxu0 %v548
  %725 = vmatprep.subr.bf16.mxu0 0
  %726 = vmatpush1.bf16.msra.mxu0 %v549
  %727 = vmatprep.mubr.bf16.mxu0 %v281
  %728 = vmatmul.mubr.bf16.gmra.mrb[0].mxu0 %v280
  %v729 = vpop.f32.mrb[0].mxu0
  %v730 = vadd.f32 %v633, %v729
  %v731 = vpop.f32.mrb[0].mxu0
  %v732 = vpop.f32.mrb[0].mxu0
  %v733 = vadd.f32 %v636, %v732
  %v734 = vpop.f32.mrb[0].mxu0
  %735 = vmatprep.mubr.bf16.mxu0 %v286
  %736 = vmatmul.mubr.bf16.gmra.mrb[0].mxu0 %v285
  %v737 = vpop.f32.mrb[0].mxu0
  %v738 = vadd.f32 %v641, %v737
  %v739 = vpop.f32.mrb[0].mxu0
  %v740 = vpop.f32.mrb[0].mxu0
  %v741 = vadd.f32 %v644, %v740
  %v742 = vpop.f32.mrb[0].mxu0
  %743 = vmatprep.mubr.bf16.mxu0 %v291
  %744 = vmatmul.mubr.bf16.gmra.mrb[0].mxu0 %v290
  %v745 = vpop.f32.mrb[0].mxu0
  %v746 = vadd.f32 %v649, %v745
  %v747 = vpop.f32.mrb[0].mxu0
  %v748 = vpop.f32.mrb[0].mxu0
  %v749 = vadd.f32 %v652, %v748
  %v750 = vpop.f32.mrb[0].mxu0
  %751 = vmatprep.mubr.bf16.mxu0 %v296
  %752 = vmatmul.mubr.bf16.gmra.mrb[0].mxu0 %v295
  %v753 = vpop.f32.mrb[0].mxu0
  %v754 = vadd.f32 %v657, %v753
  %v755 = vpop.f32.mrb[0].mxu0
  %v756 = vpop.f32.mrb[0].mxu0
  %v757 = vadd.f32 %v660, %v756
  %v758 = vpop.f32.mrb[0].mxu0
  %759 = vmatprep.mubr.bf16.mxu0 %v301
  %760 = vmatmul.mubr.bf16.gmra.mrb[0].mxu0 %v300
  %v761 = vpop.f32.mrb[0].mxu0
  %v762 = vadd.f32 %v665, %v761
  %v763 = vpop.f32.mrb[0].mxu0
  %v764 = vpop.f32.mrb[0].mxu0
  %v765 = vadd.f32 %v668, %v764
  %v766 = vpop.f32.mrb[0].mxu0
  %767 = vmatprep.mubr.bf16.mxu0 %v306
  %768 = vmatmul.mubr.bf16.gmra.mrb[0].mxu0 %v305
  %v769 = vpop.f32.mrb[0].mxu0
  %v770 = vadd.f32 %v673, %v769
  %v771 = vpop.f32.mrb[0].mxu0
  %v772 = vpop.f32.mrb[0].mxu0
  %v773 = vadd.f32 %v676, %v772
  %v774 = vpop.f32.mrb[0].mxu0
  %775 = vmatprep.mubr.bf16.mxu0 %v311
  %776 = vmatmul.mubr.bf16.gmra.mrb[0].mxu0 %v310
  %v777 = vpop.f32.mrb[0].mxu0
  %v778 = vadd.f32 %v681, %v777
  %v779 = vpop.f32.mrb[0].mxu0
  %v780 = vpop.f32.mrb[0].mxu0
  %v781 = vadd.f32 %v684, %v780
  %v782 = vpop.f32.mrb[0].mxu0
  %783 = vmatprep.mubr.bf16.mxu0 %v316
  %784 = vmatmul.mubr.bf16.gmra.mrb[0].mxu0 %v315
  %v785 = vpop.f32.mrb[0].mxu0
  %v786 = vadd.f32 %v689, %v785
  %v787 = vpop.f32.mrb[0].mxu0
  %v788 = vpop.f32.mrb[0].mxu0
  %v789 = vadd.f32 %v692, %v788
  %v790 = vpop.f32.mrb[0].mxu0
  %791 = vdwg.mxu0
  %792 = vmatprep.subr.bf16.mxu0 0
  %793 = vmatpush1.bf16.msra.mxu0 %v550
  %794 = vmatprep.subr.bf16.mxu0 0
  %795 = vmatpush1.bf16.msra.mxu0 %v551
  %796 = vmatprep.subr.bf16.mxu0 0
  %797 = vmatpush1.bf16.msra.mxu0 %v552
  %798 = vmatprep.subr.bf16.mxu0 0
  %799 = vmatpush1.bf16.msra.mxu0 %v553
  %800 = vmatprep.subr.bf16.mxu0 0
  %801 = vmatpush1.bf16.msra.mxu0 %v554
  %802 = vmatprep.subr.bf16.mxu0 0
  %803 = vmatpush1.bf16.msra.mxu0 %v555
  %804 = vmatprep.subr.bf16.mxu0 0
  %805 = vmatpush1.bf16.msra.mxu0 %v556
  %806 = vmatprep.subr.bf16.mxu0 0
  %807 = vmatpush1.bf16.msra.mxu0 %v557
  %808 = vmatprep.subr.bf16.mxu0 0
  %809 = vmatpush1.bf16.msra.mxu0 0
  %810 = vmatprep.subr.bf16.mxu0 0
  %811 = vmatpush1.bf16.msra.mxu0 0
  %812 = vmatprep.subr.bf16.mxu0 0
  %813 = vmatpush1.bf16.msra.mxu0 0
  %814 = vmatprep.subr.bf16.mxu0 0
  %815 = vmatpush1.bf16.msra.mxu0 0
  %816 = vmatprep.subr.bf16.mxu0 0
  %817 = vmatpush1.bf16.msra.mxu0 0
  %818 = vmatprep.subr.bf16.mxu0 0
  %819 = vmatpush1.bf16.msra.mxu0 0
  %820 = vmatprep.subr.bf16.mxu0 0
  %821 = vmatpush1.bf16.msra.mxu0 0
  %822 = vmatprep.subr.bf16.mxu0 0
  %823 = vmatpush1.bf16.msra.mxu0 0
  %824 = vmatprep.mubr.bf16.mxu0 0
  %825 = vmatmul.mubr.bf16.gmra.mrb[0].mxu0 %v282
  %v826 = vpop.f32.mrb[0].mxu0
  %v827 = vadd.f32 %v730, %v826
  %v828 = vpop.f32.mrb[0].mxu0
  %v829 = vpop.f32.mrb[0].mxu0
  %v830 = vadd.f32 %v733, %v829
  %v831 = vpop.f32.mrb[0].mxu0
  %832 = vmatprep.mubr.bf16.mxu0 0
  %833 = vmatmul.mubr.bf16.gmra.mrb[0].mxu0 %v287
  %v834 = vpop.f32.mrb[0].mxu0
  %v835 = vadd.f32 %v738, %v834
  %v836 = vpop.f32.mrb[0].mxu0
  %v837 = vpop.f32.mrb[0].mxu0
  %v838 = vadd.f32 %v741, %v837
  %v839 = vpop.f32.mrb[0].mxu0
  %840 = vmatprep.mubr.bf16.mxu0 0
  %841 = vmatmul.mubr.bf16.gmra.mrb[0].mxu0 %v292
  %v842 = vpop.f32.mrb[0].mxu0
  %v843 = vadd.f32 %v746, %v842
  %v844 = vpop.f32.mrb[0].mxu0
  %v845 = vpop.f32.mrb[0].mxu0
  %v846 = vadd.f32 %v749, %v845
  %v847 = vpop.f32.mrb[0].mxu0
  %848 = vmatprep.mubr.bf16.mxu0 0
  %849 = vmatmul.mubr.bf16.gmra.mrb[0].mxu0 %v297
  %v850 = vpop.f32.mrb[0].mxu0
  %v851 = vadd.f32 %v754, %v850
  %v852 = vpop.f32.mrb[0].mxu0
  %v853 = vpop.f32.mrb[0].mxu0
  %v854 = vadd.f32 %v757, %v853
  %v855 = vpop.f32.mrb[0].mxu0
  %856 = vmatprep.mubr.bf16.mxu0 0
  %857 = vmatmul.mubr.bf16.gmra.mrb[0].mxu0 %v302
  %v858 = vpop.f32.mrb[0].mxu0
  %v859 = vadd.f32 %v762, %v858
  %v860 = vpop.f32.mrb[0].mxu0
  %v861 = vpop.f32.mrb[0].mxu0
  %v862 = vadd.f32 %v765, %v861
  %v863 = vpop.f32.mrb[0].mxu0
  %864 = vmatprep.mubr.bf16.mxu0 0
  %865 = vmatmul.mubr.bf16.gmra.mrb[0].mxu0 %v307
  %v866 = vpop.f32.mrb[0].mxu0
  %v867 = vadd.f32 %v770, %v866
  %v868 = vpop.f32.mrb[0].mxu0
  %v869 = vpop.f32.mrb[0].mxu0
  %v870 = vadd.f32 %v773, %v869
  %v871 = vpop.f32.mrb[0].mxu0
  %872 = vmatprep.mubr.bf16.mxu0 0
  %873 = vmatmul.mubr.bf16.gmra.mrb[0].mxu0 %v312
  %v874 = vpop.f32.mrb[0].mxu0
  %v875 = vadd.f32 %v778, %v874
  %v876 = vpop.f32.mrb[0].mxu0
  %v877 = vpop.f32.mrb[0].mxu0
  %v878 = vadd.f32 %v781, %v877
  %v879 = vpop.f32.mrb[0].mxu0
  %880 = vmatprep.mubr.bf16.mxu0 0
  %881 = vmatmul.mubr.bf16.gmra.mrb[0].mxu0 %v317
  %v882 = vpop.f32.mrb[0].mxu0
  %v883 = vadd.f32 %v786, %v882
  %v884 = vpop.f32.mrb[0].mxu0
  %v885 = vpop.f32.mrb[0].mxu0
  %v886 = vadd.f32 %v789, %v885
  %v887 = vpop.f32.mrb[0].mxu0
  %888 = vdwg.mxu0
  %v889 = vmax.f32 %v827, 0.0
  %v890 = vmax.f32 %v830, 0.0
  %v891 = vmax.f32 %v835, 0.0
  %v892 = vmax.f32 %v838, 0.0
  %v893 = vmax.f32 %v843, 0.0
  %v894 = vmax.f32 %v846, 0.0
  %v895 = vmax.f32 %v851, 0.0
  %v896 = vmax.f32 %v854, 0.0
  %v897 = vmax.f32 %v859, 0.0
  %v898 = vmax.f32 %v862, 0.0
  %v899 = vmax.f32 %v867, 0.0
  %v900 = vmax.f32 %v870, 0.0
  %v901 = vmax.f32 %v875, 0.0
  %v902 = vmax.f32 %v878, 0.0
  %v903 = vmax.f32 %v883, 0.0
  %v904 = vmax.f32 %v886, 0.0
  %v905 = vpack.c.bf16 %v890, %v889
  %v906 = vpack.c.bf16 %v892, %v891
  %v907 = vpack.c.bf16 %v894, %v893
  %v908 = vpack.c.bf16 %v896, %v895
  %v909 = vpack.c.bf16 %v898, %v897
  %v910 = vpack.c.bf16 %v900, %v899
  %v911 = vpack.c.bf16 %v902, %v901
  %v912 = vpack.c.bf16 %v904, %v903
  %v921 = vunpack.c.l.b16 %v905
  %v922 = vunpack.c.h.b16 %v905
  %v923 = vunpack.c.l.b16 %v906
  %v924 = vunpack.c.h.b16 %v906
  %v925 = vunpack.c.l.b16 %v907
  %v926 = vunpack.c.h.b16 %v907
  %v927 = vunpack.c.l.b16 %v908
  %v928 = vunpack.c.h.b16 %v908
  %v929 = vunpack.c.l.b16 %v909
  %v930 = vunpack.c.h.b16 %v909
  %v931 = vunpack.c.l.b16 %v910
  %v932 = vunpack.c.h.b16 %v910
  %v933 = vunpack.c.l.b16 %v911
  %v934 = vunpack.c.h.b16 %v911
  %v935 = vunpack.c.l.b16 %v912
  %v936 = vunpack.c.h.b16 %v912
  %v937 = vpack.c.b16 %v921, %v921
  %v938 = vpack.c.b16 %v922, %v922
  %v939 = vpack.c.b16 %v923, %v923
  %v940 = vpack.c.b16 %v924, %v924
  %v941 = vpack.c.b16 %v925, %v925
  %v942 = vpack.c.b16 %v926, %v926
  %v943 = vpack.c.b16 %v927, %v927
  %v944 = vpack.c.b16 %v928, %v928
  %v945 = vpack.c.b16 %v929, %v929
  %v946 = vpack.c.b16 %v930, %v930
  %v947 = vpack.c.b16 %v931, %v931
  %v948 = vpack.c.b16 %v932, %v932
  %v949 = vpack.c.b16 %v933, %v933
  %v950 = vpack.c.b16 %v934, %v934
  %v951 = vpack.c.b16 %v935, %v935
  %v952 = vpack.c.b16 %v936, %v936
  %969 = vst [vmem:[%s3] sm:$0xf] %v937
  %970 = vst [vmem:[%s3 + $0x4] sm:$0xf] %v938
  %971 = vst [vmem:[%s3 + $0x8] sm:$0xf] %v939
  %972 = vst [vmem:[%s3 + $0xc] sm:$0xf] %v940
  %973 = vst [vmem:[%s3 + $0x10] sm:$0xf] %v941
  %974 = vst [vmem:[%s3 + $0x14] sm:$0xf] %v942
  %975 = vst [vmem:[%s3 + $0x18] sm:$0xf] %v943
  %976 = vst [vmem:[%s3 + $0x1c] sm:$0xf] %v944
  %977 = vst [vmem:[%s3 + $0x20] sm:$0xf] %v945
  %978 = vst [vmem:[%s3 + $0x24] sm:$0xf] %v946
  %979 = vst [vmem:[%s3 + $0x28] sm:$0xf] %v947
  %980 = vst [vmem:[%s3 + $0x2c] sm:$0xf] %v948
  %981 = vst [vmem:[%s3 + $0x30] sm:$0xf] %v949
  %982 = vst [vmem:[%s3 + $0x34] sm:$0xf] %v950
  %983 = vst [vmem:[%s3 + $0x38] sm:$0xf] %v951
  %984 = vst [vmem:[%s3 + $0x3c] sm:$0xf] %v952
  // Predicated region
  $region14: #{_lambda_.7} parent=0 // pred_check
    _
  $region15: #{_lambda_.7} parent=0 // pred_check_branch
    %986 = sbr.rel (0) target = $region17
  $region16: #{_lambda_.7} parent=0 // pred_region
    _
  $region17: #{_lambda_.7} parent=0 // pred_fallthru
    _
  // Predicated region
  $region18: #{_lambda_.7} parent=0 // pred_check
    _
  $region19: #{_lambda_.7} parent=0 // pred_check_branch
    %988 = sbr.rel (0) target = $region21
  $region20: #{_lambda_.7} parent=0 // pred_region
    _
  $region21: #{_lambda_.7} parent=0 // pred_fallthru
    _

// kernel: _lambda_.8
$region0: #{_lambda_.8}
  #allocation0 [shape = 'u32[]', space=smem, size = 0x4, offset = 0x4, fixed_abs, tag = 'smem constant byte address 0x4 - core index']
  #allocation1 [shape = 'u32[144,128]{1,0:T(1,128)}', space=vmem, size = 0x12000, scoped, tag = 'internal scratch']
  #allocation2 [shape = 'f32[1]{0:T(128)S(6)}', space=smem, size = 0x200, scoped, tag = 'scoped memory for _lambda_.8']
  %s0 = inlined_call_operand.vmem [shape: bf16[128,64], index: 0, kind: input, shape index: {}]
  %s1 = inlined_call_operand.vmem [shape: bf16[64,384], index: 1, kind: input, shape index: {}]
  %s2 = inlined_call_operand.vmem [shape: f32[1,384], index: 2, kind: input, shape index: {}]
  %s3 = inlined_call_operand.<no memory space> [shape: f32[1], index: 3, kind: input, shape index: {}]
  %s4 = inlined_call_operand.vmem [shape: bf16[128,384], index: 4, kind: output, shape index: {}]
  %s5 = sld [smem:[#allocation0]]
  $region26: #{_lambda_.8} parent=0
    _
  %s7 = ssub.s32 1, %s5
  %s8 = scalar_select 0, %s7, %s5
  %9 = sst [smem:[#allocation2]] %s3
  // Predicated region
  $region2: #{_lambda_.8} parent=0 // pred_check
    _
  $region3: #{_lambda_.8} parent=0 // pred_check_branch
    %11 = sbr.rel (0) target = $region5
  $region4: #{_lambda_.8} parent=0 // pred_region
    _
  $region5: #{_lambda_.8} parent=0 // pred_fallthru
    _
  // Predicated region
  $region6: #{_lambda_.8} parent=0 // pred_check
    _
  $region7: #{_lambda_.8} parent=0 // pred_check_branch
    %13 = sbr.rel (0) target = $region9
  $region8: #{_lambda_.8} parent=0 // pred_region
    _
  $region9: #{_lambda_.8} parent=0 // pred_fallthru
    _
  // Predicated region
  $region10: #{_lambda_.8} parent=0 // pred_check
    _
  $region11: #{_lambda_.8} parent=0 // pred_check_branch
    %15 = sbr.rel (0) target = $region13
  $region12: #{_lambda_.8} parent=0 // pred_region
    _
  $region13: #{_lambda_.8} parent=0 // pred_fallthru
    _
  // Predicated region
  $region14: #{_lambda_.8} parent=0 // pred_check
    _
  $region15: #{_lambda_.8} parent=0 // pred_check_branch
    %17 = sbr.rel (0) target = $region17
  $region16: #{_lambda_.8} parent=0 // pred_region
    _
  $region17: #{_lambda_.8} parent=0 // pred_fallthru
    _
  %v19 = vld [vmem:[%s0] sm:$0xf]
  %v20 = vld [vmem:[%s0 + $0x4] sm:$0xf]
  %v21 = vld [vmem:[%s0 + $0x8] sm:$0xf]
  %v22 = vld [vmem:[%s0 + $0xc] sm:$0xf]
  %v23 = vld [vmem:[%s0 + $0x10] sm:$0xf]
  %v24 = vld [vmem:[%s0 + $0x14] sm:$0xf]
  %v25 = vld [vmem:[%s0 + $0x18] sm:$0xf]
  %v26 = vld [vmem:[%s0 + $0x1c] sm:$0xf]
  %v27 = vld [vmem:[%s0 + $0x20] sm:$0xf]
  %v28 = vld [vmem:[%s0 + $0x24] sm:$0xf]
  %v29 = vld [vmem:[%s0 + $0x28] sm:$0xf]
  %v30 = vld [vmem:[%s0 + $0x2c] sm:$0xf]
  %v31 = vld [vmem:[%s0 + $0x30] sm:$0xf]
  %v32 = vld [vmem:[%s0 + $0x34] sm:$0xf]
  %v33 = vld [vmem:[%s0 + $0x38] sm:$0xf]
  %v34 = vld [vmem:[%s0 + $0x3c] sm:$0xf]
  %v35 = vld [vmem:[%s1] sm:$0xff]
  %v36 = vld [vmem:[%s1 + $0x8] sm:$0xf]
  %v37 = vld [vmem:[%s1 + $0xc] sm:$0xff]
  %v38 = vld [vmem:[%s1 + $0x14] sm:$0xf]
  %v39 = vld [vmem:[%s1 + $0x18] sm:$0xff]
  %v40 = vld [vmem:[%s1 + $0x20] sm:$0xf]
  %v41 = vld [vmem:[%s1 + $0x24] sm:$0xff]
  %v42 = vld [vmem:[%s1 + $0x2c] sm:$0xf]
  %v43 = vld [vmem:[%s1 + $0x30] sm:$0xff]
  %v44 = vld [vmem:[%s1 + $0x38] sm:$0xf]
  %v45 = vld [vmem:[%s1 + $0x3c] sm:$0xff]
  %v46 = vld [vmem:[%s1 + $0x44] sm:$0xf]
  %v47 = vld [vmem:[%s1 + $0x48] sm:$0xff]
  %v48 = vld [vmem:[%s1 + $0x50] sm:$0xf]
  %v49 = vld [vmem:[%s1 + $0x54] sm:$0xff]
  %v50 = vld [vmem:[%s1 + $0x5c] sm:$0xf]
  %v51 = vld [vmem:[%s2] sm:$0x7]
  %v53 = vlaneseq
  %v54 = vshrl.u32 %v53, 7
  %v55 = vsub.s32 0, %v54
  %v56 = vrot.slane %v51, %v55
  %v57 = vlaneseq
  %v58 = vshrl.u32 %v57, 7
  %v59 = vsub.s32 1, %v58
  %v60 = vrot.slane %v51, %v59
  %v61 = vlaneseq
  %v62 = vshrl.u32 %v61, 7
  %v63 = vsub.s32 2, %v62
  %v64 = vrot.slane %v51, %v63
  %v84 = vunpack.c.l.b16 %v19
  %v85 = vunpack.c.l.b16 %v20
  %v86 = vunpack.c.l.b16 %v21
  %v87 = vunpack.c.l.b16 %v22
  %v88 = vunpack.c.l.b16 %v23
  %v89 = vunpack.c.l.b16 %v24
  %v90 = vunpack.c.l.b16 %v25
  %v91 = vunpack.c.l.b16 %v26
  %v92 = vunpack.c.l.b16 %v27
  %v93 = vunpack.c.l.b16 %v28
  %v94 = vunpack.c.l.b16 %v29
  %v95 = vunpack.c.l.b16 %v30
  %v96 = vunpack.c.l.b16 %v31
  %v97 = vunpack.c.l.b16 %v32
  %v98 = vunpack.c.l.b16 %v33
  %v99 = vunpack.c.l.b16 %v34
  %v100 = vpack.c.b16 %v85, %v84
  %v101 = vpack.c.b16 %v87, %v86
  %v102 = vpack.c.b16 %v89, %v88
  %v103 = vpack.c.b16 %v91, %v90
  %v104 = vpack.c.b16 %v93, %v92
  %v105 = vpack.c.b16 %v95, %v94
  %v106 = vpack.c.b16 %v97, %v96
  %v107 = vpack.c.b16 %v99, %v98
  %v124 = vunpack.c.l.b16 %v35
  %v125 = vunpack.c.h.b16 %v35
  %v126 = vunpack.c.l.b16 %v36
  %v127 = vunpack.c.l.b16 %v37
  %v128 = vunpack.c.h.b16 %v37
  %v129 = vunpack.c.l.b16 %v38
  %v130 = vunpack.c.l.b16 %v39
  %v131 = vunpack.c.h.b16 %v39
  %v132 = vunpack.c.l.b16 %v40
  %v133 = vunpack.c.l.b16 %v41
  %v134 = vunpack.c.h.b16 %v41
  %v135 = vunpack.c.l.b16 %v42
  %v136 = vunpack.c.l.b16 %v43
  %v137 = vunpack.c.h.b16 %v43
  %v138 = vunpack.c.l.b16 %v44
  %v139 = vunpack.c.l.b16 %v45
  %v140 = vunpack.c.h.b16 %v45
  %v141 = vunpack.c.l.b16 %v46
  %v142 = vunpack.c.l.b16 %v47
  %v143 = vunpack.c.h.b16 %v47
  %v144 = vunpack.c.l.b16 %v48
  %v145 = vunpack.c.l.b16 %v49
  %v146 = vunpack.c.h.b16 %v49
  %v147 = vunpack.c.l.b16 %v50
  %v148 = vpack.c.b16 %v127, %v124
  %v149 = vpack.c.b16 %v128, %v125
  %v150 = vpack.c.b16 %v129, %v126
  %v151 = vpack.c.b16 %v133, %v130
  %v152 = vpack.c.b16 %v134, %v131
  %v153 = vpack.c.b16 %v135, %v132
  %v154 = vpack.c.b16 %v139, %v136
  %v155 = vpack.c.b16 %v140, %v137
  %v156 = vpack.c.b16 %v141, %v138
  %v157 = vpack.c.b16 %v145, %v142
  %v158 = vpack.c.b16 %v146, %v143
  %v159 = vpack.c.b16 %v147, %v144
  %vm172 = vcmask 523264
  %v174 = vsel %vm172, %v100, 0
  %v177 = vsel %vm172, %v101, 0
  %v180 = vsel %vm172, %v102, 0
  %v183 = vsel %vm172, %v103, 0
  %v186 = vsel %vm172, %v104, 0
  %v189 = vsel %vm172, %v105, 0
  %v192 = vsel %vm172, %v106, 0
  %v195 = vsel %vm172, %v107, 0
  %197 = vmatprep.subr.bf16.mxu0 %v149
  %198 = vmatpush1.bf16.msra.mxu0 %v148
  %199 = vmatprep.subr.bf16.mxu0 %v152
  %200 = vmatpush1.bf16.msra.mxu0 %v151
  %201 = vmatprep.subr.bf16.mxu0 %v155
  %202 = vmatpush1.bf16.msra.mxu0 %v154
  %203 = vmatprep.subr.bf16.mxu0 %v158
  %204 = vmatpush1.bf16.msra.mxu0 %v157
  %205 = vmatprep.subr.bf16.mxu0 0
  %206 = vmatpush1.bf16.msra.mxu0 0
  %207 = vmatprep.subr.bf16.mxu0 0
  %208 = vmatpush1.bf16.msra.mxu0 0
  %209 = vmatprep.subr.bf16.mxu0 0
  %210 = vmatpush1.bf16.msra.mxu0 0
  %211 = vmatprep.subr.bf16.mxu0 0
  %212 = vmatpush1.bf16.msra.mxu0 0
  %213 = vmatprep.subr.bf16.mxu0 0
  %214 = vmatpush1.bf16.msra.mxu0 0
  %215 = vmatprep.subr.bf16.mxu0 0
  %216 = vmatpush1.bf16.msra.mxu0 0
  %217 = vmatprep.subr.bf16.mxu0 0
  %218 = vmatpush1.bf16.msra.mxu0 0
  %219 = vmatprep.subr.bf16.mxu0 0
  %220 = vmatpush1.bf16.msra.mxu0 0
  %221 = vmatprep.subr.bf16.mxu0 0
  %222 = vmatpush1.bf16.msra.mxu0 0
  %223 = vmatprep.subr.bf16.mxu0 0
  %224 = vmatpush1.bf16.msra.mxu0 0
  %225 = vmatprep.subr.bf16.mxu0 0
  %226 = vmatpush1.bf16.msra.mxu0 0
  %227 = vmatprep.subr.bf16.mxu0 0
  %228 = vmatpush1.bf16.msra.mxu0 0
  %229 = vmatprep.mubr.bf16.mxu0 0
  %230 = vmatmul.mubr.bf16.gmra.mrb[0].mxu0 %v174
  %v231 = vpop.f32.mrb[0].mxu0
  %v232 = vadd.f32 %v56, %v231
  %v233 = vpop.f32.mrb[0].mxu0
  %v234 = vadd.f32 %v60, %v233
  %v235 = vpop.f32.mrb[0].mxu0
  %v236 = vadd.f32 %v56, %v235
  %v237 = vpop.f32.mrb[0].mxu0
  %v238 = vadd.f32 %v60, %v237
  %239 = vmatprep.mubr.bf16.mxu0 0
  %240 = vmatmul.mubr.bf16.gmra.mrb[0].mxu0 %v177
  %v241 = vpop.f32.mrb[0].mxu0
  %v242 = vadd.f32 %v56, %v241
  %v243 = vpop.f32.mrb[0].mxu0
  %v244 = vadd.f32 %v60, %v243
  %v245 = vpop.f32.mrb[0].mxu0
  %v246 = vadd.f32 %v56, %v245
  %v247 = vpop.f32.mrb[0].mxu0
  %v248 = vadd.f32 %v60, %v247
  %249 = vmatprep.mubr.bf16.mxu0 0
  %250 = vmatmul.mubr.bf16.gmra.mrb[0].mxu0 %v180
  %v251 = vpop.f32.mrb[0].mxu0
  %v252 = vadd.f32 %v56, %v251
  %v253 = vpop.f32.mrb[0].mxu0
  %v254 = vadd.f32 %v60, %v253
  %v255 = vpop.f32.mrb[0].mxu0
  %v256 = vadd.f32 %v56, %v255
  %v257 = vpop.f32.mrb[0].mxu0
  %v258 = vadd.f32 %v60, %v257
  %259 = vmatprep.mubr.bf16.mxu0 0
  %260 = vmatmul.mubr.bf16.gmra.mrb[0].mxu0 %v183
  %v261 = vpop.f32.mrb[0].mxu0
  %v262 = vadd.f32 %v56, %v261
  %v263 = vpop.f32.mrb[0].mxu0
  %v264 = vadd.f32 %v60, %v263
  %v265 = vpop.f32.mrb[0].mxu0
  %v266 = vadd.f32 %v56, %v265
  %v267 = vpop.f32.mrb[0].mxu0
  %v268 = vadd.f32 %v60, %v267
  %269 = vmatprep.mubr.bf16.mxu0 0
  %270 = vmatmul.mubr.bf16.gmra.mrb[0].mxu0 %v186
  %v271 = vpop.f32.mrb[0].mxu0
  %v272 = vadd.f32 %v56, %v271
  %v273 = vpop.f32.mrb[0].mxu0
  %v274 = vadd.f32 %v60, %v273
  %v275 = vpop.f32.mrb[0].mxu0
  %v276 = vadd.f32 %v56, %v275
  %v277 = vpop.f32.mrb[0].mxu0
  %v278 = vadd.f32 %v60, %v277
  %279 = vmatprep.mubr.bf16.mxu0 0
  %280 = vmatmul.mubr.bf16.gmra.mrb[0].mxu0 %v189
  %v281 = vpop.f32.mrb[0].mxu0
  %v282 = vadd.f32 %v56, %v281
  %v283 = vpop.f32.mrb[0].mxu0
  %v284 = vadd.f32 %v60, %v283
  %v285 = vpop.f32.mrb[0].mxu0
  %v286 = vadd.f32 %v56, %v285
  %v287 = vpop.f32.mrb[0].mxu0
  %v288 = vadd.f32 %v60, %v287
  %289 = vmatprep.mubr.bf16.mxu0 0
  %290 = vmatmul.mubr.bf16.gmra.mrb[0].mxu0 %v192
  %v291 = vpop.f32.mrb[0].mxu0
  %v292 = vadd.f32 %v56, %v291
  %v293 = vpop.f32.mrb[0].mxu0
  %v294 = vadd.f32 %v60, %v293
  %v295 = vpop.f32.mrb[0].mxu0
  %v296 = vadd.f32 %v56, %v295
  %v297 = vpop.f32.mrb[0].mxu0
  %v298 = vadd.f32 %v60, %v297
  %299 = vmatprep.mubr.bf16.mxu0 0
  %300 = vmatmul.mubr.bf16.gmra.mrb[0].mxu0 %v195
  %v301 = vpop.f32.mrb[0].mxu0
  %v302 = vadd.f32 %v56, %v301
  %v303 = vpop.f32.mrb[0].mxu0
  %v304 = vadd.f32 %v60, %v303
  %v305 = vpop.f32.mrb[0].mxu0
  %v306 = vadd.f32 %v56, %v305
  %v307 = vpop.f32.mrb[0].mxu0
  %v308 = vadd.f32 %v60, %v307
  %309 = vdwg.mxu0
  %310 = vmatprep.subr.bf16.mxu0 0
  %311 = vmatpush1.bf16.msra.mxu0 %v150
  %312 = vmatprep.subr.bf16.mxu0 0
  %313 = vmatpush1.bf16.msra.mxu0 %v153
  %314 = vmatprep.subr.bf16.mxu0 0
  %315 = vmatpush1.bf16.msra.mxu0 %v156
  %316 = vmatprep.subr.bf16.mxu0 0
  %317 = vmatpush1.bf16.msra.mxu0 %v159
  %318 = vmatprep.subr.bf16.mxu0 0
  %319 = vmatpush1.bf16.msra.mxu0 0
  %320 = vmatprep.subr.bf16.mxu0 0
  %321 = vmatpush1.bf16.msra.mxu0 0
  %322 = vmatprep.subr.bf16.mxu0 0
  %323 = vmatpush1.bf16.msra.mxu0 0
  %324 = vmatprep.subr.bf16.mxu0 0
  %325 = vmatpush1.bf16.msra.mxu0 0
  %326 = vmatprep.subr.bf16.mxu0 0
  %327 = vmatpush1.bf16.msra.mxu0 0
  %328 = vmatprep.subr.bf16.mxu0 0
  %329 = vmatpush1.bf16.msra.mxu0 0
  %330 = vmatprep.subr.bf16.mxu0 0
  %331 = vmatpush1.bf16.msra.mxu0 0
  %332 = vmatprep.subr.bf16.mxu0 0
  %333 = vmatpush1.bf16.msra.mxu0 0
  %334 = vmatprep.subr.bf16.mxu0 0
  %335 = vmatpush1.bf16.msra.mxu0 0
  %336 = vmatprep.subr.bf16.mxu0 0
  %337 = vmatpush1.bf16.msra.mxu0 0
  %338 = vmatprep.subr.bf16.mxu0 0
  %339 = vmatpush1.bf16.msra.mxu0 0
  %340 = vmatprep.subr.bf16.mxu0 0
  %341 = vmatpush1.bf16.msra.mxu0 0
  %342 = vmatprep.mubr.bf16.mxu0 0
  %343 = vmatmul.mubr.bf16.gmra.mrb[0].mxu0 %v174
  %v344 = vpop.f32.mrb[0].mxu0
  %v345 = vadd.f32 %v64, %v344
  %v346 = vpop.f32.mrb[0].mxu0
  %v347 = vpop.f32.mrb[0].mxu0
  %v348 = vadd.f32 %v64, %v347
  %v349 = vpop.f32.mrb[0].mxu0
  %350 = vmatprep.mubr.bf16.mxu0 0
  %351 = vmatmul.mubr.bf16.gmra.mrb[0].mxu0 %v177
  %v352 = vpop.f32.mrb[0].mxu0
  %v353 = vadd.f32 %v64, %v352
  %v354 = vpop.f32.mrb[0].mxu0
  %v355 = vpop.f32.mrb[0].mxu0
  %v356 = vadd.f32 %v64, %v355
  %v357 = vpop.f32.mrb[0].mxu0
  %358 = vmatprep.mubr.bf16.mxu0 0
  %359 = vmatmul.mubr.bf16.gmra.mrb[0].mxu0 %v180
  %v360 = vpop.f32.mrb[0].mxu0
  %v361 = vadd.f32 %v64, %v360
  %v362 = vpop.f32.mrb[0].mxu0
  %v363 = vpop.f32.mrb[0].mxu0
  %v364 = vadd.f32 %v64, %v363
  %v365 = vpop.f32.mrb[0].mxu0
  %366 = vmatprep.mubr.bf16.mxu0 0
  %367 = vmatmul.mubr.bf16.gmra.mrb[0].mxu0 %v183
  %v368 = vpop.f32.mrb[0].mxu0
  %v369 = vadd.f32 %v64, %v368
  %v370 = vpop.f32.mrb[0].mxu0
  %v371 = vpop.f32.mrb[0].mxu0
  %v372 = vadd.f32 %v64, %v371
  %v373 = vpop.f32.mrb[0].mxu0
  %374 = vmatprep.mubr.bf16.mxu0 0
  %375 = vmatmul.mubr.bf16.gmra.mrb[0].mxu0 %v186
  %v376 = vpop.f32.mrb[0].mxu0
  %v377 = vadd.f32 %v64, %v376
  %v378 = vpop.f32.mrb[0].mxu0
  %v379 = vpop.f32.mrb[0].mxu0
  %v380 = vadd.f32 %v64, %v379
  %v381 = vpop.f32.mrb[0].mxu0
  %382 = vmatprep.mubr.bf16.mxu0 0
  %383 = vmatmul.mubr.bf16.gmra.mrb[0].mxu0 %v189
  %v384 = vpop.f32.mrb[0].mxu0
  %v385 = vadd.f32 %v64, %v384
  %v386 = vpop.f32.mrb[0].mxu0
  %v387 = vpop.f32.mrb[0].mxu0
  %v388 = vadd.f32 %v64, %v387
  %v389 = vpop.f32.mrb[0].mxu0
  %390 = vmatprep.mubr.bf16.mxu0 0
  %391 = vmatmul.mubr.bf16.gmra.mrb[0].mxu0 %v192
  %v392 = vpop.f32.mrb[0].mxu0
  %v393 = vadd.f32 %v64, %v392
  %v394 = vpop.f32.mrb[0].mxu0
  %v395 = vpop.f32.mrb[0].mxu0
  %v396 = vadd.f32 %v64, %v395
  %v397 = vpop.f32.mrb[0].mxu0
  %398 = vmatprep.mubr.bf16.mxu0 0
  %399 = vmatmul.mubr.bf16.gmra.mrb[0].mxu0 %v195
  %v400 = vpop.f32.mrb[0].mxu0
  %v401 = vadd.f32 %v64, %v400
  %v402 = vpop.f32.mrb[0].mxu0
  %v403 = vpop.f32.mrb[0].mxu0
  %v404 = vadd.f32 %v64, %v403
  %v405 = vpop.f32.mrb[0].mxu0
  %406 = vdwg.mxu0
  %vm407 = vcmp.ge.f32.partialorder %v232, 0.0
  %vm408 = vcmp.ge.f32.partialorder %v234, 0.0
  %vm409 = vcmp.ge.f32.partialorder %v345, 0.0
  %vm410 = vcmp.ge.f32.partialorder %v236, 0.0
  %vm411 = vcmp.ge.f32.partialorder %v238, 0.0
  %vm412 = vcmp.ge.f32.partialorder %v348, 0.0
  %vm413 = vcmp.ge.f32.partialorder %v242, 0.0
  %vm414 = vcmp.ge.f32.partialorder %v244, 0.0
  %vm415 = vcmp.ge.f32.partialorder %v353, 0.0
  %vm416 = vcmp.ge.f32.partialorder %v246, 0.0
  %vm417 = vcmp.ge.f32.partialorder %v248, 0.0
  %vm418 = vcmp.ge.f32.partialorder %v356, 0.0
  %vm419 = vcmp.ge.f32.partialorder %v252, 0.0
  %vm420 = vcmp.ge.f32.partialorder %v254, 0.0
  %vm421 = vcmp.ge.f32.partialorder %v361, 0.0
  %vm422 = vcmp.ge.f32.partialorder %v256, 0.0
  %vm423 = vcmp.ge.f32.partialorder %v258, 0.0
  %vm424 = vcmp.ge.f32.partialorder %v364, 0.0
  %vm425 = vcmp.ge.f32.partialorder %v262, 0.0
  %vm426 = vcmp.ge.f32.partialorder %v264, 0.0
  %vm427 = vcmp.ge.f32.partialorder %v369, 0.0
  %vm428 = vcmp.ge.f32.partialorder %v266, 0.0
  %vm429 = vcmp.ge.f32.partialorder %v268, 0.0
  %vm430 = vcmp.ge.f32.partialorder %v372, 0.0
  %vm431 = vcmp.ge.f32.partialorder %v272, 0.0
  %vm432 = vcmp.ge.f32.partialorder %v274, 0.0
  %vm433 = vcmp.ge.f32.partialorder %v377, 0.0
  %vm434 = vcmp.ge.f32.partialorder %v276, 0.0
  %vm435 = vcmp.ge.f32.partialorder %v278, 0.0
  %vm436 = vcmp.ge.f32.partialorder %v380, 0.0
  %vm437 = vcmp.ge.f32.partialorder %v282, 0.0
  %vm438 = vcmp.ge.f32.partialorder %v284, 0.0
  %vm439 = vcmp.ge.f32.partialorder %v385, 0.0
  %vm440 = vcmp.ge.f32.partialorder %v286, 0.0
  %vm441 = vcmp.ge.f32.partialorder %v288, 0.0
  %vm442 = vcmp.ge.f32.partialorder %v388, 0.0
  %vm443 = vcmp.ge.f32.partialorder %v292, 0.0
  %vm444 = vcmp.ge.f32.partialorder %v294, 0.0
  %vm445 = vcmp.ge.f32.partialorder %v393, 0.0
  %vm446 = vcmp.ge.f32.partialorder %v296, 0.0
  %vm447 = vcmp.ge.f32.partialorder %v298, 0.0
  %vm448 = vcmp.ge.f32.partialorder %v396, 0.0
  %vm449 = vcmp.ge.f32.partialorder %v302, 0.0
  %vm450 = vcmp.ge.f32.partialorder %v304, 0.0
  %vm451 = vcmp.ge.f32.partialorder %v401, 0.0
  %vm452 = vcmp.ge.f32.partialorder %v306, 0.0
  %vm453 = vcmp.ge.f32.partialorder %v308, 0.0
  %vm454 = vcmp.ge.f32.partialorder %v404, 0.0
  %s455 = sld [smem:[#allocation2]]
  %v456 = vstv %s455
  %v457 = vmul.f32 %v456, %v232
  %v458 = vmul.f32 %v456, %v234
  %v459 = vmul.f32 %v456, %v345
  %v460 = vmul.f32 %v456, %v236
  %v461 = vmul.f32 %v456, %v238
  %v462 = vmul.f32 %v456, %v348
  %v463 = vmul.f32 %v456, %v242
  %v464 = vmul.f32 %v456, %v244
  %v465 = vmul.f32 %v456, %v353
  %v466 = vmul.f32 %v456, %v246
  %v467 = vmul.f32 %v456, %v248
  %v468 = vmul.f32 %v456, %v356
  %v469 = vmul.f32 %v456, %v252
  %v470 = vmul.f32 %v456, %v254
  %v471 = vmul.f32 %v456, %v361
  %v472 = vmul.f32 %v456, %v256
  %v473 = vmul.f32 %v456, %v258
  %v474 = vmul.f32 %v456, %v364
  %v475 = vmul.f32 %v456, %v262
  %v476 = vmul.f32 %v456, %v264
  %v477 = vmul.f32 %v456, %v369
  %v478 = vmul.f32 %v456, %v266
  %v479 = vmul.f32 %v456, %v268
  %v480 = vmul.f32 %v456, %v372
  %v481 = vmul.f32 %v456, %v272
  %v482 = vmul.f32 %v456, %v274
  %v483 = vmul.f32 %v456, %v377
  %v484 = vmul.f32 %v456, %v276
  %v485 = vmul.f32 %v456, %v278
  %v486 = vmul.f32 %v456, %v380
  %v487 = vmul.f32 %v456, %v282
  %v488 = vmul.f32 %v456, %v284
  %v489 = vmul.f32 %v456, %v385
  %v490 = vmul.f32 %v456, %v286
  %v491 = vmul.f32 %v456, %v288
  %v492 = vmul.f32 %v456, %v388
  %v493 = vmul.f32 %v456, %v292
  %v494 = vmul.f32 %v456, %v294
  %v495 = vmul.f32 %v456, %v393
  %v496 = vmul.f32 %v456, %v296
  %v497 = vmul.f32 %v456, %v298
  %v498 = vmul.f32 %v456, %v396
  %v499 = vmul.f32 %v456, %v302
  %v500 = vmul.f32 %v456, %v304
  %v501 = vmul.f32 %v456, %v401
  %v502 = vmul.f32 %v456, %v306
  %v503 = vmul.f32 %v456, %v308
  %v504 = vmul.f32 %v456, %v404
  %v505 = vsel %vm407, %v232, %v457
  %v506 = vsel %vm408, %v234, %v458
  %v507 = vsel %vm409, %v345, %v459
  %v508 = vsel %vm410, %v236, %v460
  %v509 = vsel %vm411, %v238, %v461
  %v510 = vsel %vm412, %v348, %v462
  %v511 = vsel %vm413, %v242, %v463
  %v512 = vsel %vm414, %v244, %v464
  %v513 = vsel %vm415, %v353, %v465
  %v514 = vsel %vm416, %v246, %v466
  %v515 = vsel %vm417, %v248, %v467
  %v516 = vsel %vm418, %v356, %v468
  %v517 = vsel %vm419, %v252, %v469
  %v518 = vsel %vm420, %v254, %v470
  %v519 = vsel %vm421, %v361, %v471
  %v520 = vsel %vm422, %v256, %v472
  %v521 = vsel %vm423, %v258, %v473
  %v522 = vsel %vm424, %v364, %v474
  %v523 = vsel %vm425, %v262, %v475
  %v524 = vsel %vm426, %v264, %v476
  %v525 = vsel %vm427, %v369, %v477
  %v526 = vsel %vm428, %v266, %v478
  %v527 = vsel %vm429, %v268, %v479
  %v528 = vsel %vm430, %v372, %v480
  %v529 = vsel %vm431, %v272, %v481
  %v530 = vsel %vm432, %v274, %v482
  %v531 = vsel %vm433, %v377, %v483
  %v532 = vsel %vm434, %v276, %v484
  %v533 = vsel %vm435, %v278, %v485
  %v534 = vsel %vm436, %v380, %v486
  %v535 = vsel %vm437, %v282, %v487
  %v536 = vsel %vm438, %v284, %v488
  %v537 = vsel %vm439, %v385, %v489
  %v538 = vsel %vm440, %v286, %v490
  %v539 = vsel %vm441, %v288, %v491
  %v540 = vsel %vm442, %v388, %v492
  %v541 = vsel %vm443, %v292, %v493
  %v542 = vsel %vm444, %v294, %v494
  %v543 = vsel %vm445, %v393, %v495
  %v544 = vsel %vm446, %v296, %v496
  %v545 = vsel %vm447, %v298, %v497
  %v546 = vsel %vm448, %v396, %v498
  %v547 = vsel %vm449, %v302, %v499
  %v548 = vsel %vm450, %v304, %v500
  %v549 = vsel %vm451, %v401, %v501
  %v550 = vsel %vm452, %v306, %v502
  %v551 = vsel %vm453, %v308, %v503
  %v552 = vsel %vm454, %v404, %v504
  %v553 = vpack.c.bf16 %v508, %v505
  %v554 = vpack.c.bf16 %v509, %v506
  %v555 = vpack.c.bf16 %v510, %v507
  %v556 = vpack.c.bf16 %v514, %v511
  %v557 = vpack.c.bf16 %v515, %v512
  %v558 = vpack.c.bf16 %v516, %v513
  %v559 = vpack.c.bf16 %v520, %v517
  %v560 = vpack.c.bf16 %v521, %v518
  %v561 = vpack.c.bf16 %v522, %v519
  %v562 = vpack.c.bf16 %v526, %v523
  %v563 = vpack.c.bf16 %v527, %v524
  %v564 = vpack.c.bf16 %v528, %v525
  %v565 = vpack.c.bf16 %v532, %v529
  %v566 = vpack.c.bf16 %v533, %v530
  %v567 = vpack.c.bf16 %v534, %v531
  %v568 = vpack.c.bf16 %v538, %v535
  %v569 = vpack.c.bf16 %v539, %v536
  %v570 = vpack.c.bf16 %v540, %v537
  %v571 = vpack.c.bf16 %v544, %v541
  %v572 = vpack.c.bf16 %v545, %v542
  %v573 = vpack.c.bf16 %v546, %v543
  %v574 = vpack.c.bf16 %v550, %v547
  %v575 = vpack.c.bf16 %v551, %v548
  %v576 = vpack.c.bf16 %v552, %v549
  %v601 = vunpack.c.l.b16 %v553
  %v602 = vunpack.c.l.b16 %v554
  %v603 = vunpack.c.l.b16 %v555
  %v604 = vunpack.c.h.b16 %v553
  %v605 = vunpack.c.h.b16 %v554
  %v606 = vunpack.c.h.b16 %v555
  %v607 = vunpack.c.l.b16 %v556
  %v608 = vunpack.c.l.b16 %v557
  %v609 = vunpack.c.l.b16 %v558
  %v610 = vunpack.c.h.b16 %v556
  %v611 = vunpack.c.h.b16 %v557
  %v612 = vunpack.c.h.b16 %v558
  %v613 = vunpack.c.l.b16 %v559
  %v614 = vunpack.c.l.b16 %v560
  %v615 = vunpack.c.l.b16 %v561
  %v616 = vunpack.c.h.b16 %v559
  %v617 = vunpack.c.h.b16 %v560
  %v618 = vunpack.c.h.b16 %v561
  %v619 = vunpack.c.l.b16 %v562
  %v620 = vunpack.c.l.b16 %v563
  %v621 = vunpack.c.l.b16 %v564
  %v622 = vunpack.c.h.b16 %v562
  %v623 = vunpack.c.h.b16 %v563
  %v624 = vunpack.c.h.b16 %v564
  %v625 = vunpack.c.l.b16 %v565
  %v626 = vunpack.c.l.b16 %v566
  %v627 = vunpack.c.l.b16 %v567
  %v628 = vunpack.c.h.b16 %v565
  %v629 = vunpack.c.h.b16 %v566
  %v630 = vunpack.c.h.b16 %v567
  %v631 = vunpack.c.l.b16 %v568
  %v632 = vunpack.c.l.b16 %v569
  %v633 = vunpack.c.l.b16 %v570
  %v634 = vunpack.c.h.b16 %v568
  %v635 = vunpack.c.h.b16 %v569
  %v636 = vunpack.c.h.b16 %v570
  %v637 = vunpack.c.l.b16 %v571
  %v638 = vunpack.c.l.b16 %v572
  %v639 = vunpack.c.l.b16 %v573
  %v640 = vunpack.c.h.b16 %v571
  %v641 = vunpack.c.h.b16 %v572
  %v642 = vunpack.c.h.b16 %v573
  %v643 = vunpack.c.l.b16 %v574
  %v644 = vunpack.c.l.b16 %v575
  %v645 = vunpack.c.l.b16 %v576
  %v646 = vunpack.c.h.b16 %v574
  %v647 = vunpack.c.h.b16 %v575
  %v648 = vunpack.c.h.b16 %v576
  %v649 = vpack.c.b16 %v602, %v601
  %v650 = vpack.c.b16 %v603, %v603
  %v651 = vpack.c.b16 %v605, %v604
  %v652 = vpack.c.b16 %v606, %v606
  %v653 = vpack.c.b16 %v608, %v607
  %v654 = vpack.c.b16 %v609, %v609
  %v655 = vpack.c.b16 %v611, %v610
  %v656 = vpack.c.b16 %v612, %v612
  %v657 = vpack.c.b16 %v614, %v613
  %v658 = vpack.c.b16 %v615, %v615
  %v659 = vpack.c.b16 %v617, %v616
  %v660 = vpack.c.b16 %v618, %v618
  %v661 = vpack.c.b16 %v620, %v619
  %v662 = vpack.c.b16 %v621, %v621
  %v663 = vpack.c.b16 %v623, %v622
  %v664 = vpack.c.b16 %v624, %v624
  %v665 = vpack.c.b16 %v626, %v625
  %v666 = vpack.c.b16 %v627, %v627
  %v667 = vpack.c.b16 %v629, %v628
  %v668 = vpack.c.b16 %v630, %v630
  %v669 = vpack.c.b16 %v632, %v631
  %v670 = vpack.c.b16 %v633, %v633
  %v671 = vpack.c.b16 %v635, %v634
  %v672 = vpack.c.b16 %v636, %v636
  %v673 = vpack.c.b16 %v638, %v637
  %v674 = vpack.c.b16 %v639, %v639
  %v675 = vpack.c.b16 %v641, %v640
  %v676 = vpack.c.b16 %v642, %v642
  %v677 = vpack.c.b16 %v644, %v643
  %v678 = vpack.c.b16 %v645, %v645
  %v679 = vpack.c.b16 %v647, %v646
  %v680 = vpack.c.b16 %v648, %v648
  %713 = vst [vmem:[%s4] sm:$0xff] %v649
  %714 = vst [vmem:[%s4 + $0x8] sm:$0xf] %v650
  %715 = vst [vmem:[%s4 + $0xc] sm:$0xff] %v651
  %716 = vst [vmem:[%s4 + $0x14] sm:$0xf] %v652
  %717 = vst [vmem:[%s4 + $0x18] sm:$0xff] %v653
  %718 = vst [vmem:[%s4 + $0x20] sm:$0xf] %v654
  %719 = vst [vmem:[%s4 + $0x24] sm:$0xff] %v655
  %720 = vst [vmem:[%s4 + $0x2c] sm:$0xf] %v656
  %721 = vst [vmem:[%s4 + $0x30] sm:$0xff] %v657
  %722 = vst [vmem:[%s4 + $0x38] sm:$0xf] %v658
  %723 = vst [vmem:[%s4 + $0x3c] sm:$0xff] %v659
  %724 = vst [vmem:[%s4 + $0x44] sm:$0xf] %v660
  %725 = vst [vmem:[%s4 + $0x48] sm:$0xff] %v661
  %726 = vst [vmem:[%s4 + $0x50] sm:$0xf] %v662
  %727 = vst [vmem:[%s4 + $0x54] sm:$0xff] %v663
  %728 = vst [vmem:[%s4 + $0x5c] sm:$0xf] %v664
  %729 = vst [vmem:[%s4 + $0x60] sm:$0xff] %v665
  %730 = vst [vmem:[%s4 + $0x68] sm:$0xf] %v666
  %731 = vst [vmem:[%s4 + $0x6c] sm:$0xff] %v667
  %732 = vst [vmem:[%s4 + $0x74] sm:$0xf] %v668
  %733 = vst [vmem:[%s4 + $0x78] sm:$0xff] %v669
  %734 = vst [vmem:[%s4 + $0x80] sm:$0xf] %v670
  %735 = vst [vmem:[%s4 + $0x84] sm:$0xff] %v671
  %736 = vst [vmem:[%s4 + $0x8c] sm:$0xf] %v672
  %737 = vst [vmem:[%s4 + $0x90] sm:$0xff] %v673
  %738 = vst [vmem:[%s4 + $0x98] sm:$0xf] %v674
  %739 = vst [vmem:[%s4 + $0x9c] sm:$0xff] %v675
  %740 = vst [vmem:[%s4 + $0xa4] sm:$0xf] %v676
  %741 = vst [vmem:[%s4 + $0xa8] sm:$0xff] %v677
  %742 = vst [vmem:[%s4 + $0xb0] sm:$0xf] %v678
  %743 = vst [vmem:[%s4 + $0xb4] sm:$0xff] %v679
  %744 = vst [vmem:[%s4 + $0xbc] sm:$0xf] %v680
  // Predicated region
  $region18: #{_lambda_.8} parent=0 // pred_check
    _
  $region19: #{_lambda_.8} parent=0 // pred_check_branch
    %746 = sbr.rel (0) target = $region21
  $region20: #{_lambda_.8} parent=0 // pred_region
    _
  $region21: #{_lambda_.8} parent=0 // pred_fallthru
    _
  // Predicated region
  $region22: #{_lambda_.8} parent=0 // pred_check
    _
  $region23: #{_lambda_.8} parent=0 // pred_check_branch
    %748 = sbr.rel (0) target = $region25
  $region24: #{_lambda_.8} parent=0 // pred_region
    _
  $region25: #{_lambda_.8} parent=0 // pred_fallthru
    _

// kernel: _lambda_.9
$region0: #{_lambda_.9}
  #allocation0 [shape = 'u32[]', space=smem, size = 0x4, offset = 0x4, fixed_abs, tag = 'smem constant byte address 0x4 - core index']
  #allocation1 [shape = 'u32[144,128]{1,0:T(1,128)}', space=vmem, size = 0x12000, scoped, tag = 'internal scratch']
  #allocation2 [shape = 'f32[1]{0:T(128)S(6)}', space=smem, size = 0x200, scoped, tag = 'scoped memory for _lambda_.9']
  %s0 = inlined_call_operand.vmem [shape: bf16[2048,288], index: 0, kind: input, shape index: {}]
  %s1 = inlined_call_operand.vmem [shape: bf16[288,128], index: 1, kind: input, shape index: {}]
  %s2 = inlined_call_operand.vmem [shape: f32[1,128], index: 2, kind: input, shape index: {}]
  %s3 = inlined_call_operand.<no memory space> [shape: f32[1], index: 3, kind: input, shape index: {}]
  %s4 = inlined_call_operand.vmem [shape: bf16[2048,128], index: 4, kind: output, shape index: {}]
  %s5 = sld [smem:[#allocation0]]
  $region49: #{_lambda_.9} parent=0
    _
  %s7 = ssub.s32 1, %s5
  %s8 = scalar_select 0, %s7, %s5
  %9 = sst [smem:[#allocation2]] %s3
  loop: start=0, step=1, limit=6
  $region2: #{_lambda_.9} parent=0 // loop_pre_header
    _
  $region3: #{_lambda_.9} parent=0 // loop_header
    %s11 = sphi 0, %s15
    %p12 = scmp.ge.s32.totalorder %s11, 6
    %s21 = sphi 0, %s23
    %s24 = sphi 0, %s21
    %s25 = sphi 0, %s24
    %s41 = sphi 0, %s25
    %s45 = sphi 0, %s45
    %s47 = sphi 0, %s45
    %s48 = sphi 0, %s47
    %s62 = sphi 0, %s48
    %s66 = sphi 0, %s66
    %s68 = sphi 0, %s66
    %s69 = sphi 0, %s68
    %s83 = sphi 0, %s69
    %s87 = sphi 0, %s87
    %s89 = sphi 0, %s87
    %s90 = sphi 0, %s89
    %s104 = sphi 0, %s90
    %s110 = sphi 0, %s112
    %s113 = sphi 0, %s110
    %s114 = sphi 0, %s113
    %s130 = sphi 0, %s114
  $region4: #{_lambda_.9} parent=0 // loop_header_branch
    %14 = sbr.rel (%p12) target = $region8
  $region5: #{_lambda_.9} parent=0 // loop_body
    %s16 = ssub.s32 %s11, 1
    %s17 = ssub.s32 %s11, 2
    %s18 = sadd.s32 %s11, 1
    %s19 = ssub.s32 %s11, %s18
    %p20 = scmp.eq.s32.totalorder %s19, 0
    %s22 = sadd.s32 %s21, 1
    %s23 = scalar_select %p20, %s21, %s22
    %p26 = pneg %p20
    %p27 = scmp.eq.s32.totalorder %s11, 3
    %p28 = por %p26, %p27
    %p29 = scmp.ne.s32.totalorder %s21, %s24
    %p30 = scmp.eq.s32.totalorder %s11, 0
    %p31 = por %p29, %p30
    %p32 = scmp.ne.s32.totalorder %s21, %s24
    %p33 = scmp.eq.s32.totalorder %s16, 3
    %p34 = por %p32, %p33
    %p35 = scmp.ne.s32.totalorder %s24, %s25
    %p36 = scmp.eq.s32.totalorder %s16, 0
    %p37 = por %p35, %p36
    %p38 = scmp.ne.s32.totalorder %s24, %s25
    %p39 = scmp.eq.s32.totalorder %s17, 3
    %p40 = por %p38, %p39
    %p42 = scmp.ne.s32.totalorder %s25, %s41
    %p43 = scmp.eq.s32.totalorder %s17, 0
    %p44 = por %p42, %p43
    %s46 = sadd.s32 %s45, 1
    %p49 = scmp.eq.s32.totalorder %s11, 3
    %p50 = scmp.ne.s32.totalorder %s45, %s47
    %p51 = scmp.eq.s32.totalorder %s11, 0
    %p52 = por %p50, %p51
    %p53 = scmp.ne.s32.totalorder %s45, %s47
    %p54 = scmp.eq.s32.totalorder %s16, 3
    %p55 = por %p53, %p54
    %p56 = scmp.ne.s32.totalorder %s47, %s48
    %p57 = scmp.eq.s32.totalorder %s16, 0
    %p58 = por %p56, %p57
    %p59 = scmp.ne.s32.totalorder %s47, %s48
    %p60 = scmp.eq.s32.totalorder %s17, 3
    %p61 = por %p59, %p60
    %p63 = scmp.ne.s32.totalorder %s48, %s62
    %p64 = scmp.eq.s32.totalorder %s17, 0
    %p65 = por %p63, %p64
    %s67 = sadd.s32 %s66, 1
    %p70 = scmp.eq.s32.totalorder %s11, 3
    %p71 = scmp.ne.s32.totalorder %s66, %s68
    %p72 = scmp.eq.s32.totalorder %s11, 0
    %p73 = por %p71, %p72
    %p74 = scmp.ne.s32.totalorder %s66, %s68
    %p75 = scmp.eq.s32.totalorder %s16, 3
    %p76 = por %p74, %p75
    %p77 = scmp.ne.s32.totalorder %s68, %s69
    %p78 = scmp.eq.s32.totalorder %s16, 0
    %p79 = por %p77, %p78
    %p80 = scmp.ne.s32.totalorder %s68, %s69
    %p81 = scmp.eq.s32.totalorder %s17, 3
    %p82 = por %p80, %p81
    %p84 = scmp.ne.s32.totalorder %s69, %s83
    %p85 = scmp.eq.s32.totalorder %s17, 0
    %p86 = por %p84, %p85
    %s88 = sadd.s32 %s87, 1
    %p91 = scmp.eq.s32.totalorder %s11, 3
    %p92 = scmp.ne.s32.totalorder %s87, %s89
    %p93 = scmp.eq.s32.totalorder %s11, 0
    %p94 = por %p92, %p93
    %p95 = scmp.ne.s32.totalorder %s87, %s89
    %p96 = scmp.eq.s32.totalorder %s16, 3
    %p97 = por %p95, %p96
    %p98 = scmp.ne.s32.totalorder %s89, %s90
    %p99 = scmp.eq.s32.totalorder %s16, 0
    %p100 = por %p98, %p99
    %p101 = scmp.ne.s32.totalorder %s89, %s90
    %p102 = scmp.eq.s32.totalorder %s17, 3
    %p103 = por %p101, %p102
    %p105 = scmp.ne.s32.totalorder %s90, %s104
    %p106 = scmp.eq.s32.totalorder %s17, 0
    %p107 = por %p105, %p106
    %s108 = ssub.s32 %s11, %s18
    %p109 = scmp.eq.s32.totalorder %s108, 0
    %s111 = sadd.s32 %s110, 1
    %s112 = scalar_select %p109, %s110, %s111
    %p115 = pneg %p109
    %p116 = scmp.eq.s32.totalorder %s11, 3
    %p117 = por %p115, %p116
    %p118 = scmp.ne.s32.totalorder %s110, %s113
    %p119 = scmp.eq.s32.totalorder %s11, 0
    %p120 = por %p118, %p119
    %p121 = scmp.ne.s32.totalorder %s110, %s113
    %p122 = scmp.eq.s32.totalorder %s16, 3
    %p123 = por %p121, %p122
    %p124 = scmp.ne.s32.totalorder %s113, %s114
    %p125 = scmp.eq.s32.totalorder %s16, 0
    %p126 = por %p124, %p125
    %p127 = scmp.ne.s32.totalorder %s113, %s114
    %p128 = scmp.eq.s32.totalorder %s17, 3
    %p129 = por %p127, %p128
    %p131 = scmp.ne.s32.totalorder %s114, %s130
    %p132 = scmp.eq.s32.totalorder %s17, 0
    %p133 = por %p131, %p132
    %p134 = scmp.le.s32.totalorder 1, %s11
    %p135 = scmp.lt.s32.totalorder %s11, 5
    %p136 = pnand %p134, %p135
    %p137 = pneg %p136
    // Predicated region
    $region9: #{_lambda_.9} parent=5 // pred_check
      _
    $region10: #{_lambda_.9} parent=5 // pred_check_branch
      %139 = sbr.rel (%p136) target = $region12
    $region11: #{_lambda_.9} parent=5 // pred_region
      %s140 = ssub.s32 %s11, 1
      // Predicated region
      $region13: #{_lambda_.9} parent=11 // pred_check
        %p141 = pneg %p58
      $region14: #{_lambda_.9} parent=11 // pred_check_branch
        %143 = sbr.rel (%p141) target = $region16
      $region15: #{_lambda_.9} parent=11 // pred_region
        _
      $region16: #{_lambda_.9} parent=11 // pred_fallthru
        _
      // Predicated region
      $region17: #{_lambda_.9} parent=11 // pred_check
        %p144 = pneg %p79
      $region18: #{_lambda_.9} parent=11 // pred_check_branch
        %146 = sbr.rel (%p144) target = $region20
      $region19: #{_lambda_.9} parent=11 // pred_region
        _
      $region20: #{_lambda_.9} parent=11 // pred_fallthru
        _
      // Predicated region
      $region21: #{_lambda_.9} parent=11 // pred_check
        %p147 = pneg %p100
      $region22: #{_lambda_.9} parent=11 // pred_check_branch
        %149 = sbr.rel (%p147) target = $region24
      $region23: #{_lambda_.9} parent=11 // pred_region
        _
      $region24: #{_lambda_.9} parent=11 // pred_fallthru
        _
    $region12: #{_lambda_.9} parent=5 // pred_fallthru
      _
    %p150 = scmp.lt.s32.totalorder %s11, 4
    // Predicated region
    $region25: #{_lambda_.9} parent=5 // pred_check
      %p151 = pneg %p150
    $region26: #{_lambda_.9} parent=5 // pred_check_branch
      %153 = sbr.rel (%p151) target = $region28
    $region27: #{_lambda_.9} parent=5 // pred_region
      // Predicated region
      $region29: #{_lambda_.9} parent=27 // pred_check
        %p154 = pneg %p31
      $region30: #{_lambda_.9} parent=27 // pred_check_branch
        %156 = sbr.rel (%p154) target = $region32
      $region31: #{_lambda_.9} parent=27 // pred_region
        %s157 = smul.u32 64, %s11
        %p158 = scmp.lt.s32.totalorder %s157, 255
        %s159 = scalar_select %p158, %s157, 255
        %s160 = smul.addr %s159, 3
        %s161 = smul.addr %s160, 4
        %s162 = scalar_lea.vmem %s0, %s161
        %s163 = smul.u32 64, %s11
      $region32: #{_lambda_.9} parent=27 // pred_fallthru
        _
    $region28: #{_lambda_.9} parent=5 // pred_fallthru
      _
    %p164 = scmp.le.s32.totalorder 1, %s11
    %p165 = scmp.lt.s32.totalorder %s11, 5
    %p166 = pnand %p164, %p165
    %p167 = pneg %p166
    // Predicated region
    $region33: #{_lambda_.9} parent=5 // pred_check
      _
    $region34: #{_lambda_.9} parent=5 // pred_check_branch
      %169 = sbr.rel (%p166) target = $region36
    $region35: #{_lambda_.9} parent=5 // pred_region
      %s170 = ssub.s32 %s11, 1
      %s171 = smul.u32 64, %s16
      %p172 = scmp.lt.s32.totalorder %s171, 255
      %s173 = scalar_select %p172, %s171, 255
      %s174 = smul.addr %s173, 3
      %s175 = smul.addr %s174, 4
      %s176 = scalar_lea.vmem %s0, %s175
      %p177 = pneg %p37
      %p178 = pneg %p34
      %p179 = pneg %p58
      %p180 = pneg %p55
      %p181 = pneg %p79
      %p182 = pneg %p76
      %p183 = pneg %p100
      %p184 = pneg %p97
      %p185 = pneg %p126
      %p186 = pneg %p123
      %s187 = smul.u32 64, %s16
      %p188 = scmp.lt.s32.totalorder %s187, 255
      %s189 = scalar_select %p188, %s187, 255
      %s190 = smul.addr %s189, 4
      %s191 = scalar_lea.vmem %s4, %s190
      %s192 = smul.u32 64, %s16
      %p193 = scmp.lt.s32.totalorder %s192, 255
      %s194 = scalar_select %p193, %s192, 255
      %s195 = smul.addr %s194, 3
      %s196 = smul.addr %s195, 4
      %s197 = scalar_lea.vmem %s0, %s196
      %s198 = smul.u32 64, %s16
      %s199 = smul.u32 64, %s16
      %p200 = scmp.lt.s32.totalorder %s199, 255
      %s201 = scalar_select %p200, %s199, 255
      %s202 = smul.addr %s201, 4
      %s203 = scalar_lea.vmem %s4, %s202
      %s204 = smul.u32 64, %s16
      %v206 = vld [vmem:[%s197] sm:$0xff]
      %v207 = vld [vmem:[%s197 + $0x8] sm:$0xf]
      %v208 = vld [vmem:[%s197 + $0xc] sm:$0xff]
      %v209 = vld [vmem:[%s197 + $0x14] sm:$0xf]
      %v210 = vld [vmem:[%s197 + $0x18] sm:$0xff]
      %v211 = vld [vmem:[%s197 + $0x20] sm:$0xf]
      %v212 = vld [vmem:[%s197 + $0x24] sm:$0xff]
      %v213 = vld [vmem:[%s197 + $0x2c] sm:$0xf]
      %v214 = vld [vmem:[%s197 + $0x30] sm:$0xff]
      %v215 = vld [vmem:[%s197 + $0x38] sm:$0xf]
      %v216 = vld [vmem:[%s197 + $0x3c] sm:$0xff]
      %v217 = vld [vmem:[%s197 + $0x44] sm:$0xf]
      %v218 = vld [vmem:[%s197 + $0x48] sm:$0xff]
      %v219 = vld [vmem:[%s197 + $0x50] sm:$0xf]
      %v220 = vld [vmem:[%s197 + $0x54] sm:$0xff]
      %v221 = vld [vmem:[%s197 + $0x5c] sm:$0xf]
      %v222 = vld [vmem:[%s197 + $0x60] sm:$0xff]
      %v223 = vld [vmem:[%s197 + $0x68] sm:$0xf]
      %v224 = vld [vmem:[%s197 + $0x6c] sm:$0xff]
      %v225 = vld [vmem:[%s197 + $0x74] sm:$0xf]
      %v226 = vld [vmem:[%s197 + $0x78] sm:$0xff]
      %v227 = vld [vmem:[%s197 + $0x80] sm:$0xf]
      %v228 = vld [vmem:[%s197 + $0x84] sm:$0xff]
      %v229 = vld [vmem:[%s197 + $0x8c] sm:$0xf]
      %v230 = vld [vmem:[%s197 + $0x90] sm:$0xff]
      %v231 = vld [vmem:[%s197 + $0x98] sm:$0xf]
      %v232 = vld [vmem:[%s197 + $0x9c] sm:$0xff]
      %v233 = vld [vmem:[%s197 + $0xa4] sm:$0xf]
      %v234 = vld [vmem:[%s197 + $0xa8] sm:$0xff]
      %v235 = vld [vmem:[%s197 + $0xb0] sm:$0xf]
      %v236 = vld [vmem:[%s197 + $0xb4] sm:$0xff]
      %v237 = vld [vmem:[%s197 + $0xbc] sm:$0xf]
      %v238 = vld [vmem:[%s197 + $0xc0] sm:$0xff]
      %v239 = vld [vmem:[%s197 + $0xc8] sm:$0xf]
      %v240 = vld [vmem:[%s197 + $0xcc] sm:$0xff]
      %v241 = vld [vmem:[%s197 + $0xd4] sm:$0xf]
      %v242 = vld [vmem:[%s197 + $0xd8] sm:$0xff]
      %v243 = vld [vmem:[%s197 + $0xe0] sm:$0xf]
      %v244 = vld [vmem:[%s197 + $0xe4] sm:$0xff]
      %v245 = vld [vmem:[%s197 + $0xec] sm:$0xf]
      %v246 = vld [vmem:[%s197 + $0xf0] sm:$0xff]
      %v247 = vld [vmem:[%s197 + $0xf8] sm:$0xf]
      %v248 = vld [vmem:[%s197 + $0xfc] sm:$0xff]
      %v249 = vld [vmem:[%s197 + $0x104] sm:$0xf]
      %v250 = vld [vmem:[%s197 + $0x108] sm:$0xff]
      %v251 = vld [vmem:[%s197 + $0x110] sm:$0xf]
      %v252 = vld [vmem:[%s197 + $0x114] sm:$0xff]
      %v253 = vld [vmem:[%s197 + $0x11c] sm:$0xf]
      %v254 = vld [vmem:[%s197 + $0x120] sm:$0xff]
      %v255 = vld [vmem:[%s197 + $0x128] sm:$0xf]
      %v256 = vld [vmem:[%s197 + $0x12c] sm:$0xff]
      %v257 = vld [vmem:[%s197 + $0x134] sm:$0xf]
      %v258 = vld [vmem:[%s197 + $0x138] sm:$0xff]
      %v259 = vld [vmem:[%s197 + $0x140] sm:$0xf]
      %v260 = vld [vmem:[%s197 + $0x144] sm:$0xff]
      %v261 = vld [vmem:[%s197 + $0x14c] sm:$0xf]
      %v262 = vld [vmem:[%s197 + $0x150] sm:$0xff]
      %v263 = vld [vmem:[%s197 + $0x158] sm:$0xf]
      %v264 = vld [vmem:[%s197 + $0x15c] sm:$0xff]
      %v265 = vld [vmem:[%s197 + $0x164] sm:$0xf]
      %v266 = vld [vmem:[%s197 + $0x168] sm:$0xff]
      %v267 = vld [vmem:[%s197 + $0x170] sm:$0xf]
      %v268 = vld [vmem:[%s197 + $0x174] sm:$0xff]
      %v269 = vld [vmem:[%s197 + $0x17c] sm:$0xf]
      %v270 = vld [vmem:[%s197 + $0x180] sm:$0xff]
      %v271 = vld [vmem:[%s197 + $0x188] sm:$0xf]
      %v272 = vld [vmem:[%s197 + $0x18c] sm:$0xff]
      %v273 = vld [vmem:[%s197 + $0x194] sm:$0xf]
      %v274 = vld [vmem:[%s197 + $0x198] sm:$0xff]
      %v275 = vld [vmem:[%s197 + $0x1a0] sm:$0xf]
      %v276 = vld [vmem:[%s197 + $0x1a4] sm:$0xff]
      %v277 = vld [vmem:[%s197 + $0x1ac] sm:$0xf]
      %v278 = vld [vmem:[%s197 + $0x1b0] sm:$0xff]
      %v279 = vld [vmem:[%s197 + $0x1b8] sm:$0xf]
      %v280 = vld [vmem:[%s197 + $0x1bc] sm:$0xff]
      %v281 = vld [vmem:[%s197 + $0x1c4] sm:$0xf]
      %v282 = vld [vmem:[%s197 + $0x1c8] sm:$0xff]
      %v283 = vld [vmem:[%s197 + $0x1d0] sm:$0xf]
      %v284 = vld [vmem:[%s197 + $0x1d4] sm:$0xff]
      %v285 = vld [vmem:[%s197 + $0x1dc] sm:$0xf]
      %v286 = vld [vmem:[%s197 + $0x1e0] sm:$0xff]
      %v287 = vld [vmem:[%s197 + $0x1e8] sm:$0xf]
      %v288 = vld [vmem:[%s197 + $0x1ec] sm:$0xff]
      %v289 = vld [vmem:[%s197 + $0x1f4] sm:$0xf]
      %v290 = vld [vmem:[%s197 + $0x1f8] sm:$0xff]
      %v291 = vld [vmem:[%s197 + $0x200] sm:$0xf]
      %v292 = vld [vmem:[%s197 + $0x204] sm:$0xff]
      %v293 = vld [vmem:[%s197 + $0x20c] sm:$0xf]
      %v294 = vld [vmem:[%s197 + $0x210] sm:$0xff]
      %v295 = vld [vmem:[%s197 + $0x218] sm:$0xf]
      %v296 = vld [vmem:[%s197 + $0x21c] sm:$0xff]
      %v297 = vld [vmem:[%s197 + $0x224] sm:$0xf]
      %v298 = vld [vmem:[%s197 + $0x228] sm:$0xff]
      %v299 = vld [vmem:[%s197 + $0x230] sm:$0xf]
      %v300 = vld [vmem:[%s197 + $0x234] sm:$0xff]
      %v301 = vld [vmem:[%s197 + $0x23c] sm:$0xf]
      %v302 = vld [vmem:[%s197 + $0x240] sm:$0xff]
      %v303 = vld [vmem:[%s197 + $0x248] sm:$0xf]
      %v304 = vld [vmem:[%s197 + $0x24c] sm:$0xff]
      %v305 = vld [vmem:[%s197 + $0x254] sm:$0xf]
      %v306 = vld [vmem:[%s197 + $0x258] sm:$0xff]
      %v307 = vld [vmem:[%s197 + $0x260] sm:$0xf]
      %v308 = vld [vmem:[%s197 + $0x264] sm:$0xff]
      %v309 = vld [vmem:[%s197 + $0x26c] sm:$0xf]
      %v310 = vld [vmem:[%s197 + $0x270] sm:$0xff]
      %v311 = vld [vmem:[%s197 + $0x278] sm:$0xf]
      %v312 = vld [vmem:[%s197 + $0x27c] sm:$0xff]
      %v313 = vld [vmem:[%s197 + $0x284] sm:$0xf]
      %v314 = vld [vmem:[%s197 + $0x288] sm:$0xff]
      %v315 = vld [vmem:[%s197 + $0x290] sm:$0xf]
      %v316 = vld [vmem:[%s197 + $0x294] sm:$0xff]
      %v317 = vld [vmem:[%s197 + $0x29c] sm:$0xf]
      %v318 = vld [vmem:[%s197 + $0x2a0] sm:$0xff]
      %v319 = vld [vmem:[%s197 + $0x2a8] sm:$0xf]
      %v320 = vld [vmem:[%s197 + $0x2ac] sm:$0xff]
      %v321 = vld [vmem:[%s197 + $0x2b4] sm:$0xf]
      %v322 = vld [vmem:[%s197 + $0x2b8] sm:$0xff]
      %v323 = vld [vmem:[%s197 + $0x2c0] sm:$0xf]
      %v324 = vld [vmem:[%s197 + $0x2c4] sm:$0xff]
      %v325 = vld [vmem:[%s197 + $0x2cc] sm:$0xf]
      %v326 = vld [vmem:[%s197 + $0x2d0] sm:$0xff]
      %v327 = vld [vmem:[%s197 + $0x2d8] sm:$0xf]
      %v328 = vld [vmem:[%s197 + $0x2dc] sm:$0xff]
      %v329 = vld [vmem:[%s197 + $0x2e4] sm:$0xf]
      %v330 = vld [vmem:[%s197 + $0x2e8] sm:$0xff]
      %v331 = vld [vmem:[%s197 + $0x2f0] sm:$0xf]
      %v332 = vld [vmem:[%s197 + $0x2f4] sm:$0xff]
      %v333 = vld [vmem:[%s197 + $0x2fc] sm:$0xf]
      %v334 = vld [vmem:[%s1] sm:$0xf]
      %v335 = vld [vmem:[%s1 + $0x4] sm:$0xf]
      %v336 = vld [vmem:[%s1 + $0x8] sm:$0xf]
      %v337 = vld [vmem:[%s1 + $0xc] sm:$0xf]
      %v338 = vld [vmem:[%s1 + $0x10] sm:$0xf]
      %v339 = vld [vmem:[%s1 + $0x14] sm:$0xf]
      %v340 = vld [vmem:[%s1 + $0x18] sm:$0xf]
      %v341 = vld [vmem:[%s1 + $0x1c] sm:$0xf]
      %v342 = vld [vmem:[%s1 + $0x20] sm:$0xf]
      %v343 = vld [vmem:[%s1 + $0x24] sm:$0xf]
      %v344 = vld [vmem:[%s1 + $0x28] sm:$0xf]
      %v345 = vld [vmem:[%s1 + $0x2c] sm:$0xf]
      %v346 = vld [vmem:[%s1 + $0x30] sm:$0xf]
      %v347 = vld [vmem:[%s1 + $0x34] sm:$0xf]
      %v348 = vld [vmem:[%s1 + $0x38] sm:$0xf]
      %v349 = vld [vmem:[%s1 + $0x3c] sm:$0xf]
      %v350 = vld [vmem:[%s1 + $0x40] sm:$0xf]
      %v351 = vld [vmem:[%s1 + $0x44] sm:$0xf]
      %v352 = vld [vmem:[%s1 + $0x48] sm:$0xf]
      %v353 = vld [vmem:[%s1 + $0x4c] sm:$0xf]
      %v354 = vld [vmem:[%s1 + $0x50] sm:$0xf]
      %v355 = vld [vmem:[%s1 + $0x54] sm:$0xf]
      %v356 = vld [vmem:[%s1 + $0x58] sm:$0xf]
      %v357 = vld [vmem:[%s1 + $0x5c] sm:$0xf]
      %v358 = vld [vmem:[%s1 + $0x60] sm:$0xf]
      %v359 = vld [vmem:[%s1 + $0x64] sm:$0xf]
      %v360 = vld [vmem:[%s1 + $0x68] sm:$0xf]
      %v361 = vld [vmem:[%s1 + $0x6c] sm:$0xf]
      %v362 = vld [vmem:[%s1 + $0x70] sm:$0xf]
      %v363 = vld [vmem:[%s1 + $0x74] sm:$0xf]
      %v364 = vld [vmem:[%s1 + $0x78] sm:$0xf]
      %v365 = vld [vmem:[%s1 + $0x7c] sm:$0xf]
      %v366 = vld [vmem:[%s1 + $0x80] sm:$0xf]
      %v367 = vld [vmem:[%s1 + $0x84] sm:$0xf]
      %v368 = vld [vmem:[%s1 + $0x88] sm:$0xf]
      %v369 = vld [vmem:[%s1 + $0x8c] sm:$0xf]
      %v370 = vld [vmem:[%s2] sm:$0x1]
      %v372 = vlaneseq
      %v373 = vshrl.u32 %v372, 7
      %v374 = vsub.s32 0, %v373
      %v375 = vrot.slane %v370, %v374
      %v505 = vunpack.c.l.b16 %v206
      %v506 = vunpack.c.h.b16 %v206
      %v507 = vunpack.c.l.b16 %v207
      %v508 = vunpack.c.l.b16 %v208
      %v509 = vunpack.c.h.b16 %v208
      %v510 = vunpack.c.l.b16 %v209
      %v511 = vunpack.c.l.b16 %v210
      %v512 = vunpack.c.h.b16 %v210
      %v513 = vunpack.c.l.b16 %v211
      %v514 = vunpack.c.l.b16 %v212
      %v515 = vunpack.c.h.b16 %v212
      %v516 = vunpack.c.l.b16 %v213
      %v517 = vunpack.c.l.b16 %v214
      %v518 = vunpack.c.h.b16 %v214
      %v519 = vunpack.c.l.b16 %v215
      %v520 = vunpack.c.l.b16 %v216
      %v521 = vunpack.c.h.b16 %v216
      %v522 = vunpack.c.l.b16 %v217
      %v523 = vunpack.c.l.b16 %v218
      %v524 = vunpack.c.h.b16 %v218
      %v525 = vunpack.c.l.b16 %v219
      %v526 = vunpack.c.l.b16 %v220
      %v527 = vunpack.c.h.b16 %v220
      %v528 = vunpack.c.l.b16 %v221
      %v529 = vunpack.c.l.b16 %v222
      %v530 = vunpack.c.h.b16 %v222
      %v531 = vunpack.c.l.b16 %v223
      %v532 = vunpack.c.l.b16 %v224
      %v533 = vunpack.c.h.b16 %v224
      %v534 = vunpack.c.l.b16 %v225
      %v535 = vunpack.c.l.b16 %v226
      %v536 = vunpack.c.h.b16 %v226
      %v537 = vunpack.c.l.b16 %v227
      %v538 = vunpack.c.l.b16 %v228
      %v539 = vunpack.c.h.b16 %v228
      %v540 = vunpack.c.l.b16 %v229
      %v541 = vunpack.c.l.b16 %v230
      %v542 = vunpack.c.h.b16 %v230
      %v543 = vunpack.c.l.b16 %v231
      %v544 = vunpack.c.l.b16 %v232
      %v545 = vunpack.c.h.b16 %v232
      %v546 = vunpack.c.l.b16 %v233
      %v547 = vunpack.c.l.b16 %v234
      %v548 = vunpack.c.h.b16 %v234
      %v549 = vunpack.c.l.b16 %v235
      %v550 = vunpack.c.l.b16 %v236
      %v551 = vunpack.c.h.b16 %v236
      %v552 = vunpack.c.l.b16 %v237
      %v553 = vunpack.c.l.b16 %v238
      %v554 = vunpack.c.h.b16 %v238
      %v555 = vunpack.c.l.b16 %v239
      %v556 = vunpack.c.l.b16 %v240
      %v557 = vunpack.c.h.b16 %v240
      %v558 = vunpack.c.l.b16 %v241
      %v559 = vunpack.c.l.b16 %v242
      %v560 = vunpack.c.h.b16 %v242
      %v561 = vunpack.c.l.b16 %v243
      %v562 = vunpack.c.l.b16 %v244
      %v563 = vunpack.c.h.b16 %v244
      %v564 = vunpack.c.l.b16 %v245
      %v565 = vunpack.c.l.b16 %v246
      %v566 = vunpack.c.h.b16 %v246
      %v567 = vunpack.c.l.b16 %v247
      %v568 = vunpack.c.l.b16 %v248
      %v569 = vunpack.c.h.b16 %v248
      %v570 = vunpack.c.l.b16 %v249
      %v571 = vunpack.c.l.b16 %v250
      %v572 = vunpack.c.h.b16 %v250
      %v573 = vunpack.c.l.b16 %v251
      %v574 = vunpack.c.l.b16 %v252
      %v575 = vunpack.c.h.b16 %v252
      %v576 = vunpack.c.l.b16 %v253
      %v577 = vunpack.c.l.b16 %v254
      %v578 = vunpack.c.h.b16 %v254
      %v579 = vunpack.c.l.b16 %v255
      %v580 = vunpack.c.l.b16 %v256
      %v581 = vunpack.c.h.b16 %v256
      %v582 = vunpack.c.l.b16 %v257
      %v583 = vunpack.c.l.b16 %v258
      %v584 = vunpack.c.h.b16 %v258
      %v585 = vunpack.c.l.b16 %v259
      %v586 = vunpack.c.l.b16 %v260
      %v587 = vunpack.c.h.b16 %v260
      %v588 = vunpack.c.l.b16 %v261
      %v589 = vunpack.c.l.b16 %v262
      %v590 = vunpack.c.h.b16 %v262
      %v591 = vunpack.c.l.b16 %v263
      %v592 = vunpack.c.l.b16 %v264
      %v593 = vunpack.c.h.b16 %v264
      %v594 = vunpack.c.l.b16 %v265
      %v595 = vunpack.c.l.b16 %v266
      %v596 = vunpack.c.h.b16 %v266
      %v597 = vunpack.c.l.b16 %v267
      %v598 = vunpack.c.l.b16 %v268
      %v599 = vunpack.c.h.b16 %v268
      %v600 = vunpack.c.l.b16 %v269
      %v601 = vunpack.c.l.b16 %v270
      %v602 = vunpack.c.h.b16 %v270
      %v603 = vunpack.c.l.b16 %v271
      %v604 = vunpack.c.l.b16 %v272
      %v605 = vunpack.c.h.b16 %v272
      %v606 = vunpack.c.l.b16 %v273
      %v607 = vunpack.c.l.b16 %v274
      %v608 = vunpack.c.h.b16 %v274
      %v609 = vunpack.c.l.b16 %v275
      %v610 = vunpack.c.l.b16 %v276
      %v611 = vunpack.c.h.b16 %v276
      %v612 = vunpack.c.l.b16 %v277
      %v613 = vunpack.c.l.b16 %v278
      %v614 = vunpack.c.h.b16 %v278
      %v615 = vunpack.c.l.b16 %v279
      %v616 = vunpack.c.l.b16 %v280
      %v617 = vunpack.c.h.b16 %v280
      %v618 = vunpack.c.l.b16 %v281
      %v619 = vunpack.c.l.b16 %v282
      %v620 = vunpack.c.h.b16 %v282
      %v621 = vunpack.c.l.b16 %v283
      %v622 = vunpack.c.l.b16 %v284
      %v623 = vunpack.c.h.b16 %v284
      %v624 = vunpack.c.l.b16 %v285
      %v625 = vunpack.c.l.b16 %v286
      %v626 = vunpack.c.h.b16 %v286
      %v627 = vunpack.c.l.b16 %v287
      %v628 = vunpack.c.l.b16 %v288
      %v629 = vunpack.c.h.b16 %v288
      %v630 = vunpack.c.l.b16 %v289
      %v631 = vunpack.c.l.b16 %v290
      %v632 = vunpack.c.h.b16 %v290
      %v633 = vunpack.c.l.b16 %v291
      %v634 = vunpack.c.l.b16 %v292
      %v635 = vunpack.c.h.b16 %v292
      %v636 = vunpack.c.l.b16 %v293
      %v637 = vunpack.c.l.b16 %v294
      %v638 = vunpack.c.h.b16 %v294
      %v639 = vunpack.c.l.b16 %v295
      %v640 = vunpack.c.l.b16 %v296
      %v641 = vunpack.c.h.b16 %v296
      %v642 = vunpack.c.l.b16 %v297
      %v643 = vunpack.c.l.b16 %v298
      %v644 = vunpack.c.h.b16 %v298
      %v645 = vunpack.c.l.b16 %v299
      %v646 = vunpack.c.l.b16 %v300
      %v647 = vunpack.c.h.b16 %v300
      %v648 = vunpack.c.l.b16 %v301
      %v649 = vunpack.c.l.b16 %v302
      %v650 = vunpack.c.h.b16 %v302
      %v651 = vunpack.c.l.b16 %v303
      %v652 = vunpack.c.l.b16 %v304
      %v653 = vunpack.c.h.b16 %v304
      %v654 = vunpack.c.l.b16 %v305
      %v655 = vunpack.c.l.b16 %v306
      %v656 = vunpack.c.h.b16 %v306
      %v657 = vunpack.c.l.b16 %v307
      %v658 = vunpack.c.l.b16 %v308
      %v659 = vunpack.c.h.b16 %v308
      %v660 = vunpack.c.l.b16 %v309
      %v661 = vunpack.c.l.b16 %v310
      %v662 = vunpack.c.h.b16 %v310
      %v663 = vunpack.c.l.b16 %v311
      %v664 = vunpack.c.l.b16 %v312
      %v665 = vunpack.c.h.b16 %v312
      %v666 = vunpack.c.l.b16 %v313
      %v667 = vunpack.c.l.b16 %v314
      %v668 = vunpack.c.h.b16 %v314
      %v669 = vunpack.c.l.b16 %v315
      %v670 = vunpack.c.l.b16 %v316
      %v671 = vunpack.c.h.b16 %v316
      %v672 = vunpack.c.l.b16 %v317
      %v673 = vunpack.c.l.b16 %v318
      %v674 = vunpack.c.h.b16 %v318
      %v675 = vunpack.c.l.b16 %v319
      %v676 = vunpack.c.l.b16 %v320
      %v677 = vunpack.c.h.b16 %v320
      %v678 = vunpack.c.l.b16 %v321
      %v679 = vunpack.c.l.b16 %v322
      %v680 = vunpack.c.h.b16 %v322
      %v681 = vunpack.c.l.b16 %v323
      %v682 = vunpack.c.l.b16 %v324
      %v683 = vunpack.c.h.b16 %v324
      %v684 = vunpack.c.l.b16 %v325
      %v685 = vunpack.c.l.b16 %v326
      %v686 = vunpack.c.h.b16 %v326
      %v687 = vunpack.c.l.b16 %v327
      %v688 = vunpack.c.l.b16 %v328
      %v689 = vunpack.c.h.b16 %v328
      %v690 = vunpack.c.l.b16 %v329
      %v691 = vunpack.c.l.b16 %v330
      %v692 = vunpack.c.h.b16 %v330
      %v693 = vunpack.c.l.b16 %v331
      %v694 = vunpack.c.l.b16 %v332
      %v695 = vunpack.c.h.b16 %v332
      %v696 = vunpack.c.l.b16 %v333
      %v697 = vpack.c.b16 %v508, %v505
      %v698 = vpack.c.b16 %v509, %v506
      %v699 = vpack.c.b16 %v510, %v507
      %v700 = vpack.c.b16 %v514, %v511
      %v701 = vpack.c.b16 %v515, %v512
      %v702 = vpack.c.b16 %v516, %v513
      %v703 = vpack.c.b16 %v520, %v517
      %v704 = vpack.c.b16 %v521, %v518
      %v705 = vpack.c.b16 %v522, %v519
      %v706 = vpack.c.b16 %v526, %v523
      %v707 = vpack.c.b16 %v527, %v524
      %v708 = vpack.c.b16 %v528, %v525
      %v709 = vpack.c.b16 %v532, %v529
      %v710 = vpack.c.b16 %v533, %v530
      %v711 = vpack.c.b16 %v534, %v531
      %v712 = vpack.c.b16 %v538, %v535
      %v713 = vpack.c.b16 %v539, %v536
      %v714 = vpack.c.b16 %v540, %v537
      %v715 = vpack.c.b16 %v544, %v541
      %v716 = vpack.c.b16 %v545, %v542
      %v717 = vpack.c.b16 %v546, %v543
      %v718 = vpack.c.b16 %v550, %v547
      %v719 = vpack.c.b16 %v551, %v548
      %v720 = vpack.c.b16 %v552, %v549
      %v721 = vpack.c.b16 %v556, %v553
      %v722 = vpack.c.b16 %v557, %v554
      %v723 = vpack.c.b16 %v558, %v555
      %v724 = vpack.c.b16 %v562, %v559
      %v725 = vpack.c.b16 %v563, %v560
      %v726 = vpack.c.b16 %v564, %v561
      %v727 = vpack.c.b16 %v568, %v565
      %v728 = vpack.c.b16 %v569, %v566
      %v729 = vpack.c.b16 %v570, %v567
      %v730 = vpack.c.b16 %v574, %v571
      %v731 = vpack.c.b16 %v575, %v572
      %v732 = vpack.c.b16 %v576, %v573
      %v733 = vpack.c.b16 %v580, %v577
      %v734 = vpack.c.b16 %v581, %v578
      %v735 = vpack.c.b16 %v582, %v579
      %v736 = vpack.c.b16 %v586, %v583
      %v737 = vpack.c.b16 %v587, %v584
      %v738 = vpack.c.b16 %v588, %v585
      %v739 = vpack.c.b16 %v592, %v589
      %v740 = vpack.c.b16 %v593, %v590
      %v741 = vpack.c.b16 %v594, %v591
      %v742 = vpack.c.b16 %v598, %v595
      %v743 = vpack.c.b16 %v599, %v596
      %v744 = vpack.c.b16 %v600, %v597
      %v745 = vpack.c.b16 %v604, %v601
      %v746 = vpack.c.b16 %v605, %v602
      %v747 = vpack.c.b16 %v606, %v603
      %v748 = vpack.c.b16 %v610, %v607
      %v749 = vpack.c.b16 %v611, %v608
      %v750 = vpack.c.b16 %v612, %v609
      %v751 = vpack.c.b16 %v616, %v613
      %v752 = vpack.c.b16 %v617, %v614
      %v753 = vpack.c.b16 %v618, %v615
      %v754 = vpack.c.b16 %v622, %v619
      %v755 = vpack.c.b16 %v623, %v620
      %v756 = vpack.c.b16 %v624, %v621
      %v757 = vpack.c.b16 %v628, %v625
      %v758 = vpack.c.b16 %v629, %v626
      %v759 = vpack.c.b16 %v630, %v627
      %v760 = vpack.c.b16 %v634, %v631
      %v761 = vpack.c.b16 %v635, %v632
      %v762 = vpack.c.b16 %v636, %v633
      %v763 = vpack.c.b16 %v640, %v637
      %v764 = vpack.c.b16 %v641, %v638
      %v765 = vpack.c.b16 %v642, %v639
      %v766 = vpack.c.b16 %v646, %v643
      %v767 = vpack.c.b16 %v647, %v644
      %v768 = vpack.c.b16 %v648, %v645
      %v769 = vpack.c.b16 %v652, %v649
      %v770 = vpack.c.b16 %v653, %v650
      %v771 = vpack.c.b16 %v654, %v651
      %v772 = vpack.c.b16 %v658, %v655
      %v773 = vpack.c.b16 %v659, %v656
      %v774 = vpack.c.b16 %v660, %v657
      %v775 = vpack.c.b16 %v664, %v661
      %v776 = vpack.c.b16 %v665, %v662
      %v777 = vpack.c.b16 %v666, %v663
      %v778 = vpack.c.b16 %v670, %v667
      %v779 = vpack.c.b16 %v671, %v668
      %v780 = vpack.c.b16 %v672, %v669
      %v781 = vpack.c.b16 %v676, %v673
      %v782 = vpack.c.b16 %v677, %v674
      %v783 = vpack.c.b16 %v678, %v675
      %v784 = vpack.c.b16 %v682, %v679
      %v785 = vpack.c.b16 %v683, %v680
      %v786 = vpack.c.b16 %v684, %v681
      %v787 = vpack.c.b16 %v688, %v685
      %v788 = vpack.c.b16 %v689, %v686
      %v789 = vpack.c.b16 %v690, %v687
      %v790 = vpack.c.b16 %v694, %v691
      %v791 = vpack.c.b16 %v695, %v692
      %v792 = vpack.c.b16 %v696, %v693
      %v893 = vunpack.c.l.b16 %v334
      %v894 = vunpack.c.l.b16 %v335
      %v895 = vunpack.c.l.b16 %v336
      %v896 = vunpack.c.l.b16 %v337
      %v897 = vunpack.c.l.b16 %v338
      %v898 = vunpack.c.l.b16 %v339
      %v899 = vunpack.c.l.b16 %v340
      %v900 = vunpack.c.l.b16 %v341
      %v901 = vunpack.c.l.b16 %v342
      %v902 = vunpack.c.l.b16 %v343
      %v903 = vunpack.c.l.b16 %v344
      %v904 = vunpack.c.l.b16 %v345
      %v905 = vunpack.c.l.b16 %v346
      %v906 = vunpack.c.l.b16 %v347
      %v907 = vunpack.c.l.b16 %v348
      %v908 = vunpack.c.l.b16 %v349
      %v909 = vunpack.c.l.b16 %v350
      %v910 = vunpack.c.l.b16 %v351
      %v911 = vunpack.c.l.b16 %v352
      %v912 = vunpack.c.l.b16 %v353
      %v913 = vunpack.c.l.b16 %v354
      %v914 = vunpack.c.l.b16 %v355
      %v915 = vunpack.c.l.b16 %v356
      %v916 = vunpack.c.l.b16 %v357
      %v917 = vunpack.c.l.b16 %v358
      %v918 = vunpack.c.l.b16 %v359
      %v919 = vunpack.c.l.b16 %v360
      %v920 = vunpack.c.l.b16 %v361
      %v921 = vunpack.c.l.b16 %v362
      %v922 = vunpack.c.l.b16 %v363
      %v923 = vunpack.c.l.b16 %v364
      %v924 = vunpack.c.l.b16 %v365
      %v925 = vunpack.c.l.b16 %v366
      %v926 = vunpack.c.l.b16 %v367
      %v927 = vunpack.c.l.b16 %v368
      %v928 = vunpack.c.l.b16 %v369
      %v929 = vpack.c.b16 %v894, %v893
      %v930 = vpack.c.b16 %v896, %v895
      %v931 = vpack.c.b16 %v898, %v897
      %v932 = vpack.c.b16 %v900, %v899
      %v933 = vpack.c.b16 %v902, %v901
      %v934 = vpack.c.b16 %v904, %v903
      %v935 = vpack.c.b16 %v906, %v905
      %v936 = vpack.c.b16 %v908, %v907
      %v937 = vpack.c.b16 %v910, %v909
      %v938 = vpack.c.b16 %v912, %v911
      %v939 = vpack.c.b16 %v914, %v913
      %v940 = vpack.c.b16 %v916, %v915
      %v941 = vpack.c.b16 %v918, %v917
      %v942 = vpack.c.b16 %v920, %v919
      %v943 = vpack.c.b16 %v922, %v921
      %v944 = vpack.c.b16 %v924, %v923
      %v945 = vpack.c.b16 %v926, %v925
      %v946 = vpack.c.b16 %v928, %v927
      %vm965 = vcmask 261120
      %v967 = vsel %vm965, %v699, 0
      %v970 = vsel %vm965, %v702, 0
      %v973 = vsel %vm965, %v705, 0
      %v976 = vsel %vm965, %v708, 0
      %v979 = vsel %vm965, %v711, 0
      %v982 = vsel %vm965, %v714, 0
      %v985 = vsel %vm965, %v717, 0
      %v988 = vsel %vm965, %v720, 0
      %v991 = vsel %vm965, %v723, 0
      %v994 = vsel %vm965, %v726, 0
      %v997 = vsel %vm965, %v729, 0
      %v1000 = vsel %vm965, %v732, 0
      %v1003 = vsel %vm965, %v735, 0
      %v1006 = vsel %vm965, %v738, 0
      %v1009 = vsel %vm965, %v741, 0
      %v1012 = vsel %vm965, %v744, 0
      %v1015 = vsel %vm965, %v747, 0
      %v1018 = vsel %vm965, %v750, 0
      %v1021 = vsel %vm965, %v753, 0
      %v1024 = vsel %vm965, %v756, 0
      %v1027 = vsel %vm965, %v759, 0
      %v1030 = vsel %vm965, %v762, 0
      %v1033 = vsel %vm965, %v765, 0
      %v1036 = vsel %vm965, %v768, 0
      %v1039 = vsel %vm965, %v771, 0
      %v1042 = vsel %vm965, %v774, 0
      %v1045 = vsel %vm965, %v777, 0
      %v1048 = vsel %vm965, %v780, 0
      %v1051 = vsel %vm965, %v783, 0
      %v1054 = vsel %vm965, %v786, 0
      %v1057 = vsel %vm965, %v789, 0
      %v1060 = vsel %vm965, %v792, 0
      %1062 = vmatprep.subr.bf16.mxu0 0
      %1063 = vmatpush1.bf16.msra.mxu0 %v929
      %1064 = vmatprep.subr.bf16.mxu0 0
      %1065 = vmatpush1.bf16.msra.mxu0 %v930
      %1066 = vmatprep.subr.bf16.mxu0 0
      %1067 = vmatpush1.bf16.msra.mxu0 %v931
      %1068 = vmatprep.subr.bf16.mxu0 0
      %1069 = vmatpush1.bf16.msra.mxu0 %v932
      %1070 = vmatprep.subr.bf16.mxu0 0
      %1071 = vmatpush1.bf16.msra.mxu0 %v933
      %1072 = vmatprep.subr.bf16.mxu0 0
      %1073 = vmatpush1.bf16.msra.mxu0 %v934
      %1074 = vmatprep.subr.bf16.mxu0 0
      %1075 = vmatpush1.bf16.msra.mxu0 %v935
      %1076 = vmatprep.subr.bf16.mxu0 0
      %1077 = vmatpush1.bf16.msra.mxu0 %v936
      %1078 = vmatprep.subr.bf16.mxu0 0
      %1079 = vmatpush1.bf16.msra.mxu0 %v937
      %1080 = vmatprep.subr.bf16.mxu0 0
      %1081 = vmatpush1.bf16.msra.mxu0 %v938
      %1082 = vmatprep.subr.bf16.mxu0 0
      %1083 = vmatpush1.bf16.msra.mxu0 %v939
      %1084 = vmatprep.subr.bf16.mxu0 0
      %1085 = vmatpush1.bf16.msra.mxu0 %v940
      %1086 = vmatprep.subr.bf16.mxu0 0
      %1087 = vmatpush1.bf16.msra.mxu0 %v941
      %1088 = vmatprep.subr.bf16.mxu0 0
      %1089 = vmatpush1.bf16.msra.mxu0 %v942
      %1090 = vmatprep.subr.bf16.mxu0 0
      %1091 = vmatpush1.bf16.msra.mxu0 %v943
      %1092 = vmatprep.subr.bf16.mxu0 0
      %1093 = vmatpush1.bf16.msra.mxu0 %v944
      %1094 = vmatprep.mubr.bf16.mxu0 %v698
      %1095 = vmatmul.mubr.bf16.gmra.mrb[0].mxu0 %v697
      %v1096 = vpop.f32.mrb[0].mxu0
      %v1097 = vadd.f32 %v375, %v1096
      %v1098 = vpop.f32.mrb[0].mxu0
      %v1099 = vpop.f32.mrb[0].mxu0
      %v1100 = vadd.f32 %v375, %v1099
      %v1101 = vpop.f32.mrb[0].mxu0
      %1102 = vmatprep.mubr.bf16.mxu0 %v701
      %1103 = vmatmul.mubr.bf16.gmra.mrb[0].mxu0 %v700
      %v1104 = vpop.f32.mrb[0].mxu0
      %v1105 = vadd.f32 %v375, %v1104
      %v1106 = vpop.f32.mrb[0].mxu0
      %v1107 = vpop.f32.mrb[0].mxu0
      %v1108 = vadd.f32 %v375, %v1107
      %v1109 = vpop.f32.mrb[0].mxu0
      %1110 = vmatprep.mubr.bf16.mxu0 %v704
      %1111 = vmatmul.mubr.bf16.gmra.mrb[0].mxu0 %v703
      %v1112 = vpop.f32.mrb[0].mxu0
      %v1113 = vadd.f32 %v375, %v1112
      %v1114 = vpop.f32.mrb[0].mxu0
      %v1115 = vpop.f32.mrb[0].mxu0
      %v1116 = vadd.f32 %v375, %v1115
      %v1117 = vpop.f32.mrb[0].mxu0
      %1118 = vmatprep.mubr.bf16.mxu0 %v707
      %1119 = vmatmul.mubr.bf16.gmra.mrb[0].mxu0 %v706
      %v1120 = vpop.f32.mrb[0].mxu0
      %v1121 = vadd.f32 %v375, %v1120
      %v1122 = vpop.f32.mrb[0].mxu0
      %v1123 = vpop.f32.mrb[0].mxu0
      %v1124 = vadd.f32 %v375, %v1123
      %v1125 = vpop.f32.mrb[0].mxu0
      %1126 = vmatprep.mubr.bf16.mxu0 %v710
      %1127 = vmatmul.mubr.bf16.gmra.mrb[0].mxu0 %v709
      %v1128 = vpop.f32.mrb[0].mxu0
      %v1129 = vadd.f32 %v375, %v1128
      %v1130 = vpop.f32.mrb[0].mxu0
      %v1131 = vpop.f32.mrb[0].mxu0
      %v1132 = vadd.f32 %v375, %v1131
      %v1133 = vpop.f32.mrb[0].mxu0
      %1134 = vmatprep.mubr.bf16.mxu0 %v713
      %1135 = vmatmul.mubr.bf16.gmra.mrb[0].mxu0 %v712
      %v1136 = vpop.f32.mrb[0].mxu0
      %v1137 = vadd.f32 %v375, %v1136
      %v1138 = vpop.f32.mrb[0].mxu0
      %v1139 = vpop.f32.mrb[0].mxu0
      %v1140 = vadd.f32 %v375, %v1139
      %v1141 = vpop.f32.mrb[0].mxu0
      %1142 = vmatprep.mubr.bf16.mxu0 %v716
      %1143 = vmatmul.mubr.bf16.gmra.mrb[0].mxu0 %v715
      %v1144 = vpop.f32.mrb[0].mxu0
      %v1145 = vadd.f32 %v375, %v1144
      %v1146 = vpop.f32.mrb[0].mxu0
      %v1147 = vpop.f32.mrb[0].mxu0
      %v1148 = vadd.f32 %v375, %v1147
      %v1149 = vpop.f32.mrb[0].mxu0
      %1150 = vmatprep.mubr.bf16.mxu0 %v719
      %1151 = vmatmul.mubr.bf16.gmra.mrb[0].mxu0 %v718
      %v1152 = vpop.f32.mrb[0].mxu0
      %v1153 = vadd.f32 %v375, %v1152
      %v1154 = vpop.f32.mrb[0].mxu0
      %v1155 = vpop.f32.mrb[0].mxu0
      %v1156 = vadd.f32 %v375, %v1155
      %v1157 = vpop.f32.mrb[0].mxu0
      %1158 = vmatprep.mubr.bf16.mxu0 %v722
      %1159 = vmatmul.mubr.bf16.gmra.mrb[0].mxu0 %v721
      %v1160 = vpop.f32.mrb[0].mxu0
      %v1161 = vadd.f32 %v375, %v1160
      %v1162 = vpop.f32.mrb[0].mxu0
      %v1163 = vpop.f32.mrb[0].mxu0
      %v1164 = vadd.f32 %v375, %v1163
      %v1165 = vpop.f32.mrb[0].mxu0
      %1166 = vmatprep.mubr.bf16.mxu0 %v725
      %1167 = vmatmul.mubr.bf16.gmra.mrb[0].mxu0 %v724
      %v1168 = vpop.f32.mrb[0].mxu0
      %v1169 = vadd.f32 %v375, %v1168
      %v1170 = vpop.f32.mrb[0].mxu0
      %v1171 = vpop.f32.mrb[0].mxu0
      %v1172 = vadd.f32 %v375, %v1171
      %v1173 = vpop.f32.mrb[0].mxu0
      %1174 = vmatprep.mubr.bf16.mxu0 %v728
      %1175 = vmatmul.mubr.bf16.gmra.mrb[0].mxu0 %v727
      %v1176 = vpop.f32.mrb[0].mxu0
      %v1177 = vadd.f32 %v375, %v1176
      %v1178 = vpop.f32.mrb[0].mxu0
      %v1179 = vpop.f32.mrb[0].mxu0
      %v1180 = vadd.f32 %v375, %v1179
      %v1181 = vpop.f32.mrb[0].mxu0
      %1182 = vmatprep.mubr.bf16.mxu0 %v731
      %1183 = vmatmul.mubr.bf16.gmra.mrb[0].mxu0 %v730
      %v1184 = vpop.f32.mrb[0].mxu0
      %v1185 = vadd.f32 %v375, %v1184
      %v1186 = vpop.f32.mrb[0].mxu0
      %v1187 = vpop.f32.mrb[0].mxu0
      %v1188 = vadd.f32 %v375, %v1187
      %v1189 = vpop.f32.mrb[0].mxu0
      %1190 = vmatprep.mubr.bf16.mxu0 %v734
      %1191 = vmatmul.mubr.bf16.gmra.mrb[0].mxu0 %v733
      %v1192 = vpop.f32.mrb[0].mxu0
      %v1193 = vadd.f32 %v375, %v1192
      %v1194 = vpop.f32.mrb[0].mxu0
      %v1195 = vpop.f32.mrb[0].mxu0
      %v1196 = vadd.f32 %v375, %v1195
      %v1197 = vpop.f32.mrb[0].mxu0
      %1198 = vmatprep.mubr.bf16.mxu0 %v737
      %1199 = vmatmul.mubr.bf16.gmra.mrb[0].mxu0 %v736
      %v1200 = vpop.f32.mrb[0].mxu0
      %v1201 = vadd.f32 %v375, %v1200
      %v1202 = vpop.f32.mrb[0].mxu0
      %v1203 = vpop.f32.mrb[0].mxu0
      %v1204 = vadd.f32 %v375, %v1203
      %v1205 = vpop.f32.mrb[0].mxu0
      %1206 = vmatprep.mubr.bf16.mxu0 %v740
      %1207 = vmatmul.mubr.bf16.gmra.mrb[0].mxu0 %v739
      %v1208 = vpop.f32.mrb[0].mxu0
      %v1209 = vadd.f32 %v375, %v1208
      %v1210 = vpop.f32.mrb[0].mxu0
      %v1211 = vpop.f32.mrb[0].mxu0
      %v1212 = vadd.f32 %v375, %v1211
      %v1213 = vpop.f32.mrb[0].mxu0
      %1214 = vmatprep.mubr.bf16.mxu0 %v743
      %1215 = vmatmul.mubr.bf16.gmra.mrb[0].mxu0 %v742
      %v1216 = vpop.f32.mrb[0].mxu0
      %v1217 = vadd.f32 %v375, %v1216
      %v1218 = vpop.f32.mrb[0].mxu0
      %v1219 = vpop.f32.mrb[0].mxu0
      %v1220 = vadd.f32 %v375, %v1219
      %v1221 = vpop.f32.mrb[0].mxu0
      %1222 = vmatprep.mubr.bf16.mxu0 %v746
      %1223 = vmatmul.mubr.bf16.gmra.mrb[0].mxu0 %v745
      %v1224 = vpop.f32.mrb[0].mxu0
      %v1225 = vadd.f32 %v375, %v1224
      %v1226 = vpop.f32.mrb[0].mxu0
      %v1227 = vpop.f32.mrb[0].mxu0
      %v1228 = vadd.f32 %v375, %v1227
      %v1229 = vpop.f32.mrb[0].mxu0
      %1230 = vmatprep.mubr.bf16.mxu0 %v749
      %1231 = vmatmul.mubr.bf16.gmra.mrb[0].mxu0 %v748
      %v1232 = vpop.f32.mrb[0].mxu0
      %v1233 = vadd.f32 %v375, %v1232
      %v1234 = vpop.f32.mrb[0].mxu0
      %v1235 = vpop.f32.mrb[0].mxu0
      %v1236 = vadd.f32 %v375, %v1235
      %v1237 = vpop.f32.mrb[0].mxu0
      %1238 = vmatprep.mubr.bf16.mxu0 %v752
      %1239 = vmatmul.mubr.bf16.gmra.mrb[0].mxu0 %v751
      %v1240 = vpop.f32.mrb[0].mxu0
      %v1241 = vadd.f32 %v375, %v1240
      %v1242 = vpop.f32.mrb[0].mxu0
      %v1243 = vpop.f32.mrb[0].mxu0
      %v1244 = vadd.f32 %v375, %v1243
      %v1245 = vpop.f32.mrb[0].mxu0
      %1246 = vmatprep.mubr.bf16.mxu0 %v755
      %1247 = vmatmul.mubr.bf16.gmra.mrb[0].mxu0 %v754
      %v1248 = vpop.f32.mrb[0].mxu0
      %v1249 = vadd.f32 %v375, %v1248
      %v1250 = vpop.f32.mrb[0].mxu0
      %v1251 = vpop.f32.mrb[0].mxu0
      %v1252 = vadd.f32 %v375, %v1251
      %v1253 = vpop.f32.mrb[0].mxu0
      %1254 = vmatprep.mubr.bf16.mxu0 %v758
      %1255 = vmatmul.mubr.bf16.gmra.mrb[0].mxu0 %v757
      %v1256 = vpop.f32.mrb[0].mxu0
      %v1257 = vadd.f32 %v375, %v1256
      %v1258 = vpop.f32.mrb[0].mxu0
      %v1259 = vpop.f32.mrb[0].mxu0
      %v1260 = vadd.f32 %v375, %v1259
      %v1261 = vpop.f32.mrb[0].mxu0
      %1262 = vmatprep.mubr.bf16.mxu0 %v761
      %1263 = vmatmul.mubr.bf16.gmra.mrb[0].mxu0 %v760
      %v1264 = vpop.f32.mrb[0].mxu0
      %v1265 = vadd.f32 %v375, %v1264
      %v1266 = vpop.f32.mrb[0].mxu0
      %v1267 = vpop.f32.mrb[0].mxu0
      %v1268 = vadd.f32 %v375, %v1267
      %v1269 = vpop.f32.mrb[0].mxu0
      %1270 = vmatprep.mubr.bf16.mxu0 %v764
      %1271 = vmatmul.mubr.bf16.gmra.mrb[0].mxu0 %v763
      %v1272 = vpop.f32.mrb[0].mxu0
      %v1273 = vadd.f32 %v375, %v1272
      %v1274 = vpop.f32.mrb[0].mxu0
      %v1275 = vpop.f32.mrb[0].mxu0
      %v1276 = vadd.f32 %v375, %v1275
      %v1277 = vpop.f32.mrb[0].mxu0
      %1278 = vmatprep.mubr.bf16.mxu0 %v767
      %1279 = vmatmul.mubr.bf16.gmra.mrb[0].mxu0 %v766
      %v1280 = vpop.f32.mrb[0].mxu0
      %v1281 = vadd.f32 %v375, %v1280
      %v1282 = vpop.f32.mrb[0].mxu0
      %v1283 = vpop.f32.mrb[0].mxu0
      %v1284 = vadd.f32 %v375, %v1283
      %v1285 = vpop.f32.mrb[0].mxu0
      %1286 = vmatprep.mubr.bf16.mxu0 %v770
      %1287 = vmatmul.mubr.bf16.gmra.mrb[0].mxu0 %v769
      %v1288 = vpop.f32.mrb[0].mxu0
      %v1289 = vadd.f32 %v375, %v1288
      %v1290 = vpop.f32.mrb[0].mxu0
      %v1291 = vpop.f32.mrb[0].mxu0
      %v1292 = vadd.f32 %v375, %v1291
      %v1293 = vpop.f32.mrb[0].mxu0
      %1294 = vmatprep.mubr.bf16.mxu0 %v773
      %1295 = vmatmul.mubr.bf16.gmra.mrb[0].mxu0 %v772
      %v1296 = vpop.f32.mrb[0].mxu0
      %v1297 = vadd.f32 %v375, %v1296
      %v1298 = vpop.f32.mrb[0].mxu0
      %v1299 = vpop.f32.mrb[0].mxu0
      %v1300 = vadd.f32 %v375, %v1299
      %v1301 = vpop.f32.mrb[0].mxu0
      %1302 = vmatprep.mubr.bf16.mxu0 %v776
      %1303 = vmatmul.mubr.bf16.gmra.mrb[0].mxu0 %v775
      %v1304 = vpop.f32.mrb[0].mxu0
      %v1305 = vadd.f32 %v375, %v1304
      %v1306 = vpop.f32.mrb[0].mxu0
      %v1307 = vpop.f32.mrb[0].mxu0
      %v1308 = vadd.f32 %v375, %v1307
      %v1309 = vpop.f32.mrb[0].mxu0
      %1310 = vmatprep.mubr.bf16.mxu0 %v779
      %1311 = vmatmul.mubr.bf16.gmra.mrb[0].mxu0 %v778
      %v1312 = vpop.f32.mrb[0].mxu0
      %v1313 = vadd.f32 %v375, %v1312
      %v1314 = vpop.f32.mrb[0].mxu0
      %v1315 = vpop.f32.mrb[0].mxu0
      %v1316 = vadd.f32 %v375, %v1315
      %v1317 = vpop.f32.mrb[0].mxu0
      %1318 = vmatprep.mubr.bf16.mxu0 %v782
      %1319 = vmatmul.mubr.bf16.gmra.mrb[0].mxu0 %v781
      %v1320 = vpop.f32.mrb[0].mxu0
      %v1321 = vadd.f32 %v375, %v1320
      %v1322 = vpop.f32.mrb[0].mxu0
      %v1323 = vpop.f32.mrb[0].mxu0
      %v1324 = vadd.f32 %v375, %v1323
      %v1325 = vpop.f32.mrb[0].mxu0
      %1326 = vmatprep.mubr.bf16.mxu0 %v785
      %1327 = vmatmul.mubr.bf16.gmra.mrb[0].mxu0 %v784
      %v1328 = vpop.f32.mrb[0].mxu0
      %v1329 = vadd.f32 %v375, %v1328
      %v1330 = vpop.f32.mrb[0].mxu0
      %v1331 = vpop.f32.mrb[0].mxu0
      %v1332 = vadd.f32 %v375, %v1331
      %v1333 = vpop.f32.mrb[0].mxu0
      %1334 = vmatprep.mubr.bf16.mxu0 %v788
      %1335 = vmatmul.mubr.bf16.gmra.mrb[0].mxu0 %v787
      %v1336 = vpop.f32.mrb[0].mxu0
      %v1337 = vadd.f32 %v375, %v1336
      %v1338 = vpop.f32.mrb[0].mxu0
      %v1339 = vpop.f32.mrb[0].mxu0
      %v1340 = vadd.f32 %v375, %v1339
      %v1341 = vpop.f32.mrb[0].mxu0
      %1342 = vmatprep.mubr.bf16.mxu0 %v791
      %1343 = vmatmul.mubr.bf16.gmra.mrb[0].mxu0 %v790
      %v1344 = vpop.f32.mrb[0].mxu0
      %v1345 = vadd.f32 %v375, %v1344
      %v1346 = vpop.f32.mrb[0].mxu0
      %v1347 = vpop.f32.mrb[0].mxu0
      %v1348 = vadd.f32 %v375, %v1347
      %v1349 = vpop.f32.mrb[0].mxu0
      %1350 = vdwg.mxu0
      %1351 = vmatprep.subr.bf16.mxu0 0
      %1352 = vmatpush1.bf16.msra.mxu0 %v945
      %1353 = vmatprep.subr.bf16.mxu0 0
      %1354 = vmatpush1.bf16.msra.mxu0 %v946
      %1355 = vmatprep.subr.bf16.mxu0 0
      %1356 = vmatpush1.bf16.msra.mxu0 0
      %1357 = vmatprep.subr.bf16.mxu0 0
      %1358 = vmatpush1.bf16.msra.mxu0 0
      %1359 = vmatprep.subr.bf16.mxu0 0
      %1360 = vmatpush1.bf16.msra.mxu0 0
      %1361 = vmatprep.subr.bf16.mxu0 0
      %1362 = vmatpush1.bf16.msra.mxu0 0
      %1363 = vmatprep.subr.bf16.mxu0 0
      %1364 = vmatpush1.bf16.msra.mxu0 0
      %1365 = vmatprep.subr.bf16.mxu0 0
      %1366 = vmatpush1.bf16.msra.mxu0 0
      %1367 = vmatprep.subr.bf16.mxu0 0
      %1368 = vmatpush1.bf16.msra.mxu0 0
      %1369 = vmatprep.subr.bf16.mxu0 0
      %1370 = vmatpush1.bf16.msra.mxu0 0
      %1371 = vmatprep.subr.bf16.mxu0 0
      %1372 = vmatpush1.bf16.msra.mxu0 0
      %1373 = vmatprep.subr.bf16.mxu0 0
      %1374 = vmatpush1.bf16.msra.mxu0 0
      %1375 = vmatprep.subr.bf16.mxu0 0
      %1376 = vmatpush1.bf16.msra.mxu0 0
      %1377 = vmatprep.subr.bf16.mxu0 0
      %1378 = vmatpush1.bf16.msra.mxu0 0
      %1379 = vmatprep.subr.bf16.mxu0 0
      %1380 = vmatpush1.bf16.msra.mxu0 0
      %1381 = vmatprep.subr.bf16.mxu0 0
      %1382 = vmatpush1.bf16.msra.mxu0 0
      %1383 = vmatprep.mubr.bf16.mxu0 0
      %1384 = vmatmul.mubr.bf16.gmra.mrb[0].mxu0 %v967
      %v1385 = vpop.f32.mrb[0].mxu0
      %v1386 = vadd.f32 %v1097, %v1385
      %v1387 = vpop.f32.mrb[0].mxu0
      %v1388 = vpop.f32.mrb[0].mxu0
      %v1389 = vadd.f32 %v1100, %v1388
      %v1390 = vpop.f32.mrb[0].mxu0
      %1391 = vmatprep.mubr.bf16.mxu0 0
      %1392 = vmatmul.mubr.bf16.gmra.mrb[0].mxu0 %v970
      %v1393 = vpop.f32.mrb[0].mxu0
      %v1394 = vadd.f32 %v1105, %v1393
      %v1395 = vpop.f32.mrb[0].mxu0
      %v1396 = vpop.f32.mrb[0].mxu0
      %v1397 = vadd.f32 %v1108, %v1396
      %v1398 = vpop.f32.mrb[0].mxu0
      %1399 = vmatprep.mubr.bf16.mxu0 0
      %1400 = vmatmul.mubr.bf16.gmra.mrb[0].mxu0 %v973
      %v1401 = vpop.f32.mrb[0].mxu0
      %v1402 = vadd.f32 %v1113, %v1401
      %v1403 = vpop.f32.mrb[0].mxu0
      %v1404 = vpop.f32.mrb[0].mxu0
      %v1405 = vadd.f32 %v1116, %v1404
      %v1406 = vpop.f32.mrb[0].mxu0
      %1407 = vmatprep.mubr.bf16.mxu0 0
      %1408 = vmatmul.mubr.bf16.gmra.mrb[0].mxu0 %v976
      %v1409 = vpop.f32.mrb[0].mxu0
      %v1410 = vadd.f32 %v1121, %v1409
      %v1411 = vpop.f32.mrb[0].mxu0
      %v1412 = vpop.f32.mrb[0].mxu0
      %v1413 = vadd.f32 %v1124, %v1412
      %v1414 = vpop.f32.mrb[0].mxu0
      %1415 = vmatprep.mubr.bf16.mxu0 0
      %1416 = vmatmul.mubr.bf16.gmra.mrb[0].mxu0 %v979
      %v1417 = vpop.f32.mrb[0].mxu0
      %v1418 = vadd.f32 %v1129, %v1417
      %v1419 = vpop.f32.mrb[0].mxu0
      %v1420 = vpop.f32.mrb[0].mxu0
      %v1421 = vadd.f32 %v1132, %v1420
      %v1422 = vpop.f32.mrb[0].mxu0
      %1423 = vmatprep.mubr.bf16.mxu0 0
      %1424 = vmatmul.mubr.bf16.gmra.mrb[0].mxu0 %v982
      %v1425 = vpop.f32.mrb[0].mxu0
      %v1426 = vadd.f32 %v1137, %v1425
      %v1427 = vpop.f32.mrb[0].mxu0
      %v1428 = vpop.f32.mrb[0].mxu0
      %v1429 = vadd.f32 %v1140, %v1428
      %v1430 = vpop.f32.mrb[0].mxu0
      %1431 = vmatprep.mubr.bf16.mxu0 0
      %1432 = vmatmul.mubr.bf16.gmra.mrb[0].mxu0 %v985
      %v1433 = vpop.f32.mrb[0].mxu0
      %v1434 = vadd.f32 %v1145, %v1433
      %v1435 = vpop.f32.mrb[0].mxu0
      %v1436 = vpop.f32.mrb[0].mxu0
      %v1437 = vadd.f32 %v1148, %v1436
      %v1438 = vpop.f32.mrb[0].mxu0
      %1439 = vmatprep.mubr.bf16.mxu0 0
      %1440 = vmatmul.mubr.bf16.gmra.mrb[0].mxu0 %v988
      %v1441 = vpop.f32.mrb[0].mxu0
      %v1442 = vadd.f32 %v1153, %v1441
      %v1443 = vpop.f32.mrb[0].mxu0
      %v1444 = vpop.f32.mrb[0].mxu0
      %v1445 = vadd.f32 %v1156, %v1444
      %v1446 = vpop.f32.mrb[0].mxu0
      %1447 = vmatprep.mubr.bf16.mxu0 0
      %1448 = vmatmul.mubr.bf16.gmra.mrb[0].mxu0 %v991
      %v1449 = vpop.f32.mrb[0].mxu0
      %v1450 = vadd.f32 %v1161, %v1449
      %v1451 = vpop.f32.mrb[0].mxu0
      %v1452 = vpop.f32.mrb[0].mxu0
      %v1453 = vadd.f32 %v1164, %v1452
      %v1454 = vpop.f32.mrb[0].mxu0
      %1455 = vmatprep.mubr.bf16.mxu0 0
      %1456 = vmatmul.mubr.bf16.gmra.mrb[0].mxu0 %v994
      %v1457 = vpop.f32.mrb[0].mxu0
      %v1458 = vadd.f32 %v1169, %v1457
      %v1459 = vpop.f32.mrb[0].mxu0
      %v1460 = vpop.f32.mrb[0].mxu0
      %v1461 = vadd.f32 %v1172, %v1460
      %v1462 = vpop.f32.mrb[0].mxu0
      %1463 = vmatprep.mubr.bf16.mxu0 0
      %1464 = vmatmul.mubr.bf16.gmra.mrb[0].mxu0 %v997
      %v1465 = vpop.f32.mrb[0].mxu0
      %v1466 = vadd.f32 %v1177, %v1465
      %v1467 = vpop.f32.mrb[0].mxu0
      %v1468 = vpop.f32.mrb[0].mxu0
      %v1469 = vadd.f32 %v1180, %v1468
      %v1470 = vpop.f32.mrb[0].mxu0
      %1471 = vmatprep.mubr.bf16.mxu0 0
      %1472 = vmatmul.mubr.bf16.gmra.mrb[0].mxu0 %v1000
      %v1473 = vpop.f32.mrb[0].mxu0
      %v1474 = vadd.f32 %v1185, %v1473
      %v1475 = vpop.f32.mrb[0].mxu0
      %v1476 = vpop.f32.mrb[0].mxu0
      %v1477 = vadd.f32 %v1188, %v1476
      %v1478 = vpop.f32.mrb[0].mxu0
      %1479 = vmatprep.mubr.bf16.mxu0 0
      %1480 = vmatmul.mubr.bf16.gmra.mrb[0].mxu0 %v1003
      %v1481 = vpop.f32.mrb[0].mxu0
      %v1482 = vadd.f32 %v1193, %v1481
      %v1483 = vpop.f32.mrb[0].mxu0
      %v1484 = vpop.f32.mrb[0].mxu0
      %v1485 = vadd.f32 %v1196, %v1484
      %v1486 = vpop.f32.mrb[0].mxu0
      %1487 = vmatprep.mubr.bf16.mxu0 0
      %1488 = vmatmul.mubr.bf16.gmra.mrb[0].mxu0 %v1006
      %v1489 = vpop.f32.mrb[0].mxu0
      %v1490 = vadd.f32 %v1201, %v1489
      %v1491 = vpop.f32.mrb[0].mxu0
      %v1492 = vpop.f32.mrb[0].mxu0
      %v1493 = vadd.f32 %v1204, %v1492
      %v1494 = vpop.f32.mrb[0].mxu0
      %1495 = vmatprep.mubr.bf16.mxu0 0
      %1496 = vmatmul.mubr.bf16.gmra.mrb[0].mxu0 %v1009
      %v1497 = vpop.f32.mrb[0].mxu0
      %v1498 = vadd.f32 %v1209, %v1497
      %v1499 = vpop.f32.mrb[0].mxu0
      %v1500 = vpop.f32.mrb[0].mxu0
      %v1501 = vadd.f32 %v1212, %v1500
      %v1502 = vpop.f32.mrb[0].mxu0
      %1503 = vmatprep.mubr.bf16.mxu0 0
      %1504 = vmatmul.mubr.bf16.gmra.mrb[0].mxu0 %v1012
      %v1505 = vpop.f32.mrb[0].mxu0
      %v1506 = vadd.f32 %v1217, %v1505
      %v1507 = vpop.f32.mrb[0].mxu0
      %v1508 = vpop.f32.mrb[0].mxu0
      %v1509 = vadd.f32 %v1220, %v1508
      %v1510 = vpop.f32.mrb[0].mxu0
      %1511 = vmatprep.mubr.bf16.mxu0 0
      %1512 = vmatmul.mubr.bf16.gmra.mrb[0].mxu0 %v1015
      %v1513 = vpop.f32.mrb[0].mxu0
      %v1514 = vadd.f32 %v1225, %v1513
      %v1515 = vpop.f32.mrb[0].mxu0
      %v1516 = vpop.f32.mrb[0].mxu0
      %v1517 = vadd.f32 %v1228, %v1516
      %v1518 = vpop.f32.mrb[0].mxu0
      %1519 = vmatprep.mubr.bf16.mxu0 0
      %1520 = vmatmul.mubr.bf16.gmra.mrb[0].mxu0 %v1018
      %v1521 = vpop.f32.mrb[0].mxu0
      %v1522 = vadd.f32 %v1233, %v1521
      %v1523 = vpop.f32.mrb[0].mxu0
      %v1524 = vpop.f32.mrb[0].mxu0
      %v1525 = vadd.f32 %v1236, %v1524
      %v1526 = vpop.f32.mrb[0].mxu0
      %1527 = vmatprep.mubr.bf16.mxu0 0
      %1528 = vmatmul.mubr.bf16.gmra.mrb[0].mxu0 %v1021
      %v1529 = vpop.f32.mrb[0].mxu0
      %v1530 = vadd.f32 %v1241, %v1529
      %v1531 = vpop.f32.mrb[0].mxu0
      %v1532 = vpop.f32.mrb[0].mxu0
      %v1533 = vadd.f32 %v1244, %v1532
      %v1534 = vpop.f32.mrb[0].mxu0
      %1535 = vmatprep.mubr.bf16.mxu0 0
      %1536 = vmatmul.mubr.bf16.gmra.mrb[0].mxu0 %v1024
      %v1537 = vpop.f32.mrb[0].mxu0
      %v1538 = vadd.f32 %v1249, %v1537
      %v1539 = vpop.f32.mrb[0].mxu0
      %v1540 = vpop.f32.mrb[0].mxu0
      %v1541 = vadd.f32 %v1252, %v1540
      %v1542 = vpop.f32.mrb[0].mxu0
      %1543 = vmatprep.mubr.bf16.mxu0 0
      %1544 = vmatmul.mubr.bf16.gmra.mrb[0].mxu0 %v1027
      %v1545 = vpop.f32.mrb[0].mxu0
      %v1546 = vadd.f32 %v1257, %v1545
      %v1547 = vpop.f32.mrb[0].mxu0
      %v1548 = vpop.f32.mrb[0].mxu0
      %v1549 = vadd.f32 %v1260, %v1548
      %v1550 = vpop.f32.mrb[0].mxu0
      %1551 = vmatprep.mubr.bf16.mxu0 0
      %1552 = vmatmul.mubr.bf16.gmra.mrb[0].mxu0 %v1030
      %v1553 = vpop.f32.mrb[0].mxu0
      %v1554 = vadd.f32 %v1265, %v1553
      %v1555 = vpop.f32.mrb[0].mxu0
      %v1556 = vpop.f32.mrb[0].mxu0
      %v1557 = vadd.f32 %v1268, %v1556
      %v1558 = vpop.f32.mrb[0].mxu0
      %1559 = vmatprep.mubr.bf16.mxu0 0
      %1560 = vmatmul.mubr.bf16.gmra.mrb[0].mxu0 %v1033
      %v1561 = vpop.f32.mrb[0].mxu0
      %v1562 = vadd.f32 %v1273, %v1561
      %v1563 = vpop.f32.mrb[0].mxu0
      %v1564 = vpop.f32.mrb[0].mxu0
      %v1565 = vadd.f32 %v1276, %v1564
      %v1566 = vpop.f32.mrb[0].mxu0
      %1567 = vmatprep.mubr.bf16.mxu0 0
      %1568 = vmatmul.mubr.bf16.gmra.mrb[0].mxu0 %v1036
      %v1569 = vpop.f32.mrb[0].mxu0
      %v1570 = vadd.f32 %v1281, %v1569
      %v1571 = vpop.f32.mrb[0].mxu0
      %v1572 = vpop.f32.mrb[0].mxu0
      %v1573 = vadd.f32 %v1284, %v1572
      %v1574 = vpop.f32.mrb[0].mxu0
      %1575 = vmatprep.mubr.bf16.mxu0 0
      %1576 = vmatmul.mubr.bf16.gmra.mrb[0].mxu0 %v1039
      %v1577 = vpop.f32.mrb[0].mxu0
      %v1578 = vadd.f32 %v1289, %v1577
      %v1579 = vpop.f32.mrb[0].mxu0
      %v1580 = vpop.f32.mrb[0].mxu0
      %v1581 = vadd.f32 %v1292, %v1580
      %v1582 = vpop.f32.mrb[0].mxu0
      %1583 = vmatprep.mubr.bf16.mxu0 0
      %1584 = vmatmul.mubr.bf16.gmra.mrb[0].mxu0 %v1042
      %v1585 = vpop.f32.mrb[0].mxu0
      %v1586 = vadd.f32 %v1297, %v1585
      %v1587 = vpop.f32.mrb[0].mxu0
      %v1588 = vpop.f32.mrb[0].mxu0
      %v1589 = vadd.f32 %v1300, %v1588
      %v1590 = vpop.f32.mrb[0].mxu0
      %1591 = vmatprep.mubr.bf16.mxu0 0
      %1592 = vmatmul.mubr.bf16.gmra.mrb[0].mxu0 %v1045
      %v1593 = vpop.f32.mrb[0].mxu0
      %v1594 = vadd.f32 %v1305, %v1593
      %v1595 = vpop.f32.mrb[0].mxu0
      %v1596 = vpop.f32.mrb[0].mxu0
      %v1597 = vadd.f32 %v1308, %v1596
      %v1598 = vpop.f32.mrb[0].mxu0
      %1599 = vmatprep.mubr.bf16.mxu0 0
      %1600 = vmatmul.mubr.bf16.gmra.mrb[0].mxu0 %v1048
      %v1601 = vpop.f32.mrb[0].mxu0
      %v1602 = vadd.f32 %v1313, %v1601
      %v1603 = vpop.f32.mrb[0].mxu0
      %v1604 = vpop.f32.mrb[0].mxu0
      %v1605 = vadd.f32 %v1316, %v1604
      %v1606 = vpop.f32.mrb[0].mxu0
      %1607 = vmatprep.mubr.bf16.mxu0 0
      %1608 = vmatmul.mubr.bf16.gmra.mrb[0].mxu0 %v1051
      %v1609 = vpop.f32.mrb[0].mxu0
      %v1610 = vadd.f32 %v1321, %v1609
      %v1611 = vpop.f32.mrb[0].mxu0
      %v1612 = vpop.f32.mrb[0].mxu0
      %v1613 = vadd.f32 %v1324, %v1612
      %v1614 = vpop.f32.mrb[0].mxu0
      %1615 = vmatprep.mubr.bf16.mxu0 0
      %1616 = vmatmul.mubr.bf16.gmra.mrb[0].mxu0 %v1054
      %v1617 = vpop.f32.mrb[0].mxu0
      %v1618 = vadd.f32 %v1329, %v1617
      %v1619 = vpop.f32.mrb[0].mxu0
      %v1620 = vpop.f32.mrb[0].mxu0
      %v1621 = vadd.f32 %v1332, %v1620
      %v1622 = vpop.f32.mrb[0].mxu0
      %1623 = vmatprep.mubr.bf16.mxu0 0
      %1624 = vmatmul.mubr.bf16.gmra.mrb[0].mxu0 %v1057
      %v1625 = vpop.f32.mrb[0].mxu0
      %v1626 = vadd.f32 %v1337, %v1625
      %v1627 = vpop.f32.mrb[0].mxu0
      %v1628 = vpop.f32.mrb[0].mxu0
      %v1629 = vadd.f32 %v1340, %v1628
      %v1630 = vpop.f32.mrb[0].mxu0
      %1631 = vmatprep.mubr.bf16.mxu0 0
      %1632 = vmatmul.mubr.bf16.gmra.mrb[0].mxu0 %v1060
      %v1633 = vpop.f32.mrb[0].mxu0
      %v1634 = vadd.f32 %v1345, %v1633
      %v1635 = vpop.f32.mrb[0].mxu0
      %v1636 = vpop.f32.mrb[0].mxu0
      %v1637 = vadd.f32 %v1348, %v1636
      %v1638 = vpop.f32.mrb[0].mxu0
      %1639 = vdwg.mxu0
      %vm1640 = vcmp.ge.f32.partialorder %v1386, 0.0
      %vm1641 = vcmp.ge.f32.partialorder %v1389, 0.0
      %vm1642 = vcmp.ge.f32.partialorder %v1394, 0.0
      %vm1643 = vcmp.ge.f32.partialorder %v1397, 0.0
      %vm1644 = vcmp.ge.f32.partialorder %v1402, 0.0
      %vm1645 = vcmp.ge.f32.partialorder %v1405, 0.0
      %vm1646 = vcmp.ge.f32.partialorder %v1410, 0.0
      %vm1647 = vcmp.ge.f32.partialorder %v1413, 0.0
      %vm1648 = vcmp.ge.f32.partialorder %v1418, 0.0
      %vm1649 = vcmp.ge.f32.partialorder %v1421, 0.0
      %vm1650 = vcmp.ge.f32.partialorder %v1426, 0.0
      %vm1651 = vcmp.ge.f32.partialorder %v1429, 0.0
      %vm1652 = vcmp.ge.f32.partialorder %v1434, 0.0
      %vm1653 = vcmp.ge.f32.partialorder %v1437, 0.0
      %vm1654 = vcmp.ge.f32.partialorder %v1442, 0.0
      %vm1655 = vcmp.ge.f32.partialorder %v1445, 0.0
      %vm1656 = vcmp.ge.f32.partialorder %v1450, 0.0
      %vm1657 = vcmp.ge.f32.partialorder %v1453, 0.0
      %vm1658 = vcmp.ge.f32.partialorder %v1458, 0.0
      %vm1659 = vcmp.ge.f32.partialorder %v1461, 0.0
      %vm1660 = vcmp.ge.f32.partialorder %v1466, 0.0
      %vm1661 = vcmp.ge.f32.partialorder %v1469, 0.0
      %vm1662 = vcmp.ge.f32.partialorder %v1474, 0.0
      %vm1663 = vcmp.ge.f32.partialorder %v1477, 0.0
      %vm1664 = vcmp.ge.f32.partialorder %v1482, 0.0
      %vm1665 = vcmp.ge.f32.partialorder %v1485, 0.0
      %vm1666 = vcmp.ge.f32.partialorder %v1490, 0.0
      %vm1667 = vcmp.ge.f32.partialorder %v1493, 0.0
      %vm1668 = vcmp.ge.f32.partialorder %v1498, 0.0
      %vm1669 = vcmp.ge.f32.partialorder %v1501, 0.0
      %vm1670 = vcmp.ge.f32.partialorder %v1506, 0.0
      %vm1671 = vcmp.ge.f32.partialorder %v1509, 0.0
      %vm1672 = vcmp.ge.f32.partialorder %v1514, 0.0
      %vm1673 = vcmp.ge.f32.partialorder %v1517, 0.0
      %vm1674 = vcmp.ge.f32.partialorder %v1522, 0.0
      %vm1675 = vcmp.ge.f32.partialorder %v1525, 0.0
      %vm1676 = vcmp.ge.f32.partialorder %v1530, 0.0
      %vm1677 = vcmp.ge.f32.partialorder %v1533, 0.0
      %vm1678 = vcmp.ge.f32.partialorder %v1538, 0.0
      %vm1679 = vcmp.ge.f32.partialorder %v1541, 0.0
      %vm1680 = vcmp.ge.f32.partialorder %v1546, 0.0
      %vm1681 = vcmp.ge.f32.partialorder %v1549, 0.0
      %vm1682 = vcmp.ge.f32.partialorder %v1554, 0.0
      %vm1683 = vcmp.ge.f32.partialorder %v1557, 0.0
      %vm1684 = vcmp.ge.f32.partialorder %v1562, 0.0
      %vm1685 = vcmp.ge.f32.partialorder %v1565, 0.0
      %vm1686 = vcmp.ge.f32.partialorder %v1570, 0.0
      %vm1687 = vcmp.ge.f32.partialorder %v1573, 0.0
      %vm1688 = vcmp.ge.f32.partialorder %v1578, 0.0
      %vm1689 = vcmp.ge.f32.partialorder %v1581, 0.0
      %vm1690 = vcmp.ge.f32.partialorder %v1586, 0.0
      %vm1691 = vcmp.ge.f32.partialorder %v1589, 0.0
      %vm1692 = vcmp.ge.f32.partialorder %v1594, 0.0
      %vm1693 = vcmp.ge.f32.partialorder %v1597, 0.0
      %vm1694 = vcmp.ge.f32.partialorder %v1602, 0.0
      %vm1695 = vcmp.ge.f32.partialorder %v1605, 0.0
      %vm1696 = vcmp.ge.f32.partialorder %v1610, 0.0
      %vm1697 = vcmp.ge.f32.partialorder %v1613, 0.0
      %vm1698 = vcmp.ge.f32.partialorder %v1618, 0.0
      %vm1699 = vcmp.ge.f32.partialorder %v1621, 0.0
      %vm1700 = vcmp.ge.f32.partialorder %v1626, 0.0
      %vm1701 = vcmp.ge.f32.partialorder %v1629, 0.0
      %vm1702 = vcmp.ge.f32.partialorder %v1634, 0.0
      %vm1703 = vcmp.ge.f32.partialorder %v1637, 0.0
      %s1704 = sld [smem:[#allocation2]]
      %v1705 = vstv %s1704
      %v1706 = vmul.f32 %v1705, %v1386
      %v1707 = vmul.f32 %v1705, %v1389
      %v1708 = vmul.f32 %v1705, %v1394
      %v1709 = vmul.f32 %v1705, %v1397
      %v1710 = vmul.f32 %v1705, %v1402
      %v1711 = vmul.f32 %v1705, %v1405
      %v1712 = vmul.f32 %v1705, %v1410
      %v1713 = vmul.f32 %v1705, %v1413
      %v1714 = vmul.f32 %v1705, %v1418
      %v1715 = vmul.f32 %v1705, %v1421
      %v1716 = vmul.f32 %v1705, %v1426
      %v1717 = vmul.f32 %v1705, %v1429
      %v1718 = vmul.f32 %v1705, %v1434
      %v1719 = vmul.f32 %v1705, %v1437
      %v1720 = vmul.f32 %v1705, %v1442
      %v1721 = vmul.f32 %v1705, %v1445
      %v1722 = vmul.f32 %v1705, %v1450
      %v1723 = vmul.f32 %v1705, %v1453
      %v1724 = vmul.f32 %v1705, %v1458
      %v1725 = vmul.f32 %v1705, %v1461
      %v1726 = vmul.f32 %v1705, %v1466
      %v1727 = vmul.f32 %v1705, %v1469
      %v1728 = vmul.f32 %v1705, %v1474
      %v1729 = vmul.f32 %v1705, %v1477
      %v1730 = vmul.f32 %v1705, %v1482
      %v1731 = vmul.f32 %v1705, %v1485
      %v1732 = vmul.f32 %v1705, %v1490
      %v1733 = vmul.f32 %v1705, %v1493
      %v1734 = vmul.f32 %v1705, %v1498
      %v1735 = vmul.f32 %v1705, %v1501
      %v1736 = vmul.f32 %v1705, %v1506
      %v1737 = vmul.f32 %v1705, %v1509
      %v1738 = vmul.f32 %v1705, %v1514
      %v1739 = vmul.f32 %v1705, %v1517
      %v1740 = vmul.f32 %v1705, %v1522
      %v1741 = vmul.f32 %v1705, %v1525
      %v1742 = vmul.f32 %v1705, %v1530
      %v1743 = vmul.f32 %v1705, %v1533
      %v1744 = vmul.f32 %v1705, %v1538
      %v1745 = vmul.f32 %v1705, %v1541
      %v1746 = vmul.f32 %v1705, %v1546
      %v1747 = vmul.f32 %v1705, %v1549
      %v1748 = vmul.f32 %v1705, %v1554
      %v1749 = vmul.f32 %v1705, %v1557
      %v1750 = vmul.f32 %v1705, %v1562
      %v1751 = vmul.f32 %v1705, %v1565
      %v1752 = vmul.f32 %v1705, %v1570
      %v1753 = vmul.f32 %v1705, %v1573
      %v1754 = vmul.f32 %v1705, %v1578
      %v1755 = vmul.f32 %v1705, %v1581
      %v1756 = vmul.f32 %v1705, %v1586
      %v1757 = vmul.f32 %v1705, %v1589
      %v1758 = vmul.f32 %v1705, %v1594
      %v1759 = vmul.f32 %v1705, %v1597
      %v1760 = vmul.f32 %v1705, %v1602
      %v1761 = vmul.f32 %v1705, %v1605
      %v1762 = vmul.f32 %v1705, %v1610
      %v1763 = vmul.f32 %v1705, %v1613
      %v1764 = vmul.f32 %v1705, %v1618
      %v1765 = vmul.f32 %v1705, %v1621
      %v1766 = vmul.f32 %v1705, %v1626
      %v1767 = vmul.f32 %v1705, %v1629
      %v1768 = vmul.f32 %v1705, %v1634
      %v1769 = vmul.f32 %v1705, %v1637
      %v1770 = vsel %vm1640, %v1386, %v1706
      %v1771 = vsel %vm1641, %v1389, %v1707
      %v1772 = vsel %vm1642, %v1394, %v1708
      %v1773 = vsel %vm1643, %v1397, %v1709
      %v1774 = vsel %vm1644, %v1402, %v1710
      %v1775 = vsel %vm1645, %v1405, %v1711
      %v1776 = vsel %vm1646, %v1410, %v1712
      %v1777 = vsel %vm1647, %v1413, %v1713
      %v1778 = vsel %vm1648, %v1418, %v1714
      %v1779 = vsel %vm1649, %v1421, %v1715
      %v1780 = vsel %vm1650, %v1426, %v1716
      %v1781 = vsel %vm1651, %v1429, %v1717
      %v1782 = vsel %vm1652, %v1434, %v1718
      %v1783 = vsel %vm1653, %v1437, %v1719
      %v1784 = vsel %vm1654, %v1442, %v1720
      %v1785 = vsel %vm1655, %v1445, %v1721
      %v1786 = vsel %vm1656, %v1450, %v1722
      %v1787 = vsel %vm1657, %v1453, %v1723
      %v1788 = vsel %vm1658, %v1458, %v1724
      %v1789 = vsel %vm1659, %v1461, %v1725
      %v1790 = vsel %vm1660, %v1466, %v1726
      %v1791 = vsel %vm1661, %v1469, %v1727
      %v1792 = vsel %vm1662, %v1474, %v1728
      %v1793 = vsel %vm1663, %v1477, %v1729
      %v1794 = vsel %vm1664, %v1482, %v1730
      %v1795 = vsel %vm1665, %v1485, %v1731
      %v1796 = vsel %vm1666, %v1490, %v1732
      %v1797 = vsel %vm1667, %v1493, %v1733
      %v1798 = vsel %vm1668, %v1498, %v1734
      %v1799 = vsel %vm1669, %v1501, %v1735
      %v1800 = vsel %vm1670, %v1506, %v1736
      %v1801 = vsel %vm1671, %v1509, %v1737
      %v1802 = vsel %vm1672, %v1514, %v1738
      %v1803 = vsel %vm1673, %v1517, %v1739
      %v1804 = vsel %vm1674, %v1522, %v1740
      %v1805 = vsel %vm1675, %v1525, %v1741
      %v1806 = vsel %vm1676, %v1530, %v1742
      %v1807 = vsel %vm1677, %v1533, %v1743
      %v1808 = vsel %vm1678, %v1538, %v1744
      %v1809 = vsel %vm1679, %v1541, %v1745
      %v1810 = vsel %vm1680, %v1546, %v1746
      %v1811 = vsel %vm1681, %v1549, %v1747
      %v1812 = vsel %vm1682, %v1554, %v1748
      %v1813 = vsel %vm1683, %v1557, %v1749
      %v1814 = vsel %vm1684, %v1562, %v1750
      %v1815 = vsel %vm1685, %v1565, %v1751
      %v1816 = vsel %vm1686, %v1570, %v1752
      %v1817 = vsel %vm1687, %v1573, %v1753
      %v1818 = vsel %vm1688, %v1578, %v1754
      %v1819 = vsel %vm1689, %v1581, %v1755
      %v1820 = vsel %vm1690, %v1586, %v1756
      %v1821 = vsel %vm1691, %v1589, %v1757
      %v1822 = vsel %vm1692, %v1594, %v1758
      %v1823 = vsel %vm1693, %v1597, %v1759
      %v1824 = vsel %vm1694, %v1602, %v1760
      %v1825 = vsel %vm1695, %v1605, %v1761
      %v1826 = vsel %vm1696, %v1610, %v1762
      %v1827 = vsel %vm1697, %v1613, %v1763
      %v1828 = vsel %vm1698, %v1618, %v1764
      %v1829 = vsel %vm1699, %v1621, %v1765
      %v1830 = vsel %vm1700, %v1626, %v1766
      %v1831 = vsel %vm1701, %v1629, %v1767
      %v1832 = vsel %vm1702, %v1634, %v1768
      %v1833 = vsel %vm1703, %v1637, %v1769
      %v1834 = vpack.c.bf16 %v1771, %v1770
      %v1835 = vpack.c.bf16 %v1773, %v1772
      %v1836 = vpack.c.bf16 %v1775, %v1774
      %v1837 = vpack.c.bf16 %v1777, %v1776
      %v1838 = vpack.c.bf16 %v1779, %v1778
      %v1839 = vpack.c.bf16 %v1781, %v1780
      %v1840 = vpack.c.bf16 %v1783, %v1782
      %v1841 = vpack.c.bf16 %v1785, %v1784
      %v1842 = vpack.c.bf16 %v1787, %v1786
      %v1843 = vpack.c.bf16 %v1789, %v1788
      %v1844 = vpack.c.bf16 %v1791, %v1790
      %v1845 = vpack.c.bf16 %v1793, %v1792
      %v1846 = vpack.c.bf16 %v1795, %v1794
      %v1847 = vpack.c.bf16 %v1797, %v1796
      %v1848 = vpack.c.bf16 %v1799, %v1798
      %v1849 = vpack.c.bf16 %v1801, %v1800
      %v1850 = vpack.c.bf16 %v1803, %v1802
      %v1851 = vpack.c.bf16 %v1805, %v1804
      %v1852 = vpack.c.bf16 %v1807, %v1806
      %v1853 = vpack.c.bf16 %v1809, %v1808
      %v1854 = vpack.c.bf16 %v1811, %v1810
      %v1855 = vpack.c.bf16 %v1813, %v1812
      %v1856 = vpack.c.bf16 %v1815, %v1814
      %v1857 = vpack.c.bf16 %v1817, %v1816
      %v1858 = vpack.c.bf16 %v1819, %v1818
      %v1859 = vpack.c.bf16 %v1821, %v1820
      %v1860 = vpack.c.bf16 %v1823, %v1822
      %v1861 = vpack.c.bf16 %v1825, %v1824
      %v1862 = vpack.c.bf16 %v1827, %v1826
      %v1863 = vpack.c.bf16 %v1829, %v1828
      %v1864 = vpack.c.bf16 %v1831, %v1830
      %v1865 = vpack.c.bf16 %v1833, %v1832
      %v1898 = vunpack.c.l.b16 %v1834
      %v1899 = vunpack.c.h.b16 %v1834
      %v1900 = vunpack.c.l.b16 %v1835
      %v1901 = vunpack.c.h.b16 %v1835
      %v1902 = vunpack.c.l.b16 %v1836
      %v1903 = vunpack.c.h.b16 %v1836
      %v1904 = vunpack.c.l.b16 %v1837
      %v1905 = vunpack.c.h.b16 %v1837
      %v1906 = vunpack.c.l.b16 %v1838
      %v1907 = vunpack.c.h.b16 %v1838
      %v1908 = vunpack.c.l.b16 %v1839
      %v1909 = vunpack.c.h.b16 %v1839
      %v1910 = vunpack.c.l.b16 %v1840
      %v1911 = vunpack.c.h.b16 %v1840
      %v1912 = vunpack.c.l.b16 %v1841
      %v1913 = vunpack.c.h.b16 %v1841
      %v1914 = vunpack.c.l.b16 %v1842
      %v1915 = vunpack.c.h.b16 %v1842
      %v1916 = vunpack.c.l.b16 %v1843
      %v1917 = vunpack.c.h.b16 %v1843
      %v1918 = vunpack.c.l.b16 %v1844
      %v1919 = vunpack.c.h.b16 %v1844
      %v1920 = vunpack.c.l.b16 %v1845
      %v1921 = vunpack.c.h.b16 %v1845
      %v1922 = vunpack.c.l.b16 %v1846
      %v1923 = vunpack.c.h.b16 %v1846
      %v1924 = vunpack.c.l.b16 %v1847
      %v1925 = vunpack.c.h.b16 %v1847
      %v1926 = vunpack.c.l.b16 %v1848
      %v1927 = vunpack.c.h.b16 %v1848
      %v1928 = vunpack.c.l.b16 %v1849
      %v1929 = vunpack.c.h.b16 %v1849
      %v1930 = vunpack.c.l.b16 %v1850
      %v1931 = vunpack.c.h.b16 %v1850
      %v1932 = vunpack.c.l.b16 %v1851
      %v1933 = vunpack.c.h.b16 %v1851
      %v1934 = vunpack.c.l.b16 %v1852
      %v1935 = vunpack.c.h.b16 %v1852
      %v1936 = vunpack.c.l.b16 %v1853
      %v1937 = vunpack.c.h.b16 %v1853
      %v1938 = vunpack.c.l.b16 %v1854
      %v1939 = vunpack.c.h.b16 %v1854
      %v1940 = vunpack.c.l.b16 %v1855
      %v1941 = vunpack.c.h.b16 %v1855
      %v1942 = vunpack.c.l.b16 %v1856
      %v1943 = vunpack.c.h.b16 %v1856
      %v1944 = vunpack.c.l.b16 %v1857
      %v1945 = vunpack.c.h.b16 %v1857
      %v1946 = vunpack.c.l.b16 %v1858
      %v1947 = vunpack.c.h.b16 %v1858
      %v1948 = vunpack.c.l.b16 %v1859
      %v1949 = vunpack.c.h.b16 %v1859
      %v1950 = vunpack.c.l.b16 %v1860
      %v1951 = vunpack.c.h.b16 %v1860
      %v1952 = vunpack.c.l.b16 %v1861
      %v1953 = vunpack.c.h.b16 %v1861
      %v1954 = vunpack.c.l.b16 %v1862
      %v1955 = vunpack.c.h.b16 %v1862
      %v1956 = vunpack.c.l.b16 %v1863
      %v1957 = vunpack.c.h.b16 %v1863
      %v1958 = vunpack.c.l.b16 %v1864
      %v1959 = vunpack.c.h.b16 %v1864
      %v1960 = vunpack.c.l.b16 %v1865
      %v1961 = vunpack.c.h.b16 %v1865
      %v1962 = vpack.c.b16 %v1898, %v1898
      %v1963 = vpack.c.b16 %v1899, %v1899
      %v1964 = vpack.c.b16 %v1900, %v1900
      %v1965 = vpack.c.b16 %v1901, %v1901
      %v1966 = vpack.c.b16 %v1902, %v1902
      %v1967 = vpack.c.b16 %v1903, %v1903
      %v1968 = vpack.c.b16 %v1904, %v1904
      %v1969 = vpack.c.b16 %v1905, %v1905
      %v1970 = vpack.c.b16 %v1906, %v1906
      %v1971 = vpack.c.b16 %v1907, %v1907
      %v1972 = vpack.c.b16 %v1908, %v1908
      %v1973 = vpack.c.b16 %v1909, %v1909
      %v1974 = vpack.c.b16 %v1910, %v1910
      %v1975 = vpack.c.b16 %v1911, %v1911
      %v1976 = vpack.c.b16 %v1912, %v1912
      %v1977 = vpack.c.b16 %v1913, %v1913
      %v1978 = vpack.c.b16 %v1914, %v1914
      %v1979 = vpack.c.b16 %v1915, %v1915
      %v1980 = vpack.c.b16 %v1916, %v1916
      %v1981 = vpack.c.b16 %v1917, %v1917
      %v1982 = vpack.c.b16 %v1918, %v1918
      %v1983 = vpack.c.b16 %v1919, %v1919
      %v1984 = vpack.c.b16 %v1920, %v1920
      %v1985 = vpack.c.b16 %v1921, %v1921
      %v1986 = vpack.c.b16 %v1922, %v1922
      %v1987 = vpack.c.b16 %v1923, %v1923
      %v1988 = vpack.c.b16 %v1924, %v1924
      %v1989 = vpack.c.b16 %v1925, %v1925
      %v1990 = vpack.c.b16 %v1926, %v1926
      %v1991 = vpack.c.b16 %v1927, %v1927
      %v1992 = vpack.c.b16 %v1928, %v1928
      %v1993 = vpack.c.b16 %v1929, %v1929
      %v1994 = vpack.c.b16 %v1930, %v1930
      %v1995 = vpack.c.b16 %v1931, %v1931
      %v1996 = vpack.c.b16 %v1932, %v1932
      %v1997 = vpack.c.b16 %v1933, %v1933
      %v1998 = vpack.c.b16 %v1934, %v1934
      %v1999 = vpack.c.b16 %v1935, %v1935
      %v2000 = vpack.c.b16 %v1936, %v1936
      %v2001 = vpack.c.b16 %v1937, %v1937
      %v2002 = vpack.c.b16 %v1938, %v1938
      %v2003 = vpack.c.b16 %v1939, %v1939
      %v2004 = vpack.c.b16 %v1940, %v1940
      %v2005 = vpack.c.b16 %v1941, %v1941
      %v2006 = vpack.c.b16 %v1942, %v1942
      %v2007 = vpack.c.b16 %v1943, %v1943
      %v2008 = vpack.c.b16 %v1944, %v1944
      %v2009 = vpack.c.b16 %v1945, %v1945
      %v2010 = vpack.c.b16 %v1946, %v1946
      %v2011 = vpack.c.b16 %v1947, %v1947
      %v2012 = vpack.c.b16 %v1948, %v1948
      %v2013 = vpack.c.b16 %v1949, %v1949
      %v2014 = vpack.c.b16 %v1950, %v1950
      %v2015 = vpack.c.b16 %v1951, %v1951
      %v2016 = vpack.c.b16 %v1952, %v1952
      %v2017 = vpack.c.b16 %v1953, %v1953
      %v2018 = vpack.c.b16 %v1954, %v1954
      %v2019 = vpack.c.b16 %v1955, %v1955
      %v2020 = vpack.c.b16 %v1956, %v1956
      %v2021 = vpack.c.b16 %v1957, %v1957
      %v2022 = vpack.c.b16 %v1958, %v1958
      %v2023 = vpack.c.b16 %v1959, %v1959
      %v2024 = vpack.c.b16 %v1960, %v1960
      %v2025 = vpack.c.b16 %v1961, %v1961
      %2090 = vst [vmem:[%s203] sm:$0xf] %v1962
      %2091 = vst [vmem:[%s203 + $0x4] sm:$0xf] %v1963
      %2092 = vst [vmem:[%s203 + $0x8] sm:$0xf] %v1964
      %2093 = vst [vmem:[%s203 + $0xc] sm:$0xf] %v1965
      %2094 = vst [vmem:[%s203 + $0x10] sm:$0xf] %v1966
      %2095 = vst [vmem:[%s203 + $0x14] sm:$0xf] %v1967
      %2096 = vst [vmem:[%s203 + $0x18] sm:$0xf] %v1968
      %2097 = vst [vmem:[%s203 + $0x1c] sm:$0xf] %v1969
      %2098 = vst [vmem:[%s203 + $0x20] sm:$0xf] %v1970
      %2099 = vst [vmem:[%s203 + $0x24] sm:$0xf] %v1971
      %2100 = vst [vmem:[%s203 + $0x28] sm:$0xf] %v1972
      %2101 = vst [vmem:[%s203 + $0x2c] sm:$0xf] %v1973
      %2102 = vst [vmem:[%s203 + $0x30] sm:$0xf] %v1974
      %2103 = vst [vmem:[%s203 + $0x34] sm:$0xf] %v1975
      %2104 = vst [vmem:[%s203 + $0x38] sm:$0xf] %v1976
      %2105 = vst [vmem:[%s203 + $0x3c] sm:$0xf] %v1977
      %2106 = vst [vmem:[%s203 + $0x40] sm:$0xf] %v1978
      %2107 = vst [vmem:[%s203 + $0x44] sm:$0xf] %v1979
      %2108 = vst [vmem:[%s203 + $0x48] sm:$0xf] %v1980
      %2109 = vst [vmem:[%s203 + $0x4c] sm:$0xf] %v1981
      %2110 = vst [vmem:[%s203 + $0x50] sm:$0xf] %v1982
      %2111 = vst [vmem:[%s203 + $0x54] sm:$0xf] %v1983
      %2112 = vst [vmem:[%s203 + $0x58] sm:$0xf] %v1984
      %2113 = vst [vmem:[%s203 + $0x5c] sm:$0xf] %v1985
      %2114 = vst [vmem:[%s203 + $0x60] sm:$0xf] %v1986
      %2115 = vst [vmem:[%s203 + $0x64] sm:$0xf] %v1987
      %2116 = vst [vmem:[%s203 + $0x68] sm:$0xf] %v1988
      %2117 = vst [vmem:[%s203 + $0x6c] sm:$0xf] %v1989
      %2118 = vst [vmem:[%s203 + $0x70] sm:$0xf] %v1990
      %2119 = vst [vmem:[%s203 + $0x74] sm:$0xf] %v1991
      %2120 = vst [vmem:[%s203 + $0x78] sm:$0xf] %v1992
      %2121 = vst [vmem:[%s203 + $0x7c] sm:$0xf] %v1993
      %2122 = vst [vmem:[%s203 + $0x80] sm:$0xf] %v1994
      %2123 = vst [vmem:[%s203 + $0x84] sm:$0xf] %v1995
      %2124 = vst [vmem:[%s203 + $0x88] sm:$0xf] %v1996
      %2125 = vst [vmem:[%s203 + $0x8c] sm:$0xf] %v1997
      %2126 = vst [vmem:[%s203 + $0x90] sm:$0xf] %v1998
      %2127 = vst [vmem:[%s203 + $0x94] sm:$0xf] %v1999
      %2128 = vst [vmem:[%s203 + $0x98] sm:$0xf] %v2000
      %2129 = vst [vmem:[%s203 + $0x9c] sm:$0xf] %v2001
      %2130 = vst [vmem:[%s203 + $0xa0] sm:$0xf] %v2002
      %2131 = vst [vmem:[%s203 + $0xa4] sm:$0xf] %v2003
      %2132 = vst [vmem:[%s203 + $0xa8] sm:$0xf] %v2004
      %2133 = vst [vmem:[%s203 + $0xac] sm:$0xf] %v2005
      %2134 = vst [vmem:[%s203 + $0xb0] sm:$0xf] %v2006
      %2135 = vst [vmem:[%s203 + $0xb4] sm:$0xf] %v2007
      %2136 = vst [vmem:[%s203 + $0xb8] sm:$0xf] %v2008
      %2137 = vst [vmem:[%s203 + $0xbc] sm:$0xf] %v2009
      %2138 = vst [vmem:[%s203 + $0xc0] sm:$0xf] %v2010
      %2139 = vst [vmem:[%s203 + $0xc4] sm:$0xf] %v2011
      %2140 = vst [vmem:[%s203 + $0xc8] sm:$0xf] %v2012
      %2141 = vst [vmem:[%s203 + $0xcc] sm:$0xf] %v2013
      %2142 = vst [vmem:[%s203 + $0xd0] sm:$0xf] %v2014
      %2143 = vst [vmem:[%s203 + $0xd4] sm:$0xf] %v2015
      %2144 = vst [vmem:[%s203 + $0xd8] sm:$0xf] %v2016
      %2145 = vst [vmem:[%s203 + $0xdc] sm:$0xf] %v2017
      %2146 = vst [vmem:[%s203 + $0xe0] sm:$0xf] %v2018
      %2147 = vst [vmem:[%s203 + $0xe4] sm:$0xf] %v2019
      %2148 = vst [vmem:[%s203 + $0xe8] sm:$0xf] %v2020
      %2149 = vst [vmem:[%s203 + $0xec] sm:$0xf] %v2021
      %2150 = vst [vmem:[%s203 + $0xf0] sm:$0xf] %v2022
      %2151 = vst [vmem:[%s203 + $0xf4] sm:$0xf] %v2023
      %2152 = vst [vmem:[%s203 + $0xf8] sm:$0xf] %v2024
      %2153 = vst [vmem:[%s203 + $0xfc] sm:$0xf] %v2025
      %s2154 = smul.u32 64, %s16
      %p2155 = scmp.lt.s32.totalorder %s2154, 255
      %s2156 = scalar_select %p2155, %s2154, 255
      %s2157 = smul.addr %s2156, 4
      %s2158 = scalar_lea.vmem %s4, %s2157
      // Predicated region
      $region37: #{_lambda_.9} parent=35 // pred_check
        %p2159 = pneg %p123
      $region38: #{_lambda_.9} parent=35 // pred_check_branch
        %2161 = sbr.rel (%p2159) target = $region40
      $region39: #{_lambda_.9} parent=35 // pred_region
        %s2162 = smul.u32 64, %s16
      $region40: #{_lambda_.9} parent=35 // pred_fallthru
        _
    $region36: #{_lambda_.9} parent=5 // pred_fallthru
      _
    %p2163 = scmp.le.s32.totalorder 2, %s11
    // Predicated region
    $region41: #{_lambda_.9} parent=5 // pred_check
      %p2164 = pneg %p2163
    $region42: #{_lambda_.9} parent=5 // pred_check_branch
      %2166 = sbr.rel (%p2164) target = $region44
    $region43: #{_lambda_.9} parent=5 // pred_region
      %s2167 = ssub.s32 %s11, 2
      // Predicated region
      $region45: #{_lambda_.9} parent=43 // pred_check
        %p2168 = pneg %p129
      $region46: #{_lambda_.9} parent=43 // pred_check_branch
        %2170 = sbr.rel (%p2168) target = $region48
      $region47: #{_lambda_.9} parent=43 // pred_region
        %s2171 = smul.u32 64, %s17
        %p2172 = scmp.lt.s32.totalorder %s2171, 255
        %s2173 = scalar_select %p2172, %s2171, 255
        %s2174 = smul.addr %s2173, 4
        %s2175 = scalar_lea.vmem %s4, %s2174
      $region48: #{_lambda_.9} parent=43 // pred_fallthru
        _
    $region44: #{_lambda_.9} parent=5 // pred_fallthru
      _
  $region6: #{_lambda_.9} parent=0 // loop_footer
    %s15 = sadd.s32 1, %s11
  $region7: #{_lambda_.9} parent=0 // loop_footer_branch
    %10 = sbr.rel target = $region3
  $region8: #{_lambda_.9} parent=0 // loop_exit
    _

// kernel: _lambda_.11
$region0: #{_lambda_.11}
  #allocation0 [shape = 'u32[]', space=smem, size = 0x4, offset = 0x4, fixed_abs, tag = 'smem constant byte address 0x4 - core index']
  #allocation1 [shape = 'u32[144,128]{1,0:T(1,128)}', space=vmem, size = 0x12000, scoped, tag = 'internal scratch']
  %s0 = inlined_call_operand.vmem [shape: bf16[2048,32], index: 0, kind: input, shape index: {}]
  %s1 = inlined_call_operand.vmem [shape: bf16[2048,64], index: 1, kind: input, shape index: {}]
  %s2 = inlined_call_operand.vmem [shape: bf16[2048,64], index: 2, kind: input, shape index: {}]
  %s3 = inlined_call_operand.vmem [shape: bf16[2048,128], index: 3, kind: input, shape index: {}]
  %s4 = inlined_call_operand.vmem [shape: bf16[32,128], index: 4, kind: input, shape index: {}]
  %s5 = inlined_call_operand.vmem [shape: bf16[64,128], index: 5, kind: input, shape index: {}]
  %s6 = inlined_call_operand.vmem [shape: bf16[64,128], index: 6, kind: input, shape index: {}]
  %s7 = inlined_call_operand.vmem [shape: bf16[128,128], index: 7, kind: input, shape index: {}]
  %s8 = inlined_call_operand.vmem [shape: f32[1,128], index: 8, kind: input, shape index: {}]
  %s9 = inlined_call_operand.vmem [shape: bf16[4,2048,128], index: 9, kind: output, shape index: {}]
  %s10 = sld [smem:[#allocation0]]
  $region106: #{_lambda_.11} parent=0
    _
  %s12 = ssub.s32 1, %s10
  %s13 = scalar_select 0, %s12, %s10
  $region1: #{_lambda_.11} parent=0
    #allocation2 [shape = 'u8[1048576]{0}', space=vmem, size = 0x100000, scoped, tag = 'output window, operand 0']
    loop: start=0, step=1, limit=6
    $region2: #{_lambda_.11} parent=1 // loop_pre_header
      _
    $region3: #{_lambda_.11} parent=1 // loop_header
      %s15 = sphi 0, %s19
      %p16 = scmp.ge.s32.totalorder %s15, 6
      %s25 = sphi 0, %s27
      %s28 = sphi 0, %s25
      %s29 = sphi 0, %s28
      %s45 = sphi 0, %s29
      %s51 = sphi 0, %s53
      %s54 = sphi 0, %s51
      %s55 = sphi 0, %s54
      %s71 = sphi 0, %s55
      %s77 = sphi 0, %s79
      %s80 = sphi 0, %s77
      %s81 = sphi 0, %s80
      %s97 = sphi 0, %s81
      %s103 = sphi 0, %s105
      %s106 = sphi 0, %s103
      %s107 = sphi 0, %s106
      %s123 = sphi 0, %s107
      %s127 = sphi 0, %s127
      %s129 = sphi 0, %s127
      %s130 = sphi 0, %s129
      %s144 = sphi 0, %s130
      %s148 = sphi 0, %s148
      %s150 = sphi 0, %s148
      %s151 = sphi 0, %s150
      %s165 = sphi 0, %s151
      %s169 = sphi 0, %s169
      %s171 = sphi 0, %s169
      %s172 = sphi 0, %s171
      %s186 = sphi 0, %s172
      %s190 = sphi 0, %s190
      %s192 = sphi 0, %s190
      %s193 = sphi 0, %s192
      %s207 = sphi 0, %s193
      %s211 = sphi 0, %s211
      %s213 = sphi 0, %s211
      %s214 = sphi 0, %s213
      %s228 = sphi 0, %s214
      %s234 = sphi 0, %s236
      %s237 = sphi 0, %s234
      %s238 = sphi 0, %s237
      %s254 = sphi 0, %s238
    $region4: #{_lambda_.11} parent=1 // loop_header_branch
      %18 = sbr.rel (%p16) target = $region8
    $region5: #{_lambda_.11} parent=1 // loop_body
      %s20 = ssub.s32 %s15, 1
      %s21 = ssub.s32 %s15, 2
      %s22 = sadd.s32 %s15, 1
      %s23 = ssub.s32 %s15, %s22
      %p24 = scmp.eq.s32.totalorder %s23, 0
      %s26 = sadd.s32 %s25, 1
      %s27 = scalar_select %p24, %s25, %s26
      %p30 = pneg %p24
      %p31 = scmp.eq.s32.totalorder %s15, 3
      %p32 = por %p30, %p31
      %p33 = scmp.ne.s32.totalorder %s25, %s28
      %p34 = scmp.eq.s32.totalorder %s15, 0
      %p35 = por %p33, %p34
      %p36 = scmp.ne.s32.totalorder %s25, %s28
      %p37 = scmp.eq.s32.totalorder %s20, 3
      %p38 = por %p36, %p37
      %p39 = scmp.ne.s32.totalorder %s28, %s29
      %p40 = scmp.eq.s32.totalorder %s20, 0
      %p41 = por %p39, %p40
      %p42 = scmp.ne.s32.totalorder %s28, %s29
      %p43 = scmp.eq.s32.totalorder %s21, 3
      %p44 = por %p42, %p43
      %p46 = scmp.ne.s32.totalorder %s29, %s45
      %p47 = scmp.eq.s32.totalorder %s21, 0
      %p48 = por %p46, %p47
      %s49 = ssub.s32 %s15, %s22
      %p50 = scmp.eq.s32.totalorder %s49, 0
      %s52 = sadd.s32 %s51, 1
      %s53 = scalar_select %p50, %s51, %s52
      %p56 = pneg %p50
      %p57 = scmp.eq.s32.totalorder %s15, 3
      %p58 = por %p56, %p57
      %p59 = scmp.ne.s32.totalorder %s51, %s54
      %p60 = scmp.eq.s32.totalorder %s15, 0
      %p61 = por %p59, %p60
      %p62 = scmp.ne.s32.totalorder %s51, %s54
      %p63 = scmp.eq.s32.totalorder %s20, 3
      %p64 = por %p62, %p63
      %p65 = scmp.ne.s32.totalorder %s54, %s55
      %p66 = scmp.eq.s32.totalorder %s20, 0
      %p67 = por %p65, %p66
      %p68 = scmp.ne.s32.totalorder %s54, %s55
      %p69 = scmp.eq.s32.totalorder %s21, 3
      %p70 = por %p68, %p69
      %p72 = scmp.ne.s32.totalorder %s55, %s71
      %p73 = scmp.eq.s32.totalorder %s21, 0
      %p74 = por %p72, %p73
      %s75 = ssub.s32 %s15, %s22
      %p76 = scmp.eq.s32.totalorder %s75, 0
      %s78 = sadd.s32 %s77, 1
      %s79 = scalar_select %p76, %s77, %s78
      %p82 = pneg %p76
      %p83 = scmp.eq.s32.totalorder %s15, 3
      %p84 = por %p82, %p83
      %p85 = scmp.ne.s32.totalorder %s77, %s80
      %p86 = scmp.eq.s32.totalorder %s15, 0
      %p87 = por %p85, %p86
      %p88 = scmp.ne.s32.totalorder %s77, %s80
      %p89 = scmp.eq.s32.totalorder %s20, 3
      %p90 = por %p88, %p89
      %p91 = scmp.ne.s32.totalorder %s80, %s81
      %p92 = scmp.eq.s32.totalorder %s20, 0
      %p93 = por %p91, %p92
      %p94 = scmp.ne.s32.totalorder %s80, %s81
      %p95 = scmp.eq.s32.totalorder %s21, 3
      %p96 = por %p94, %p95
      %p98 = scmp.ne.s32.totalorder %s81, %s97
      %p99 = scmp.eq.s32.totalorder %s21, 0
      %p100 = por %p98, %p99
      %s101 = ssub.s32 %s15, %s22
      %p102 = scmp.eq.s32.totalorder %s101, 0
      %s104 = sadd.s32 %s103, 1
      %s105 = scalar_select %p102, %s103, %s104
      %p108 = pneg %p102
      %p109 = scmp.eq.s32.totalorder %s15, 3
      %p110 = por %p108, %p109
      %p111 = scmp.ne.s32.totalorder %s103, %s106
      %p112 = scmp.eq.s32.totalorder %s15, 0
      %p113 = por %p111, %p112
      %p114 = scmp.ne.s32.totalorder %s103, %s106
      %p115 = scmp.eq.s32.totalorder %s20, 3
      %p116 = por %p114, %p115
      %p117 = scmp.ne.s32.totalorder %s106, %s107
      %p118 = scmp.eq.s32.totalorder %s20, 0
      %p119 = por %p117, %p118
      %p120 = scmp.ne.s32.totalorder %s106, %s107
      %p121 = scmp.eq.s32.totalorder %s21, 3
      %p122 = por %p120, %p121
      %p124 = scmp.ne.s32.totalorder %s107, %s123
      %p125 = scmp.eq.s32.totalorder %s21, 0
      %p126 = por %p124, %p125
      %s128 = sadd.s32 %s127, 1
      %p131 = scmp.eq.s32.totalorder %s15, 3
      %p132 = scmp.ne.s32.totalorder %s127, %s129
      %p133 = scmp.eq.s32.totalorder %s15, 0
      %p134 = por %p132, %p133
      %p135 = scmp.ne.s32.totalorder %s127, %s129
      %p136 = scmp.eq.s32.totalorder %s20, 3
      %p137 = por %p135, %p136
      %p138 = scmp.ne.s32.totalorder %s129, %s130
      %p139 = scmp.eq.s32.totalorder %s20, 0
      %p140 = por %p138, %p139
      %p141 = scmp.ne.s32.totalorder %s129, %s130
      %p142 = scmp.eq.s32.totalorder %s21, 3
      %p143 = por %p141, %p142
      %p145 = scmp.ne.s32.totalorder %s130, %s144
      %p146 = scmp.eq.s32.totalorder %s21, 0
      %p147 = por %p145, %p146
      %s149 = sadd.s32 %s148, 1
      %p152 = scmp.eq.s32.totalorder %s15, 3
      %p153 = scmp.ne.s32.totalorder %s148, %s150
      %p154 = scmp.eq.s32.totalorder %s15, 0
      %p155 = por %p153, %p154
      %p156 = scmp.ne.s32.totalorder %s148, %s150
      %p157 = scmp.eq.s32.totalorder %s20, 3
      %p158 = por %p156, %p157
      %p159 = scmp.ne.s32.totalorder %s150, %s151
      %p160 = scmp.eq.s32.totalorder %s20, 0
      %p161 = por %p159, %p160
      %p162 = scmp.ne.s32.totalorder %s150, %s151
      %p163 = scmp.eq.s32.totalorder %s21, 3
      %p164 = por %p162, %p163
      %p166 = scmp.ne.s32.totalorder %s151, %s165
      %p167 = scmp.eq.s32.totalorder %s21, 0
      %p168 = por %p166, %p167
      %s170 = sadd.s32 %s169, 1
      %p173 = scmp.eq.s32.totalorder %s15, 3
      %p174 = scmp.ne.s32.totalorder %s169, %s171
      %p175 = scmp.eq.s32.totalorder %s15, 0
      %p176 = por %p174, %p175
      %p177 = scmp.ne.s32.totalorder %s169, %s171
      %p178 = scmp.eq.s32.totalorder %s20, 3
      %p179 = por %p177, %p178
      %p180 = scmp.ne.s32.totalorder %s171, %s172
      %p181 = scmp.eq.s32.totalorder %s20, 0
      %p182 = por %p180, %p181
      %p183 = scmp.ne.s32.totalorder %s171, %s172
      %p184 = scmp.eq.s32.totalorder %s21, 3
      %p185 = por %p183, %p184
      %p187 = scmp.ne.s32.totalorder %s172, %s186
      %p188 = scmp.eq.s32.totalorder %s21, 0
      %p189 = por %p187, %p188
      %s191 = sadd.s32 %s190, 1
      %p194 = scmp.eq.s32.totalorder %s15, 3
      %p195 = scmp.ne.s32.totalorder %s190, %s192
      %p196 = scmp.eq.s32.totalorder %s15, 0
      %p197 = por %p195, %p196
      %p198 = scmp.ne.s32.totalorder %s190, %s192
      %p199 = scmp.eq.s32.totalorder %s20, 3
      %p200 = por %p198, %p199
      %p201 = scmp.ne.s32.totalorder %s192, %s193
      %p202 = scmp.eq.s32.totalorder %s20, 0
      %p203 = por %p201, %p202
      %p204 = scmp.ne.s32.totalorder %s192, %s193
      %p205 = scmp.eq.s32.totalorder %s21, 3
      %p206 = por %p204, %p205
      %p208 = scmp.ne.s32.totalorder %s193, %s207
      %p209 = scmp.eq.s32.totalorder %s21, 0
      %p210 = por %p208, %p209
      %s212 = sadd.s32 %s211, 1
      %p215 = scmp.eq.s32.totalorder %s15, 3
      %p216 = scmp.ne.s32.totalorder %s211, %s213
      %p217 = scmp.eq.s32.totalorder %s15, 0
      %p218 = por %p216, %p217
      %p219 = scmp.ne.s32.totalorder %s211, %s213
      %p220 = scmp.eq.s32.totalorder %s20, 3
      %p221 = por %p219, %p220
      %p222 = scmp.ne.s32.totalorder %s213, %s214
      %p223 = scmp.eq.s32.totalorder %s20, 0
      %p224 = por %p222, %p223
      %p225 = scmp.ne.s32.totalorder %s213, %s214
      %p226 = scmp.eq.s32.totalorder %s21, 3
      %p227 = por %p225, %p226
      %p229 = scmp.ne.s32.totalorder %s214, %s228
      %p230 = scmp.eq.s32.totalorder %s21, 0
      %p231 = por %p229, %p230
      %s232 = ssub.s32 %s15, %s22
      %p233 = scmp.eq.s32.totalorder %s232, 0
      %s235 = sadd.s32 %s234, 1
      %s236 = scalar_select %p233, %s234, %s235
      %p239 = pneg %p233
      %p240 = scmp.eq.s32.totalorder %s15, 3
      %p241 = por %p239, %p240
      %p242 = scmp.ne.s32.totalorder %s234, %s237
      %p243 = scmp.eq.s32.totalorder %s15, 0
      %p244 = por %p242, %p243
      %p245 = scmp.ne.s32.totalorder %s234, %s237
      %p246 = scmp.eq.s32.totalorder %s20, 3
      %p247 = por %p245, %p246
      %p248 = scmp.ne.s32.totalorder %s237, %s238
      %p249 = scmp.eq.s32.totalorder %s20, 0
      %p250 = por %p248, %p249
      %p251 = scmp.ne.s32.totalorder %s237, %s238
      %p252 = scmp.eq.s32.totalorder %s21, 3
      %p253 = por %p251, %p252
      %p255 = scmp.ne.s32.totalorder %s238, %s254
      %p256 = scmp.eq.s32.totalorder %s21, 0
      %p257 = por %p255, %p256
      %p258 = scmp.le.s32.totalorder 1, %s15
      %p259 = scmp.lt.s32.totalorder %s15, 5
      %p260 = pnand %p258, %p259
      %p261 = pneg %p260
      // Predicated region
      $region9: #{_lambda_.11} parent=5 // pred_check
        _
      $region10: #{_lambda_.11} parent=5 // pred_check_branch
        %263 = sbr.rel (%p260) target = $region12
      $region11: #{_lambda_.11} parent=5 // pred_region
        %s264 = ssub.s32 %s15, 1
        // Predicated region
        $region13: #{_lambda_.11} parent=11 // pred_check
          %p265 = pneg %p140
        $region14: #{_lambda_.11} parent=11 // pred_check_branch
          %267 = sbr.rel (%p265) target = $region16
        $region15: #{_lambda_.11} parent=11 // pred_region
          _
        $region16: #{_lambda_.11} parent=11 // pred_fallthru
          _
        // Predicated region
        $region17: #{_lambda_.11} parent=11 // pred_check
          %p268 = pneg %p161
        $region18: #{_lambda_.11} parent=11 // pred_check_branch
          %270 = sbr.rel (%p268) target = $region20
        $region19: #{_lambda_.11} parent=11 // pred_region
          _
        $region20: #{_lambda_.11} parent=11 // pred_fallthru
          _
        // Predicated region
        $region21: #{_lambda_.11} parent=11 // pred_check
          %p271 = pneg %p182
        $region22: #{_lambda_.11} parent=11 // pred_check_branch
          %273 = sbr.rel (%p271) target = $region24
        $region23: #{_lambda_.11} parent=11 // pred_region
          _
        $region24: #{_lambda_.11} parent=11 // pred_fallthru
          _
        // Predicated region
        $region25: #{_lambda_.11} parent=11 // pred_check
          %p274 = pneg %p203
        $region26: #{_lambda_.11} parent=11 // pred_check_branch
          %276 = sbr.rel (%p274) target = $region28
        $region27: #{_lambda_.11} parent=11 // pred_region
          _
        $region28: #{_lambda_.11} parent=11 // pred_fallthru
          _
        // Predicated region
        $region29: #{_lambda_.11} parent=11 // pred_check
          %p277 = pneg %p224
        $region30: #{_lambda_.11} parent=11 // pred_check_branch
          %279 = sbr.rel (%p277) target = $region32
        $region31: #{_lambda_.11} parent=11 // pred_region
          _
        $region32: #{_lambda_.11} parent=11 // pred_fallthru
          _
      $region12: #{_lambda_.11} parent=5 // pred_fallthru
        _
      %p280 = scmp.lt.s32.totalorder %s15, 4
      // Predicated region
      $region33: #{_lambda_.11} parent=5 // pred_check
        %p281 = pneg %p280
      $region34: #{_lambda_.11} parent=5 // pred_check_branch
        %283 = sbr.rel (%p281) target = $region36
      $region35: #{_lambda_.11} parent=5 // pred_region
        // Predicated region
        $region37: #{_lambda_.11} parent=35 // pred_check
          %p284 = pneg %p35
        $region38: #{_lambda_.11} parent=35 // pred_check_branch
          %286 = sbr.rel (%p284) target = $region40
        $region39: #{_lambda_.11} parent=35 // pred_region
          %s287 = smul.u32 64, %s15
          %p288 = scmp.lt.s32.totalorder %s287, 255
          %s289 = scalar_select %p288, %s287, 255
          %s290 = smul.addr %s289, 4
          %s291 = scalar_lea.vmem %s0, %s290
          %s292 = smul.u32 64, %s15
        $region40: #{_lambda_.11} parent=35 // pred_fallthru
          _
        // Predicated region
        $region41: #{_lambda_.11} parent=35 // pred_check
          %p293 = pneg %p61
        $region42: #{_lambda_.11} parent=35 // pred_check_branch
          %295 = sbr.rel (%p293) target = $region44
        $region43: #{_lambda_.11} parent=35 // pred_region
          %s296 = smul.u32 64, %s15
          %p297 = scmp.lt.s32.totalorder %s296, 255
          %s298 = scalar_select %p297, %s296, 255
          %s299 = smul.addr %s298, 4
          %s300 = scalar_lea.vmem %s1, %s299
          %s301 = smul.u32 64, %s15
        $region44: #{_lambda_.11} parent=35 // pred_fallthru
          _
        // Predicated region
        $region45: #{_lambda_.11} parent=35 // pred_check
          %p302 = pneg %p87
        $region46: #{_lambda_.11} parent=35 // pred_check_branch
          %304 = sbr.rel (%p302) target = $region48
        $region47: #{_lambda_.11} parent=35 // pred_region
          %s305 = smul.u32 64, %s15
          %p306 = scmp.lt.s32.totalorder %s305, 255
          %s307 = scalar_select %p306, %s305, 255
          %s308 = smul.addr %s307, 4
          %s309 = scalar_lea.vmem %s2, %s308
          %s310 = smul.u32 64, %s15
        $region48: #{_lambda_.11} parent=35 // pred_fallthru
          _
        // Predicated region
        $region49: #{_lambda_.11} parent=35 // pred_check
          %p311 = pneg %p113
        $region50: #{_lambda_.11} parent=35 // pred_check_branch
          %313 = sbr.rel (%p311) target = $region52
        $region51: #{_lambda_.11} parent=35 // pred_region
          %s314 = smul.u32 64, %s15
          %p315 = scmp.lt.s32.totalorder %s314, 255
          %s316 = scalar_select %p315, %s314, 255
          %s317 = smul.addr %s316, 4
          %s318 = scalar_lea.vmem %s3, %s317
          %s319 = smul.u32 64, %s15
        $region52: #{_lambda_.11} parent=35 // pred_fallthru
          _
      $region36: #{_lambda_.11} parent=5 // pred_fallthru
        _
      %p320 = scmp.le.s32.totalorder 1, %s15
      %p321 = scmp.lt.s32.totalorder %s15, 5
      %p322 = pnand %p320, %p321
      %p323 = pneg %p322
      // Predicated region
      $region53: #{_lambda_.11} parent=5 // pred_check
        _
      $region54: #{_lambda_.11} parent=5 // pred_check_branch
        %325 = sbr.rel (%p322) target = $region56
      $region55: #{_lambda_.11} parent=5 // pred_region
        %s326 = ssub.s32 %s15, 1
        %s327 = smul.u32 64, %s20
        %p328 = scmp.lt.s32.totalorder %s327, 255
        %s329 = scalar_select %p328, %s327, 255
        %s330 = smul.addr %s329, 4
        %s331 = scalar_lea.vmem %s0, %s330
        %p332 = pneg %p41
        %p333 = pneg %p38
        %s334 = smul.u32 64, %s20
        %p335 = scmp.lt.s32.totalorder %s334, 255
        %s336 = scalar_select %p335, %s334, 255
        %s337 = smul.addr %s336, 4
        %s338 = scalar_lea.vmem %s1, %s337
        %p339 = pneg %p67
        %p340 = pneg %p64
        %s341 = smul.u32 64, %s20
        %p342 = scmp.lt.s32.totalorder %s341, 255
        %s343 = scalar_select %p342, %s341, 255
        %s344 = smul.addr %s343, 4
        %s345 = scalar_lea.vmem %s2, %s344
        %p346 = pneg %p93
        %p347 = pneg %p90
        %s348 = smul.u32 64, %s20
        %p349 = scmp.lt.s32.totalorder %s348, 255
        %s350 = scalar_select %p349, %s348, 255
        %s351 = smul.addr %s350, 4
        %s352 = scalar_lea.vmem %s3, %s351
        %p353 = pneg %p119
        %p354 = pneg %p116
        %p355 = pneg %p140
        %p356 = pneg %p137
        %p357 = pneg %p161
        %p358 = pneg %p158
        %p359 = pneg %p182
        %p360 = pneg %p179
        %p361 = pneg %p203
        %p362 = pneg %p200
        %p363 = pneg %p224
        %p364 = pneg %p221
        %p365 = pneg %p250
        %p366 = pneg %p247
        %s367 = sand.u32 %s237, 1
        %s368 = sand.u32 %s237, 1
        %s369 = smul.addr %s368, 1024
        %s370 = scalar_lea.vmem [#allocation2], %s369
        %s371 = smul.u32 64, %s20
        %p372 = scmp.lt.s32.totalorder %s371, 255
        %s373 = scalar_select %p372, %s371, 255
        %s374 = smul.addr %s373, 4
        %s375 = scalar_lea.vmem %s0, %s374
        %s376 = smul.u32 64, %s20
        %s377 = smul.u32 64, %s20
        %p378 = scmp.lt.s32.totalorder %s377, 255
        %s379 = scalar_select %p378, %s377, 255
        %s380 = smul.addr %s379, 4
        %s381 = scalar_lea.vmem %s1, %s380
        %s382 = smul.u32 64, %s20
        %s383 = smul.u32 64, %s20
        %p384 = scmp.lt.s32.totalorder %s383, 255
        %s385 = scalar_select %p384, %s383, 255
        %s386 = smul.addr %s385, 4
        %s387 = scalar_lea.vmem %s2, %s386
        %s388 = smul.u32 64, %s20
        %s389 = smul.u32 64, %s20
        %p390 = scmp.lt.s32.totalorder %s389, 255
        %s391 = scalar_select %p390, %s389, 255
        %s392 = smul.addr %s391, 4
        %s393 = scalar_lea.vmem %s3, %s392
        %s394 = smul.u32 64, %s20
        %s395 = smul.u32 64, %s20
        %v397 = vld [vmem:[%s8] sm:$0x1]
        %v398 = vld [vmem:[%s375] sm:$0xf]
        %v399 = vld [vmem:[%s375 + $0x4] sm:$0xf]
        %v400 = vld [vmem:[%s375 + $0x8] sm:$0xf]
        %v401 = vld [vmem:[%s375 + $0xc] sm:$0xf]
        %v402 = vld [vmem:[%s375 + $0x10] sm:$0xf]
        %v403 = vld [vmem:[%s375 + $0x14] sm:$0xf]
        %v404 = vld [vmem:[%s375 + $0x18] sm:$0xf]
        %v405 = vld [vmem:[%s375 + $0x1c] sm:$0xf]
        %v406 = vld [vmem:[%s375 + $0x20] sm:$0xf]
        %v407 = vld [vmem:[%s375 + $0x24] sm:$0xf]
        %v408 = vld [vmem:[%s375 + $0x28] sm:$0xf]
        %v409 = vld [vmem:[%s375 + $0x2c] sm:$0xf]
        %v410 = vld [vmem:[%s375 + $0x30] sm:$0xf]
        %v411 = vld [vmem:[%s375 + $0x34] sm:$0xf]
        %v412 = vld [vmem:[%s375 + $0x38] sm:$0xf]
        %v413 = vld [vmem:[%s375 + $0x3c] sm:$0xf]
        %v414 = vld [vmem:[%s375 + $0x40] sm:$0xf]
        %v415 = vld [vmem:[%s375 + $0x44] sm:$0xf]
        %v416 = vld [vmem:[%s375 + $0x48] sm:$0xf]
        %v417 = vld [vmem:[%s375 + $0x4c] sm:$0xf]
        %v418 = vld [vmem:[%s375 + $0x50] sm:$0xf]
        %v419 = vld [vmem:[%s375 + $0x54] sm:$0xf]
        %v420 = vld [vmem:[%s375 + $0x58] sm:$0xf]
        %v421 = vld [vmem:[%s375 + $0x5c] sm:$0xf]
        %v422 = vld [vmem:[%s375 + $0x60] sm:$0xf]
        %v423 = vld [vmem:[%s375 + $0x64] sm:$0xf]
        %v424 = vld [vmem:[%s375 + $0x68] sm:$0xf]
        %v425 = vld [vmem:[%s375 + $0x6c] sm:$0xf]
        %v426 = vld [vmem:[%s375 + $0x70] sm:$0xf]
        %v427 = vld [vmem:[%s375 + $0x74] sm:$0xf]
        %v428 = vld [vmem:[%s375 + $0x78] sm:$0xf]
        %v429 = vld [vmem:[%s375 + $0x7c] sm:$0xf]
        %v430 = vld [vmem:[%s375 + $0x80] sm:$0xf]
        %v431 = vld [vmem:[%s375 + $0x84] sm:$0xf]
        %v432 = vld [vmem:[%s375 + $0x88] sm:$0xf]
        %v433 = vld [vmem:[%s375 + $0x8c] sm:$0xf]
        %v434 = vld [vmem:[%s375 + $0x90] sm:$0xf]
        %v435 = vld [vmem:[%s375 + $0x94] sm:$0xf]
        %v436 = vld [vmem:[%s375 + $0x98] sm:$0xf]
        %v437 = vld [vmem:[%s375 + $0x9c] sm:$0xf]
        %v438 = vld [vmem:[%s375 + $0xa0] sm:$0xf]
        %v439 = vld [vmem:[%s375 + $0xa4] sm:$0xf]
        %v440 = vld [vmem:[%s375 + $0xa8] sm:$0xf]
        %v441 = vld [vmem:[%s375 + $0xac] sm:$0xf]
        %v442 = vld [vmem:[%s375 + $0xb0] sm:$0xf]
        %v443 = vld [vmem:[%s375 + $0xb4] sm:$0xf]
        %v444 = vld [vmem:[%s375 + $0xb8] sm:$0xf]
        %v445 = vld [vmem:[%s375 + $0xbc] sm:$0xf]
        %v446 = vld [vmem:[%s375 + $0xc0] sm:$0xf]
        %v447 = vld [vmem:[%s375 + $0xc4] sm:$0xf]
        %v448 = vld [vmem:[%s375 + $0xc8] sm:$0xf]
        %v449 = vld [vmem:[%s375 + $0xcc] sm:$0xf]
        %v450 = vld [vmem:[%s375 + $0xd0] sm:$0xf]
        %v451 = vld [vmem:[%s375 + $0xd4] sm:$0xf]
        %v452 = vld [vmem:[%s375 + $0xd8] sm:$0xf]
        %v453 = vld [vmem:[%s375 + $0xdc] sm:$0xf]
        %v454 = vld [vmem:[%s375 + $0xe0] sm:$0xf]
        %v455 = vld [vmem:[%s375 + $0xe4] sm:$0xf]
        %v456 = vld [vmem:[%s375 + $0xe8] sm:$0xf]
        %v457 = vld [vmem:[%s375 + $0xec] sm:$0xf]
        %v458 = vld [vmem:[%s375 + $0xf0] sm:$0xf]
        %v459 = vld [vmem:[%s375 + $0xf4] sm:$0xf]
        %v460 = vld [vmem:[%s375 + $0xf8] sm:$0xf]
        %v461 = vld [vmem:[%s375 + $0xfc] sm:$0xf]
        %v462 = vld [vmem:[%s4] sm:$0xf]
        %v463 = vld [vmem:[%s4 + $0x4] sm:$0xf]
        %v464 = vld [vmem:[%s4 + $0x8] sm:$0xf]
        %v465 = vld [vmem:[%s4 + $0xc] sm:$0xf]
        %v467 = vlaneseq
        %v468 = vshrl.u32 %v467, 7
        %v469 = vsub.s32 0, %v468
        %v470 = vrot.slane %v397, %v469
        %v536 = vunpack.c.l.b16 %v398
        %v537 = vunpack.c.l.b16 %v399
        %v538 = vunpack.c.l.b16 %v400
        %v539 = vunpack.c.l.b16 %v401
        %v540 = vunpack.c.l.b16 %v402
        %v541 = vunpack.c.l.b16 %v403
        %v542 = vunpack.c.l.b16 %v404
        %v543 = vunpack.c.l.b16 %v405
        %v544 = vunpack.c.l.b16 %v406
        %v545 = vunpack.c.l.b16 %v407
        %v546 = vunpack.c.l.b16 %v408
        %v547 = vunpack.c.l.b16 %v409
        %v548 = vunpack.c.l.b16 %v410
        %v549 = vunpack.c.l.b16 %v411
        %v550 = vunpack.c.l.b16 %v412
        %v551 = vunpack.c.l.b16 %v413
        %v552 = vunpack.c.l.b16 %v414
        %v553 = vunpack.c.l.b16 %v415
        %v554 = vunpack.c.l.b16 %v416
        %v555 = vunpack.c.l.b16 %v417
        %v556 = vunpack.c.l.b16 %v418
        %v557 = vunpack.c.l.b16 %v419
        %v558 = vunpack.c.l.b16 %v420
        %v559 = vunpack.c.l.b16 %v421
        %v560 = vunpack.c.l.b16 %v422
        %v561 = vunpack.c.l.b16 %v423
        %v562 = vunpack.c.l.b16 %v424
        %v563 = vunpack.c.l.b16 %v425
        %v564 = vunpack.c.l.b16 %v426
        %v565 = vunpack.c.l.b16 %v427
        %v566 = vunpack.c.l.b16 %v428
        %v567 = vunpack.c.l.b16 %v429
        %v568 = vunpack.c.l.b16 %v430
        %v569 = vunpack.c.l.b16 %v431
        %v570 = vunpack.c.l.b16 %v432
        %v571 = vunpack.c.l.b16 %v433
        %v572 = vunpack.c.l.b16 %v434
        %v573 = vunpack.c.l.b16 %v435
        %v574 = vunpack.c.l.b16 %v436
        %v575 = vunpack.c.l.b16 %v437
        %v576 = vunpack.c.l.b16 %v438
        %v577 = vunpack.c.l.b16 %v439
        %v578 = vunpack.c.l.b16 %v440
        %v579 = vunpack.c.l.b16 %v441
        %v580 = vunpack.c.l.b16 %v442
        %v581 = vunpack.c.l.b16 %v443
        %v582 = vunpack.c.l.b16 %v444
        %v583 = vunpack.c.l.b16 %v445
        %v584 = vunpack.c.l.b16 %v446
        %v585 = vunpack.c.l.b16 %v447
        %v586 = vunpack.c.l.b16 %v448
        %v587 = vunpack.c.l.b16 %v449
        %v588 = vunpack.c.l.b16 %v450
        %v589 = vunpack.c.l.b16 %v451
        %v590 = vunpack.c.l.b16 %v452
        %v591 = vunpack.c.l.b16 %v453
        %v592 = vunpack.c.l.b16 %v454
        %v593 = vunpack.c.l.b16 %v455
        %v594 = vunpack.c.l.b16 %v456
        %v595 = vunpack.c.l.b16 %v457
        %v596 = vunpack.c.l.b16 %v458
        %v597 = vunpack.c.l.b16 %v459
        %v598 = vunpack.c.l.b16 %v460
        %v599 = vunpack.c.l.b16 %v461
        %v600 = vpack.c.b16 %v537, %v536
        %v601 = vpack.c.b16 %v539, %v538
        %v602 = vpack.c.b16 %v541, %v540
        %v603 = vpack.c.b16 %v543, %v542
        %v604 = vpack.c.b16 %v545, %v544
        %v605 = vpack.c.b16 %v547, %v546
        %v606 = vpack.c.b16 %v549, %v548
        %v607 = vpack.c.b16 %v551, %v550
        %v608 = vpack.c.b16 %v553, %v552
        %v609 = vpack.c.b16 %v555, %v554
        %v610 = vpack.c.b16 %v557, %v556
        %v611 = vpack.c.b16 %v559, %v558
        %v612 = vpack.c.b16 %v561, %v560
        %v613 = vpack.c.b16 %v563, %v562
        %v614 = vpack.c.b16 %v565, %v564
        %v615 = vpack.c.b16 %v567, %v566
        %v616 = vpack.c.b16 %v569, %v568
        %v617 = vpack.c.b16 %v571, %v570
        %v618 = vpack.c.b16 %v573, %v572
        %v619 = vpack.c.b16 %v575, %v574
        %v620 = vpack.c.b16 %v577, %v576
        %v621 = vpack.c.b16 %v579, %v578
        %v622 = vpack.c.b16 %v581, %v580
        %v623 = vpack.c.b16 %v583, %v582
        %v624 = vpack.c.b16 %v585, %v584
        %v625 = vpack.c.b16 %v587, %v586
        %v626 = vpack.c.b16 %v589, %v588
        %v627 = vpack.c.b16 %v591, %v590
        %v628 = vpack.c.b16 %v593, %v592
        %v629 = vpack.c.b16 %v595, %v594
        %v630 = vpack.c.b16 %v597, %v596
        %v631 = vpack.c.b16 %v599, %v598
        %v636 = vunpack.c.l.b16 %v462
        %v637 = vunpack.c.l.b16 %v463
        %v638 = vunpack.c.l.b16 %v464
        %v639 = vunpack.c.l.b16 %v465
        %v640 = vpack.c.b16 %v637, %v636
        %v641 = vpack.c.b16 %v639, %v638
        %vm644 = vcmask 261120
        %v646 = vsel %vm644, %v600, 0
        %v649 = vsel %vm644, %v601, 0
        %v652 = vsel %vm644, %v602, 0
        %v655 = vsel %vm644, %v603, 0
        %v658 = vsel %vm644, %v604, 0
        %v661 = vsel %vm644, %v605, 0
        %v664 = vsel %vm644, %v606, 0
        %v667 = vsel %vm644, %v607, 0
        %v670 = vsel %vm644, %v608, 0
        %v673 = vsel %vm644, %v609, 0
        %v676 = vsel %vm644, %v610, 0
        %v679 = vsel %vm644, %v611, 0
        %v682 = vsel %vm644, %v612, 0
        %v685 = vsel %vm644, %v613, 0
        %v688 = vsel %vm644, %v614, 0
        %v691 = vsel %vm644, %v615, 0
        %v694 = vsel %vm644, %v616, 0
        %v697 = vsel %vm644, %v617, 0
        %v700 = vsel %vm644, %v618, 0
        %v703 = vsel %vm644, %v619, 0
        %v706 = vsel %vm644, %v620, 0
        %v709 = vsel %vm644, %v621, 0
        %v712 = vsel %vm644, %v622, 0
        %v715 = vsel %vm644, %v623, 0
        %v718 = vsel %vm644, %v624, 0
        %v721 = vsel %vm644, %v625, 0
        %v724 = vsel %vm644, %v626, 0
        %v727 = vsel %vm644, %v627, 0
        %v730 = vsel %vm644, %v628, 0
        %v733 = vsel %vm644, %v629, 0
        %v736 = vsel %vm644, %v630, 0
        %v739 = vsel %vm644, %v631, 0
        %741 = vmatprep.subr.bf16.mxu0 0
        %742 = vmatpush1.bf16.msra.mxu0 %v640
        %743 = vmatprep.subr.bf16.mxu0 0
        %744 = vmatpush1.bf16.msra.mxu0 %v641
        %745 = vmatprep.subr.bf16.mxu0 0
        %746 = vmatpush1.bf16.msra.mxu0 0
        %747 = vmatprep.subr.bf16.mxu0 0
        %748 = vmatpush1.bf16.msra.mxu0 0
        %749 = vmatprep.subr.bf16.mxu0 0
        %750 = vmatpush1.bf16.msra.mxu0 0
        %751 = vmatprep.subr.bf16.mxu0 0
        %752 = vmatpush1.bf16.msra.mxu0 0
        %753 = vmatprep.subr.bf16.mxu0 0
        %754 = vmatpush1.bf16.msra.mxu0 0
        %755 = vmatprep.subr.bf16.mxu0 0
        %756 = vmatpush1.bf16.msra.mxu0 0
        %757 = vmatprep.subr.bf16.mxu0 0
        %758 = vmatpush1.bf16.msra.mxu0 0
        %759 = vmatprep.subr.bf16.mxu0 0
        %760 = vmatpush1.bf16.msra.mxu0 0
        %761 = vmatprep.subr.bf16.mxu0 0
        %762 = vmatpush1.bf16.msra.mxu0 0
        %763 = vmatprep.subr.bf16.mxu0 0
        %764 = vmatpush1.bf16.msra.mxu0 0
        %765 = vmatprep.subr.bf16.mxu0 0
        %766 = vmatpush1.bf16.msra.mxu0 0
        %767 = vmatprep.subr.bf16.mxu0 0
        %768 = vmatpush1.bf16.msra.mxu0 0
        %769 = vmatprep.subr.bf16.mxu0 0
        %770 = vmatpush1.bf16.msra.mxu0 0
        %771 = vmatprep.subr.bf16.mxu0 0
        %772 = vmatpush1.bf16.msra.mxu0 0
        %773 = vmatprep.mubr.bf16.mxu0 0
        %774 = vmatmul.mubr.bf16.gmra.mrb[0].mxu0 %v646
        %v775 = vpop.f32.mrb[0].mxu0
        %v776 = vadd.f32 %v470, %v775
        %v777 = vpop.f32.mrb[0].mxu0
        %v778 = vpop.f32.mrb[0].mxu0
        %v779 = vadd.f32 %v470, %v778
        %v780 = vpop.f32.mrb[0].mxu0
        %781 = vmatprep.mubr.bf16.mxu0 0
        %782 = vmatmul.mubr.bf16.gmra.mrb[0].mxu0 %v649
        %v783 = vpop.f32.mrb[0].mxu0
        %v784 = vadd.f32 %v470, %v783
        %v785 = vpop.f32.mrb[0].mxu0
        %v786 = vpop.f32.mrb[0].mxu0
        %v787 = vadd.f32 %v470, %v786
        %v788 = vpop.f32.mrb[0].mxu0
        %789 = vmatprep.mubr.bf16.mxu0 0
        %790 = vmatmul.mubr.bf16.gmra.mrb[0].mxu0 %v652
        %v791 = vpop.f32.mrb[0].mxu0
        %v792 = vadd.f32 %v470, %v791
        %v793 = vpop.f32.mrb[0].mxu0
        %v794 = vpop.f32.mrb[0].mxu0
        %v795 = vadd.f32 %v470, %v794
        %v796 = vpop.f32.mrb[0].mxu0
        %797 = vmatprep.mubr.bf16.mxu0 0
        %798 = vmatmul.mubr.bf16.gmra.mrb[0].mxu0 %v655
        %v799 = vpop.f32.mrb[0].mxu0
        %v800 = vadd.f32 %v470, %v799
        %v801 = vpop.f32.mrb[0].mxu0
        %v802 = vpop.f32.mrb[0].mxu0
        %v803 = vadd.f32 %v470, %v802
        %v804 = vpop.f32.mrb[0].mxu0
        %805 = vmatprep.mubr.bf16.mxu0 0
        %806 = vmatmul.mubr.bf16.gmra.mrb[0].mxu0 %v658
        %v807 = vpop.f32.mrb[0].mxu0
        %v808 = vadd.f32 %v470, %v807
        %v809 = vpop.f32.mrb[0].mxu0
        %v810 = vpop.f32.mrb[0].mxu0
        %v811 = vadd.f32 %v470, %v810
        %v812 = vpop.f32.mrb[0].mxu0
        %813 = vmatprep.mubr.bf16.mxu0 0
        %814 = vmatmul.mubr.bf16.gmra.mrb[0].mxu0 %v661
        %v815 = vpop.f32.mrb[0].mxu0
        %v816 = vadd.f32 %v470, %v815
        %v817 = vpop.f32.mrb[0].mxu0
        %v818 = vpop.f32.mrb[0].mxu0
        %v819 = vadd.f32 %v470, %v818
        %v820 = vpop.f32.mrb[0].mxu0
        %821 = vmatprep.mubr.bf16.mxu0 0
        %822 = vmatmul.mubr.bf16.gmra.mrb[0].mxu0 %v664
        %v823 = vpop.f32.mrb[0].mxu0
        %v824 = vadd.f32 %v470, %v823
        %v825 = vpop.f32.mrb[0].mxu0
        %v826 = vpop.f32.mrb[0].mxu0
        %v827 = vadd.f32 %v470, %v826
        %v828 = vpop.f32.mrb[0].mxu0
        %829 = vmatprep.mubr.bf16.mxu0 0
        %830 = vmatmul.mubr.bf16.gmra.mrb[0].mxu0 %v667
        %v831 = vpop.f32.mrb[0].mxu0
        %v832 = vadd.f32 %v470, %v831
        %v833 = vpop.f32.mrb[0].mxu0
        %v834 = vpop.f32.mrb[0].mxu0
        %v835 = vadd.f32 %v470, %v834
        %v836 = vpop.f32.mrb[0].mxu0
        %837 = vmatprep.mubr.bf16.mxu0 0
        %838 = vmatmul.mubr.bf16.gmra.mrb[0].mxu0 %v670
        %v839 = vpop.f32.mrb[0].mxu0
        %v840 = vadd.f32 %v470, %v839
        %v841 = vpop.f32.mrb[0].mxu0
        %v842 = vpop.f32.mrb[0].mxu0
        %v843 = vadd.f32 %v470, %v842
        %v844 = vpop.f32.mrb[0].mxu0
        %845 = vmatprep.mubr.bf16.mxu0 0
        %846 = vmatmul.mubr.bf16.gmra.mrb[0].mxu0 %v673
        %v847 = vpop.f32.mrb[0].mxu0
        %v848 = vadd.f32 %v470, %v847
        %v849 = vpop.f32.mrb[0].mxu0
        %v850 = vpop.f32.mrb[0].mxu0
        %v851 = vadd.f32 %v470, %v850
        %v852 = vpop.f32.mrb[0].mxu0
        %853 = vmatprep.mubr.bf16.mxu0 0
        %854 = vmatmul.mubr.bf16.gmra.mrb[0].mxu0 %v676
        %v855 = vpop.f32.mrb[0].mxu0
        %v856 = vadd.f32 %v470, %v855
        %v857 = vpop.f32.mrb[0].mxu0
        %v858 = vpop.f32.mrb[0].mxu0
        %v859 = vadd.f32 %v470, %v858
        %v860 = vpop.f32.mrb[0].mxu0
        %861 = vmatprep.mubr.bf16.mxu0 0
        %862 = vmatmul.mubr.bf16.gmra.mrb[0].mxu0 %v679
        %v863 = vpop.f32.mrb[0].mxu0
        %v864 = vadd.f32 %v470, %v863
        %v865 = vpop.f32.mrb[0].mxu0
        %v866 = vpop.f32.mrb[0].mxu0
        %v867 = vadd.f32 %v470, %v866
        %v868 = vpop.f32.mrb[0].mxu0
        %869 = vmatprep.mubr.bf16.mxu0 0
        %870 = vmatmul.mubr.bf16.gmra.mrb[0].mxu0 %v682
        %v871 = vpop.f32.mrb[0].mxu0
        %v872 = vadd.f32 %v470, %v871
        %v873 = vpop.f32.mrb[0].mxu0
        %v874 = vpop.f32.mrb[0].mxu0
        %v875 = vadd.f32 %v470, %v874
        %v876 = vpop.f32.mrb[0].mxu0
        %877 = vmatprep.mubr.bf16.mxu0 0
        %878 = vmatmul.mubr.bf16.gmra.mrb[0].mxu0 %v685
        %v879 = vpop.f32.mrb[0].mxu0
        %v880 = vadd.f32 %v470, %v879
        %v881 = vpop.f32.mrb[0].mxu0
        %v882 = vpop.f32.mrb[0].mxu0
        %v883 = vadd.f32 %v470, %v882
        %v884 = vpop.f32.mrb[0].mxu0
        %885 = vmatprep.mubr.bf16.mxu0 0
        %886 = vmatmul.mubr.bf16.gmra.mrb[0].mxu0 %v688
        %v887 = vpop.f32.mrb[0].mxu0
        %v888 = vadd.f32 %v470, %v887
        %v889 = vpop.f32.mrb[0].mxu0
        %v890 = vpop.f32.mrb[0].mxu0
        %v891 = vadd.f32 %v470, %v890
        %v892 = vpop.f32.mrb[0].mxu0
        %893 = vmatprep.mubr.bf16.mxu0 0
        %894 = vmatmul.mubr.bf16.gmra.mrb[0].mxu0 %v691
        %v895 = vpop.f32.mrb[0].mxu0
        %v896 = vadd.f32 %v470, %v895
        %v897 = vpop.f32.mrb[0].mxu0
        %v898 = vpop.f32.mrb[0].mxu0
        %v899 = vadd.f32 %v470, %v898
        %v900 = vpop.f32.mrb[0].mxu0
        %901 = vmatprep.mubr.bf16.mxu0 0
        %902 = vmatmul.mubr.bf16.gmra.mrb[0].mxu0 %v694
        %v903 = vpop.f32.mrb[0].mxu0
        %v904 = vadd.f32 %v470, %v903
        %v905 = vpop.f32.mrb[0].mxu0
        %v906 = vpop.f32.mrb[0].mxu0
        %v907 = vadd.f32 %v470, %v906
        %v908 = vpop.f32.mrb[0].mxu0
        %909 = vmatprep.mubr.bf16.mxu0 0
        %910 = vmatmul.mubr.bf16.gmra.mrb[0].mxu0 %v697
        %v911 = vpop.f32.mrb[0].mxu0
        %v912 = vadd.f32 %v470, %v911
        %v913 = vpop.f32.mrb[0].mxu0
        %v914 = vpop.f32.mrb[0].mxu0
        %v915 = vadd.f32 %v470, %v914
        %v916 = vpop.f32.mrb[0].mxu0
        %917 = vmatprep.mubr.bf16.mxu0 0
        %918 = vmatmul.mubr.bf16.gmra.mrb[0].mxu0 %v700
        %v919 = vpop.f32.mrb[0].mxu0
        %v920 = vadd.f32 %v470, %v919
        %v921 = vpop.f32.mrb[0].mxu0
        %v922 = vpop.f32.mrb[0].mxu0
        %v923 = vadd.f32 %v470, %v922
        %v924 = vpop.f32.mrb[0].mxu0
        %925 = vmatprep.mubr.bf16.mxu0 0
        %926 = vmatmul.mubr.bf16.gmra.mrb[0].mxu0 %v703
        %v927 = vpop.f32.mrb[0].mxu0
        %v928 = vadd.f32 %v470, %v927
        %v929 = vpop.f32.mrb[0].mxu0
        %v930 = vpop.f32.mrb[0].mxu0
        %v931 = vadd.f32 %v470, %v930
        %v932 = vpop.f32.mrb[0].mxu0
        %933 = vmatprep.mubr.bf16.mxu0 0
        %934 = vmatmul.mubr.bf16.gmra.mrb[0].mxu0 %v706
        %v935 = vpop.f32.mrb[0].mxu0
        %v936 = vadd.f32 %v470, %v935
        %v937 = vpop.f32.mrb[0].mxu0
        %v938 = vpop.f32.mrb[0].mxu0
        %v939 = vadd.f32 %v470, %v938
        %v940 = vpop.f32.mrb[0].mxu0
        %941 = vmatprep.mubr.bf16.mxu0 0
        %942 = vmatmul.mubr.bf16.gmra.mrb[0].mxu0 %v709
        %v943 = vpop.f32.mrb[0].mxu0
        %v944 = vadd.f32 %v470, %v943
        %v945 = vpop.f32.mrb[0].mxu0
        %v946 = vpop.f32.mrb[0].mxu0
        %v947 = vadd.f32 %v470, %v946
        %v948 = vpop.f32.mrb[0].mxu0
        %949 = vmatprep.mubr.bf16.mxu0 0
        %950 = vmatmul.mubr.bf16.gmra.mrb[0].mxu0 %v712
        %v951 = vpop.f32.mrb[0].mxu0
        %v952 = vadd.f32 %v470, %v951
        %v953 = vpop.f32.mrb[0].mxu0
        %v954 = vpop.f32.mrb[0].mxu0
        %v955 = vadd.f32 %v470, %v954
        %v956 = vpop.f32.mrb[0].mxu0
        %957 = vmatprep.mubr.bf16.mxu0 0
        %958 = vmatmul.mubr.bf16.gmra.mrb[0].mxu0 %v715
        %v959 = vpop.f32.mrb[0].mxu0
        %v960 = vadd.f32 %v470, %v959
        %v961 = vpop.f32.mrb[0].mxu0
        %v962 = vpop.f32.mrb[0].mxu0
        %v963 = vadd.f32 %v470, %v962
        %v964 = vpop.f32.mrb[0].mxu0
        %965 = vmatprep.mubr.bf16.mxu0 0
        %966 = vmatmul.mubr.bf16.gmra.mrb[0].mxu0 %v718
        %v967 = vpop.f32.mrb[0].mxu0
        %v968 = vadd.f32 %v470, %v967
        %v969 = vpop.f32.mrb[0].mxu0
        %v970 = vpop.f32.mrb[0].mxu0
        %v971 = vadd.f32 %v470, %v970
        %v972 = vpop.f32.mrb[0].mxu0
        %973 = vmatprep.mubr.bf16.mxu0 0
        %974 = vmatmul.mubr.bf16.gmra.mrb[0].mxu0 %v721
        %v975 = vpop.f32.mrb[0].mxu0
        %v976 = vadd.f32 %v470, %v975
        %v977 = vpop.f32.mrb[0].mxu0
        %v978 = vpop.f32.mrb[0].mxu0
        %v979 = vadd.f32 %v470, %v978
        %v980 = vpop.f32.mrb[0].mxu0
        %981 = vmatprep.mubr.bf16.mxu0 0
        %982 = vmatmul.mubr.bf16.gmra.mrb[0].mxu0 %v724
        %v983 = vpop.f32.mrb[0].mxu0
        %v984 = vadd.f32 %v470, %v983
        %v985 = vpop.f32.mrb[0].mxu0
        %v986 = vpop.f32.mrb[0].mxu0
        %v987 = vadd.f32 %v470, %v986
        %v988 = vpop.f32.mrb[0].mxu0
        %989 = vmatprep.mubr.bf16.mxu0 0
        %990 = vmatmul.mubr.bf16.gmra.mrb[0].mxu0 %v727
        %v991 = vpop.f32.mrb[0].mxu0
        %v992 = vadd.f32 %v470, %v991
        %v993 = vpop.f32.mrb[0].mxu0
        %v994 = vpop.f32.mrb[0].mxu0
        %v995 = vadd.f32 %v470, %v994
        %v996 = vpop.f32.mrb[0].mxu0
        %997 = vmatprep.mubr.bf16.mxu0 0
        %998 = vmatmul.mubr.bf16.gmra.mrb[0].mxu0 %v730
        %v999 = vpop.f32.mrb[0].mxu0
        %v1000 = vadd.f32 %v470, %v999
        %v1001 = vpop.f32.mrb[0].mxu0
        %v1002 = vpop.f32.mrb[0].mxu0
        %v1003 = vadd.f32 %v470, %v1002
        %v1004 = vpop.f32.mrb[0].mxu0
        %1005 = vmatprep.mubr.bf16.mxu0 0
        %1006 = vmatmul.mubr.bf16.gmra.mrb[0].mxu0 %v733
        %v1007 = vpop.f32.mrb[0].mxu0
        %v1008 = vadd.f32 %v470, %v1007
        %v1009 = vpop.f32.mrb[0].mxu0
        %v1010 = vpop.f32.mrb[0].mxu0
        %v1011 = vadd.f32 %v470, %v1010
        %v1012 = vpop.f32.mrb[0].mxu0
        %1013 = vmatprep.mubr.bf16.mxu0 0
        %1014 = vmatmul.mubr.bf16.gmra.mrb[0].mxu0 %v736
        %v1015 = vpop.f32.mrb[0].mxu0
        %v1016 = vadd.f32 %v470, %v1015
        %v1017 = vpop.f32.mrb[0].mxu0
        %v1018 = vpop.f32.mrb[0].mxu0
        %v1019 = vadd.f32 %v470, %v1018
        %v1020 = vpop.f32.mrb[0].mxu0
        %1021 = vmatprep.mubr.bf16.mxu0 0
        %1022 = vmatmul.mubr.bf16.gmra.mrb[0].mxu0 %v739
        %v1023 = vpop.f32.mrb[0].mxu0
        %v1024 = vadd.f32 %v470, %v1023
        %v1025 = vpop.f32.mrb[0].mxu0
        %v1026 = vpop.f32.mrb[0].mxu0
        %v1027 = vadd.f32 %v470, %v1026
        %v1028 = vpop.f32.mrb[0].mxu0
        %1029 = vdwg.mxu0
        %v1030 = vpack.c.bf16 %v779, %v776
        %v1031 = vpack.c.bf16 %v787, %v784
        %v1032 = vpack.c.bf16 %v795, %v792
        %v1033 = vpack.c.bf16 %v803, %v800
        %v1034 = vpack.c.bf16 %v811, %v808
        %v1035 = vpack.c.bf16 %v819, %v816
        %v1036 = vpack.c.bf16 %v827, %v824
        %v1037 = vpack.c.bf16 %v835, %v832
        %v1038 = vpack.c.bf16 %v843, %v840
        %v1039 = vpack.c.bf16 %v851, %v848
        %v1040 = vpack.c.bf16 %v859, %v856
        %v1041 = vpack.c.bf16 %v867, %v864
        %v1042 = vpack.c.bf16 %v875, %v872
        %v1043 = vpack.c.bf16 %v883, %v880
        %v1044 = vpack.c.bf16 %v891, %v888
        %v1045 = vpack.c.bf16 %v899, %v896
        %v1046 = vpack.c.bf16 %v907, %v904
        %v1047 = vpack.c.bf16 %v915, %v912
        %v1048 = vpack.c.bf16 %v923, %v920
        %v1049 = vpack.c.bf16 %v931, %v928
        %v1050 = vpack.c.bf16 %v939, %v936
        %v1051 = vpack.c.bf16 %v947, %v944
        %v1052 = vpack.c.bf16 %v955, %v952
        %v1053 = vpack.c.bf16 %v963, %v960
        %v1054 = vpack.c.bf16 %v971, %v968
        %v1055 = vpack.c.bf16 %v979, %v976
        %v1056 = vpack.c.bf16 %v987, %v984
        %v1057 = vpack.c.bf16 %v995, %v992
        %v1058 = vpack.c.bf16 %v1003, %v1000
        %v1059 = vpack.c.bf16 %v1011, %v1008
        %v1060 = vpack.c.bf16 %v1019, %v1016
        %v1061 = vpack.c.bf16 %v1027, %v1024
        %v1094 = vunpack.c.l.b16 %v1030
        %v1095 = vunpack.c.h.b16 %v1030
        %v1096 = vunpack.c.l.b16 %v1031
        %v1097 = vunpack.c.h.b16 %v1031
        %v1098 = vunpack.c.l.b16 %v1032
        %v1099 = vunpack.c.h.b16 %v1032
        %v1100 = vunpack.c.l.b16 %v1033
        %v1101 = vunpack.c.h.b16 %v1033
        %v1102 = vunpack.c.l.b16 %v1034
        %v1103 = vunpack.c.h.b16 %v1034
        %v1104 = vunpack.c.l.b16 %v1035
        %v1105 = vunpack.c.h.b16 %v1035
        %v1106 = vunpack.c.l.b16 %v1036
        %v1107 = vunpack.c.h.b16 %v1036
        %v1108 = vunpack.c.l.b16 %v1037
        %v1109 = vunpack.c.h.b16 %v1037
        %v1110 = vunpack.c.l.b16 %v1038
        %v1111 = vunpack.c.h.b16 %v1038
        %v1112 = vunpack.c.l.b16 %v1039
        %v1113 = vunpack.c.h.b16 %v1039
        %v1114 = vunpack.c.l.b16 %v1040
        %v1115 = vunpack.c.h.b16 %v1040
        %v1116 = vunpack.c.l.b16 %v1041
        %v1117 = vunpack.c.h.b16 %v1041
        %v1118 = vunpack.c.l.b16 %v1042
        %v1119 = vunpack.c.h.b16 %v1042
        %v1120 = vunpack.c.l.b16 %v1043
        %v1121 = vunpack.c.h.b16 %v1043
        %v1122 = vunpack.c.l.b16 %v1044
        %v1123 = vunpack.c.h.b16 %v1044
        %v1124 = vunpack.c.l.b16 %v1045
        %v1125 = vunpack.c.h.b16 %v1045
        %v1126 = vunpack.c.l.b16 %v1046
        %v1127 = vunpack.c.h.b16 %v1046
        %v1128 = vunpack.c.l.b16 %v1047
        %v1129 = vunpack.c.h.b16 %v1047
        %v1130 = vunpack.c.l.b16 %v1048
        %v1131 = vunpack.c.h.b16 %v1048
        %v1132 = vunpack.c.l.b16 %v1049
        %v1133 = vunpack.c.h.b16 %v1049
        %v1134 = vunpack.c.l.b16 %v1050
        %v1135 = vunpack.c.h.b16 %v1050
        %v1136 = vunpack.c.l.b16 %v1051
        %v1137 = vunpack.c.h.b16 %v1051
        %v1138 = vunpack.c.l.b16 %v1052
        %v1139 = vunpack.c.h.b16 %v1052
        %v1140 = vunpack.c.l.b16 %v1053
        %v1141 = vunpack.c.h.b16 %v1053
        %v1142 = vunpack.c.l.b16 %v1054
        %v1143 = vunpack.c.h.b16 %v1054
        %v1144 = vunpack.c.l.b16 %v1055
        %v1145 = vunpack.c.h.b16 %v1055
        %v1146 = vunpack.c.l.b16 %v1056
        %v1147 = vunpack.c.h.b16 %v1056
        %v1148 = vunpack.c.l.b16 %v1057
        %v1149 = vunpack.c.h.b16 %v1057
        %v1150 = vunpack.c.l.b16 %v1058
        %v1151 = vunpack.c.h.b16 %v1058
        %v1152 = vunpack.c.l.b16 %v1059
        %v1153 = vunpack.c.h.b16 %v1059
        %v1154 = vunpack.c.l.b16 %v1060
        %v1155 = vunpack.c.h.b16 %v1060
        %v1156 = vunpack.c.l.b16 %v1061
        %v1157 = vunpack.c.h.b16 %v1061
        %v1158 = vpack.c.b16 %v1094, %v1094
        %v1159 = vpack.c.b16 %v1095, %v1095
        %v1160 = vpack.c.b16 %v1096, %v1096
        %v1161 = vpack.c.b16 %v1097, %v1097
        %v1162 = vpack.c.b16 %v1098, %v1098
        %v1163 = vpack.c.b16 %v1099, %v1099
        %v1164 = vpack.c.b16 %v1100, %v1100
        %v1165 = vpack.c.b16 %v1101, %v1101
        %v1166 = vpack.c.b16 %v1102, %v1102
        %v1167 = vpack.c.b16 %v1103, %v1103
        %v1168 = vpack.c.b16 %v1104, %v1104
        %v1169 = vpack.c.b16 %v1105, %v1105
        %v1170 = vpack.c.b16 %v1106, %v1106
        %v1171 = vpack.c.b16 %v1107, %v1107
        %v1172 = vpack.c.b16 %v1108, %v1108
        %v1173 = vpack.c.b16 %v1109, %v1109
        %v1174 = vpack.c.b16 %v1110, %v1110
        %v1175 = vpack.c.b16 %v1111, %v1111
        %v1176 = vpack.c.b16 %v1112, %v1112
        %v1177 = vpack.c.b16 %v1113, %v1113
        %v1178 = vpack.c.b16 %v1114, %v1114
        %v1179 = vpack.c.b16 %v1115, %v1115
        %v1180 = vpack.c.b16 %v1116, %v1116
        %v1181 = vpack.c.b16 %v1117, %v1117
        %v1182 = vpack.c.b16 %v1118, %v1118
        %v1183 = vpack.c.b16 %v1119, %v1119
        %v1184 = vpack.c.b16 %v1120, %v1120
        %v1185 = vpack.c.b16 %v1121, %v1121
        %v1186 = vpack.c.b16 %v1122, %v1122
        %v1187 = vpack.c.b16 %v1123, %v1123
        %v1188 = vpack.c.b16 %v1124, %v1124
        %v1189 = vpack.c.b16 %v1125, %v1125
        %v1190 = vpack.c.b16 %v1126, %v1126
        %v1191 = vpack.c.b16 %v1127, %v1127
        %v1192 = vpack.c.b16 %v1128, %v1128
        %v1193 = vpack.c.b16 %v1129, %v1129
        %v1194 = vpack.c.b16 %v1130, %v1130
        %v1195 = vpack.c.b16 %v1131, %v1131
        %v1196 = vpack.c.b16 %v1132, %v1132
        %v1197 = vpack.c.b16 %v1133, %v1133
        %v1198 = vpack.c.b16 %v1134, %v1134
        %v1199 = vpack.c.b16 %v1135, %v1135
        %v1200 = vpack.c.b16 %v1136, %v1136
        %v1201 = vpack.c.b16 %v1137, %v1137
        %v1202 = vpack.c.b16 %v1138, %v1138
        %v1203 = vpack.c.b16 %v1139, %v1139
        %v1204 = vpack.c.b16 %v1140, %v1140
        %v1205 = vpack.c.b16 %v1141, %v1141
        %v1206 = vpack.c.b16 %v1142, %v1142
        %v1207 = vpack.c.b16 %v1143, %v1143
        %v1208 = vpack.c.b16 %v1144, %v1144
        %v1209 = vpack.c.b16 %v1145, %v1145
        %v1210 = vpack.c.b16 %v1146, %v1146
        %v1211 = vpack.c.b16 %v1147, %v1147
        %v1212 = vpack.c.b16 %v1148, %v1148
        %v1213 = vpack.c.b16 %v1149, %v1149
        %v1214 = vpack.c.b16 %v1150, %v1150
        %v1215 = vpack.c.b16 %v1151, %v1151
        %v1216 = vpack.c.b16 %v1152, %v1152
        %v1217 = vpack.c.b16 %v1153, %v1153
        %v1218 = vpack.c.b16 %v1154, %v1154
        %v1219 = vpack.c.b16 %v1155, %v1155
        %v1220 = vpack.c.b16 %v1156, %v1156
        %v1221 = vpack.c.b16 %v1157, %v1157
        %1286 = vst [vmem:[%s370] sm:$0xf] %v1158
        %1287 = vst [vmem:[%s370 + $0x4] sm:$0xf] %v1159
        %1288 = vst [vmem:[%s370 + $0x8] sm:$0xf] %v1160
        %1289 = vst [vmem:[%s370 + $0xc] sm:$0xf] %v1161
        %1290 = vst [vmem:[%s370 + $0x10] sm:$0xf] %v1162
        %1291 = vst [vmem:[%s370 + $0x14] sm:$0xf] %v1163
        %1292 = vst [vmem:[%s370 + $0x18] sm:$0xf] %v1164
        %1293 = vst [vmem:[%s370 + $0x1c] sm:$0xf] %v1165
        %1294 = vst [vmem:[%s370 + $0x20] sm:$0xf] %v1166
        %1295 = vst [vmem:[%s370 + $0x24] sm:$0xf] %v1167
        %1296 = vst [vmem:[%s370 + $0x28] sm:$0xf] %v1168
        %1297 = vst [vmem:[%s370 + $0x2c] sm:$0xf] %v1169
        %1298 = vst [vmem:[%s370 + $0x30] sm:$0xf] %v1170
        %1299 = vst [vmem:[%s370 + $0x34] sm:$0xf] %v1171
        %1300 = vst [vmem:[%s370 + $0x38] sm:$0xf] %v1172
        %1301 = vst [vmem:[%s370 + $0x3c] sm:$0xf] %v1173
        %1302 = vst [vmem:[%s370 + $0x40] sm:$0xf] %v1174
        %1303 = vst [vmem:[%s370 + $0x44] sm:$0xf] %v1175
        %1304 = vst [vmem:[%s370 + $0x48] sm:$0xf] %v1176
        %1305 = vst [vmem:[%s370 + $0x4c] sm:$0xf] %v1177
        %1306 = vst [vmem:[%s370 + $0x50] sm:$0xf] %v1178
        %1307 = vst [vmem:[%s370 + $0x54] sm:$0xf] %v1179
        %1308 = vst [vmem:[%s370 + $0x58] sm:$0xf] %v1180
        %1309 = vst [vmem:[%s370 + $0x5c] sm:$0xf] %v1181
        %1310 = vst [vmem:[%s370 + $0x60] sm:$0xf] %v1182
        %1311 = vst [vmem:[%s370 + $0x64] sm:$0xf] %v1183
        %1312 = vst [vmem:[%s370 + $0x68] sm:$0xf] %v1184
        %1313 = vst [vmem:[%s370 + $0x6c] sm:$0xf] %v1185
        %1314 = vst [vmem:[%s370 + $0x70] sm:$0xf] %v1186
        %1315 = vst [vmem:[%s370 + $0x74] sm:$0xf] %v1187
        %1316 = vst [vmem:[%s370 + $0x78] sm:$0xf] %v1188
        %1317 = vst [vmem:[%s370 + $0x7c] sm:$0xf] %v1189
        %1318 = vst [vmem:[%s370 + $0x80] sm:$0xf] %v1190
        %1319 = vst [vmem:[%s370 + $0x84] sm:$0xf] %v1191
        %1320 = vst [vmem:[%s370 + $0x88] sm:$0xf] %v1192
        %1321 = vst [vmem:[%s370 + $0x8c] sm:$0xf] %v1193
        %1322 = vst [vmem:[%s370 + $0x90] sm:$0xf] %v1194
        %1323 = vst [vmem:[%s370 + $0x94] sm:$0xf] %v1195
        %1324 = vst [vmem:[%s370 + $0x98] sm:$0xf] %v1196
        %1325 = vst [vmem:[%s370 + $0x9c] sm:$0xf] %v1197
        %1326 = vst [vmem:[%s370 + $0xa0] sm:$0xf] %v1198
        %1327 = vst [vmem:[%s370 + $0xa4] sm:$0xf] %v1199
        %1328 = vst [vmem:[%s370 + $0xa8] sm:$0xf] %v1200
        %1329 = vst [vmem:[%s370 + $0xac] sm:$0xf] %v1201
        %1330 = vst [vmem:[%s370 + $0xb0] sm:$0xf] %v1202
        %1331 = vst [vmem:[%s370 + $0xb4] sm:$0xf] %v1203
        %1332 = vst [vmem:[%s370 + $0xb8] sm:$0xf] %v1204
        %1333 = vst [vmem:[%s370 + $0xbc] sm:$0xf] %v1205
        %1334 = vst [vmem:[%s370 + $0xc0] sm:$0xf] %v1206
        %1335 = vst [vmem:[%s370 + $0xc4] sm:$0xf] %v1207
        %1336 = vst [vmem:[%s370 + $0xc8] sm:$0xf] %v1208
        %1337 = vst [vmem:[%s370 + $0xcc] sm:$0xf] %v1209
        %1338 = vst [vmem:[%s370 + $0xd0] sm:$0xf] %v1210
        %1339 = vst [vmem:[%s370 + $0xd4] sm:$0xf] %v1211
        %1340 = vst [vmem:[%s370 + $0xd8] sm:$0xf] %v1212
        %1341 = vst [vmem:[%s370 + $0xdc] sm:$0xf] %v1213
        %1342 = vst [vmem:[%s370 + $0xe0] sm:$0xf] %v1214
        %1343 = vst [vmem:[%s370 + $0xe4] sm:$0xf] %v1215
        %1344 = vst [vmem:[%s370 + $0xe8] sm:$0xf] %v1216
        %1345 = vst [vmem:[%s370 + $0xec] sm:$0xf] %v1217
        %1346 = vst [vmem:[%s370 + $0xf0] sm:$0xf] %v1218
        %1347 = vst [vmem:[%s370 + $0xf4] sm:$0xf] %v1219
        %1348 = vst [vmem:[%s370 + $0xf8] sm:$0xf] %v1220
        %1349 = vst [vmem:[%s370 + $0xfc] sm:$0xf] %v1221
        %v1350 = vld [vmem:[%s381] sm:$0xf]
        %v1351 = vld [vmem:[%s381 + $0x4] sm:$0xf]
        %v1352 = vld [vmem:[%s381 + $0x8] sm:$0xf]
        %v1353 = vld [vmem:[%s381 + $0xc] sm:$0xf]
        %v1354 = vld [vmem:[%s381 + $0x10] sm:$0xf]
        %v1355 = vld [vmem:[%s381 + $0x14] sm:$0xf]
        %v1356 = vld [vmem:[%s381 + $0x18] sm:$0xf]
        %v1357 = vld [vmem:[%s381 + $0x1c] sm:$0xf]
        %v1358 = vld [vmem:[%s381 + $0x20] sm:$0xf]
        %v1359 = vld [vmem:[%s381 + $0x24] sm:$0xf]
        %v1360 = vld [vmem:[%s381 + $0x28] sm:$0xf]
        %v1361 = vld [vmem:[%s381 + $0x2c] sm:$0xf]
        %v1362 = vld [vmem:[%s381 + $0x30] sm:$0xf]
        %v1363 = vld [vmem:[%s381 + $0x34] sm:$0xf]
        %v1364 = vld [vmem:[%s381 + $0x38] sm:$0xf]
        %v1365 = vld [vmem:[%s381 + $0x3c] sm:$0xf]
        %v1366 = vld [vmem:[%s381 + $0x40] sm:$0xf]
        %v1367 = vld [vmem:[%s381 + $0x44] sm:$0xf]
        %v1368 = vld [vmem:[%s381 + $0x48] sm:$0xf]
        %v1369 = vld [vmem:[%s381 + $0x4c] sm:$0xf]
        %v1370 = vld [vmem:[%s381 + $0x50] sm:$0xf]
        %v1371 = vld [vmem:[%s381 + $0x54] sm:$0xf]
        %v1372 = vld [vmem:[%s381 + $0x58] sm:$0xf]
        %v1373 = vld [vmem:[%s381 + $0x5c] sm:$0xf]
        %v1374 = vld [vmem:[%s381 + $0x60] sm:$0xf]
        %v1375 = vld [vmem:[%s381 + $0x64] sm:$0xf]
        %v1376 = vld [vmem:[%s381 + $0x68] sm:$0xf]
        %v1377 = vld [vmem:[%s381 + $0x6c] sm:$0xf]
        %v1378 = vld [vmem:[%s381 + $0x70] sm:$0xf]
        %v1379 = vld [vmem:[%s381 + $0x74] sm:$0xf]
        %v1380 = vld [vmem:[%s381 + $0x78] sm:$0xf]
        %v1381 = vld [vmem:[%s381 + $0x7c] sm:$0xf]
        %v1382 = vld [vmem:[%s381 + $0x80] sm:$0xf]
        %v1383 = vld [vmem:[%s381 + $0x84] sm:$0xf]
        %v1384 = vld [vmem:[%s381 + $0x88] sm:$0xf]
        %v1385 = vld [vmem:[%s381 + $0x8c] sm:$0xf]
        %v1386 = vld [vmem:[%s381 + $0x90] sm:$0xf]
        %v1387 = vld [vmem:[%s381 + $0x94] sm:$0xf]
        %v1388 = vld [vmem:[%s381 + $0x98] sm:$0xf]
        %v1389 = vld [vmem:[%s381 + $0x9c] sm:$0xf]
        %v1390 = vld [vmem:[%s381 + $0xa0] sm:$0xf]
        %v1391 = vld [vmem:[%s381 + $0xa4] sm:$0xf]
        %v1392 = vld [vmem:[%s381 + $0xa8] sm:$0xf]
        %v1393 = vld [vmem:[%s381 + $0xac] sm:$0xf]
        %v1394 = vld [vmem:[%s381 + $0xb0] sm:$0xf]
        %v1395 = vld [vmem:[%s381 + $0xb4] sm:$0xf]
        %v1396 = vld [vmem:[%s381 + $0xb8] sm:$0xf]
        %v1397 = vld [vmem:[%s381 + $0xbc] sm:$0xf]
        %v1398 = vld [vmem:[%s381 + $0xc0] sm:$0xf]
        %v1399 = vld [vmem:[%s381 + $0xc4] sm:$0xf]
        %v1400 = vld [vmem:[%s381 + $0xc8] sm:$0xf]
        %v1401 = vld [vmem:[%s381 + $0xcc] sm:$0xf]
        %v1402 = vld [vmem:[%s381 + $0xd0] sm:$0xf]
        %v1403 = vld [vmem:[%s381 + $0xd4] sm:$0xf]
        %v1404 = vld [vmem:[%s381 + $0xd8] sm:$0xf]
        %v1405 = vld [vmem:[%s381 + $0xdc] sm:$0xf]
        %v1406 = vld [vmem:[%s381 + $0xe0] sm:$0xf]
        %v1407 = vld [vmem:[%s381 + $0xe4] sm:$0xf]
        %v1408 = vld [vmem:[%s381 + $0xe8] sm:$0xf]
        %v1409 = vld [vmem:[%s381 + $0xec] sm:$0xf]
        %v1410 = vld [vmem:[%s381 + $0xf0] sm:$0xf]
        %v1411 = vld [vmem:[%s381 + $0xf4] sm:$0xf]
        %v1412 = vld [vmem:[%s381 + $0xf8] sm:$0xf]
        %v1413 = vld [vmem:[%s381 + $0xfc] sm:$0xf]
        %v1414 = vld [vmem:[%s5] sm:$0xf]
        %v1415 = vld [vmem:[%s5 + $0x4] sm:$0xf]
        %v1416 = vld [vmem:[%s5 + $0x8] sm:$0xf]
        %v1417 = vld [vmem:[%s5 + $0xc] sm:$0xf]
        %v1418 = vld [vmem:[%s5 + $0x10] sm:$0xf]
        %v1419 = vld [vmem:[%s5 + $0x14] sm:$0xf]
        %v1420 = vld [vmem:[%s5 + $0x18] sm:$0xf]
        %v1421 = vld [vmem:[%s5 + $0x1c] sm:$0xf]
        %v1486 = vunpack.c.l.b16 %v1350
        %v1487 = vunpack.c.l.b16 %v1351
        %v1488 = vunpack.c.l.b16 %v1352
        %v1489 = vunpack.c.l.b16 %v1353
        %v1490 = vunpack.c.l.b16 %v1354
        %v1491 = vunpack.c.l.b16 %v1355
        %v1492 = vunpack.c.l.b16 %v1356
        %v1493 = vunpack.c.l.b16 %v1357
        %v1494 = vunpack.c.l.b16 %v1358
        %v1495 = vunpack.c.l.b16 %v1359
        %v1496 = vunpack.c.l.b16 %v1360
        %v1497 = vunpack.c.l.b16 %v1361
        %v1498 = vunpack.c.l.b16 %v1362
        %v1499 = vunpack.c.l.b16 %v1363
        %v1500 = vunpack.c.l.b16 %v1364
        %v1501 = vunpack.c.l.b16 %v1365
        %v1502 = vunpack.c.l.b16 %v1366
        %v1503 = vunpack.c.l.b16 %v1367
        %v1504 = vunpack.c.l.b16 %v1368
        %v1505 = vunpack.c.l.b16 %v1369
        %v1506 = vunpack.c.l.b16 %v1370
        %v1507 = vunpack.c.l.b16 %v1371
        %v1508 = vunpack.c.l.b16 %v1372
        %v1509 = vunpack.c.l.b16 %v1373
        %v1510 = vunpack.c.l.b16 %v1374
        %v1511 = vunpack.c.l.b16 %v1375
        %v1512 = vunpack.c.l.b16 %v1376
        %v1513 = vunpack.c.l.b16 %v1377
        %v1514 = vunpack.c.l.b16 %v1378
        %v1515 = vunpack.c.l.b16 %v1379
        %v1516 = vunpack.c.l.b16 %v1380
        %v1517 = vunpack.c.l.b16 %v1381
        %v1518 = vunpack.c.l.b16 %v1382
        %v1519 = vunpack.c.l.b16 %v1383
        %v1520 = vunpack.c.l.b16 %v1384
        %v1521 = vunpack.c.l.b16 %v1385
        %v1522 = vunpack.c.l.b16 %v1386
        %v1523 = vunpack.c.l.b16 %v1387
        %v1524 = vunpack.c.l.b16 %v1388
        %v1525 = vunpack.c.l.b16 %v1389
        %v1526 = vunpack.c.l.b16 %v1390
        %v1527 = vunpack.c.l.b16 %v1391
        %v1528 = vunpack.c.l.b16 %v1392
        %v1529 = vunpack.c.l.b16 %v1393
        %v1530 = vunpack.c.l.b16 %v1394
        %v1531 = vunpack.c.l.b16 %v1395
        %v1532 = vunpack.c.l.b16 %v1396
        %v1533 = vunpack.c.l.b16 %v1397
        %v1534 = vunpack.c.l.b16 %v1398
        %v1535 = vunpack.c.l.b16 %v1399
        %v1536 = vunpack.c.l.b16 %v1400
        %v1537 = vunpack.c.l.b16 %v1401
        %v1538 = vunpack.c.l.b16 %v1402
        %v1539 = vunpack.c.l.b16 %v1403
        %v1540 = vunpack.c.l.b16 %v1404
        %v1541 = vunpack.c.l.b16 %v1405
        %v1542 = vunpack.c.l.b16 %v1406
        %v1543 = vunpack.c.l.b16 %v1407
        %v1544 = vunpack.c.l.b16 %v1408
        %v1545 = vunpack.c.l.b16 %v1409
        %v1546 = vunpack.c.l.b16 %v1410
        %v1547 = vunpack.c.l.b16 %v1411
        %v1548 = vunpack.c.l.b16 %v1412
        %v1549 = vunpack.c.l.b16 %v1413
        %v1550 = vpack.c.b16 %v1487, %v1486
        %v1551 = vpack.c.b16 %v1489, %v1488
        %v1552 = vpack.c.b16 %v1491, %v1490
        %v1553 = vpack.c.b16 %v1493, %v1492
        %v1554 = vpack.c.b16 %v1495, %v1494
        %v1555 = vpack.c.b16 %v1497, %v1496
        %v1556 = vpack.c.b16 %v1499, %v1498
        %v1557 = vpack.c.b16 %v1501, %v1500
        %v1558 = vpack.c.b16 %v1503, %v1502
        %v1559 = vpack.c.b16 %v1505, %v1504
        %v1560 = vpack.c.b16 %v1507, %v1506
        %v1561 = vpack.c.b16 %v1509, %v1508
        %v1562 = vpack.c.b16 %v1511, %v1510
        %v1563 = vpack.c.b16 %v1513, %v1512
        %v1564 = vpack.c.b16 %v1515, %v1514
        %v1565 = vpack.c.b16 %v1517, %v1516
        %v1566 = vpack.c.b16 %v1519, %v1518
        %v1567 = vpack.c.b16 %v1521, %v1520
        %v1568 = vpack.c.b16 %v1523, %v1522
        %v1569 = vpack.c.b16 %v1525, %v1524
        %v1570 = vpack.c.b16 %v1527, %v1526
        %v1571 = vpack.c.b16 %v1529, %v1528
        %v1572 = vpack.c.b16 %v1531, %v1530
        %v1573 = vpack.c.b16 %v1533, %v1532
        %v1574 = vpack.c.b16 %v1535, %v1534
        %v1575 = vpack.c.b16 %v1537, %v1536
        %v1576 = vpack.c.b16 %v1539, %v1538
        %v1577 = vpack.c.b16 %v1541, %v1540
        %v1578 = vpack.c.b16 %v1543, %v1542
        %v1579 = vpack.c.b16 %v1545, %v1544
        %v1580 = vpack.c.b16 %v1547, %v1546
        %v1581 = vpack.c.b16 %v1549, %v1548
        %v1590 = vunpack.c.l.b16 %v1414
        %v1591 = vunpack.c.l.b16 %v1415
        %v1592 = vunpack.c.l.b16 %v1416
        %v1593 = vunpack.c.l.b16 %v1417
        %v1594 = vunpack.c.l.b16 %v1418
        %v1595 = vunpack.c.l.b16 %v1419
        %v1596 = vunpack.c.l.b16 %v1420
        %v1597 = vunpack.c.l.b16 %v1421
        %v1598 = vpack.c.b16 %v1591, %v1590
        %v1599 = vpack.c.b16 %v1593, %v1592
        %v1600 = vpack.c.b16 %v1595, %v1594
        %v1601 = vpack.c.b16 %v1597, %v1596
        %vm1606 = vcmask 523264
        %v1608 = vsel %vm1606, %v1550, 0
        %v1611 = vsel %vm1606, %v1551, 0
        %v1614 = vsel %vm1606, %v1552, 0
        %v1617 = vsel %vm1606, %v1553, 0
        %v1620 = vsel %vm1606, %v1554, 0
        %v1623 = vsel %vm1606, %v1555, 0
        %v1626 = vsel %vm1606, %v1556, 0
        %v1629 = vsel %vm1606, %v1557, 0
        %v1632 = vsel %vm1606, %v1558, 0
        %v1635 = vsel %vm1606, %v1559, 0
        %v1638 = vsel %vm1606, %v1560, 0
        %v1641 = vsel %vm1606, %v1561, 0
        %v1644 = vsel %vm1606, %v1562, 0
        %v1647 = vsel %vm1606, %v1563, 0
        %v1650 = vsel %vm1606, %v1564, 0
        %v1653 = vsel %vm1606, %v1565, 0
        %v1656 = vsel %vm1606, %v1566, 0
        %v1659 = vsel %vm1606, %v1567, 0
        %v1662 = vsel %vm1606, %v1568, 0
        %v1665 = vsel %vm1606, %v1569, 0
        %v1668 = vsel %vm1606, %v1570, 0
        %v1671 = vsel %vm1606, %v1571, 0
        %v1674 = vsel %vm1606, %v1572, 0
        %v1677 = vsel %vm1606, %v1573, 0
        %v1680 = vsel %vm1606, %v1574, 0
        %v1683 = vsel %vm1606, %v1575, 0
        %v1686 = vsel %vm1606, %v1576, 0
        %v1689 = vsel %vm1606, %v1577, 0
        %v1692 = vsel %vm1606, %v1578, 0
        %v1695 = vsel %vm1606, %v1579, 0
        %v1698 = vsel %vm1606, %v1580, 0
        %v1701 = vsel %vm1606, %v1581, 0
        %1703 = vmatprep.subr.bf16.mxu0 0
        %1704 = vmatpush1.bf16.msra.mxu0 %v1598
        %1705 = vmatprep.subr.bf16.mxu0 0
        %1706 = vmatpush1.bf16.msra.mxu0 %v1599
        %1707 = vmatprep.subr.bf16.mxu0 0
        %1708 = vmatpush1.bf16.msra.mxu0 %v1600
        %1709 = vmatprep.subr.bf16.mxu0 0
        %1710 = vmatpush1.bf16.msra.mxu0 %v1601
        %1711 = vmatprep.subr.bf16.mxu0 0
        %1712 = vmatpush1.bf16.msra.mxu0 0
        %1713 = vmatprep.subr.bf16.mxu0 0
        %1714 = vmatpush1.bf16.msra.mxu0 0
        %1715 = vmatprep.subr.bf16.mxu0 0
        %1716 = vmatpush1.bf16.msra.mxu0 0
        %1717 = vmatprep.subr.bf16.mxu0 0
        %1718 = vmatpush1.bf16.msra.mxu0 0
        %1719 = vmatprep.subr.bf16.mxu0 0
        %1720 = vmatpush1.bf16.msra.mxu0 0
        %1721 = vmatprep.subr.bf16.mxu0 0
        %1722 = vmatpush1.bf16.msra.mxu0 0
        %1723 = vmatprep.subr.bf16.mxu0 0
        %1724 = vmatpush1.bf16.msra.mxu0 0
        %1725 = vmatprep.subr.bf16.mxu0 0
        %1726 = vmatpush1.bf16.msra.mxu0 0
        %1727 = vmatprep.subr.bf16.mxu0 0
        %1728 = vmatpush1.bf16.msra.mxu0 0
        %1729 = vmatprep.subr.bf16.mxu0 0
        %1730 = vmatpush1.bf16.msra.mxu0 0
        %1731 = vmatprep.subr.bf16.mxu0 0
        %1732 = vmatpush1.bf16.msra.mxu0 0
        %1733 = vmatprep.subr.bf16.mxu0 0
        %1734 = vmatpush1.bf16.msra.mxu0 0
        %1735 = vmatprep.mubr.bf16.mxu0 0
        %1736 = vmatmul.mubr.bf16.gmra.mrb[0].mxu0 %v1608
        %v1737 = vpop.f32.mrb[0].mxu0
        %v1738 = vadd.f32 %v470, %v1737
        %v1739 = vpop.f32.mrb[0].mxu0
        %v1740 = vpop.f32.mrb[0].mxu0
        %v1741 = vadd.f32 %v470, %v1740
        %v1742 = vpop.f32.mrb[0].mxu0
        %1743 = vmatprep.mubr.bf16.mxu0 0
        %1744 = vmatmul.mubr.bf16.gmra.mrb[0].mxu0 %v1611
        %v1745 = vpop.f32.mrb[0].mxu0
        %v1746 = vadd.f32 %v470, %v1745
        %v1747 = vpop.f32.mrb[0].mxu0
        %v1748 = vpop.f32.mrb[0].mxu0
        %v1749 = vadd.f32 %v470, %v1748
        %v1750 = vpop.f32.mrb[0].mxu0
        %1751 = vmatprep.mubr.bf16.mxu0 0
        %1752 = vmatmul.mubr.bf16.gmra.mrb[0].mxu0 %v1614
        %v1753 = vpop.f32.mrb[0].mxu0
        %v1754 = vadd.f32 %v470, %v1753
        %v1755 = vpop.f32.mrb[0].mxu0
        %v1756 = vpop.f32.mrb[0].mxu0
        %v1757 = vadd.f32 %v470, %v1756
        %v1758 = vpop.f32.mrb[0].mxu0
        %1759 = vmatprep.mubr.bf16.mxu0 0
        %1760 = vmatmul.mubr.bf16.gmra.mrb[0].mxu0 %v1617
        %v1761 = vpop.f32.mrb[0].mxu0
        %v1762 = vadd.f32 %v470, %v1761
        %v1763 = vpop.f32.mrb[0].mxu0
        %v1764 = vpop.f32.mrb[0].mxu0
        %v1765 = vadd.f32 %v470, %v1764
        %v1766 = vpop.f32.mrb[0].mxu0
        %1767 = vmatprep.mubr.bf16.mxu0 0
        %1768 = vmatmul.mubr.bf16.gmra.mrb[0].mxu0 %v1620
        %v1769 = vpop.f32.mrb[0].mxu0
        %v1770 = vadd.f32 %v470, %v1769
        %v1771 = vpop.f32.mrb[0].mxu0
        %v1772 = vpop.f32.mrb[0].mxu0
        %v1773 = vadd.f32 %v470, %v1772
        %v1774 = vpop.f32.mrb[0].mxu0
        %1775 = vmatprep.mubr.bf16.mxu0 0
        %1776 = vmatmul.mubr.bf16.gmra.mrb[0].mxu0 %v1623
        %v1777 = vpop.f32.mrb[0].mxu0
        %v1778 = vadd.f32 %v470, %v1777
        %v1779 = vpop.f32.mrb[0].mxu0
        %v1780 = vpop.f32.mrb[0].mxu0
        %v1781 = vadd.f32 %v470, %v1780
        %v1782 = vpop.f32.mrb[0].mxu0
        %1783 = vmatprep.mubr.bf16.mxu0 0
        %1784 = vmatmul.mubr.bf16.gmra.mrb[0].mxu0 %v1626
        %v1785 = vpop.f32.mrb[0].mxu0
        %v1786 = vadd.f32 %v470, %v1785
        %v1787 = vpop.f32.mrb[0].mxu0
        %v1788 = vpop.f32.mrb[0].mxu0
        %v1789 = vadd.f32 %v470, %v1788
        %v1790 = vpop.f32.mrb[0].mxu0
        %1791 = vmatprep.mubr.bf16.mxu0 0
        %1792 = vmatmul.mubr.bf16.gmra.mrb[0].mxu0 %v1629
        %v1793 = vpop.f32.mrb[0].mxu0
        %v1794 = vadd.f32 %v470, %v1793
        %v1795 = vpop.f32.mrb[0].mxu0
        %v1796 = vpop.f32.mrb[0].mxu0
        %v1797 = vadd.f32 %v470, %v1796
        %v1798 = vpop.f32.mrb[0].mxu0
        %1799 = vmatprep.mubr.bf16.mxu0 0
        %1800 = vmatmul.mubr.bf16.gmra.mrb[0].mxu0 %v1632
        %v1801 = vpop.f32.mrb[0].mxu0
        %v1802 = vadd.f32 %v470, %v1801
        %v1803 = vpop.f32.mrb[0].mxu0
        %v1804 = vpop.f32.mrb[0].mxu0
        %v1805 = vadd.f32 %v470, %v1804
        %v1806 = vpop.f32.mrb[0].mxu0
        %1807 = vmatprep.mubr.bf16.mxu0 0
        %1808 = vmatmul.mubr.bf16.gmra.mrb[0].mxu0 %v1635
        %v1809 = vpop.f32.mrb[0].mxu0
        %v1810 = vadd.f32 %v470, %v1809
        %v1811 = vpop.f32.mrb[0].mxu0
        %v1812 = vpop.f32.mrb[0].mxu0
        %v1813 = vadd.f32 %v470, %v1812
        %v1814 = vpop.f32.mrb[0].mxu0
        %1815 = vmatprep.mubr.bf16.mxu0 0
        %1816 = vmatmul.mubr.bf16.gmra.mrb[0].mxu0 %v1638
        %v1817 = vpop.f32.mrb[0].mxu0
        %v1818 = vadd.f32 %v470, %v1817
        %v1819 = vpop.f32.mrb[0].mxu0
        %v1820 = vpop.f32.mrb[0].mxu0
        %v1821 = vadd.f32 %v470, %v1820
        %v1822 = vpop.f32.mrb[0].mxu0
        %1823 = vmatprep.mubr.bf16.mxu0 0
        %1824 = vmatmul.mubr.bf16.gmra.mrb[0].mxu0 %v1641
        %v1825 = vpop.f32.mrb[0].mxu0
        %v1826 = vadd.f32 %v470, %v1825
        %v1827 = vpop.f32.mrb[0].mxu0
        %v1828 = vpop.f32.mrb[0].mxu0
        %v1829 = vadd.f32 %v470, %v1828
        %v1830 = vpop.f32.mrb[0].mxu0
        %1831 = vmatprep.mubr.bf16.mxu0 0
        %1832 = vmatmul.mubr.bf16.gmra.mrb[0].mxu0 %v1644
        %v1833 = vpop.f32.mrb[0].mxu0
        %v1834 = vadd.f32 %v470, %v1833
        %v1835 = vpop.f32.mrb[0].mxu0
        %v1836 = vpop.f32.mrb[0].mxu0
        %v1837 = vadd.f32 %v470, %v1836
        %v1838 = vpop.f32.mrb[0].mxu0
        %1839 = vmatprep.mubr.bf16.mxu0 0
        %1840 = vmatmul.mubr.bf16.gmra.mrb[0].mxu0 %v1647
        %v1841 = vpop.f32.mrb[0].mxu0
        %v1842 = vadd.f32 %v470, %v1841
        %v1843 = vpop.f32.mrb[0].mxu0
        %v1844 = vpop.f32.mrb[0].mxu0
        %v1845 = vadd.f32 %v470, %v1844
        %v1846 = vpop.f32.mrb[0].mxu0
        %1847 = vmatprep.mubr.bf16.mxu0 0
        %1848 = vmatmul.mubr.bf16.gmra.mrb[0].mxu0 %v1650
        %v1849 = vpop.f32.mrb[0].mxu0
        %v1850 = vadd.f32 %v470, %v1849
        %v1851 = vpop.f32.mrb[0].mxu0
        %v1852 = vpop.f32.mrb[0].mxu0
        %v1853 = vadd.f32 %v470, %v1852
        %v1854 = vpop.f32.mrb[0].mxu0
        %1855 = vmatprep.mubr.bf16.mxu0 0
        %1856 = vmatmul.mubr.bf16.gmra.mrb[0].mxu0 %v1653
        %v1857 = vpop.f32.mrb[0].mxu0
        %v1858 = vadd.f32 %v470, %v1857
        %v1859 = vpop.f32.mrb[0].mxu0
        %v1860 = vpop.f32.mrb[0].mxu0
        %v1861 = vadd.f32 %v470, %v1860
        %v1862 = vpop.f32.mrb[0].mxu0
        %1863 = vmatprep.mubr.bf16.mxu0 0
        %1864 = vmatmul.mubr.bf16.gmra.mrb[0].mxu0 %v1656
        %v1865 = vpop.f32.mrb[0].mxu0
        %v1866 = vadd.f32 %v470, %v1865
        %v1867 = vpop.f32.mrb[0].mxu0
        %v1868 = vpop.f32.mrb[0].mxu0
        %v1869 = vadd.f32 %v470, %v1868
        %v1870 = vpop.f32.mrb[0].mxu0
        %1871 = vmatprep.mubr.bf16.mxu0 0
        %1872 = vmatmul.mubr.bf16.gmra.mrb[0].mxu0 %v1659
        %v1873 = vpop.f32.mrb[0].mxu0
        %v1874 = vadd.f32 %v470, %v1873
        %v1875 = vpop.f32.mrb[0].mxu0
        %v1876 = vpop.f32.mrb[0].mxu0
        %v1877 = vadd.f32 %v470, %v1876
        %v1878 = vpop.f32.mrb[0].mxu0
        %1879 = vmatprep.mubr.bf16.mxu0 0
        %1880 = vmatmul.mubr.bf16.gmra.mrb[0].mxu0 %v1662
        %v1881 = vpop.f32.mrb[0].mxu0
        %v1882 = vadd.f32 %v470, %v1881
        %v1883 = vpop.f32.mrb[0].mxu0
        %v1884 = vpop.f32.mrb[0].mxu0
        %v1885 = vadd.f32 %v470, %v1884
        %v1886 = vpop.f32.mrb[0].mxu0
        %1887 = vmatprep.mubr.bf16.mxu0 0
        %1888 = vmatmul.mubr.bf16.gmra.mrb[0].mxu0 %v1665
        %v1889 = vpop.f32.mrb[0].mxu0
        %v1890 = vadd.f32 %v470, %v1889
        %v1891 = vpop.f32.mrb[0].mxu0
        %v1892 = vpop.f32.mrb[0].mxu0
        %v1893 = vadd.f32 %v470, %v1892
        %v1894 = vpop.f32.mrb[0].mxu0
        %1895 = vmatprep.mubr.bf16.mxu0 0
        %1896 = vmatmul.mubr.bf16.gmra.mrb[0].mxu0 %v1668
        %v1897 = vpop.f32.mrb[0].mxu0
        %v1898 = vadd.f32 %v470, %v1897
        %v1899 = vpop.f32.mrb[0].mxu0
        %v1900 = vpop.f32.mrb[0].mxu0
        %v1901 = vadd.f32 %v470, %v1900
        %v1902 = vpop.f32.mrb[0].mxu0
        %1903 = vmatprep.mubr.bf16.mxu0 0
        %1904 = vmatmul.mubr.bf16.gmra.mrb[0].mxu0 %v1671
        %v1905 = vpop.f32.mrb[0].mxu0
        %v1906 = vadd.f32 %v470, %v1905
        %v1907 = vpop.f32.mrb[0].mxu0
        %v1908 = vpop.f32.mrb[0].mxu0
        %v1909 = vadd.f32 %v470, %v1908
        %v1910 = vpop.f32.mrb[0].mxu0
        %1911 = vmatprep.mubr.bf16.mxu0 0
        %1912 = vmatmul.mubr.bf16.gmra.mrb[0].mxu0 %v1674
        %v1913 = vpop.f32.mrb[0].mxu0
        %v1914 = vadd.f32 %v470, %v1913
        %v1915 = vpop.f32.mrb[0].mxu0
        %v1916 = vpop.f32.mrb[0].mxu0
        %v1917 = vadd.f32 %v470, %v1916
        %v1918 = vpop.f32.mrb[0].mxu0
        %1919 = vmatprep.mubr.bf16.mxu0 0
        %1920 = vmatmul.mubr.bf16.gmra.mrb[0].mxu0 %v1677
        %v1921 = vpop.f32.mrb[0].mxu0
        %v1922 = vadd.f32 %v470, %v1921
        %v1923 = vpop.f32.mrb[0].mxu0
        %v1924 = vpop.f32.mrb[0].mxu0
        %v1925 = vadd.f32 %v470, %v1924
        %v1926 = vpop.f32.mrb[0].mxu0
        %1927 = vmatprep.mubr.bf16.mxu0 0
        %1928 = vmatmul.mubr.bf16.gmra.mrb[0].mxu0 %v1680
        %v1929 = vpop.f32.mrb[0].mxu0
        %v1930 = vadd.f32 %v470, %v1929
        %v1931 = vpop.f32.mrb[0].mxu0
        %v1932 = vpop.f32.mrb[0].mxu0
        %v1933 = vadd.f32 %v470, %v1932
        %v1934 = vpop.f32.mrb[0].mxu0
        %1935 = vmatprep.mubr.bf16.mxu0 0
        %1936 = vmatmul.mubr.bf16.gmra.mrb[0].mxu0 %v1683
        %v1937 = vpop.f32.mrb[0].mxu0
        %v1938 = vadd.f32 %v470, %v1937
        %v1939 = vpop.f32.mrb[0].mxu0
        %v1940 = vpop.f32.mrb[0].mxu0
        %v1941 = vadd.f32 %v470, %v1940
        %v1942 = vpop.f32.mrb[0].mxu0
        %1943 = vmatprep.mubr.bf16.mxu0 0
        %1944 = vmatmul.mubr.bf16.gmra.mrb[0].mxu0 %v1686
        %v1945 = vpop.f32.mrb[0].mxu0
        %v1946 = vadd.f32 %v470, %v1945
        %v1947 = vpop.f32.mrb[0].mxu0
        %v1948 = vpop.f32.mrb[0].mxu0
        %v1949 = vadd.f32 %v470, %v1948
        %v1950 = vpop.f32.mrb[0].mxu0
        %1951 = vmatprep.mubr.bf16.mxu0 0
        %1952 = vmatmul.mubr.bf16.gmra.mrb[0].mxu0 %v1689
        %v1953 = vpop.f32.mrb[0].mxu0
        %v1954 = vadd.f32 %v470, %v1953
        %v1955 = vpop.f32.mrb[0].mxu0
        %v1956 = vpop.f32.mrb[0].mxu0
        %v1957 = vadd.f32 %v470, %v1956
        %v1958 = vpop.f32.mrb[0].mxu0
        %1959 = vmatprep.mubr.bf16.mxu0 0
        %1960 = vmatmul.mubr.bf16.gmra.mrb[0].mxu0 %v1692
        %v1961 = vpop.f32.mrb[0].mxu0
        %v1962 = vadd.f32 %v470, %v1961
        %v1963 = vpop.f32.mrb[0].mxu0
        %v1964 = vpop.f32.mrb[0].mxu0
        %v1965 = vadd.f32 %v470, %v1964
        %v1966 = vpop.f32.mrb[0].mxu0
        %1967 = vmatprep.mubr.bf16.mxu0 0
        %1968 = vmatmul.mubr.bf16.gmra.mrb[0].mxu0 %v1695
        %v1969 = vpop.f32.mrb[0].mxu0
        %v1970 = vadd.f32 %v470, %v1969
        %v1971 = vpop.f32.mrb[0].mxu0
        %v1972 = vpop.f32.mrb[0].mxu0
        %v1973 = vadd.f32 %v470, %v1972
        %v1974 = vpop.f32.mrb[0].mxu0
        %1975 = vmatprep.mubr.bf16.mxu0 0
        %1976 = vmatmul.mubr.bf16.gmra.mrb[0].mxu0 %v1698
        %v1977 = vpop.f32.mrb[0].mxu0
        %v1978 = vadd.f32 %v470, %v1977
        %v1979 = vpop.f32.mrb[0].mxu0
        %v1980 = vpop.f32.mrb[0].mxu0
        %v1981 = vadd.f32 %v470, %v1980
        %v1982 = vpop.f32.mrb[0].mxu0
        %1983 = vmatprep.mubr.bf16.mxu0 0
        %1984 = vmatmul.mubr.bf16.gmra.mrb[0].mxu0 %v1701
        %v1985 = vpop.f32.mrb[0].mxu0
        %v1986 = vadd.f32 %v470, %v1985
        %v1987 = vpop.f32.mrb[0].mxu0
        %v1988 = vpop.f32.mrb[0].mxu0
        %v1989 = vadd.f32 %v470, %v1988
        %v1990 = vpop.f32.mrb[0].mxu0
        %1991 = vdwg.mxu0
        %v1992 = vpack.c.bf16 %v1741, %v1738
        %v1993 = vpack.c.bf16 %v1749, %v1746
        %v1994 = vpack.c.bf16 %v1757, %v1754
        %v1995 = vpack.c.bf16 %v1765, %v1762
        %v1996 = vpack.c.bf16 %v1773, %v1770
        %v1997 = vpack.c.bf16 %v1781, %v1778
        %v1998 = vpack.c.bf16 %v1789, %v1786
        %v1999 = vpack.c.bf16 %v1797, %v1794
        %v2000 = vpack.c.bf16 %v1805, %v1802
        %v2001 = vpack.c.bf16 %v1813, %v1810
        %v2002 = vpack.c.bf16 %v1821, %v1818
        %v2003 = vpack.c.bf16 %v1829, %v1826
        %v2004 = vpack.c.bf16 %v1837, %v1834
        %v2005 = vpack.c.bf16 %v1845, %v1842
        %v2006 = vpack.c.bf16 %v1853, %v1850
        %v2007 = vpack.c.bf16 %v1861, %v1858
        %v2008 = vpack.c.bf16 %v1869, %v1866
        %v2009 = vpack.c.bf16 %v1877, %v1874
        %v2010 = vpack.c.bf16 %v1885, %v1882
        %v2011 = vpack.c.bf16 %v1893, %v1890
        %v2012 = vpack.c.bf16 %v1901, %v1898
        %v2013 = vpack.c.bf16 %v1909, %v1906
        %v2014 = vpack.c.bf16 %v1917, %v1914
        %v2015 = vpack.c.bf16 %v1925, %v1922
        %v2016 = vpack.c.bf16 %v1933, %v1930
        %v2017 = vpack.c.bf16 %v1941, %v1938
        %v2018 = vpack.c.bf16 %v1949, %v1946
        %v2019 = vpack.c.bf16 %v1957, %v1954
        %v2020 = vpack.c.bf16 %v1965, %v1962
        %v2021 = vpack.c.bf16 %v1973, %v1970
        %v2022 = vpack.c.bf16 %v1981, %v1978
        %v2023 = vpack.c.bf16 %v1989, %v1986
        %v2056 = vunpack.c.l.b16 %v1992
        %v2057 = vunpack.c.h.b16 %v1992
        %v2058 = vunpack.c.l.b16 %v1993
        %v2059 = vunpack.c.h.b16 %v1993
        %v2060 = vunpack.c.l.b16 %v1994
        %v2061 = vunpack.c.h.b16 %v1994
        %v2062 = vunpack.c.l.b16 %v1995
        %v2063 = vunpack.c.h.b16 %v1995
        %v2064 = vunpack.c.l.b16 %v1996
        %v2065 = vunpack.c.h.b16 %v1996
        %v2066 = vunpack.c.l.b16 %v1997
        %v2067 = vunpack.c.h.b16 %v1997
        %v2068 = vunpack.c.l.b16 %v1998
        %v2069 = vunpack.c.h.b16 %v1998
        %v2070 = vunpack.c.l.b16 %v1999
        %v2071 = vunpack.c.h.b16 %v1999
        %v2072 = vunpack.c.l.b16 %v2000
        %v2073 = vunpack.c.h.b16 %v2000
        %v2074 = vunpack.c.l.b16 %v2001
        %v2075 = vunpack.c.h.b16 %v2001
        %v2076 = vunpack.c.l.b16 %v2002
        %v2077 = vunpack.c.h.b16 %v2002
        %v2078 = vunpack.c.l.b16 %v2003
        %v2079 = vunpack.c.h.b16 %v2003
        %v2080 = vunpack.c.l.b16 %v2004
        %v2081 = vunpack.c.h.b16 %v2004
        %v2082 = vunpack.c.l.b16 %v2005
        %v2083 = vunpack.c.h.b16 %v2005
        %v2084 = vunpack.c.l.b16 %v2006
        %v2085 = vunpack.c.h.b16 %v2006
        %v2086 = vunpack.c.l.b16 %v2007
        %v2087 = vunpack.c.h.b16 %v2007
        %v2088 = vunpack.c.l.b16 %v2008
        %v2089 = vunpack.c.h.b16 %v2008
        %v2090 = vunpack.c.l.b16 %v2009
        %v2091 = vunpack.c.h.b16 %v2009
        %v2092 = vunpack.c.l.b16 %v2010
        %v2093 = vunpack.c.h.b16 %v2010
        %v2094 = vunpack.c.l.b16 %v2011
        %v2095 = vunpack.c.h.b16 %v2011
        %v2096 = vunpack.c.l.b16 %v2012
        %v2097 = vunpack.c.h.b16 %v2012
        %v2098 = vunpack.c.l.b16 %v2013
        %v2099 = vunpack.c.h.b16 %v2013
        %v2100 = vunpack.c.l.b16 %v2014
        %v2101 = vunpack.c.h.b16 %v2014
        %v2102 = vunpack.c.l.b16 %v2015
        %v2103 = vunpack.c.h.b16 %v2015
        %v2104 = vunpack.c.l.b16 %v2016
        %v2105 = vunpack.c.h.b16 %v2016
        %v2106 = vunpack.c.l.b16 %v2017
        %v2107 = vunpack.c.h.b16 %v2017
        %v2108 = vunpack.c.l.b16 %v2018
        %v2109 = vunpack.c.h.b16 %v2018
        %v2110 = vunpack.c.l.b16 %v2019
        %v2111 = vunpack.c.h.b16 %v2019
        %v2112 = vunpack.c.l.b16 %v2020
        %v2113 = vunpack.c.h.b16 %v2020
        %v2114 = vunpack.c.l.b16 %v2021
        %v2115 = vunpack.c.h.b16 %v2021
        %v2116 = vunpack.c.l.b16 %v2022
        %v2117 = vunpack.c.h.b16 %v2022
        %v2118 = vunpack.c.l.b16 %v2023
        %v2119 = vunpack.c.h.b16 %v2023
        %v2120 = vpack.c.b16 %v2056, %v2056
        %v2121 = vpack.c.b16 %v2057, %v2057
        %v2122 = vpack.c.b16 %v2058, %v2058
        %v2123 = vpack.c.b16 %v2059, %v2059
        %v2124 = vpack.c.b16 %v2060, %v2060
        %v2125 = vpack.c.b16 %v2061, %v2061
        %v2126 = vpack.c.b16 %v2062, %v2062
        %v2127 = vpack.c.b16 %v2063, %v2063
        %v2128 = vpack.c.b16 %v2064, %v2064
        %v2129 = vpack.c.b16 %v2065, %v2065
        %v2130 = vpack.c.b16 %v2066, %v2066
        %v2131 = vpack.c.b16 %v2067, %v2067
        %v2132 = vpack.c.b16 %v2068, %v2068
        %v2133 = vpack.c.b16 %v2069, %v2069
        %v2134 = vpack.c.b16 %v2070, %v2070
        %v2135 = vpack.c.b16 %v2071, %v2071
        %v2136 = vpack.c.b16 %v2072, %v2072
        %v2137 = vpack.c.b16 %v2073, %v2073
        %v2138 = vpack.c.b16 %v2074, %v2074
        %v2139 = vpack.c.b16 %v2075, %v2075
        %v2140 = vpack.c.b16 %v2076, %v2076
        %v2141 = vpack.c.b16 %v2077, %v2077
        %v2142 = vpack.c.b16 %v2078, %v2078
        %v2143 = vpack.c.b16 %v2079, %v2079
        %v2144 = vpack.c.b16 %v2080, %v2080
        %v2145 = vpack.c.b16 %v2081, %v2081
        %v2146 = vpack.c.b16 %v2082, %v2082
        %v2147 = vpack.c.b16 %v2083, %v2083
        %v2148 = vpack.c.b16 %v2084, %v2084
        %v2149 = vpack.c.b16 %v2085, %v2085
        %v2150 = vpack.c.b16 %v2086, %v2086
        %v2151 = vpack.c.b16 %v2087, %v2087
        %v2152 = vpack.c.b16 %v2088, %v2088
        %v2153 = vpack.c.b16 %v2089, %v2089
        %v2154 = vpack.c.b16 %v2090, %v2090
        %v2155 = vpack.c.b16 %v2091, %v2091
        %v2156 = vpack.c.b16 %v2092, %v2092
        %v2157 = vpack.c.b16 %v2093, %v2093
        %v2158 = vpack.c.b16 %v2094, %v2094
        %v2159 = vpack.c.b16 %v2095, %v2095
        %v2160 = vpack.c.b16 %v2096, %v2096
        %v2161 = vpack.c.b16 %v2097, %v2097
        %v2162 = vpack.c.b16 %v2098, %v2098
        %v2163 = vpack.c.b16 %v2099, %v2099
        %v2164 = vpack.c.b16 %v2100, %v2100
        %v2165 = vpack.c.b16 %v2101, %v2101
        %v2166 = vpack.c.b16 %v2102, %v2102
        %v2167 = vpack.c.b16 %v2103, %v2103
        %v2168 = vpack.c.b16 %v2104, %v2104
        %v2169 = vpack.c.b16 %v2105, %v2105
        %v2170 = vpack.c.b16 %v2106, %v2106
        %v2171 = vpack.c.b16 %v2107, %v2107
        %v2172 = vpack.c.b16 %v2108, %v2108
        %v2173 = vpack.c.b16 %v2109, %v2109
        %v2174 = vpack.c.b16 %v2110, %v2110
        %v2175 = vpack.c.b16 %v2111, %v2111
        %v2176 = vpack.c.b16 %v2112, %v2112
        %v2177 = vpack.c.b16 %v2113, %v2113
        %v2178 = vpack.c.b16 %v2114, %v2114
        %v2179 = vpack.c.b16 %v2115, %v2115
        %v2180 = vpack.c.b16 %v2116, %v2116
        %v2181 = vpack.c.b16 %v2117, %v2117
        %v2182 = vpack.c.b16 %v2118, %v2118
        %v2183 = vpack.c.b16 %v2119, %v2119
        %s2248 = scalar_lea.vmem %s370, 256 [#allocation2]
        %2249 = vst [vmem:[%s2248] sm:$0xf] %v2120
        %2250 = vst [vmem:[%s2248 + $0x4] sm:$0xf] %v2121
        %2251 = vst [vmem:[%s2248 + $0x8] sm:$0xf] %v2122
        %2252 = vst [vmem:[%s2248 + $0xc] sm:$0xf] %v2123
        %2253 = vst [vmem:[%s2248 + $0x10] sm:$0xf] %v2124
        %2254 = vst [vmem:[%s2248 + $0x14] sm:$0xf] %v2125
        %2255 = vst [vmem:[%s2248 + $0x18] sm:$0xf] %v2126
        %2256 = vst [vmem:[%s2248 + $0x1c] sm:$0xf] %v2127
        %2257 = vst [vmem:[%s2248 + $0x20] sm:$0xf] %v2128
        %2258 = vst [vmem:[%s2248 + $0x24] sm:$0xf] %v2129
        %2259 = vst [vmem:[%s2248 + $0x28] sm:$0xf] %v2130
        %2260 = vst [vmem:[%s2248 + $0x2c] sm:$0xf] %v2131
        %2261 = vst [vmem:[%s2248 + $0x30] sm:$0xf] %v2132
        %2262 = vst [vmem:[%s2248 + $0x34] sm:$0xf] %v2133
        %2263 = vst [vmem:[%s2248 + $0x38] sm:$0xf] %v2134
        %2264 = vst [vmem:[%s2248 + $0x3c] sm:$0xf] %v2135
        %2265 = vst [vmem:[%s2248 + $0x40] sm:$0xf] %v2136
        %2266 = vst [vmem:[%s2248 + $0x44] sm:$0xf] %v2137
        %2267 = vst [vmem:[%s2248 + $0x48] sm:$0xf] %v2138
        %2268 = vst [vmem:[%s2248 + $0x4c] sm:$0xf] %v2139
        %2269 = vst [vmem:[%s2248 + $0x50] sm:$0xf] %v2140
        %2270 = vst [vmem:[%s2248 + $0x54] sm:$0xf] %v2141
        %2271 = vst [vmem:[%s2248 + $0x58] sm:$0xf] %v2142
        %2272 = vst [vmem:[%s2248 + $0x5c] sm:$0xf] %v2143
        %2273 = vst [vmem:[%s2248 + $0x60] sm:$0xf] %v2144
        %2274 = vst [vmem:[%s2248 + $0x64] sm:$0xf] %v2145
        %2275 = vst [vmem:[%s2248 + $0x68] sm:$0xf] %v2146
        %2276 = vst [vmem:[%s2248 + $0x6c] sm:$0xf] %v2147
        %2277 = vst [vmem:[%s2248 + $0x70] sm:$0xf] %v2148
        %2278 = vst [vmem:[%s2248 + $0x74] sm:$0xf] %v2149
        %2279 = vst [vmem:[%s2248 + $0x78] sm:$0xf] %v2150
        %2280 = vst [vmem:[%s2248 + $0x7c] sm:$0xf] %v2151
        %2281 = vst [vmem:[%s2248 + $0x80] sm:$0xf] %v2152
        %2282 = vst [vmem:[%s2248 + $0x84] sm:$0xf] %v2153
        %2283 = vst [vmem:[%s2248 + $0x88] sm:$0xf] %v2154
        %2284 = vst [vmem:[%s2248 + $0x8c] sm:$0xf] %v2155
        %2285 = vst [vmem:[%s2248 + $0x90] sm:$0xf] %v2156
        %2286 = vst [vmem:[%s2248 + $0x94] sm:$0xf] %v2157
        %2287 = vst [vmem:[%s2248 + $0x98] sm:$0xf] %v2158
        %2288 = vst [vmem:[%s2248 + $0x9c] sm:$0xf] %v2159
        %2289 = vst [vmem:[%s2248 + $0xa0] sm:$0xf] %v2160
        %2290 = vst [vmem:[%s2248 + $0xa4] sm:$0xf] %v2161
        %2291 = vst [vmem:[%s2248 + $0xa8] sm:$0xf] %v2162
        %2292 = vst [vmem:[%s2248 + $0xac] sm:$0xf] %v2163
        %2293 = vst [vmem:[%s2248 + $0xb0] sm:$0xf] %v2164
        %2294 = vst [vmem:[%s2248 + $0xb4] sm:$0xf] %v2165
        %2295 = vst [vmem:[%s2248 + $0xb8] sm:$0xf] %v2166
        %2296 = vst [vmem:[%s2248 + $0xbc] sm:$0xf] %v2167
        %2297 = vst [vmem:[%s2248 + $0xc0] sm:$0xf] %v2168
        %2298 = vst [vmem:[%s2248 + $0xc4] sm:$0xf] %v2169
        %2299 = vst [vmem:[%s2248 + $0xc8] sm:$0xf] %v2170
        %2300 = vst [vmem:[%s2248 + $0xcc] sm:$0xf] %v2171
        %2301 = vst [vmem:[%s2248 + $0xd0] sm:$0xf] %v2172
        %2302 = vst [vmem:[%s2248 + $0xd4] sm:$0xf] %v2173
        %2303 = vst [vmem:[%s2248 + $0xd8] sm:$0xf] %v2174
        %2304 = vst [vmem:[%s2248 + $0xdc] sm:$0xf] %v2175
        %2305 = vst [vmem:[%s2248 + $0xe0] sm:$0xf] %v2176
        %2306 = vst [vmem:[%s2248 + $0xe4] sm:$0xf] %v2177
        %2307 = vst [vmem:[%s2248 + $0xe8] sm:$0xf] %v2178
        %2308 = vst [vmem:[%s2248 + $0xec] sm:$0xf] %v2179
        %2309 = vst [vmem:[%s2248 + $0xf0] sm:$0xf] %v2180
        %2310 = vst [vmem:[%s2248 + $0xf4] sm:$0xf] %v2181
        %2311 = vst [vmem:[%s2248 + $0xf8] sm:$0xf] %v2182
        %2312 = vst [vmem:[%s2248 + $0xfc] sm:$0xf] %v2183
        %v2313 = vld [vmem:[%s387] sm:$0xf]
        %v2314 = vld [vmem:[%s387 + $0x4] sm:$0xf]
        %v2315 = vld [vmem:[%s387 + $0x8] sm:$0xf]
        %v2316 = vld [vmem:[%s387 + $0xc] sm:$0xf]
        %v2317 = vld [vmem:[%s387 + $0x10] sm:$0xf]
        %v2318 = vld [vmem:[%s387 + $0x14] sm:$0xf]
        %v2319 = vld [vmem:[%s387 + $0x18] sm:$0xf]
        %v2320 = vld [vmem:[%s387 + $0x1c] sm:$0xf]
        %v2321 = vld [vmem:[%s387 + $0x20] sm:$0xf]
        %v2322 = vld [vmem:[%s387 + $0x24] sm:$0xf]
        %v2323 = vld [vmem:[%s387 + $0x28] sm:$0xf]
        %v2324 = vld [vmem:[%s387 + $0x2c] sm:$0xf]
        %v2325 = vld [vmem:[%s387 + $0x30] sm:$0xf]
        %v2326 = vld [vmem:[%s387 + $0x34] sm:$0xf]
        %v2327 = vld [vmem:[%s387 + $0x38] sm:$0xf]
        %v2328 = vld [vmem:[%s387 + $0x3c] sm:$0xf]
        %v2329 = vld [vmem:[%s387 + $0x40] sm:$0xf]
        %v2330 = vld [vmem:[%s387 + $0x44] sm:$0xf]
        %v2331 = vld [vmem:[%s387 + $0x48] sm:$0xf]
        %v2332 = vld [vmem:[%s387 + $0x4c] sm:$0xf]
        %v2333 = vld [vmem:[%s387 + $0x50] sm:$0xf]
        %v2334 = vld [vmem:[%s387 + $0x54] sm:$0xf]
        %v2335 = vld [vmem:[%s387 + $0x58] sm:$0xf]
        %v2336 = vld [vmem:[%s387 + $0x5c] sm:$0xf]
        %v2337 = vld [vmem:[%s387 + $0x60] sm:$0xf]
        %v2338 = vld [vmem:[%s387 + $0x64] sm:$0xf]
        %v2339 = vld [vmem:[%s387 + $0x68] sm:$0xf]
        %v2340 = vld [vmem:[%s387 + $0x6c] sm:$0xf]
        %v2341 = vld [vmem:[%s387 + $0x70] sm:$0xf]
        %v2342 = vld [vmem:[%s387 + $0x74] sm:$0xf]
        %v2343 = vld [vmem:[%s387 + $0x78] sm:$0xf]
        %v2344 = vld [vmem:[%s387 + $0x7c] sm:$0xf]
        %v2345 = vld [vmem:[%s387 + $0x80] sm:$0xf]
        %v2346 = vld [vmem:[%s387 + $0x84] sm:$0xf]
        %v2347 = vld [vmem:[%s387 + $0x88] sm:$0xf]
        %v2348 = vld [vmem:[%s387 + $0x8c] sm:$0xf]
        %v2349 = vld [vmem:[%s387 + $0x90] sm:$0xf]
        %v2350 = vld [vmem:[%s387 + $0x94] sm:$0xf]
        %v2351 = vld [vmem:[%s387 + $0x98] sm:$0xf]
        %v2352 = vld [vmem:[%s387 + $0x9c] sm:$0xf]
        %v2353 = vld [vmem:[%s387 + $0xa0] sm:$0xf]
        %v2354 = vld [vmem:[%s387 + $0xa4] sm:$0xf]
        %v2355 = vld [vmem:[%s387 + $0xa8] sm:$0xf]
        %v2356 = vld [vmem:[%s387 + $0xac] sm:$0xf]
        %v2357 = vld [vmem:[%s387 + $0xb0] sm:$0xf]
        %v2358 = vld [vmem:[%s387 + $0xb4] sm:$0xf]
        %v2359 = vld [vmem:[%s387 + $0xb8] sm:$0xf]
        %v2360 = vld [vmem:[%s387 + $0xbc] sm:$0xf]
        %v2361 = vld [vmem:[%s387 + $0xc0] sm:$0xf]
        %v2362 = vld [vmem:[%s387 + $0xc4] sm:$0xf]
        %v2363 = vld [vmem:[%s387 + $0xc8] sm:$0xf]
        %v2364 = vld [vmem:[%s387 + $0xcc] sm:$0xf]
        %v2365 = vld [vmem:[%s387 + $0xd0] sm:$0xf]
        %v2366 = vld [vmem:[%s387 + $0xd4] sm:$0xf]
        %v2367 = vld [vmem:[%s387 + $0xd8] sm:$0xf]
        %v2368 = vld [vmem:[%s387 + $0xdc] sm:$0xf]
        %v2369 = vld [vmem:[%s387 + $0xe0] sm:$0xf]
        %v2370 = vld [vmem:[%s387 + $0xe4] sm:$0xf]
        %v2371 = vld [vmem:[%s387 + $0xe8] sm:$0xf]
        %v2372 = vld [vmem:[%s387 + $0xec] sm:$0xf]
        %v2373 = vld [vmem:[%s387 + $0xf0] sm:$0xf]
        %v2374 = vld [vmem:[%s387 + $0xf4] sm:$0xf]
        %v2375 = vld [vmem:[%s387 + $0xf8] sm:$0xf]
        %v2376 = vld [vmem:[%s387 + $0xfc] sm:$0xf]
        %v2377 = vld [vmem:[%s6] sm:$0xf]
        %v2378 = vld [vmem:[%s6 + $0x4] sm:$0xf]
        %v2379 = vld [vmem:[%s6 + $0x8] sm:$0xf]
        %v2380 = vld [vmem:[%s6 + $0xc] sm:$0xf]
        %v2381 = vld [vmem:[%s6 + $0x10] sm:$0xf]
        %v2382 = vld [vmem:[%s6 + $0x14] sm:$0xf]
        %v2383 = vld [vmem:[%s6 + $0x18] sm:$0xf]
        %v2384 = vld [vmem:[%s6 + $0x1c] sm:$0xf]
        %v2449 = vunpack.c.l.b16 %v2313
        %v2450 = vunpack.c.l.b16 %v2314
        %v2451 = vunpack.c.l.b16 %v2315
        %v2452 = vunpack.c.l.b16 %v2316
        %v2453 = vunpack.c.l.b16 %v2317
        %v2454 = vunpack.c.l.b16 %v2318
        %v2455 = vunpack.c.l.b16 %v2319
        %v2456 = vunpack.c.l.b16 %v2320
        %v2457 = vunpack.c.l.b16 %v2321
        %v2458 = vunpack.c.l.b16 %v2322
        %v2459 = vunpack.c.l.b16 %v2323
        %v2460 = vunpack.c.l.b16 %v2324
        %v2461 = vunpack.c.l.b16 %v2325
        %v2462 = vunpack.c.l.b16 %v2326
        %v2463 = vunpack.c.l.b16 %v2327
        %v2464 = vunpack.c.l.b16 %v2328
        %v2465 = vunpack.c.l.b16 %v2329
        %v2466 = vunpack.c.l.b16 %v2330
        %v2467 = vunpack.c.l.b16 %v2331
        %v2468 = vunpack.c.l.b16 %v2332
        %v2469 = vunpack.c.l.b16 %v2333
        %v2470 = vunpack.c.l.b16 %v2334
        %v2471 = vunpack.c.l.b16 %v2335
        %v2472 = vunpack.c.l.b16 %v2336
        %v2473 = vunpack.c.l.b16 %v2337
        %v2474 = vunpack.c.l.b16 %v2338
        %v2475 = vunpack.c.l.b16 %v2339
        %v2476 = vunpack.c.l.b16 %v2340
        %v2477 = vunpack.c.l.b16 %v2341
        %v2478 = vunpack.c.l.b16 %v2342
        %v2479 = vunpack.c.l.b16 %v2343
        %v2480 = vunpack.c.l.b16 %v2344
        %v2481 = vunpack.c.l.b16 %v2345
        %v2482 = vunpack.c.l.b16 %v2346
        %v2483 = vunpack.c.l.b16 %v2347
        %v2484 = vunpack.c.l.b16 %v2348
        %v2485 = vunpack.c.l.b16 %v2349
        %v2486 = vunpack.c.l.b16 %v2350
        %v2487 = vunpack.c.l.b16 %v2351
        %v2488 = vunpack.c.l.b16 %v2352
        %v2489 = vunpack.c.l.b16 %v2353
        %v2490 = vunpack.c.l.b16 %v2354
        %v2491 = vunpack.c.l.b16 %v2355
        %v2492 = vunpack.c.l.b16 %v2356
        %v2493 = vunpack.c.l.b16 %v2357
        %v2494 = vunpack.c.l.b16 %v2358
        %v2495 = vunpack.c.l.b16 %v2359
        %v2496 = vunpack.c.l.b16 %v2360
        %v2497 = vunpack.c.l.b16 %v2361
        %v2498 = vunpack.c.l.b16 %v2362
        %v2499 = vunpack.c.l.b16 %v2363
        %v2500 = vunpack.c.l.b16 %v2364
        %v2501 = vunpack.c.l.b16 %v2365
        %v2502 = vunpack.c.l.b16 %v2366
        %v2503 = vunpack.c.l.b16 %v2367
        %v2504 = vunpack.c.l.b16 %v2368
        %v2505 = vunpack.c.l.b16 %v2369
        %v2506 = vunpack.c.l.b16 %v2370
        %v2507 = vunpack.c.l.b16 %v2371
        %v2508 = vunpack.c.l.b16 %v2372
        %v2509 = vunpack.c.l.b16 %v2373
        %v2510 = vunpack.c.l.b16 %v2374
        %v2511 = vunpack.c.l.b16 %v2375
        %v2512 = vunpack.c.l.b16 %v2376
        %v2513 = vpack.c.b16 %v2450, %v2449
        %v2514 = vpack.c.b16 %v2452, %v2451
        %v2515 = vpack.c.b16 %v2454, %v2453
        %v2516 = vpack.c.b16 %v2456, %v2455
        %v2517 = vpack.c.b16 %v2458, %v2457
        %v2518 = vpack.c.b16 %v2460, %v2459
        %v2519 = vpack.c.b16 %v2462, %v2461
        %v2520 = vpack.c.b16 %v2464, %v2463
        %v2521 = vpack.c.b16 %v2466, %v2465
        %v2522 = vpack.c.b16 %v2468, %v2467
        %v2523 = vpack.c.b16 %v2470, %v2469
        %v2524 = vpack.c.b16 %v2472, %v2471
        %v2525 = vpack.c.b16 %v2474, %v2473
        %v2526 = vpack.c.b16 %v2476, %v2475
        %v2527 = vpack.c.b16 %v2478, %v2477
        %v2528 = vpack.c.b16 %v2480, %v2479
        %v2529 = vpack.c.b16 %v2482, %v2481
        %v2530 = vpack.c.b16 %v2484, %v2483
        %v2531 = vpack.c.b16 %v2486, %v2485
        %v2532 = vpack.c.b16 %v2488, %v2487
        %v2533 = vpack.c.b16 %v2490, %v2489
        %v2534 = vpack.c.b16 %v2492, %v2491
        %v2535 = vpack.c.b16 %v2494, %v2493
        %v2536 = vpack.c.b16 %v2496, %v2495
        %v2537 = vpack.c.b16 %v2498, %v2497
        %v2538 = vpack.c.b16 %v2500, %v2499
        %v2539 = vpack.c.b16 %v2502, %v2501
        %v2540 = vpack.c.b16 %v2504, %v2503
        %v2541 = vpack.c.b16 %v2506, %v2505
        %v2542 = vpack.c.b16 %v2508, %v2507
        %v2543 = vpack.c.b16 %v2510, %v2509
        %v2544 = vpack.c.b16 %v2512, %v2511
        %v2553 = vunpack.c.l.b16 %v2377
        %v2554 = vunpack.c.l.b16 %v2378
        %v2555 = vunpack.c.l.b16 %v2379
        %v2556 = vunpack.c.l.b16 %v2380
        %v2557 = vunpack.c.l.b16 %v2381
        %v2558 = vunpack.c.l.b16 %v2382
        %v2559 = vunpack.c.l.b16 %v2383
        %v2560 = vunpack.c.l.b16 %v2384
        %v2561 = vpack.c.b16 %v2554, %v2553
        %v2562 = vpack.c.b16 %v2556, %v2555
        %v2563 = vpack.c.b16 %v2558, %v2557
        %v2564 = vpack.c.b16 %v2560, %v2559
        %v2570 = vsel %vm1606, %v2513, 0
        %v2573 = vsel %vm1606, %v2514, 0
        %v2576 = vsel %vm1606, %v2515, 0
        %v2579 = vsel %vm1606, %v2516, 0
        %v2582 = vsel %vm1606, %v2517, 0
        %v2585 = vsel %vm1606, %v2518, 0
        %v2588 = vsel %vm1606, %v2519, 0
        %v2591 = vsel %vm1606, %v2520, 0
        %v2594 = vsel %vm1606, %v2521, 0
        %v2597 = vsel %vm1606, %v2522, 0
        %v2600 = vsel %vm1606, %v2523, 0
        %v2603 = vsel %vm1606, %v2524, 0
        %v2606 = vsel %vm1606, %v2525, 0
        %v2609 = vsel %vm1606, %v2526, 0
        %v2612 = vsel %vm1606, %v2527, 0
        %v2615 = vsel %vm1606, %v2528, 0
        %v2618 = vsel %vm1606, %v2529, 0
        %v2621 = vsel %vm1606, %v2530, 0
        %v2624 = vsel %vm1606, %v2531, 0
        %v2627 = vsel %vm1606, %v2532, 0
        %v2630 = vsel %vm1606, %v2533, 0
        %v2633 = vsel %vm1606, %v2534, 0
        %v2636 = vsel %vm1606, %v2535, 0
        %v2639 = vsel %vm1606, %v2536, 0
        %v2642 = vsel %vm1606, %v2537, 0
        %v2645 = vsel %vm1606, %v2538, 0
        %v2648 = vsel %vm1606, %v2539, 0
        %v2651 = vsel %vm1606, %v2540, 0
        %v2654 = vsel %vm1606, %v2541, 0
        %v2657 = vsel %vm1606, %v2542, 0
        %v2660 = vsel %vm1606, %v2543, 0
        %v2663 = vsel %vm1606, %v2544, 0
        %2665 = vmatprep.subr.bf16.mxu0 0
        %2666 = vmatpush1.bf16.msra.mxu0 %v2561
        %2667 = vmatprep.subr.bf16.mxu0 0
        %2668 = vmatpush1.bf16.msra.mxu0 %v2562
        %2669 = vmatprep.subr.bf16.mxu0 0
        %2670 = vmatpush1.bf16.msra.mxu0 %v2563
        %2671 = vmatprep.subr.bf16.mxu0 0
        %2672 = vmatpush1.bf16.msra.mxu0 %v2564
        %2673 = vmatprep.subr.bf16.mxu0 0
        %2674 = vmatpush1.bf16.msra.mxu0 0
        %2675 = vmatprep.subr.bf16.mxu0 0
        %2676 = vmatpush1.bf16.msra.mxu0 0
        %2677 = vmatprep.subr.bf16.mxu0 0
        %2678 = vmatpush1.bf16.msra.mxu0 0
        %2679 = vmatprep.subr.bf16.mxu0 0
        %2680 = vmatpush1.bf16.msra.mxu0 0
        %2681 = vmatprep.subr.bf16.mxu0 0
        %2682 = vmatpush1.bf16.msra.mxu0 0
        %2683 = vmatprep.subr.bf16.mxu0 0
        %2684 = vmatpush1.bf16.msra.mxu0 0
        %2685 = vmatprep.subr.bf16.mxu0 0
        %2686 = vmatpush1.bf16.msra.mxu0 0
        %2687 = vmatprep.subr.bf16.mxu0 0
        %2688 = vmatpush1.bf16.msra.mxu0 0
        %2689 = vmatprep.subr.bf16.mxu0 0
        %2690 = vmatpush1.bf16.msra.mxu0 0
        %2691 = vmatprep.subr.bf16.mxu0 0
        %2692 = vmatpush1.bf16.msra.mxu0 0
        %2693 = vmatprep.subr.bf16.mxu0 0
        %2694 = vmatpush1.bf16.msra.mxu0 0
        %2695 = vmatprep.subr.bf16.mxu0 0
        %2696 = vmatpush1.bf16.msra.mxu0 0
        %2697 = vmatprep.mubr.bf16.mxu0 0
        %2698 = vmatmul.mubr.bf16.gmra.mrb[0].mxu0 %v2570
        %v2699 = vpop.f32.mrb[0].mxu0
        %v2700 = vadd.f32 %v470, %v2699
        %v2701 = vpop.f32.mrb[0].mxu0
        %v2702 = vpop.f32.mrb[0].mxu0
        %v2703 = vadd.f32 %v470, %v2702
        %v2704 = vpop.f32.mrb[0].mxu0
        %2705 = vmatprep.mubr.bf16.mxu0 0
        %2706 = vmatmul.mubr.bf16.gmra.mrb[0].mxu0 %v2573
        %v2707 = vpop.f32.mrb[0].mxu0
        %v2708 = vadd.f32 %v470, %v2707
        %v2709 = vpop.f32.mrb[0].mxu0
        %v2710 = vpop.f32.mrb[0].mxu0
        %v2711 = vadd.f32 %v470, %v2710
        %v2712 = vpop.f32.mrb[0].mxu0
        %2713 = vmatprep.mubr.bf16.mxu0 0
        %2714 = vmatmul.mubr.bf16.gmra.mrb[0].mxu0 %v2576
        %v2715 = vpop.f32.mrb[0].mxu0
        %v2716 = vadd.f32 %v470, %v2715
        %v2717 = vpop.f32.mrb[0].mxu0
        %v2718 = vpop.f32.mrb[0].mxu0
        %v2719 = vadd.f32 %v470, %v2718
        %v2720 = vpop.f32.mrb[0].mxu0
        %2721 = vmatprep.mubr.bf16.mxu0 0
        %2722 = vmatmul.mubr.bf16.gmra.mrb[0].mxu0 %v2579
        %v2723 = vpop.f32.mrb[0].mxu0
        %v2724 = vadd.f32 %v470, %v2723
        %v2725 = vpop.f32.mrb[0].mxu0
        %v2726 = vpop.f32.mrb[0].mxu0
        %v2727 = vadd.f32 %v470, %v2726
        %v2728 = vpop.f32.mrb[0].mxu0
        %2729 = vmatprep.mubr.bf16.mxu0 0
        %2730 = vmatmul.mubr.bf16.gmra.mrb[0].mxu0 %v2582
        %v2731 = vpop.f32.mrb[0].mxu0
        %v2732 = vadd.f32 %v470, %v2731
        %v2733 = vpop.f32.mrb[0].mxu0
        %v2734 = vpop.f32.mrb[0].mxu0
        %v2735 = vadd.f32 %v470, %v2734
        %v2736 = vpop.f32.mrb[0].mxu0
        %2737 = vmatprep.mubr.bf16.mxu0 0
        %2738 = vmatmul.mubr.bf16.gmra.mrb[0].mxu0 %v2585
        %v2739 = vpop.f32.mrb[0].mxu0
        %v2740 = vadd.f32 %v470, %v2739
        %v2741 = vpop.f32.mrb[0].mxu0
        %v2742 = vpop.f32.mrb[0].mxu0
        %v2743 = vadd.f32 %v470, %v2742
        %v2744 = vpop.f32.mrb[0].mxu0
        %2745 = vmatprep.mubr.bf16.mxu0 0
        %2746 = vmatmul.mubr.bf16.gmra.mrb[0].mxu0 %v2588
        %v2747 = vpop.f32.mrb[0].mxu0
        %v2748 = vadd.f32 %v470, %v2747
        %v2749 = vpop.f32.mrb[0].mxu0
        %v2750 = vpop.f32.mrb[0].mxu0
        %v2751 = vadd.f32 %v470, %v2750
        %v2752 = vpop.f32.mrb[0].mxu0
        %2753 = vmatprep.mubr.bf16.mxu0 0
        %2754 = vmatmul.mubr.bf16.gmra.mrb[0].mxu0 %v2591
        %v2755 = vpop.f32.mrb[0].mxu0
        %v2756 = vadd.f32 %v470, %v2755
        %v2757 = vpop.f32.mrb[0].mxu0
        %v2758 = vpop.f32.mrb[0].mxu0
        %v2759 = vadd.f32 %v470, %v2758
        %v2760 = vpop.f32.mrb[0].mxu0
        %2761 = vmatprep.mubr.bf16.mxu0 0
        %2762 = vmatmul.mubr.bf16.gmra.mrb[0].mxu0 %v2594
        %v2763 = vpop.f32.mrb[0].mxu0
        %v2764 = vadd.f32 %v470, %v2763
        %v2765 = vpop.f32.mrb[0].mxu0
        %v2766 = vpop.f32.mrb[0].mxu0
        %v2767 = vadd.f32 %v470, %v2766
        %v2768 = vpop.f32.mrb[0].mxu0
        %2769 = vmatprep.mubr.bf16.mxu0 0
        %2770 = vmatmul.mubr.bf16.gmra.mrb[0].mxu0 %v2597
        %v2771 = vpop.f32.mrb[0].mxu0
        %v2772 = vadd.f32 %v470, %v2771
        %v2773 = vpop.f32.mrb[0].mxu0
        %v2774 = vpop.f32.mrb[0].mxu0
        %v2775 = vadd.f32 %v470, %v2774
        %v2776 = vpop.f32.mrb[0].mxu0
        %2777 = vmatprep.mubr.bf16.mxu0 0
        %2778 = vmatmul.mubr.bf16.gmra.mrb[0].mxu0 %v2600
        %v2779 = vpop.f32.mrb[0].mxu0
        %v2780 = vadd.f32 %v470, %v2779
        %v2781 = vpop.f32.mrb[0].mxu0
        %v2782 = vpop.f32.mrb[0].mxu0
        %v2783 = vadd.f32 %v470, %v2782
        %v2784 = vpop.f32.mrb[0].mxu0
        %2785 = vmatprep.mubr.bf16.mxu0 0
        %2786 = vmatmul.mubr.bf16.gmra.mrb[0].mxu0 %v2603
        %v2787 = vpop.f32.mrb[0].mxu0
        %v2788 = vadd.f32 %v470, %v2787
        %v2789 = vpop.f32.mrb[0].mxu0
        %v2790 = vpop.f32.mrb[0].mxu0
        %v2791 = vadd.f32 %v470, %v2790
        %v2792 = vpop.f32.mrb[0].mxu0
        %2793 = vmatprep.mubr.bf16.mxu0 0
        %2794 = vmatmul.mubr.bf16.gmra.mrb[0].mxu0 %v2606
        %v2795 = vpop.f32.mrb[0].mxu0
        %v2796 = vadd.f32 %v470, %v2795
        %v2797 = vpop.f32.mrb[0].mxu0
        %v2798 = vpop.f32.mrb[0].mxu0
        %v2799 = vadd.f32 %v470, %v2798
        %v2800 = vpop.f32.mrb[0].mxu0
        %2801 = vmatprep.mubr.bf16.mxu0 0
        %2802 = vmatmul.mubr.bf16.gmra.mrb[0].mxu0 %v2609
        %v2803 = vpop.f32.mrb[0].mxu0
        %v2804 = vadd.f32 %v470, %v2803
        %v2805 = vpop.f32.mrb[0].mxu0
        %v2806 = vpop.f32.mrb[0].mxu0
        %v2807 = vadd.f32 %v470, %v2806
        %v2808 = vpop.f32.mrb[0].mxu0
        %2809 = vmatprep.mubr.bf16.mxu0 0
        %2810 = vmatmul.mubr.bf16.gmra.mrb[0].mxu0 %v2612
        %v2811 = vpop.f32.mrb[0].mxu0
        %v2812 = vadd.f32 %v470, %v2811
        %v2813 = vpop.f32.mrb[0].mxu0
        %v2814 = vpop.f32.mrb[0].mxu0
        %v2815 = vadd.f32 %v470, %v2814
        %v2816 = vpop.f32.mrb[0].mxu0
        %2817 = vmatprep.mubr.bf16.mxu0 0
        %2818 = vmatmul.mubr.bf16.gmra.mrb[0].mxu0 %v2615
        %v2819 = vpop.f32.mrb[0].mxu0
        %v2820 = vadd.f32 %v470, %v2819
        %v2821 = vpop.f32.mrb[0].mxu0
        %v2822 = vpop.f32.mrb[0].mxu0
        %v2823 = vadd.f32 %v470, %v2822
        %v2824 = vpop.f32.mrb[0].mxu0
        %2825 = vmatprep.mubr.bf16.mxu0 0
        %2826 = vmatmul.mubr.bf16.gmra.mrb[0].mxu0 %v2618
        %v2827 = vpop.f32.mrb[0].mxu0
        %v2828 = vadd.f32 %v470, %v2827
        %v2829 = vpop.f32.mrb[0].mxu0
        %v2830 = vpop.f32.mrb[0].mxu0
        %v2831 = vadd.f32 %v470, %v2830
        %v2832 = vpop.f32.mrb[0].mxu0
        %2833 = vmatprep.mubr.bf16.mxu0 0
        %2834 = vmatmul.mubr.bf16.gmra.mrb[0].mxu0 %v2621
        %v2835 = vpop.f32.mrb[0].mxu0
        %v2836 = vadd.f32 %v470, %v2835
        %v2837 = vpop.f32.mrb[0].mxu0
        %v2838 = vpop.f32.mrb[0].mxu0
        %v2839 = vadd.f32 %v470, %v2838
        %v2840 = vpop.f32.mrb[0].mxu0
        %2841 = vmatprep.mubr.bf16.mxu0 0
        %2842 = vmatmul.mubr.bf16.gmra.mrb[0].mxu0 %v2624
        %v2843 = vpop.f32.mrb[0].mxu0
        %v2844 = vadd.f32 %v470, %v2843
        %v2845 = vpop.f32.mrb[0].mxu0
        %v2846 = vpop.f32.mrb[0].mxu0
        %v2847 = vadd.f32 %v470, %v2846
        %v2848 = vpop.f32.mrb[0].mxu0
        %2849 = vmatprep.mubr.bf16.mxu0 0
        %2850 = vmatmul.mubr.bf16.gmra.mrb[0].mxu0 %v2627
        %v2851 = vpop.f32.mrb[0].mxu0
        %v2852 = vadd.f32 %v470, %v2851
        %v2853 = vpop.f32.mrb[0].mxu0
        %v2854 = vpop.f32.mrb[0].mxu0
        %v2855 = vadd.f32 %v470, %v2854
        %v2856 = vpop.f32.mrb[0].mxu0
        %2857 = vmatprep.mubr.bf16.mxu0 0
        %2858 = vmatmul.mubr.bf16.gmra.mrb[0].mxu0 %v2630
        %v2859 = vpop.f32.mrb[0].mxu0
        %v2860 = vadd.f32 %v470, %v2859
        %v2861 = vpop.f32.mrb[0].mxu0
        %v2862 = vpop.f32.mrb[0].mxu0
        %v2863 = vadd.f32 %v470, %v2862
        %v2864 = vpop.f32.mrb[0].mxu0
        %2865 = vmatprep.mubr.bf16.mxu0 0
        %2866 = vmatmul.mubr.bf16.gmra.mrb[0].mxu0 %v2633
        %v2867 = vpop.f32.mrb[0].mxu0
        %v2868 = vadd.f32 %v470, %v2867
        %v2869 = vpop.f32.mrb[0].mxu0
        %v2870 = vpop.f32.mrb[0].mxu0
        %v2871 = vadd.f32 %v470, %v2870
        %v2872 = vpop.f32.mrb[0].mxu0
        %2873 = vmatprep.mubr.bf16.mxu0 0
        %2874 = vmatmul.mubr.bf16.gmra.mrb[0].mxu0 %v2636
        %v2875 = vpop.f32.mrb[0].mxu0
        %v2876 = vadd.f32 %v470, %v2875
        %v2877 = vpop.f32.mrb[0].mxu0
        %v2878 = vpop.f32.mrb[0].mxu0
        %v2879 = vadd.f32 %v470, %v2878
        %v2880 = vpop.f32.mrb[0].mxu0
        %2881 = vmatprep.mubr.bf16.mxu0 0
        %2882 = vmatmul.mubr.bf16.gmra.mrb[0].mxu0 %v2639
        %v2883 = vpop.f32.mrb[0].mxu0
        %v2884 = vadd.f32 %v470, %v2883
        %v2885 = vpop.f32.mrb[0].mxu0
        %v2886 = vpop.f32.mrb[0].mxu0
        %v2887 = vadd.f32 %v470, %v2886
        %v2888 = vpop.f32.mrb[0].mxu0
        %2889 = vmatprep.mubr.bf16.mxu0 0
        %2890 = vmatmul.mubr.bf16.gmra.mrb[0].mxu0 %v2642
        %v2891 = vpop.f32.mrb[0].mxu0
        %v2892 = vadd.f32 %v470, %v2891
        %v2893 = vpop.f32.mrb[0].mxu0
        %v2894 = vpop.f32.mrb[0].mxu0
        %v2895 = vadd.f32 %v470, %v2894
        %v2896 = vpop.f32.mrb[0].mxu0
        %2897 = vmatprep.mubr.bf16.mxu0 0
        %2898 = vmatmul.mubr.bf16.gmra.mrb[0].mxu0 %v2645
        %v2899 = vpop.f32.mrb[0].mxu0
        %v2900 = vadd.f32 %v470, %v2899
        %v2901 = vpop.f32.mrb[0].mxu0
        %v2902 = vpop.f32.mrb[0].mxu0
        %v2903 = vadd.f32 %v470, %v2902
        %v2904 = vpop.f32.mrb[0].mxu0
        %2905 = vmatprep.mubr.bf16.mxu0 0
        %2906 = vmatmul.mubr.bf16.gmra.mrb[0].mxu0 %v2648
        %v2907 = vpop.f32.mrb[0].mxu0
        %v2908 = vadd.f32 %v470, %v2907
        %v2909 = vpop.f32.mrb[0].mxu0
        %v2910 = vpop.f32.mrb[0].mxu0
        %v2911 = vadd.f32 %v470, %v2910
        %v2912 = vpop.f32.mrb[0].mxu0
        %2913 = vmatprep.mubr.bf16.mxu0 0
        %2914 = vmatmul.mubr.bf16.gmra.mrb[0].mxu0 %v2651
        %v2915 = vpop.f32.mrb[0].mxu0
        %v2916 = vadd.f32 %v470, %v2915
        %v2917 = vpop.f32.mrb[0].mxu0
        %v2918 = vpop.f32.mrb[0].mxu0
        %v2919 = vadd.f32 %v470, %v2918
        %v2920 = vpop.f32.mrb[0].mxu0
        %2921 = vmatprep.mubr.bf16.mxu0 0
        %2922 = vmatmul.mubr.bf16.gmra.mrb[0].mxu0 %v2654
        %v2923 = vpop.f32.mrb[0].mxu0
        %v2924 = vadd.f32 %v470, %v2923
        %v2925 = vpop.f32.mrb[0].mxu0
        %v2926 = vpop.f32.mrb[0].mxu0
        %v2927 = vadd.f32 %v470, %v2926
        %v2928 = vpop.f32.mrb[0].mxu0
        %2929 = vmatprep.mubr.bf16.mxu0 0
        %2930 = vmatmul.mubr.bf16.gmra.mrb[0].mxu0 %v2657
        %v2931 = vpop.f32.mrb[0].mxu0
        %v2932 = vadd.f32 %v470, %v2931
        %v2933 = vpop.f32.mrb[0].mxu0
        %v2934 = vpop.f32.mrb[0].mxu0
        %v2935 = vadd.f32 %v470, %v2934
        %v2936 = vpop.f32.mrb[0].mxu0
        %2937 = vmatprep.mubr.bf16.mxu0 0
        %2938 = vmatmul.mubr.bf16.gmra.mrb[0].mxu0 %v2660
        %v2939 = vpop.f32.mrb[0].mxu0
        %v2940 = vadd.f32 %v470, %v2939
        %v2941 = vpop.f32.mrb[0].mxu0
        %v2942 = vpop.f32.mrb[0].mxu0
        %v2943 = vadd.f32 %v470, %v2942
        %v2944 = vpop.f32.mrb[0].mxu0
        %2945 = vmatprep.mubr.bf16.mxu0 0
        %2946 = vmatmul.mubr.bf16.gmra.mrb[0].mxu0 %v2663
        %v2947 = vpop.f32.mrb[0].mxu0
        %v2948 = vadd.f32 %v470, %v2947
        %v2949 = vpop.f32.mrb[0].mxu0
        %v2950 = vpop.f32.mrb[0].mxu0
        %v2951 = vadd.f32 %v470, %v2950
        %v2952 = vpop.f32.mrb[0].mxu0
        %2953 = vdwg.mxu0
        %v2954 = vpack.c.bf16 %v2703, %v2700
        %v2955 = vpack.c.bf16 %v2711, %v2708
        %v2956 = vpack.c.bf16 %v2719, %v2716
        %v2957 = vpack.c.bf16 %v2727, %v2724
        %v2958 = vpack.c.bf16 %v2735, %v2732
        %v2959 = vpack.c.bf16 %v2743, %v2740
        %v2960 = vpack.c.bf16 %v2751, %v2748
        %v2961 = vpack.c.bf16 %v2759, %v2756
        %v2962 = vpack.c.bf16 %v2767, %v2764
        %v2963 = vpack.c.bf16 %v2775, %v2772
        %v2964 = vpack.c.bf16 %v2783, %v2780
        %v2965 = vpack.c.bf16 %v2791, %v2788
        %v2966 = vpack.c.bf16 %v2799, %v2796
        %v2967 = vpack.c.bf16 %v2807, %v2804
        %v2968 = vpack.c.bf16 %v2815, %v2812
        %v2969 = vpack.c.bf16 %v2823, %v2820
        %v2970 = vpack.c.bf16 %v2831, %v2828
        %v2971 = vpack.c.bf16 %v2839, %v2836
        %v2972 = vpack.c.bf16 %v2847, %v2844
        %v2973 = vpack.c.bf16 %v2855, %v2852
        %v2974 = vpack.c.bf16 %v2863, %v2860
        %v2975 = vpack.c.bf16 %v2871, %v2868
        %v2976 = vpack.c.bf16 %v2879, %v2876
        %v2977 = vpack.c.bf16 %v2887, %v2884
        %v2978 = vpack.c.bf16 %v2895, %v2892
        %v2979 = vpack.c.bf16 %v2903, %v2900
        %v2980 = vpack.c.bf16 %v2911, %v2908
        %v2981 = vpack.c.bf16 %v2919, %v2916
        %v2982 = vpack.c.bf16 %v2927, %v2924
        %v2983 = vpack.c.bf16 %v2935, %v2932
        %v2984 = vpack.c.bf16 %v2943, %v2940
        %v2985 = vpack.c.bf16 %v2951, %v2948
        %v3018 = vunpack.c.l.b16 %v2954
        %v3019 = vunpack.c.h.b16 %v2954
        %v3020 = vunpack.c.l.b16 %v2955
        %v3021 = vunpack.c.h.b16 %v2955
        %v3022 = vunpack.c.l.b16 %v2956
        %v3023 = vunpack.c.h.b16 %v2956
        %v3024 = vunpack.c.l.b16 %v2957
        %v3025 = vunpack.c.h.b16 %v2957
        %v3026 = vunpack.c.l.b16 %v2958
        %v3027 = vunpack.c.h.b16 %v2958
        %v3028 = vunpack.c.l.b16 %v2959
        %v3029 = vunpack.c.h.b16 %v2959
        %v3030 = vunpack.c.l.b16 %v2960
        %v3031 = vunpack.c.h.b16 %v2960
        %v3032 = vunpack.c.l.b16 %v2961
        %v3033 = vunpack.c.h.b16 %v2961
        %v3034 = vunpack.c.l.b16 %v2962
        %v3035 = vunpack.c.h.b16 %v2962
        %v3036 = vunpack.c.l.b16 %v2963
        %v3037 = vunpack.c.h.b16 %v2963
        %v3038 = vunpack.c.l.b16 %v2964
        %v3039 = vunpack.c.h.b16 %v2964
        %v3040 = vunpack.c.l.b16 %v2965
        %v3041 = vunpack.c.h.b16 %v2965
        %v3042 = vunpack.c.l.b16 %v2966
        %v3043 = vunpack.c.h.b16 %v2966
        %v3044 = vunpack.c.l.b16 %v2967
        %v3045 = vunpack.c.h.b16 %v2967
        %v3046 = vunpack.c.l.b16 %v2968
        %v3047 = vunpack.c.h.b16 %v2968
        %v3048 = vunpack.c.l.b16 %v2969
        %v3049 = vunpack.c.h.b16 %v2969
        %v3050 = vunpack.c.l.b16 %v2970
        %v3051 = vunpack.c.h.b16 %v2970
        %v3052 = vunpack.c.l.b16 %v2971
        %v3053 = vunpack.c.h.b16 %v2971
        %v3054 = vunpack.c.l.b16 %v2972
        %v3055 = vunpack.c.h.b16 %v2972
        %v3056 = vunpack.c.l.b16 %v2973
        %v3057 = vunpack.c.h.b16 %v2973
        %v3058 = vunpack.c.l.b16 %v2974
        %v3059 = vunpack.c.h.b16 %v2974
        %v3060 = vunpack.c.l.b16 %v2975
        %v3061 = vunpack.c.h.b16 %v2975
        %v3062 = vunpack.c.l.b16 %v2976
        %v3063 = vunpack.c.h.b16 %v2976
        %v3064 = vunpack.c.l.b16 %v2977
        %v3065 = vunpack.c.h.b16 %v2977
        %v3066 = vunpack.c.l.b16 %v2978
        %v3067 = vunpack.c.h.b16 %v2978
        %v3068 = vunpack.c.l.b16 %v2979
        %v3069 = vunpack.c.h.b16 %v2979
        %v3070 = vunpack.c.l.b16 %v2980
        %v3071 = vunpack.c.h.b16 %v2980
        %v3072 = vunpack.c.l.b16 %v2981
        %v3073 = vunpack.c.h.b16 %v2981
        %v3074 = vunpack.c.l.b16 %v2982
        %v3075 = vunpack.c.h.b16 %v2982
        %v3076 = vunpack.c.l.b16 %v2983
        %v3077 = vunpack.c.h.b16 %v2983
        %v3078 = vunpack.c.l.b16 %v2984
        %v3079 = vunpack.c.h.b16 %v2984
        %v3080 = vunpack.c.l.b16 %v2985
        %v3081 = vunpack.c.h.b16 %v2985
        %v3082 = vpack.c.b16 %v3018, %v3018
        %v3083 = vpack.c.b16 %v3019, %v3019
        %v3084 = vpack.c.b16 %v3020, %v3020
        %v3085 = vpack.c.b16 %v3021, %v3021
        %v3086 = vpack.c.b16 %v3022, %v3022
        %v3087 = vpack.c.b16 %v3023, %v3023
        %v3088 = vpack.c.b16 %v3024, %v3024
        %v3089 = vpack.c.b16 %v3025, %v3025
        %v3090 = vpack.c.b16 %v3026, %v3026
        %v3091 = vpack.c.b16 %v3027, %v3027
        %v3092 = vpack.c.b16 %v3028, %v3028
        %v3093 = vpack.c.b16 %v3029, %v3029
        %v3094 = vpack.c.b16 %v3030, %v3030
        %v3095 = vpack.c.b16 %v3031, %v3031
        %v3096 = vpack.c.b16 %v3032, %v3032
        %v3097 = vpack.c.b16 %v3033, %v3033
        %v3098 = vpack.c.b16 %v3034, %v3034
        %v3099 = vpack.c.b16 %v3035, %v3035
        %v3100 = vpack.c.b16 %v3036, %v3036
        %v3101 = vpack.c.b16 %v3037, %v3037
        %v3102 = vpack.c.b16 %v3038, %v3038
        %v3103 = vpack.c.b16 %v3039, %v3039
        %v3104 = vpack.c.b16 %v3040, %v3040
        %v3105 = vpack.c.b16 %v3041, %v3041
        %v3106 = vpack.c.b16 %v3042, %v3042
        %v3107 = vpack.c.b16 %v3043, %v3043
        %v3108 = vpack.c.b16 %v3044, %v3044
        %v3109 = vpack.c.b16 %v3045, %v3045
        %v3110 = vpack.c.b16 %v3046, %v3046
        %v3111 = vpack.c.b16 %v3047, %v3047
        %v3112 = vpack.c.b16 %v3048, %v3048
        %v3113 = vpack.c.b16 %v3049, %v3049
        %v3114 = vpack.c.b16 %v3050, %v3050
        %v3115 = vpack.c.b16 %v3051, %v3051
        %v3116 = vpack.c.b16 %v3052, %v3052
        %v3117 = vpack.c.b16 %v3053, %v3053
        %v3118 = vpack.c.b16 %v3054, %v3054
        %v3119 = vpack.c.b16 %v3055, %v3055
        %v3120 = vpack.c.b16 %v3056, %v3056
        %v3121 = vpack.c.b16 %v3057, %v3057
        %v3122 = vpack.c.b16 %v3058, %v3058
        %v3123 = vpack.c.b16 %v3059, %v3059
        %v3124 = vpack.c.b16 %v3060, %v3060
        %v3125 = vpack.c.b16 %v3061, %v3061
        %v3126 = vpack.c.b16 %v3062, %v3062
        %v3127 = vpack.c.b16 %v3063, %v3063
        %v3128 = vpack.c.b16 %v3064, %v3064
        %v3129 = vpack.c.b16 %v3065, %v3065
        %v3130 = vpack.c.b16 %v3066, %v3066
        %v3131 = vpack.c.b16 %v3067, %v3067
        %v3132 = vpack.c.b16 %v3068, %v3068
        %v3133 = vpack.c.b16 %v3069, %v3069
        %v3134 = vpack.c.b16 %v3070, %v3070
        %v3135 = vpack.c.b16 %v3071, %v3071
        %v3136 = vpack.c.b16 %v3072, %v3072
        %v3137 = vpack.c.b16 %v3073, %v3073
        %v3138 = vpack.c.b16 %v3074, %v3074
        %v3139 = vpack.c.b16 %v3075, %v3075
        %v3140 = vpack.c.b16 %v3076, %v3076
        %v3141 = vpack.c.b16 %v3077, %v3077
        %v3142 = vpack.c.b16 %v3078, %v3078
        %v3143 = vpack.c.b16 %v3079, %v3079
        %v3144 = vpack.c.b16 %v3080, %v3080
        %v3145 = vpack.c.b16 %v3081, %v3081
        %s3210 = scalar_lea.vmem %s370, 512 [#allocation2]
        %3211 = vst [vmem:[%s3210] sm:$0xf] %v3082
        %3212 = vst [vmem:[%s3210 + $0x4] sm:$0xf] %v3083
        %3213 = vst [vmem:[%s3210 + $0x8] sm:$0xf] %v3084
        %3214 = vst [vmem:[%s3210 + $0xc] sm:$0xf] %v3085
        %3215 = vst [vmem:[%s3210 + $0x10] sm:$0xf] %v3086
        %3216 = vst [vmem:[%s3210 + $0x14] sm:$0xf] %v3087
        %3217 = vst [vmem:[%s3210 + $0x18] sm:$0xf] %v3088
        %3218 = vst [vmem:[%s3210 + $0x1c] sm:$0xf] %v3089
        %3219 = vst [vmem:[%s3210 + $0x20] sm:$0xf] %v3090
        %3220 = vst [vmem:[%s3210 + $0x24] sm:$0xf] %v3091
        %3221 = vst [vmem:[%s3210 + $0x28] sm:$0xf] %v3092
        %3222 = vst [vmem:[%s3210 + $0x2c] sm:$0xf] %v3093
        %3223 = vst [vmem:[%s3210 + $0x30] sm:$0xf] %v3094
        %3224 = vst [vmem:[%s3210 + $0x34] sm:$0xf] %v3095
        %3225 = vst [vmem:[%s3210 + $0x38] sm:$0xf] %v3096
        %3226 = vst [vmem:[%s3210 + $0x3c] sm:$0xf] %v3097
        %3227 = vst [vmem:[%s3210 + $0x40] sm:$0xf] %v3098
        %3228 = vst [vmem:[%s3210 + $0x44] sm:$0xf] %v3099
        %3229 = vst [vmem:[%s3210 + $0x48] sm:$0xf] %v3100
        %3230 = vst [vmem:[%s3210 + $0x4c] sm:$0xf] %v3101
        %3231 = vst [vmem:[%s3210 + $0x50] sm:$0xf] %v3102
        %3232 = vst [vmem:[%s3210 + $0x54] sm:$0xf] %v3103
        %3233 = vst [vmem:[%s3210 + $0x58] sm:$0xf] %v3104
        %3234 = vst [vmem:[%s3210 + $0x5c] sm:$0xf] %v3105
        %3235 = vst [vmem:[%s3210 + $0x60] sm:$0xf] %v3106
        %3236 = vst [vmem:[%s3210 + $0x64] sm:$0xf] %v3107
        %3237 = vst [vmem:[%s3210 + $0x68] sm:$0xf] %v3108
        %3238 = vst [vmem:[%s3210 + $0x6c] sm:$0xf] %v3109
        %3239 = vst [vmem:[%s3210 + $0x70] sm:$0xf] %v3110
        %3240 = vst [vmem:[%s3210 + $0x74] sm:$0xf] %v3111
        %3241 = vst [vmem:[%s3210 + $0x78] sm:$0xf] %v3112
        %3242 = vst [vmem:[%s3210 + $0x7c] sm:$0xf] %v3113
        %3243 = vst [vmem:[%s3210 + $0x80] sm:$0xf] %v3114
        %3244 = vst [vmem:[%s3210 + $0x84] sm:$0xf] %v3115
        %3245 = vst [vmem:[%s3210 + $0x88] sm:$0xf] %v3116
        %3246 = vst [vmem:[%s3210 + $0x8c] sm:$0xf] %v3117
        %3247 = vst [vmem:[%s3210 + $0x90] sm:$0xf] %v3118
        %3248 = vst [vmem:[%s3210 + $0x94] sm:$0xf] %v3119
        %3249 = vst [vmem:[%s3210 + $0x98] sm:$0xf] %v3120
        %3250 = vst [vmem:[%s3210 + $0x9c] sm:$0xf] %v3121
        %3251 = vst [vmem:[%s3210 + $0xa0] sm:$0xf] %v3122
        %3252 = vst [vmem:[%s3210 + $0xa4] sm:$0xf] %v3123
        %3253 = vst [vmem:[%s3210 + $0xa8] sm:$0xf] %v3124
        %3254 = vst [vmem:[%s3210 + $0xac] sm:$0xf] %v3125
        %3255 = vst [vmem:[%s3210 + $0xb0] sm:$0xf] %v3126
        %3256 = vst [vmem:[%s3210 + $0xb4] sm:$0xf] %v3127
        %3257 = vst [vmem:[%s3210 + $0xb8] sm:$0xf] %v3128
        %3258 = vst [vmem:[%s3210 + $0xbc] sm:$0xf] %v3129
        %3259 = vst [vmem:[%s3210 + $0xc0] sm:$0xf] %v3130
        %3260 = vst [vmem:[%s3210 + $0xc4] sm:$0xf] %v3131
        %3261 = vst [vmem:[%s3210 + $0xc8] sm:$0xf] %v3132
        %3262 = vst [vmem:[%s3210 + $0xcc] sm:$0xf] %v3133
        %3263 = vst [vmem:[%s3210 + $0xd0] sm:$0xf] %v3134
        %3264 = vst [vmem:[%s3210 + $0xd4] sm:$0xf] %v3135
        %3265 = vst [vmem:[%s3210 + $0xd8] sm:$0xf] %v3136
        %3266 = vst [vmem:[%s3210 + $0xdc] sm:$0xf] %v3137
        %3267 = vst [vmem:[%s3210 + $0xe0] sm:$0xf] %v3138
        %3268 = vst [vmem:[%s3210 + $0xe4] sm:$0xf] %v3139
        %3269 = vst [vmem:[%s3210 + $0xe8] sm:$0xf] %v3140
        %3270 = vst [vmem:[%s3210 + $0xec] sm:$0xf] %v3141
        %3271 = vst [vmem:[%s3210 + $0xf0] sm:$0xf] %v3142
        %3272 = vst [vmem:[%s3210 + $0xf4] sm:$0xf] %v3143
        %3273 = vst [vmem:[%s3210 + $0xf8] sm:$0xf] %v3144
        %3274 = vst [vmem:[%s3210 + $0xfc] sm:$0xf] %v3145
        %v3275 = vld [vmem:[%s393] sm:$0xf]
        %v3276 = vld [vmem:[%s393 + $0x4] sm:$0xf]
        %v3277 = vld [vmem:[%s393 + $0x8] sm:$0xf]
        %v3278 = vld [vmem:[%s393 + $0xc] sm:$0xf]
        %v3279 = vld [vmem:[%s393 + $0x10] sm:$0xf]
        %v3280 = vld [vmem:[%s393 + $0x14] sm:$0xf]
        %v3281 = vld [vmem:[%s393 + $0x18] sm:$0xf]
        %v3282 = vld [vmem:[%s393 + $0x1c] sm:$0xf]
        %v3283 = vld [vmem:[%s393 + $0x20] sm:$0xf]
        %v3284 = vld [vmem:[%s393 + $0x24] sm:$0xf]
        %v3285 = vld [vmem:[%s393 + $0x28] sm:$0xf]
        %v3286 = vld [vmem:[%s393 + $0x2c] sm:$0xf]
        %v3287 = vld [vmem:[%s393 + $0x30] sm:$0xf]
        %v3288 = vld [vmem:[%s393 + $0x34] sm:$0xf]
        %v3289 = vld [vmem:[%s393 + $0x38] sm:$0xf]
        %v3290 = vld [vmem:[%s393 + $0x3c] sm:$0xf]
        %v3291 = vld [vmem:[%s393 + $0x40] sm:$0xf]
        %v3292 = vld [vmem:[%s393 + $0x44] sm:$0xf]
        %v3293 = vld [vmem:[%s393 + $0x48] sm:$0xf]
        %v3294 = vld [vmem:[%s393 + $0x4c] sm:$0xf]
        %v3295 = vld [vmem:[%s393 + $0x50] sm:$0xf]
        %v3296 = vld [vmem:[%s393 + $0x54] sm:$0xf]
        %v3297 = vld [vmem:[%s393 + $0x58] sm:$0xf]
        %v3298 = vld [vmem:[%s393 + $0x5c] sm:$0xf]
        %v3299 = vld [vmem:[%s393 + $0x60] sm:$0xf]
        %v3300 = vld [vmem:[%s393 + $0x64] sm:$0xf]
        %v3301 = vld [vmem:[%s393 + $0x68] sm:$0xf]
        %v3302 = vld [vmem:[%s393 + $0x6c] sm:$0xf]
        %v3303 = vld [vmem:[%s393 + $0x70] sm:$0xf]
        %v3304 = vld [vmem:[%s393 + $0x74] sm:$0xf]
        %v3305 = vld [vmem:[%s393 + $0x78] sm:$0xf]
        %v3306 = vld [vmem:[%s393 + $0x7c] sm:$0xf]
        %v3307 = vld [vmem:[%s393 + $0x80] sm:$0xf]
        %v3308 = vld [vmem:[%s393 + $0x84] sm:$0xf]
        %v3309 = vld [vmem:[%s393 + $0x88] sm:$0xf]
        %v3310 = vld [vmem:[%s393 + $0x8c] sm:$0xf]
        %v3311 = vld [vmem:[%s393 + $0x90] sm:$0xf]
        %v3312 = vld [vmem:[%s393 + $0x94] sm:$0xf]
        %v3313 = vld [vmem:[%s393 + $0x98] sm:$0xf]
        %v3314 = vld [vmem:[%s393 + $0x9c] sm:$0xf]
        %v3315 = vld [vmem:[%s393 + $0xa0] sm:$0xf]
        %v3316 = vld [vmem:[%s393 + $0xa4] sm:$0xf]
        %v3317 = vld [vmem:[%s393 + $0xa8] sm:$0xf]
        %v3318 = vld [vmem:[%s393 + $0xac] sm:$0xf]
        %v3319 = vld [vmem:[%s393 + $0xb0] sm:$0xf]
        %v3320 = vld [vmem:[%s393 + $0xb4] sm:$0xf]
        %v3321 = vld [vmem:[%s393 + $0xb8] sm:$0xf]
        %v3322 = vld [vmem:[%s393 + $0xbc] sm:$0xf]
        %v3323 = vld [vmem:[%s393 + $0xc0] sm:$0xf]
        %v3324 = vld [vmem:[%s393 + $0xc4] sm:$0xf]
        %v3325 = vld [vmem:[%s393 + $0xc8] sm:$0xf]
        %v3326 = vld [vmem:[%s393 + $0xcc] sm:$0xf]
        %v3327 = vld [vmem:[%s393 + $0xd0] sm:$0xf]
        %v3328 = vld [vmem:[%s393 + $0xd4] sm:$0xf]
        %v3329 = vld [vmem:[%s393 + $0xd8] sm:$0xf]
        %v3330 = vld [vmem:[%s393 + $0xdc] sm:$0xf]
        %v3331 = vld [vmem:[%s393 + $0xe0] sm:$0xf]
        %v3332 = vld [vmem:[%s393 + $0xe4] sm:$0xf]
        %v3333 = vld [vmem:[%s393 + $0xe8] sm:$0xf]
        %v3334 = vld [vmem:[%s393 + $0xec] sm:$0xf]
        %v3335 = vld [vmem:[%s393 + $0xf0] sm:$0xf]
        %v3336 = vld [vmem:[%s393 + $0xf4] sm:$0xf]
        %v3337 = vld [vmem:[%s393 + $0xf8] sm:$0xf]
        %v3338 = vld [vmem:[%s393 + $0xfc] sm:$0xf]
        %v3339 = vld [vmem:[%s7] sm:$0xf]
        %v3340 = vld [vmem:[%s7 + $0x4] sm:$0xf]
        %v3341 = vld [vmem:[%s7 + $0x8] sm:$0xf]
        %v3342 = vld [vmem:[%s7 + $0xc] sm:$0xf]
        %v3343 = vld [vmem:[%s7 + $0x10] sm:$0xf]
        %v3344 = vld [vmem:[%s7 + $0x14] sm:$0xf]
        %v3345 = vld [vmem:[%s7 + $0x18] sm:$0xf]
        %v3346 = vld [vmem:[%s7 + $0x1c] sm:$0xf]
        %v3347 = vld [vmem:[%s7 + $0x20] sm:$0xf]
        %v3348 = vld [vmem:[%s7 + $0x24] sm:$0xf]
        %v3349 = vld [vmem:[%s7 + $0x28] sm:$0xf]
        %v3350 = vld [vmem:[%s7 + $0x2c] sm:$0xf]
        %v3351 = vld [vmem:[%s7 + $0x30] sm:$0xf]
        %v3352 = vld [vmem:[%s7 + $0x34] sm:$0xf]
        %v3353 = vld [vmem:[%s7 + $0x38] sm:$0xf]
        %v3354 = vld [vmem:[%s7 + $0x3c] sm:$0xf]
        %v3419 = vunpack.c.l.b16 %v3275
        %v3420 = vunpack.c.l.b16 %v3276
        %v3421 = vunpack.c.l.b16 %v3277
        %v3422 = vunpack.c.l.b16 %v3278
        %v3423 = vunpack.c.l.b16 %v3279
        %v3424 = vunpack.c.l.b16 %v3280
        %v3425 = vunpack.c.l.b16 %v3281
        %v3426 = vunpack.c.l.b16 %v3282
        %v3427 = vunpack.c.l.b16 %v3283
        %v3428 = vunpack.c.l.b16 %v3284
        %v3429 = vunpack.c.l.b16 %v3285
        %v3430 = vunpack.c.l.b16 %v3286
        %v3431 = vunpack.c.l.b16 %v3287
        %v3432 = vunpack.c.l.b16 %v3288
        %v3433 = vunpack.c.l.b16 %v3289
        %v3434 = vunpack.c.l.b16 %v3290
        %v3435 = vunpack.c.l.b16 %v3291
        %v3436 = vunpack.c.l.b16 %v3292
        %v3437 = vunpack.c.l.b16 %v3293
        %v3438 = vunpack.c.l.b16 %v3294
        %v3439 = vunpack.c.l.b16 %v3295
        %v3440 = vunpack.c.l.b16 %v3296
        %v3441 = vunpack.c.l.b16 %v3297
        %v3442 = vunpack.c.l.b16 %v3298
        %v3443 = vunpack.c.l.b16 %v3299
        %v3444 = vunpack.c.l.b16 %v3300
        %v3445 = vunpack.c.l.b16 %v3301
        %v3446 = vunpack.c.l.b16 %v3302
        %v3447 = vunpack.c.l.b16 %v3303
        %v3448 = vunpack.c.l.b16 %v3304
        %v3449 = vunpack.c.l.b16 %v3305
        %v3450 = vunpack.c.l.b16 %v3306
        %v3451 = vunpack.c.l.b16 %v3307
        %v3452 = vunpack.c.l.b16 %v3308
        %v3453 = vunpack.c.l.b16 %v3309
        %v3454 = vunpack.c.l.b16 %v3310
        %v3455 = vunpack.c.l.b16 %v3311
        %v3456 = vunpack.c.l.b16 %v3312
        %v3457 = vunpack.c.l.b16 %v3313
        %v3458 = vunpack.c.l.b16 %v3314
        %v3459 = vunpack.c.l.b16 %v3315
        %v3460 = vunpack.c.l.b16 %v3316
        %v3461 = vunpack.c.l.b16 %v3317
        %v3462 = vunpack.c.l.b16 %v3318
        %v3463 = vunpack.c.l.b16 %v3319
        %v3464 = vunpack.c.l.b16 %v3320
        %v3465 = vunpack.c.l.b16 %v3321
        %v3466 = vunpack.c.l.b16 %v3322
        %v3467 = vunpack.c.l.b16 %v3323
        %v3468 = vunpack.c.l.b16 %v3324
        %v3469 = vunpack.c.l.b16 %v3325
        %v3470 = vunpack.c.l.b16 %v3326
        %v3471 = vunpack.c.l.b16 %v3327
        %v3472 = vunpack.c.l.b16 %v3328
        %v3473 = vunpack.c.l.b16 %v3329
        %v3474 = vunpack.c.l.b16 %v3330
        %v3475 = vunpack.c.l.b16 %v3331
        %v3476 = vunpack.c.l.b16 %v3332
        %v3477 = vunpack.c.l.b16 %v3333
        %v3478 = vunpack.c.l.b16 %v3334
        %v3479 = vunpack.c.l.b16 %v3335
        %v3480 = vunpack.c.l.b16 %v3336
        %v3481 = vunpack.c.l.b16 %v3337
        %v3482 = vunpack.c.l.b16 %v3338
        %v3483 = vpack.c.b16 %v3420, %v3419
        %v3484 = vpack.c.b16 %v3422, %v3421
        %v3485 = vpack.c.b16 %v3424, %v3423
        %v3486 = vpack.c.b16 %v3426, %v3425
        %v3487 = vpack.c.b16 %v3428, %v3427
        %v3488 = vpack.c.b16 %v3430, %v3429
        %v3489 = vpack.c.b16 %v3432, %v3431
        %v3490 = vpack.c.b16 %v3434, %v3433
        %v3491 = vpack.c.b16 %v3436, %v3435
        %v3492 = vpack.c.b16 %v3438, %v3437
        %v3493 = vpack.c.b16 %v3440, %v3439
        %v3494 = vpack.c.b16 %v3442, %v3441
        %v3495 = vpack.c.b16 %v3444, %v3443
        %v3496 = vpack.c.b16 %v3446, %v3445
        %v3497 = vpack.c.b16 %v3448, %v3447
        %v3498 = vpack.c.b16 %v3450, %v3449
        %v3499 = vpack.c.b16 %v3452, %v3451
        %v3500 = vpack.c.b16 %v3454, %v3453
        %v3501 = vpack.c.b16 %v3456, %v3455
        %v3502 = vpack.c.b16 %v3458, %v3457
        %v3503 = vpack.c.b16 %v3460, %v3459
        %v3504 = vpack.c.b16 %v3462, %v3461
        %v3505 = vpack.c.b16 %v3464, %v3463
        %v3506 = vpack.c.b16 %v3466, %v3465
        %v3507 = vpack.c.b16 %v3468, %v3467
        %v3508 = vpack.c.b16 %v3470, %v3469
        %v3509 = vpack.c.b16 %v3472, %v3471
        %v3510 = vpack.c.b16 %v3474, %v3473
        %v3511 = vpack.c.b16 %v3476, %v3475
        %v3512 = vpack.c.b16 %v3478, %v3477
        %v3513 = vpack.c.b16 %v3480, %v3479
        %v3514 = vpack.c.b16 %v3482, %v3481
        %v3563 = vunpack.c.l.b16 %v3339
        %v3564 = vunpack.c.l.b16 %v3340
        %v3565 = vunpack.c.l.b16 %v3341
        %v3566 = vunpack.c.l.b16 %v3342
        %v3567 = vunpack.c.l.b16 %v3343
        %v3568 = vunpack.c.l.b16 %v3344
        %v3569 = vunpack.c.l.b16 %v3345
        %v3570 = vunpack.c.l.b16 %v3346
        %v3571 = vunpack.c.l.b16 %v3347
        %v3572 = vunpack.c.l.b16 %v3348
        %v3573 = vunpack.c.l.b16 %v3349
        %v3574 = vunpack.c.l.b16 %v3350
        %v3575 = vunpack.c.l.b16 %v3351
        %v3576 = vunpack.c.l.b16 %v3352
        %v3577 = vunpack.c.l.b16 %v3353
        %v3578 = vunpack.c.l.b16 %v3354
        %v3579 = vpack.c.b16 %v3564, %v3563
        %v3580 = vpack.c.b16 %v3566, %v3565
        %v3581 = vpack.c.b16 %v3568, %v3567
        %v3582 = vpack.c.b16 %v3570, %v3569
        %v3583 = vpack.c.b16 %v3572, %v3571
        %v3584 = vpack.c.b16 %v3574, %v3573
        %v3585 = vpack.c.b16 %v3576, %v3575
        %v3586 = vpack.c.b16 %v3578, %v3577
        %3595 = vmatprep.subr.bf16.mxu0 0
        %3596 = vmatpush1.bf16.msra.mxu0 %v3579
        %3597 = vmatprep.subr.bf16.mxu0 0
        %3598 = vmatpush1.bf16.msra.mxu0 %v3580
        %3599 = vmatprep.subr.bf16.mxu0 0
        %3600 = vmatpush1.bf16.msra.mxu0 %v3581
        %3601 = vmatprep.subr.bf16.mxu0 0
        %3602 = vmatpush1.bf16.msra.mxu0 %v3582
        %3603 = vmatprep.subr.bf16.mxu0 0
        %3604 = vmatpush1.bf16.msra.mxu0 %v3583
        %3605 = vmatprep.subr.bf16.mxu0 0
        %3606 = vmatpush1.bf16.msra.mxu0 %v3584
        %3607 = vmatprep.subr.bf16.mxu0 0
        %3608 = vmatpush1.bf16.msra.mxu0 %v3585
        %3609 = vmatprep.subr.bf16.mxu0 0
        %3610 = vmatpush1.bf16.msra.mxu0 %v3586
        %3611 = vmatprep.subr.bf16.mxu0 0
        %3612 = vmatpush1.bf16.msra.mxu0 0
        %3613 = vmatprep.subr.bf16.mxu0 0
        %3614 = vmatpush1.bf16.msra.mxu0 0
        %3615 = vmatprep.subr.bf16.mxu0 0
        %3616 = vmatpush1.bf16.msra.mxu0 0
        %3617 = vmatprep.subr.bf16.mxu0 0
        %3618 = vmatpush1.bf16.msra.mxu0 0
        %3619 = vmatprep.subr.bf16.mxu0 0
        %3620 = vmatpush1.bf16.msra.mxu0 0
        %3621 = vmatprep.subr.bf16.mxu0 0
        %3622 = vmatpush1.bf16.msra.mxu0 0
        %3623 = vmatprep.subr.bf16.mxu0 0
        %3624 = vmatpush1.bf16.msra.mxu0 0
        %3625 = vmatprep.subr.bf16.mxu0 0
        %3626 = vmatpush1.bf16.msra.mxu0 0
        %3627 = vmatprep.mubr.bf16.mxu0 0
        %3628 = vmatmul.mubr.bf16.gmra.mrb[0].mxu0 %v3483
        %v3629 = vpop.f32.mrb[0].mxu0
        %v3630 = vadd.f32 %v470, %v3629
        %v3631 = vpop.f32.mrb[0].mxu0
        %v3632 = vpop.f32.mrb[0].mxu0
        %v3633 = vadd.f32 %v470, %v3632
        %v3634 = vpop.f32.mrb[0].mxu0
        %3635 = vmatprep.mubr.bf16.mxu0 0
        %3636 = vmatmul.mubr.bf16.gmra.mrb[0].mxu0 %v3484
        %v3637 = vpop.f32.mrb[0].mxu0
        %v3638 = vadd.f32 %v470, %v3637
        %v3639 = vpop.f32.mrb[0].mxu0
        %v3640 = vpop.f32.mrb[0].mxu0
        %v3641 = vadd.f32 %v470, %v3640
        %v3642 = vpop.f32.mrb[0].mxu0
        %3643 = vmatprep.mubr.bf16.mxu0 0
        %3644 = vmatmul.mubr.bf16.gmra.mrb[0].mxu0 %v3485
        %v3645 = vpop.f32.mrb[0].mxu0
        %v3646 = vadd.f32 %v470, %v3645
        %v3647 = vpop.f32.mrb[0].mxu0
        %v3648 = vpop.f32.mrb[0].mxu0
        %v3649 = vadd.f32 %v470, %v3648
        %v3650 = vpop.f32.mrb[0].mxu0
        %3651 = vmatprep.mubr.bf16.mxu0 0
        %3652 = vmatmul.mubr.bf16.gmra.mrb[0].mxu0 %v3486
        %v3653 = vpop.f32.mrb[0].mxu0
        %v3654 = vadd.f32 %v470, %v3653
        %v3655 = vpop.f32.mrb[0].mxu0
        %v3656 = vpop.f32.mrb[0].mxu0
        %v3657 = vadd.f32 %v470, %v3656
        %v3658 = vpop.f32.mrb[0].mxu0
        %3659 = vmatprep.mubr.bf16.mxu0 0
        %3660 = vmatmul.mubr.bf16.gmra.mrb[0].mxu0 %v3487
        %v3661 = vpop.f32.mrb[0].mxu0
        %v3662 = vadd.f32 %v470, %v3661
        %v3663 = vpop.f32.mrb[0].mxu0
        %v3664 = vpop.f32.mrb[0].mxu0
        %v3665 = vadd.f32 %v470, %v3664
        %v3666 = vpop.f32.mrb[0].mxu0
        %3667 = vmatprep.mubr.bf16.mxu0 0
        %3668 = vmatmul.mubr.bf16.gmra.mrb[0].mxu0 %v3488
        %v3669 = vpop.f32.mrb[0].mxu0
        %v3670 = vadd.f32 %v470, %v3669
        %v3671 = vpop.f32.mrb[0].mxu0
        %v3672 = vpop.f32.mrb[0].mxu0
        %v3673 = vadd.f32 %v470, %v3672
        %v3674 = vpop.f32.mrb[0].mxu0
        %3675 = vmatprep.mubr.bf16.mxu0 0
        %3676 = vmatmul.mubr.bf16.gmra.mrb[0].mxu0 %v3489
        %v3677 = vpop.f32.mrb[0].mxu0
        %v3678 = vadd.f32 %v470, %v3677
        %v3679 = vpop.f32.mrb[0].mxu0
        %v3680 = vpop.f32.mrb[0].mxu0
        %v3681 = vadd.f32 %v470, %v3680
        %v3682 = vpop.f32.mrb[0].mxu0
        %3683 = vmatprep.mubr.bf16.mxu0 0
        %3684 = vmatmul.mubr.bf16.gmra.mrb[0].mxu0 %v3490
        %v3685 = vpop.f32.mrb[0].mxu0
        %v3686 = vadd.f32 %v470, %v3685
        %v3687 = vpop.f32.mrb[0].mxu0
        %v3688 = vpop.f32.mrb[0].mxu0
        %v3689 = vadd.f32 %v470, %v3688
        %v3690 = vpop.f32.mrb[0].mxu0
        %3691 = vmatprep.mubr.bf16.mxu0 0
        %3692 = vmatmul.mubr.bf16.gmra.mrb[0].mxu0 %v3491
        %v3693 = vpop.f32.mrb[0].mxu0
        %v3694 = vadd.f32 %v470, %v3693
        %v3695 = vpop.f32.mrb[0].mxu0
        %v3696 = vpop.f32.mrb[0].mxu0
        %v3697 = vadd.f32 %v470, %v3696
        %v3698 = vpop.f32.mrb[0].mxu0
        %3699 = vmatprep.mubr.bf16.mxu0 0
        %3700 = vmatmul.mubr.bf16.gmra.mrb[0].mxu0 %v3492
        %v3701 = vpop.f32.mrb[0].mxu0
        %v3702 = vadd.f32 %v470, %v3701
        %v3703 = vpop.f32.mrb[0].mxu0
        %v3704 = vpop.f32.mrb[0].mxu0
        %v3705 = vadd.f32 %v470, %v3704
        %v3706 = vpop.f32.mrb[0].mxu0
        %3707 = vmatprep.mubr.bf16.mxu0 0
        %3708 = vmatmul.mubr.bf16.gmra.mrb[0].mxu0 %v3493
        %v3709 = vpop.f32.mrb[0].mxu0
        %v3710 = vadd.f32 %v470, %v3709
        %v3711 = vpop.f32.mrb[0].mxu0
        %v3712 = vpop.f32.mrb[0].mxu0
        %v3713 = vadd.f32 %v470, %v3712
        %v3714 = vpop.f32.mrb[0].mxu0
        %3715 = vmatprep.mubr.bf16.mxu0 0
        %3716 = vmatmul.mubr.bf16.gmra.mrb[0].mxu0 %v3494
        %v3717 = vpop.f32.mrb[0].mxu0
        %v3718 = vadd.f32 %v470, %v3717
        %v3719 = vpop.f32.mrb[0].mxu0
        %v3720 = vpop.f32.mrb[0].mxu0
        %v3721 = vadd.f32 %v470, %v3720
        %v3722 = vpop.f32.mrb[0].mxu0
        %3723 = vmatprep.mubr.bf16.mxu0 0
        %3724 = vmatmul.mubr.bf16.gmra.mrb[0].mxu0 %v3495
        %v3725 = vpop.f32.mrb[0].mxu0
        %v3726 = vadd.f32 %v470, %v3725
        %v3727 = vpop.f32.mrb[0].mxu0
        %v3728 = vpop.f32.mrb[0].mxu0
        %v3729 = vadd.f32 %v470, %v3728
        %v3730 = vpop.f32.mrb[0].mxu0
        %3731 = vmatprep.mubr.bf16.mxu0 0
        %3732 = vmatmul.mubr.bf16.gmra.mrb[0].mxu0 %v3496
        %v3733 = vpop.f32.mrb[0].mxu0
        %v3734 = vadd.f32 %v470, %v3733
        %v3735 = vpop.f32.mrb[0].mxu0
        %v3736 = vpop.f32.mrb[0].mxu0
        %v3737 = vadd.f32 %v470, %v3736
        %v3738 = vpop.f32.mrb[0].mxu0
        %3739 = vmatprep.mubr.bf16.mxu0 0
        %3740 = vmatmul.mubr.bf16.gmra.mrb[0].mxu0 %v3497
        %v3741 = vpop.f32.mrb[0].mxu0
        %v3742 = vadd.f32 %v470, %v3741
        %v3743 = vpop.f32.mrb[0].mxu0
        %v3744 = vpop.f32.mrb[0].mxu0
        %v3745 = vadd.f32 %v470, %v3744
        %v3746 = vpop.f32.mrb[0].mxu0
        %3747 = vmatprep.mubr.bf16.mxu0 0
        %3748 = vmatmul.mubr.bf16.gmra.mrb[0].mxu0 %v3498
        %v3749 = vpop.f32.mrb[0].mxu0
        %v3750 = vadd.f32 %v470, %v3749
        %v3751 = vpop.f32.mrb[0].mxu0
        %v3752 = vpop.f32.mrb[0].mxu0
        %v3753 = vadd.f32 %v470, %v3752
        %v3754 = vpop.f32.mrb[0].mxu0
        %3755 = vmatprep.mubr.bf16.mxu0 0
        %3756 = vmatmul.mubr.bf16.gmra.mrb[0].mxu0 %v3499
        %v3757 = vpop.f32.mrb[0].mxu0
        %v3758 = vadd.f32 %v470, %v3757
        %v3759 = vpop.f32.mrb[0].mxu0
        %v3760 = vpop.f32.mrb[0].mxu0
        %v3761 = vadd.f32 %v470, %v3760
        %v3762 = vpop.f32.mrb[0].mxu0
        %3763 = vmatprep.mubr.bf16.mxu0 0
        %3764 = vmatmul.mubr.bf16.gmra.mrb[0].mxu0 %v3500
        %v3765 = vpop.f32.mrb[0].mxu0
        %v3766 = vadd.f32 %v470, %v3765
        %v3767 = vpop.f32.mrb[0].mxu0
        %v3768 = vpop.f32.mrb[0].mxu0
        %v3769 = vadd.f32 %v470, %v3768
        %v3770 = vpop.f32.mrb[0].mxu0
        %3771 = vmatprep.mubr.bf16.mxu0 0
        %3772 = vmatmul.mubr.bf16.gmra.mrb[0].mxu0 %v3501
        %v3773 = vpop.f32.mrb[0].mxu0
        %v3774 = vadd.f32 %v470, %v3773
        %v3775 = vpop.f32.mrb[0].mxu0
        %v3776 = vpop.f32.mrb[0].mxu0
        %v3777 = vadd.f32 %v470, %v3776
        %v3778 = vpop.f32.mrb[0].mxu0
        %3779 = vmatprep.mubr.bf16.mxu0 0
        %3780 = vmatmul.mubr.bf16.gmra.mrb[0].mxu0 %v3502
        %v3781 = vpop.f32.mrb[0].mxu0
        %v3782 = vadd.f32 %v470, %v3781
        %v3783 = vpop.f32.mrb[0].mxu0
        %v3784 = vpop.f32.mrb[0].mxu0
        %v3785 = vadd.f32 %v470, %v3784
        %v3786 = vpop.f32.mrb[0].mxu0
        %3787 = vmatprep.mubr.bf16.mxu0 0
        %3788 = vmatmul.mubr.bf16.gmra.mrb[0].mxu0 %v3503
        %v3789 = vpop.f32.mrb[0].mxu0
        %v3790 = vadd.f32 %v470, %v3789
        %v3791 = vpop.f32.mrb[0].mxu0
        %v3792 = vpop.f32.mrb[0].mxu0
        %v3793 = vadd.f32 %v470, %v3792
        %v3794 = vpop.f32.mrb[0].mxu0
        %3795 = vmatprep.mubr.bf16.mxu0 0
        %3796 = vmatmul.mubr.bf16.gmra.mrb[0].mxu0 %v3504
        %v3797 = vpop.f32.mrb[0].mxu0
        %v3798 = vadd.f32 %v470, %v3797
        %v3799 = vpop.f32.mrb[0].mxu0
        %v3800 = vpop.f32.mrb[0].mxu0
        %v3801 = vadd.f32 %v470, %v3800
        %v3802 = vpop.f32.mrb[0].mxu0
        %3803 = vmatprep.mubr.bf16.mxu0 0
        %3804 = vmatmul.mubr.bf16.gmra.mrb[0].mxu0 %v3505
        %v3805 = vpop.f32.mrb[0].mxu0
        %v3806 = vadd.f32 %v470, %v3805
        %v3807 = vpop.f32.mrb[0].mxu0
        %v3808 = vpop.f32.mrb[0].mxu0
        %v3809 = vadd.f32 %v470, %v3808
        %v3810 = vpop.f32.mrb[0].mxu0
        %3811 = vmatprep.mubr.bf16.mxu0 0
        %3812 = vmatmul.mubr.bf16.gmra.mrb[0].mxu0 %v3506
        %v3813 = vpop.f32.mrb[0].mxu0
        %v3814 = vadd.f32 %v470, %v3813
        %v3815 = vpop.f32.mrb[0].mxu0
        %v3816 = vpop.f32.mrb[0].mxu0
        %v3817 = vadd.f32 %v470, %v3816
        %v3818 = vpop.f32.mrb[0].mxu0
        %3819 = vmatprep.mubr.bf16.mxu0 0
        %3820 = vmatmul.mubr.bf16.gmra.mrb[0].mxu0 %v3507
        %v3821 = vpop.f32.mrb[0].mxu0
        %v3822 = vadd.f32 %v470, %v3821
        %v3823 = vpop.f32.mrb[0].mxu0
        %v3824 = vpop.f32.mrb[0].mxu0
        %v3825 = vadd.f32 %v470, %v3824
        %v3826 = vpop.f32.mrb[0].mxu0
        %3827 = vmatprep.mubr.bf16.mxu0 0
        %3828 = vmatmul.mubr.bf16.gmra.mrb[0].mxu0 %v3508
        %v3829 = vpop.f32.mrb[0].mxu0
        %v3830 = vadd.f32 %v470, %v3829
        %v3831 = vpop.f32.mrb[0].mxu0
        %v3832 = vpop.f32.mrb[0].mxu0
        %v3833 = vadd.f32 %v470, %v3832
        %v3834 = vpop.f32.mrb[0].mxu0
        %3835 = vmatprep.mubr.bf16.mxu0 0
        %3836 = vmatmul.mubr.bf16.gmra.mrb[0].mxu0 %v3509
        %v3837 = vpop.f32.mrb[0].mxu0
        %v3838 = vadd.f32 %v470, %v3837
        %v3839 = vpop.f32.mrb[0].mxu0
        %v3840 = vpop.f32.mrb[0].mxu0
        %v3841 = vadd.f32 %v470, %v3840
        %v3842 = vpop.f32.mrb[0].mxu0
        %3843 = vmatprep.mubr.bf16.mxu0 0
        %3844 = vmatmul.mubr.bf16.gmra.mrb[0].mxu0 %v3510
        %v3845 = vpop.f32.mrb[0].mxu0
        %v3846 = vadd.f32 %v470, %v3845
        %v3847 = vpop.f32.mrb[0].mxu0
        %v3848 = vpop.f32.mrb[0].mxu0
        %v3849 = vadd.f32 %v470, %v3848
        %v3850 = vpop.f32.mrb[0].mxu0
        %3851 = vmatprep.mubr.bf16.mxu0 0
        %3852 = vmatmul.mubr.bf16.gmra.mrb[0].mxu0 %v3511
        %v3853 = vpop.f32.mrb[0].mxu0
        %v3854 = vadd.f32 %v470, %v3853
        %v3855 = vpop.f32.mrb[0].mxu0
        %v3856 = vpop.f32.mrb[0].mxu0
        %v3857 = vadd.f32 %v470, %v3856
        %v3858 = vpop.f32.mrb[0].mxu0
        %3859 = vmatprep.mubr.bf16.mxu0 0
        %3860 = vmatmul.mubr.bf16.gmra.mrb[0].mxu0 %v3512
        %v3861 = vpop.f32.mrb[0].mxu0
        %v3862 = vadd.f32 %v470, %v3861
        %v3863 = vpop.f32.mrb[0].mxu0
        %v3864 = vpop.f32.mrb[0].mxu0
        %v3865 = vadd.f32 %v470, %v3864
        %v3866 = vpop.f32.mrb[0].mxu0
        %3867 = vmatprep.mubr.bf16.mxu0 0
        %3868 = vmatmul.mubr.bf16.gmra.mrb[0].mxu0 %v3513
        %v3869 = vpop.f32.mrb[0].mxu0
        %v3870 = vadd.f32 %v470, %v3869
        %v3871 = vpop.f32.mrb[0].mxu0
        %v3872 = vpop.f32.mrb[0].mxu0
        %v3873 = vadd.f32 %v470, %v3872
        %v3874 = vpop.f32.mrb[0].mxu0
        %3875 = vmatprep.mubr.bf16.mxu0 0
        %3876 = vmatmul.mubr.bf16.gmra.mrb[0].mxu0 %v3514
        %v3877 = vpop.f32.mrb[0].mxu0
        %v3878 = vadd.f32 %v470, %v3877
        %v3879 = vpop.f32.mrb[0].mxu0
        %v3880 = vpop.f32.mrb[0].mxu0
        %v3881 = vadd.f32 %v470, %v3880
        %v3882 = vpop.f32.mrb[0].mxu0
        %3883 = vdwg.mxu0
        %v3884 = vpack.c.bf16 %v3633, %v3630
        %v3885 = vpack.c.bf16 %v3641, %v3638
        %v3886 = vpack.c.bf16 %v3649, %v3646
        %v3887 = vpack.c.bf16 %v3657, %v3654
        %v3888 = vpack.c.bf16 %v3665, %v3662
        %v3889 = vpack.c.bf16 %v3673, %v3670
        %v3890 = vpack.c.bf16 %v3681, %v3678
        %v3891 = vpack.c.bf16 %v3689, %v3686
        %v3892 = vpack.c.bf16 %v3697, %v3694
        %v3893 = vpack.c.bf16 %v3705, %v3702
        %v3894 = vpack.c.bf16 %v3713, %v3710
        %v3895 = vpack.c.bf16 %v3721, %v3718
        %v3896 = vpack.c.bf16 %v3729, %v3726
        %v3897 = vpack.c.bf16 %v3737, %v3734
        %v3898 = vpack.c.bf16 %v3745, %v3742
        %v3899 = vpack.c.bf16 %v3753, %v3750
        %v3900 = vpack.c.bf16 %v3761, %v3758
        %v3901 = vpack.c.bf16 %v3769, %v3766
        %v3902 = vpack.c.bf16 %v3777, %v3774
        %v3903 = vpack.c.bf16 %v3785, %v3782
        %v3904 = vpack.c.bf16 %v3793, %v3790
        %v3905 = vpack.c.bf16 %v3801, %v3798
        %v3906 = vpack.c.bf16 %v3809, %v3806
        %v3907 = vpack.c.bf16 %v3817, %v3814
        %v3908 = vpack.c.bf16 %v3825, %v3822
        %v3909 = vpack.c.bf16 %v3833, %v3830
        %v3910 = vpack.c.bf16 %v3841, %v3838
        %v3911 = vpack.c.bf16 %v3849, %v3846
        %v3912 = vpack.c.bf16 %v3857, %v3854
        %v3913 = vpack.c.bf16 %v3865, %v3862
        %v3914 = vpack.c.bf16 %v3873, %v3870
        %v3915 = vpack.c.bf16 %v3881, %v3878
        %v3948 = vunpack.c.l.b16 %v3884
        %v3949 = vunpack.c.h.b16 %v3884
        %v3950 = vunpack.c.l.b16 %v3885
        %v3951 = vunpack.c.h.b16 %v3885
        %v3952 = vunpack.c.l.b16 %v3886
        %v3953 = vunpack.c.h.b16 %v3886
        %v3954 = vunpack.c.l.b16 %v3887
        %v3955 = vunpack.c.h.b16 %v3887
        %v3956 = vunpack.c.l.b16 %v3888
        %v3957 = vunpack.c.h.b16 %v3888
        %v3958 = vunpack.c.l.b16 %v3889
        %v3959 = vunpack.c.h.b16 %v3889
        %v3960 = vunpack.c.l.b16 %v3890
        %v3961 = vunpack.c.h.b16 %v3890
        %v3962 = vunpack.c.l.b16 %v3891
        %v3963 = vunpack.c.h.b16 %v3891
        %v3964 = vunpack.c.l.b16 %v3892
        %v3965 = vunpack.c.h.b16 %v3892
        %v3966 = vunpack.c.l.b16 %v3893
        %v3967 = vunpack.c.h.b16 %v3893
        %v3968 = vunpack.c.l.b16 %v3894
        %v3969 = vunpack.c.h.b16 %v3894
        %v3970 = vunpack.c.l.b16 %v3895
        %v3971 = vunpack.c.h.b16 %v3895
        %v3972 = vunpack.c.l.b16 %v3896
        %v3973 = vunpack.c.h.b16 %v3896
        %v3974 = vunpack.c.l.b16 %v3897
        %v3975 = vunpack.c.h.b16 %v3897
        %v3976 = vunpack.c.l.b16 %v3898
        %v3977 = vunpack.c.h.b16 %v3898
        %v3978 = vunpack.c.l.b16 %v3899
        %v3979 = vunpack.c.h.b16 %v3899
        %v3980 = vunpack.c.l.b16 %v3900
        %v3981 = vunpack.c.h.b16 %v3900
        %v3982 = vunpack.c.l.b16 %v3901
        %v3983 = vunpack.c.h.b16 %v3901
        %v3984 = vunpack.c.l.b16 %v3902
        %v3985 = vunpack.c.h.b16 %v3902
        %v3986 = vunpack.c.l.b16 %v3903
        %v3987 = vunpack.c.h.b16 %v3903
        %v3988 = vunpack.c.l.b16 %v3904
        %v3989 = vunpack.c.h.b16 %v3904
        %v3990 = vunpack.c.l.b16 %v3905
        %v3991 = vunpack.c.h.b16 %v3905
        %v3992 = vunpack.c.l.b16 %v3906
        %v3993 = vunpack.c.h.b16 %v3906
        %v3994 = vunpack.c.l.b16 %v3907
        %v3995 = vunpack.c.h.b16 %v3907
        %v3996 = vunpack.c.l.b16 %v3908
        %v3997 = vunpack.c.h.b16 %v3908
        %v3998 = vunpack.c.l.b16 %v3909
        %v3999 = vunpack.c.h.b16 %v3909
        %v4000 = vunpack.c.l.b16 %v3910
        %v4001 = vunpack.c.h.b16 %v3910
        %v4002 = vunpack.c.l.b16 %v3911
        %v4003 = vunpack.c.h.b16 %v3911
        %v4004 = vunpack.c.l.b16 %v3912
        %v4005 = vunpack.c.h.b16 %v3912
        %v4006 = vunpack.c.l.b16 %v3913
        %v4007 = vunpack.c.h.b16 %v3913
        %v4008 = vunpack.c.l.b16 %v3914
        %v4009 = vunpack.c.h.b16 %v3914
        %v4010 = vunpack.c.l.b16 %v3915
        %v4011 = vunpack.c.h.b16 %v3915
        %v4012 = vpack.c.b16 %v3948, %v3948
        %v4013 = vpack.c.b16 %v3949, %v3949
        %v4014 = vpack.c.b16 %v3950, %v3950
        %v4015 = vpack.c.b16 %v3951, %v3951
        %v4016 = vpack.c.b16 %v3952, %v3952
        %v4017 = vpack.c.b16 %v3953, %v3953
        %v4018 = vpack.c.b16 %v3954, %v3954
        %v4019 = vpack.c.b16 %v3955, %v3955
        %v4020 = vpack.c.b16 %v3956, %v3956
        %v4021 = vpack.c.b16 %v3957, %v3957
        %v4022 = vpack.c.b16 %v3958, %v3958
        %v4023 = vpack.c.b16 %v3959, %v3959
        %v4024 = vpack.c.b16 %v3960, %v3960
        %v4025 = vpack.c.b16 %v3961, %v3961
        %v4026 = vpack.c.b16 %v3962, %v3962
        %v4027 = vpack.c.b16 %v3963, %v3963
        %v4028 = vpack.c.b16 %v3964, %v3964
        %v4029 = vpack.c.b16 %v3965, %v3965
        %v4030 = vpack.c.b16 %v3966, %v3966
        %v4031 = vpack.c.b16 %v3967, %v3967
        %v4032 = vpack.c.b16 %v3968, %v3968
        %v4033 = vpack.c.b16 %v3969, %v3969
        %v4034 = vpack.c.b16 %v3970, %v3970
        %v4035 = vpack.c.b16 %v3971, %v3971
        %v4036 = vpack.c.b16 %v3972, %v3972
        %v4037 = vpack.c.b16 %v3973, %v3973
        %v4038 = vpack.c.b16 %v3974, %v3974
        %v4039 = vpack.c.b16 %v3975, %v3975
        %v4040 = vpack.c.b16 %v3976, %v3976
        %v4041 = vpack.c.b16 %v3977, %v3977
        %v4042 = vpack.c.b16 %v3978, %v3978
        %v4043 = vpack.c.b16 %v3979, %v3979
        %v4044 = vpack.c.b16 %v3980, %v3980
        %v4045 = vpack.c.b16 %v3981, %v3981
        %v4046 = vpack.c.b16 %v3982, %v3982
        %v4047 = vpack.c.b16 %v3983, %v3983
        %v4048 = vpack.c.b16 %v3984, %v3984
        %v4049 = vpack.c.b16 %v3985, %v3985
        %v4050 = vpack.c.b16 %v3986, %v3986
        %v4051 = vpack.c.b16 %v3987, %v3987
        %v4052 = vpack.c.b16 %v3988, %v3988
        %v4053 = vpack.c.b16 %v3989, %v3989
        %v4054 = vpack.c.b16 %v3990, %v3990
        %v4055 = vpack.c.b16 %v3991, %v3991
        %v4056 = vpack.c.b16 %v3992, %v3992
        %v4057 = vpack.c.b16 %v3993, %v3993
        %v4058 = vpack.c.b16 %v3994, %v3994
        %v4059 = vpack.c.b16 %v3995, %v3995
        %v4060 = vpack.c.b16 %v3996, %v3996
        %v4061 = vpack.c.b16 %v3997, %v3997
        %v4062 = vpack.c.b16 %v3998, %v3998
        %v4063 = vpack.c.b16 %v3999, %v3999
        %v4064 = vpack.c.b16 %v4000, %v4000
        %v4065 = vpack.c.b16 %v4001, %v4001
        %v4066 = vpack.c.b16 %v4002, %v4002
        %v4067 = vpack.c.b16 %v4003, %v4003
        %v4068 = vpack.c.b16 %v4004, %v4004
        %v4069 = vpack.c.b16 %v4005, %v4005
        %v4070 = vpack.c.b16 %v4006, %v4006
        %v4071 = vpack.c.b16 %v4007, %v4007
        %v4072 = vpack.c.b16 %v4008, %v4008
        %v4073 = vpack.c.b16 %v4009, %v4009
        %v4074 = vpack.c.b16 %v4010, %v4010
        %v4075 = vpack.c.b16 %v4011, %v4011
        %s4140 = scalar_lea.vmem %s370, 768 [#allocation2]
        %4141 = vst [vmem:[%s4140] sm:$0xf] %v4012
        %4142 = vst [vmem:[%s4140 + $0x4] sm:$0xf] %v4013
        %4143 = vst [vmem:[%s4140 + $0x8] sm:$0xf] %v4014
        %4144 = vst [vmem:[%s4140 + $0xc] sm:$0xf] %v4015
        %4145 = vst [vmem:[%s4140 + $0x10] sm:$0xf] %v4016
        %4146 = vst [vmem:[%s4140 + $0x14] sm:$0xf] %v4017
        %4147 = vst [vmem:[%s4140 + $0x18] sm:$0xf] %v4018
        %4148 = vst [vmem:[%s4140 + $0x1c] sm:$0xf] %v4019
        %4149 = vst [vmem:[%s4140 + $0x20] sm:$0xf] %v4020
        %4150 = vst [vmem:[%s4140 + $0x24] sm:$0xf] %v4021
        %4151 = vst [vmem:[%s4140 + $0x28] sm:$0xf] %v4022
        %4152 = vst [vmem:[%s4140 + $0x2c] sm:$0xf] %v4023
        %4153 = vst [vmem:[%s4140 + $0x30] sm:$0xf] %v4024
        %4154 = vst [vmem:[%s4140 + $0x34] sm:$0xf] %v4025
        %4155 = vst [vmem:[%s4140 + $0x38] sm:$0xf] %v4026
        %4156 = vst [vmem:[%s4140 + $0x3c] sm:$0xf] %v4027
        %4157 = vst [vmem:[%s4140 + $0x40] sm:$0xf] %v4028
        %4158 = vst [vmem:[%s4140 + $0x44] sm:$0xf] %v4029
        %4159 = vst [vmem:[%s4140 + $0x48] sm:$0xf] %v4030
        %4160 = vst [vmem:[%s4140 + $0x4c] sm:$0xf] %v4031
        %4161 = vst [vmem:[%s4140 + $0x50] sm:$0xf] %v4032
        %4162 = vst [vmem:[%s4140 + $0x54] sm:$0xf] %v4033
        %4163 = vst [vmem:[%s4140 + $0x58] sm:$0xf] %v4034
        %4164 = vst [vmem:[%s4140 + $0x5c] sm:$0xf] %v4035
        %4165 = vst [vmem:[%s4140 + $0x60] sm:$0xf] %v4036
        %4166 = vst [vmem:[%s4140 + $0x64] sm:$0xf] %v4037
        %4167 = vst [vmem:[%s4140 + $0x68] sm:$0xf] %v4038
        %4168 = vst [vmem:[%s4140 + $0x6c] sm:$0xf] %v4039
        %4169 = vst [vmem:[%s4140 + $0x70] sm:$0xf] %v4040
        %4170 = vst [vmem:[%s4140 + $0x74] sm:$0xf] %v4041
        %4171 = vst [vmem:[%s4140 + $0x78] sm:$0xf] %v4042
        %4172 = vst [vmem:[%s4140 + $0x7c] sm:$0xf] %v4043
        %4173 = vst [vmem:[%s4140 + $0x80] sm:$0xf] %v4044
        %4174 = vst [vmem:[%s4140 + $0x84] sm:$0xf] %v4045
        %4175 = vst [vmem:[%s4140 + $0x88] sm:$0xf] %v4046
        %4176 = vst [vmem:[%s4140 + $0x8c] sm:$0xf] %v4047
        %4177 = vst [vmem:[%s4140 + $0x90] sm:$0xf] %v4048
        %4178 = vst [vmem:[%s4140 + $0x94] sm:$0xf] %v4049
        %4179 = vst [vmem:[%s4140 + $0x98] sm:$0xf] %v4050
        %4180 = vst [vmem:[%s4140 + $0x9c] sm:$0xf] %v4051
        %4181 = vst [vmem:[%s4140 + $0xa0] sm:$0xf] %v4052
        %4182 = vst [vmem:[%s4140 + $0xa4] sm:$0xf] %v4053
        %4183 = vst [vmem:[%s4140 + $0xa8] sm:$0xf] %v4054
        %4184 = vst [vmem:[%s4140 + $0xac] sm:$0xf] %v4055
        %4185 = vst [vmem:[%s4140 + $0xb0] sm:$0xf] %v4056
        %4186 = vst [vmem:[%s4140 + $0xb4] sm:$0xf] %v4057
        %4187 = vst [vmem:[%s4140 + $0xb8] sm:$0xf] %v4058
        %4188 = vst [vmem:[%s4140 + $0xbc] sm:$0xf] %v4059
        %4189 = vst [vmem:[%s4140 + $0xc0] sm:$0xf] %v4060
        %4190 = vst [vmem:[%s4140 + $0xc4] sm:$0xf] %v4061
        %4191 = vst [vmem:[%s4140 + $0xc8] sm:$0xf] %v4062
        %4192 = vst [vmem:[%s4140 + $0xcc] sm:$0xf] %v4063
        %4193 = vst [vmem:[%s4140 + $0xd0] sm:$0xf] %v4064
        %4194 = vst [vmem:[%s4140 + $0xd4] sm:$0xf] %v4065
        %4195 = vst [vmem:[%s4140 + $0xd8] sm:$0xf] %v4066
        %4196 = vst [vmem:[%s4140 + $0xdc] sm:$0xf] %v4067
        %4197 = vst [vmem:[%s4140 + $0xe0] sm:$0xf] %v4068
        %4198 = vst [vmem:[%s4140 + $0xe4] sm:$0xf] %v4069
        %4199 = vst [vmem:[%s4140 + $0xe8] sm:$0xf] %v4070
        %4200 = vst [vmem:[%s4140 + $0xec] sm:$0xf] %v4071
        %4201 = vst [vmem:[%s4140 + $0xf0] sm:$0xf] %v4072
        %4202 = vst [vmem:[%s4140 + $0xf4] sm:$0xf] %v4073
        %4203 = vst [vmem:[%s4140 + $0xf8] sm:$0xf] %v4074
        %4204 = vst [vmem:[%s4140 + $0xfc] sm:$0xf] %v4075
        %s4205 = sand.u32 %s237, 1
        %s4206 = sand.u32 %s237, 1
        %s4207 = smul.addr %s4206, 1024
        %s4208 = scalar_lea.vmem [#allocation2], %s4207
        // Predicated region
        $region57: #{_lambda_.11} parent=55 // pred_check
          %p4209 = pneg %p247
        $region58: #{_lambda_.11} parent=55 // pred_check_branch
          %4211 = sbr.rel (%p4209) target = $region60
        $region59: #{_lambda_.11} parent=55 // pred_region
          %s4212 = smul.u32 64, %s20
          %s4213 = smul.addr %s4212, 4
          %s4214 = scalar_lea.vmem %s9, %s4213
          // Predicated region
          $region61: #{_lambda_.11} parent=59 // pred_check
            _
          $region62: #{_lambda_.11} parent=59 // pred_check_branch
            %4216 = sbr.rel (0) target = $region64
          $region63: #{_lambda_.11} parent=59 // pred_region
            // Predicated region
            $region65: #{_lambda_.11} parent=63 // pred_check
              _
            $region66: #{_lambda_.11} parent=63 // pred_check_branch
              %4218 = sbr.rel target = $region68
            $region67: #{_lambda_.11} parent=63 // pred_region
              // Predicated region
              $region80: #{_lambda_.11} parent=67 // pred_check
                _
              $region81: #{_lambda_.11} parent=67 // pred_check_branch
                %4743 = sbr.rel (0) target = $region83
              $region82: #{_lambda_.11} parent=67 // pred_region
                loop: start=0, step=1, limit=1
                $region84: #{_lambda_.11} parent=82 // loop_pre_header
                  _
                $region85: #{_lambda_.11} parent=82 // loop_header
                  %s4745 = sphi 0, %s4749
                  %p4746 = scmp.ge.s32.totalorder %s4745, 1
                  %s4750 = sphi %s4208, %s4208
                  %s4751 = sphi %s4214, %s4214
                $region86: #{_lambda_.11} parent=82 // loop_header_branch
                  %4748 = sbr.rel (%p4746) target = $region90
                $region87: #{_lambda_.11} parent=82 // loop_body
                  _
                $region88: #{_lambda_.11} parent=82 // loop_footer
                  %s4749 = sadd.s32 1, %s4745
                $region89: #{_lambda_.11} parent=82 // loop_footer_branch
                  %4744 = sbr.rel target = $region85
                $region90: #{_lambda_.11} parent=82 // loop_exit
                  _
                loop: start=0, step=1, limit=1
                $region91: #{_lambda_.11} parent=82 // loop_pre_header
                  _
                $region92: #{_lambda_.11} parent=82 // loop_header
                  %s4754 = sphi 0, %s4758
                  %p4755 = scmp.ge.s32.totalorder %s4754, 1
                  %s4759 = sphi %s4208, %s4208
                  %s4760 = sphi %s4214, %s4214
                $region93: #{_lambda_.11} parent=82 // loop_header_branch
                  %4757 = sbr.rel (%p4755) target = $region97
                $region94: #{_lambda_.11} parent=82 // loop_body
                  %v4761 = vld [vmem:[%s4759] sm:$0xf]
                  %4762 = vst [vmem:[%s4760] sm:$0xf] %v4761
                  %v4763 = vld [vmem:[%s4759 + $0x4] sm:$0xf]
                  %4764 = vst [vmem:[%s4760 + $0x4] sm:$0xf] %v4763
                  %v4765 = vld [vmem:[%s4759 + $0x8] sm:$0xf]
                  %4766 = vst [vmem:[%s4760 + $0x8] sm:$0xf] %v4765
                  %v4767 = vld [vmem:[%s4759 + $0xc] sm:$0xf]
                  %4768 = vst [vmem:[%s4760 + $0xc] sm:$0xf] %v4767
                  %v4769 = vld [vmem:[%s4759 + $0x10] sm:$0xf]
                  %4770 = vst [vmem:[%s4760 + $0x10] sm:$0xf] %v4769
                  %v4771 = vld [vmem:[%s4759 + $0x14] sm:$0xf]
                  %4772 = vst [vmem:[%s4760 + $0x14] sm:$0xf] %v4771
                  %v4773 = vld [vmem:[%s4759 + $0x18] sm:$0xf]
                  %4774 = vst [vmem:[%s4760 + $0x18] sm:$0xf] %v4773
                  %v4775 = vld [vmem:[%s4759 + $0x1c] sm:$0xf]
                  %4776 = vst [vmem:[%s4760 + $0x1c] sm:$0xf] %v4775
                  %v4777 = vld [vmem:[%s4759 + $0x20] sm:$0xf]
                  %4778 = vst [vmem:[%s4760 + $0x20] sm:$0xf] %v4777
                  %v4779 = vld [vmem:[%s4759 + $0x24] sm:$0xf]
                  %4780 = vst [vmem:[%s4760 + $0x24] sm:$0xf] %v4779
                  %v4781 = vld [vmem:[%s4759 + $0x28] sm:$0xf]
                  %4782 = vst [vmem:[%s4760 + $0x28] sm:$0xf] %v4781
                  %v4783 = vld [vmem:[%s4759 + $0x2c] sm:$0xf]
                  %4784 = vst [vmem:[%s4760 + $0x2c] sm:$0xf] %v4783
                  %v4785 = vld [vmem:[%s4759 + $0x30] sm:$0xf]
                  %4786 = vst [vmem:[%s4760 + $0x30] sm:$0xf] %v4785
                  %v4787 = vld [vmem:[%s4759 + $0x34] sm:$0xf]
                  %4788 = vst [vmem:[%s4760 + $0x34] sm:$0xf] %v4787
                  %v4789 = vld [vmem:[%s4759 + $0x38] sm:$0xf]
                  %4790 = vst [vmem:[%s4760 + $0x38] sm:$0xf] %v4789
                  %v4791 = vld [vmem:[%s4759 + $0x3c] sm:$0xf]
                  %4792 = vst [vmem:[%s4760 + $0x3c] sm:$0xf] %v4791
                  %v4793 = vld [vmem:[%s4759 + $0x40] sm:$0xf]
                  %4794 = vst [vmem:[%s4760 + $0x40] sm:$0xf] %v4793
                  %v4795 = vld [vmem:[%s4759 + $0x44] sm:$0xf]
                  %4796 = vst [vmem:[%s4760 + $0x44] sm:$0xf] %v4795
                  %v4797 = vld [vmem:[%s4759 + $0x48] sm:$0xf]
                  %4798 = vst [vmem:[%s4760 + $0x48] sm:$0xf] %v4797
                  %v4799 = vld [vmem:[%s4759 + $0x4c] sm:$0xf]
                  %4800 = vst [vmem:[%s4760 + $0x4c] sm:$0xf] %v4799
                  %v4801 = vld [vmem:[%s4759 + $0x50] sm:$0xf]
                  %4802 = vst [vmem:[%s4760 + $0x50] sm:$0xf] %v4801
                  %v4803 = vld [vmem:[%s4759 + $0x54] sm:$0xf]
                  %4804 = vst [vmem:[%s4760 + $0x54] sm:$0xf] %v4803
                  %v4805 = vld [vmem:[%s4759 + $0x58] sm:$0xf]
                  %4806 = vst [vmem:[%s4760 + $0x58] sm:$0xf] %v4805
                  %v4807 = vld [vmem:[%s4759 + $0x5c] sm:$0xf]
                  %4808 = vst [vmem:[%s4760 + $0x5c] sm:$0xf] %v4807
                  %v4809 = vld [vmem:[%s4759 + $0x60] sm:$0xf]
                  %4810 = vst [vmem:[%s4760 + $0x60] sm:$0xf] %v4809
                  %v4811 = vld [vmem:[%s4759 + $0x64] sm:$0xf]
                  %4812 = vst [vmem:[%s4760 + $0x64] sm:$0xf] %v4811
                  %v4813 = vld [vmem:[%s4759 + $0x68] sm:$0xf]
                  %4814 = vst [vmem:[%s4760 + $0x68] sm:$0xf] %v4813
                  %v4815 = vld [vmem:[%s4759 + $0x6c] sm:$0xf]
                  %4816 = vst [vmem:[%s4760 + $0x6c] sm:$0xf] %v4815
                  %v4817 = vld [vmem:[%s4759 + $0x70] sm:$0xf]
                  %4818 = vst [vmem:[%s4760 + $0x70] sm:$0xf] %v4817
                  %v4819 = vld [vmem:[%s4759 + $0x74] sm:$0xf]
                  %4820 = vst [vmem:[%s4760 + $0x74] sm:$0xf] %v4819
                  %v4821 = vld [vmem:[%s4759 + $0x78] sm:$0xf]
                  %4822 = vst [vmem:[%s4760 + $0x78] sm:$0xf] %v4821
                  %v4823 = vld [vmem:[%s4759 + $0x7c] sm:$0xf]
                  %4824 = vst [vmem:[%s4760 + $0x7c] sm:$0xf] %v4823
                  %v4825 = vld [vmem:[%s4759 + $0x80] sm:$0xf]
                  %4826 = vst [vmem:[%s4760 + $0x80] sm:$0xf] %v4825
                  %v4827 = vld [vmem:[%s4759 + $0x84] sm:$0xf]
                  %4828 = vst [vmem:[%s4760 + $0x84] sm:$0xf] %v4827
                  %v4829 = vld [vmem:[%s4759 + $0x88] sm:$0xf]
                  %4830 = vst [vmem:[%s4760 + $0x88] sm:$0xf] %v4829
                  %v4831 = vld [vmem:[%s4759 + $0x8c] sm:$0xf]
                  %4832 = vst [vmem:[%s4760 + $0x8c] sm:$0xf] %v4831
                  %v4833 = vld [vmem:[%s4759 + $0x90] sm:$0xf]
                  %4834 = vst [vmem:[%s4760 + $0x90] sm:$0xf] %v4833
                  %v4835 = vld [vmem:[%s4759 + $0x94] sm:$0xf]
                  %4836 = vst [vmem:[%s4760 + $0x94] sm:$0xf] %v4835
                  %v4837 = vld [vmem:[%s4759 + $0x98] sm:$0xf]
                  %4838 = vst [vmem:[%s4760 + $0x98] sm:$0xf] %v4837
                  %v4839 = vld [vmem:[%s4759 + $0x9c] sm:$0xf]
                  %4840 = vst [vmem:[%s4760 + $0x9c] sm:$0xf] %v4839
                  %v4841 = vld [vmem:[%s4759 + $0xa0] sm:$0xf]
                  %4842 = vst [vmem:[%s4760 + $0xa0] sm:$0xf] %v4841
                  %v4843 = vld [vmem:[%s4759 + $0xa4] sm:$0xf]
                  %4844 = vst [vmem:[%s4760 + $0xa4] sm:$0xf] %v4843
                  %v4845 = vld [vmem:[%s4759 + $0xa8] sm:$0xf]
                  %4846 = vst [vmem:[%s4760 + $0xa8] sm:$0xf] %v4845
                  %v4847 = vld [vmem:[%s4759 + $0xac] sm:$0xf]
                  %4848 = vst [vmem:[%s4760 + $0xac] sm:$0xf] %v4847
                  %v4849 = vld [vmem:[%s4759 + $0xb0] sm:$0xf]
                  %4850 = vst [vmem:[%s4760 + $0xb0] sm:$0xf] %v4849
                  %v4851 = vld [vmem:[%s4759 + $0xb4] sm:$0xf]
                  %4852 = vst [vmem:[%s4760 + $0xb4] sm:$0xf] %v4851
                  %v4853 = vld [vmem:[%s4759 + $0xb8] sm:$0xf]
                  %4854 = vst [vmem:[%s4760 + $0xb8] sm:$0xf] %v4853
                  %v4855 = vld [vmem:[%s4759 + $0xbc] sm:$0xf]
                  %4856 = vst [vmem:[%s4760 + $0xbc] sm:$0xf] %v4855
                  %v4857 = vld [vmem:[%s4759 + $0xc0] sm:$0xf]
                  %4858 = vst [vmem:[%s4760 + $0xc0] sm:$0xf] %v4857
                  %v4859 = vld [vmem:[%s4759 + $0xc4] sm:$0xf]
                  %4860 = vst [vmem:[%s4760 + $0xc4] sm:$0xf] %v4859
                  %v4861 = vld [vmem:[%s4759 + $0xc8] sm:$0xf]
                  %4862 = vst [vmem:[%s4760 + $0xc8] sm:$0xf] %v4861
                  %v4863 = vld [vmem:[%s4759 + $0xcc] sm:$0xf]
                  %4864 = vst [vmem:[%s4760 + $0xcc] sm:$0xf] %v4863
                  %v4865 = vld [vmem:[%s4759 + $0xd0] sm:$0xf]
                  %4866 = vst [vmem:[%s4760 + $0xd0] sm:$0xf] %v4865
                  %v4867 = vld [vmem:[%s4759 + $0xd4] sm:$0xf]
                  %4868 = vst [vmem:[%s4760 + $0xd4] sm:$0xf] %v4867
                  %v4869 = vld [vmem:[%s4759 + $0xd8] sm:$0xf]
                  %4870 = vst [vmem:[%s4760 + $0xd8] sm:$0xf] %v4869
                  %v4871 = vld [vmem:[%s4759 + $0xdc] sm:$0xf]
                  %4872 = vst [vmem:[%s4760 + $0xdc] sm:$0xf] %v4871
                  %v4873 = vld [vmem:[%s4759 + $0xe0] sm:$0xf]
                  %4874 = vst [vmem:[%s4760 + $0xe0] sm:$0xf] %v4873
                  %v4875 = vld [vmem:[%s4759 + $0xe4] sm:$0xf]
                  %4876 = vst [vmem:[%s4760 + $0xe4] sm:$0xf] %v4875
                  %v4877 = vld [vmem:[%s4759 + $0xe8] sm:$0xf]
                  %4878 = vst [vmem:[%s4760 + $0xe8] sm:$0xf] %v4877
                  %v4879 = vld [vmem:[%s4759 + $0xec] sm:$0xf]
                  %4880 = vst [vmem:[%s4760 + $0xec] sm:$0xf] %v4879
                  %v4881 = vld [vmem:[%s4759 + $0xf0] sm:$0xf]
                  %4882 = vst [vmem:[%s4760 + $0xf0] sm:$0xf] %v4881
                  %v4883 = vld [vmem:[%s4759 + $0xf4] sm:$0xf]
                  %4884 = vst [vmem:[%s4760 + $0xf4] sm:$0xf] %v4883
                  %v4885 = vld [vmem:[%s4759 + $0xf8] sm:$0xf]
                  %4886 = vst [vmem:[%s4760 + $0xf8] sm:$0xf] %v4885
                  %v4887 = vld [vmem:[%s4759 + $0xfc] sm:$0xf]
                  %4888 = vst [vmem:[%s4760 + $0xfc] sm:$0xf] %v4887
                  %v4889 = vld [vmem:[%s4759 + $0x100] sm:$0xf]
                  %4890 = vst [vmem:[%s4760 + $0x400] sm:$0xf] %v4889
                  %v4891 = vld [vmem:[%s4759 + $0x104] sm:$0xf]
                  %4892 = vst [vmem:[%s4760 + $0x404] sm:$0xf] %v4891
                  %v4893 = vld [vmem:[%s4759 + $0x108] sm:$0xf]
                  %4894 = vst [vmem:[%s4760 + $0x408] sm:$0xf] %v4893
                  %v4895 = vld [vmem:[%s4759 + $0x10c] sm:$0xf]
                  %4896 = vst [vmem:[%s4760 + $0x40c] sm:$0xf] %v4895
                  %v4897 = vld [vmem:[%s4759 + $0x110] sm:$0xf]
                  %4898 = vst [vmem:[%s4760 + $0x410] sm:$0xf] %v4897
                  %v4899 = vld [vmem:[%s4759 + $0x114] sm:$0xf]
                  %4900 = vst [vmem:[%s4760 + $0x414] sm:$0xf] %v4899
                  %v4901 = vld [vmem:[%s4759 + $0x118] sm:$0xf]
                  %4902 = vst [vmem:[%s4760 + $0x418] sm:$0xf] %v4901
                  %v4903 = vld [vmem:[%s4759 + $0x11c] sm:$0xf]
                  %4904 = vst [vmem:[%s4760 + $0x41c] sm:$0xf] %v4903
                  %v4905 = vld [vmem:[%s4759 + $0x120] sm:$0xf]
                  %4906 = vst [vmem:[%s4760 + $0x420] sm:$0xf] %v4905
                  %v4907 = vld [vmem:[%s4759 + $0x124] sm:$0xf]
                  %4908 = vst [vmem:[%s4760 + $0x424] sm:$0xf] %v4907
                  %v4909 = vld [vmem:[%s4759 + $0x128] sm:$0xf]
                  %4910 = vst [vmem:[%s4760 + $0x428] sm:$0xf] %v4909
                  %v4911 = vld [vmem:[%s4759 + $0x12c] sm:$0xf]
                  %4912 = vst [vmem:[%s4760 + $0x42c] sm:$0xf] %v4911
                  %v4913 = vld [vmem:[%s4759 + $0x130] sm:$0xf]
                  %4914 = vst [vmem:[%s4760 + $0x430] sm:$0xf] %v4913
                  %v4915 = vld [vmem:[%s4759 + $0x134] sm:$0xf]
                  %4916 = vst [vmem:[%s4760 + $0x434] sm:$0xf] %v4915
                  %v4917 = vld [vmem:[%s4759 + $0x138] sm:$0xf]
                  %4918 = vst [vmem:[%s4760 + $0x438] sm:$0xf] %v4917
                  %v4919 = vld [vmem:[%s4759 + $0x13c] sm:$0xf]
                  %4920 = vst [vmem:[%s4760 + $0x43c] sm:$0xf] %v4919
                  %v4921 = vld [vmem:[%s4759 + $0x140] sm:$0xf]
                  %4922 = vst [vmem:[%s4760 + $0x440] sm:$0xf] %v4921
                  %v4923 = vld [vmem:[%s4759 + $0x144] sm:$0xf]
                  %4924 = vst [vmem:[%s4760 + $0x444] sm:$0xf] %v4923
                  %v4925 = vld [vmem:[%s4759 + $0x148] sm:$0xf]
                  %4926 = vst [vmem:[%s4760 + $0x448] sm:$0xf] %v4925
                  %v4927 = vld [vmem:[%s4759 + $0x14c] sm:$0xf]
                  %4928 = vst [vmem:[%s4760 + $0x44c] sm:$0xf] %v4927
                  %v4929 = vld [vmem:[%s4759 + $0x150] sm:$0xf]
                  %4930 = vst [vmem:[%s4760 + $0x450] sm:$0xf] %v4929
                  %v4931 = vld [vmem:[%s4759 + $0x154] sm:$0xf]
                  %4932 = vst [vmem:[%s4760 + $0x454] sm:$0xf] %v4931
                  %v4933 = vld [vmem:[%s4759 + $0x158] sm:$0xf]
                  %4934 = vst [vmem:[%s4760 + $0x458] sm:$0xf] %v4933
                  %v4935 = vld [vmem:[%s4759 + $0x15c] sm:$0xf]
                  %4936 = vst [vmem:[%s4760 + $0x45c] sm:$0xf] %v4935
                  %v4937 = vld [vmem:[%s4759 + $0x160] sm:$0xf]
                  %4938 = vst [vmem:[%s4760 + $0x460] sm:$0xf] %v4937
                  %v4939 = vld [vmem:[%s4759 + $0x164] sm:$0xf]
                  %4940 = vst [vmem:[%s4760 + $0x464] sm:$0xf] %v4939
                  %v4941 = vld [vmem:[%s4759 + $0x168] sm:$0xf]
                  %4942 = vst [vmem:[%s4760 + $0x468] sm:$0xf] %v4941
                  %v4943 = vld [vmem:[%s4759 + $0x16c] sm:$0xf]
                  %4944 = vst [vmem:[%s4760 + $0x46c] sm:$0xf] %v4943
                  %v4945 = vld [vmem:[%s4759 + $0x170] sm:$0xf]
                  %4946 = vst [vmem:[%s4760 + $0x470] sm:$0xf] %v4945
                  %v4947 = vld [vmem:[%s4759 + $0x174] sm:$0xf]
                  %4948 = vst [vmem:[%s4760 + $0x474] sm:$0xf] %v4947
                  %v4949 = vld [vmem:[%s4759 + $0x178] sm:$0xf]
                  %4950 = vst [vmem:[%s4760 + $0x478] sm:$0xf] %v4949
                  %v4951 = vld [vmem:[%s4759 + $0x17c] sm:$0xf]
                  %4952 = vst [vmem:[%s4760 + $0x47c] sm:$0xf] %v4951
                  %v4953 = vld [vmem:[%s4759 + $0x180] sm:$0xf]
                  %4954 = vst [vmem:[%s4760 + $0x480] sm:$0xf] %v4953
                  %v4955 = vld [vmem:[%s4759 + $0x184] sm:$0xf]
                  %4956 = vst [vmem:[%s4760 + $0x484] sm:$0xf] %v4955
                  %v4957 = vld [vmem:[%s4759 + $0x188] sm:$0xf]
                  %4958 = vst [vmem:[%s4760 + $0x488] sm:$0xf] %v4957
                  %v4959 = vld [vmem:[%s4759 + $0x18c] sm:$0xf]
                  %4960 = vst [vmem:[%s4760 + $0x48c] sm:$0xf] %v4959
                  %v4961 = vld [vmem:[%s4759 + $0x190] sm:$0xf]
                  %4962 = vst [vmem:[%s4760 + $0x490] sm:$0xf] %v4961
                  %v4963 = vld [vmem:[%s4759 + $0x194] sm:$0xf]
                  %4964 = vst [vmem:[%s4760 + $0x494] sm:$0xf] %v4963
                  %v4965 = vld [vmem:[%s4759 + $0x198] sm:$0xf]
                  %4966 = vst [vmem:[%s4760 + $0x498] sm:$0xf] %v4965
                  %v4967 = vld [vmem:[%s4759 + $0x19c] sm:$0xf]
                  %4968 = vst [vmem:[%s4760 + $0x49c] sm:$0xf] %v4967
                  %v4969 = vld [vmem:[%s4759 + $0x1a0] sm:$0xf]
                  %4970 = vst [vmem:[%s4760 + $0x4a0] sm:$0xf] %v4969
                  %v4971 = vld [vmem:[%s4759 + $0x1a4] sm:$0xf]
                  %4972 = vst [vmem:[%s4760 + $0x4a4] sm:$0xf] %v4971
                  %v4973 = vld [vmem:[%s4759 + $0x1a8] sm:$0xf]
                  %4974 = vst [vmem:[%s4760 + $0x4a8] sm:$0xf] %v4973
                  %v4975 = vld [vmem:[%s4759 + $0x1ac] sm:$0xf]
                  %4976 = vst [vmem:[%s4760 + $0x4ac] sm:$0xf] %v4975
                  %v4977 = vld [vmem:[%s4759 + $0x1b0] sm:$0xf]
                  %4978 = vst [vmem:[%s4760 + $0x4b0] sm:$0xf] %v4977
                  %v4979 = vld [vmem:[%s4759 + $0x1b4] sm:$0xf]
                  %4980 = vst [vmem:[%s4760 + $0x4b4] sm:$0xf] %v4979
                  %v4981 = vld [vmem:[%s4759 + $0x1b8] sm:$0xf]
                  %4982 = vst [vmem:[%s4760 + $0x4b8] sm:$0xf] %v4981
                  %v4983 = vld [vmem:[%s4759 + $0x1bc] sm:$0xf]
                  %4984 = vst [vmem:[%s4760 + $0x4bc] sm:$0xf] %v4983
                  %v4985 = vld [vmem:[%s4759 + $0x1c0] sm:$0xf]
                  %4986 = vst [vmem:[%s4760 + $0x4c0] sm:$0xf] %v4985
                  %v4987 = vld [vmem:[%s4759 + $0x1c4] sm:$0xf]
                  %4988 = vst [vmem:[%s4760 + $0x4c4] sm:$0xf] %v4987
                  %v4989 = vld [vmem:[%s4759 + $0x1c8] sm:$0xf]
                  %4990 = vst [vmem:[%s4760 + $0x4c8] sm:$0xf] %v4989
                  %v4991 = vld [vmem:[%s4759 + $0x1cc] sm:$0xf]
                  %4992 = vst [vmem:[%s4760 + $0x4cc] sm:$0xf] %v4991
                  %v4993 = vld [vmem:[%s4759 + $0x1d0] sm:$0xf]
                  %4994 = vst [vmem:[%s4760 + $0x4d0] sm:$0xf] %v4993
                  %v4995 = vld [vmem:[%s4759 + $0x1d4] sm:$0xf]
                  %4996 = vst [vmem:[%s4760 + $0x4d4] sm:$0xf] %v4995
                  %v4997 = vld [vmem:[%s4759 + $0x1d8] sm:$0xf]
                  %4998 = vst [vmem:[%s4760 + $0x4d8] sm:$0xf] %v4997
                  %v4999 = vld [vmem:[%s4759 + $0x1dc] sm:$0xf]
                  %5000 = vst [vmem:[%s4760 + $0x4dc] sm:$0xf] %v4999
                  %v5001 = vld [vmem:[%s4759 + $0x1e0] sm:$0xf]
                  %5002 = vst [vmem:[%s4760 + $0x4e0] sm:$0xf] %v5001
                  %v5003 = vld [vmem:[%s4759 + $0x1e4] sm:$0xf]
                  %5004 = vst [vmem:[%s4760 + $0x4e4] sm:$0xf] %v5003
                  %v5005 = vld [vmem:[%s4759 + $0x1e8] sm:$0xf]
                  %5006 = vst [vmem:[%s4760 + $0x4e8] sm:$0xf] %v5005
                  %v5007 = vld [vmem:[%s4759 + $0x1ec] sm:$0xf]
                  %5008 = vst [vmem:[%s4760 + $0x4ec] sm:$0xf] %v5007
                  %v5009 = vld [vmem:[%s4759 + $0x1f0] sm:$0xf]
                  %5010 = vst [vmem:[%s4760 + $0x4f0] sm:$0xf] %v5009
                  %v5011 = vld [vmem:[%s4759 + $0x1f4] sm:$0xf]
                  %5012 = vst [vmem:[%s4760 + $0x4f4] sm:$0xf] %v5011
                  %v5013 = vld [vmem:[%s4759 + $0x1f8] sm:$0xf]
                  %5014 = vst [vmem:[%s4760 + $0x4f8] sm:$0xf] %v5013
                  %v5015 = vld [vmem:[%s4759 + $0x1fc] sm:$0xf]
                  %5016 = vst [vmem:[%s4760 + $0x4fc] sm:$0xf] %v5015
                  %v5017 = vld [vmem:[%s4759 + $0x200] sm:$0xf]
                  %5018 = vst [vmem:[%s4760 + $0x800] sm:$0xf] %v5017
                  %v5019 = vld [vmem:[%s4759 + $0x204] sm:$0xf]
                  %5020 = vst [vmem:[%s4760 + $0x804] sm:$0xf] %v5019
                  %v5021 = vld [vmem:[%s4759 + $0x208] sm:$0xf]
                  %5022 = vst [vmem:[%s4760 + $0x808] sm:$0xf] %v5021
                  %v5023 = vld [vmem:[%s4759 + $0x20c] sm:$0xf]
                  %5024 = vst [vmem:[%s4760 + $0x80c] sm:$0xf] %v5023
                  %v5025 = vld [vmem:[%s4759 + $0x210] sm:$0xf]
                  %5026 = vst [vmem:[%s4760 + $0x810] sm:$0xf] %v5025
                  %v5027 = vld [vmem:[%s4759 + $0x214] sm:$0xf]
                  %5028 = vst [vmem:[%s4760 + $0x814] sm:$0xf] %v5027
                  %v5029 = vld [vmem:[%s4759 + $0x218] sm:$0xf]
                  %5030 = vst [vmem:[%s4760 + $0x818] sm:$0xf] %v5029
                  %v5031 = vld [vmem:[%s4759 + $0x21c] sm:$0xf]
                  %5032 = vst [vmem:[%s4760 + $0x81c] sm:$0xf] %v5031
                  %v5033 = vld [vmem:[%s4759 + $0x220] sm:$0xf]
                  %5034 = vst [vmem:[%s4760 + $0x820] sm:$0xf] %v5033
                  %v5035 = vld [vmem:[%s4759 + $0x224] sm:$0xf]
                  %5036 = vst [vmem:[%s4760 + $0x824] sm:$0xf] %v5035
                  %v5037 = vld [vmem:[%s4759 + $0x228] sm:$0xf]
                  %5038 = vst [vmem:[%s4760 + $0x828] sm:$0xf] %v5037
                  %v5039 = vld [vmem:[%s4759 + $0x22c] sm:$0xf]
                  %5040 = vst [vmem:[%s4760 + $0x82c] sm:$0xf] %v5039
                  %v5041 = vld [vmem:[%s4759 + $0x230] sm:$0xf]
                  %5042 = vst [vmem:[%s4760 + $0x830] sm:$0xf] %v5041
                  %v5043 = vld [vmem:[%s4759 + $0x234] sm:$0xf]
                  %5044 = vst [vmem:[%s4760 + $0x834] sm:$0xf] %v5043
                  %v5045 = vld [vmem:[%s4759 + $0x238] sm:$0xf]
                  %5046 = vst [vmem:[%s4760 + $0x838] sm:$0xf] %v5045
                  %v5047 = vld [vmem:[%s4759 + $0x23c] sm:$0xf]
                  %5048 = vst [vmem:[%s4760 + $0x83c] sm:$0xf] %v5047
                  %v5049 = vld [vmem:[%s4759 + $0x240] sm:$0xf]
                  %5050 = vst [vmem:[%s4760 + $0x840] sm:$0xf] %v5049
                  %v5051 = vld [vmem:[%s4759 + $0x244] sm:$0xf]
                  %5052 = vst [vmem:[%s4760 + $0x844] sm:$0xf] %v5051
                  %v5053 = vld [vmem:[%s4759 + $0x248] sm:$0xf]
                  %5054 = vst [vmem:[%s4760 + $0x848] sm:$0xf] %v5053
                  %v5055 = vld [vmem:[%s4759 + $0x24c] sm:$0xf]
                  %5056 = vst [vmem:[%s4760 + $0x84c] sm:$0xf] %v5055
                  %v5057 = vld [vmem:[%s4759 + $0x250] sm:$0xf]
                  %5058 = vst [vmem:[%s4760 + $0x850] sm:$0xf] %v5057
                  %v5059 = vld [vmem:[%s4759 + $0x254] sm:$0xf]
                  %5060 = vst [vmem:[%s4760 + $0x854] sm:$0xf] %v5059
                  %v5061 = vld [vmem:[%s4759 + $0x258] sm:$0xf]
                  %5062 = vst [vmem:[%s4760 + $0x858] sm:$0xf] %v5061
                  %v5063 = vld [vmem:[%s4759 + $0x25c] sm:$0xf]
                  %5064 = vst [vmem:[%s4760 + $0x85c] sm:$0xf] %v5063
                  %v5065 = vld [vmem:[%s4759 + $0x260] sm:$0xf]
                  %5066 = vst [vmem:[%s4760 + $0x860] sm:$0xf] %v5065
                  %v5067 = vld [vmem:[%s4759 + $0x264] sm:$0xf]
                  %5068 = vst [vmem:[%s4760 + $0x864] sm:$0xf] %v5067
                  %v5069 = vld [vmem:[%s4759 + $0x268] sm:$0xf]
                  %5070 = vst [vmem:[%s4760 + $0x868] sm:$0xf] %v5069
                  %v5071 = vld [vmem:[%s4759 + $0x26c] sm:$0xf]
                  %5072 = vst [vmem:[%s4760 + $0x86c] sm:$0xf] %v5071
                  %v5073 = vld [vmem:[%s4759 + $0x270] sm:$0xf]
                  %5074 = vst [vmem:[%s4760 + $0x870] sm:$0xf] %v5073
                  %v5075 = vld [vmem:[%s4759 + $0x274] sm:$0xf]
                  %5076 = vst [vmem:[%s4760 + $0x874] sm:$0xf] %v5075
                  %v5077 = vld [vmem:[%s4759 + $0x278] sm:$0xf]
                  %5078 = vst [vmem:[%s4760 + $0x878] sm:$0xf] %v5077
                  %v5079 = vld [vmem:[%s4759 + $0x27c] sm:$0xf]
                  %5080 = vst [vmem:[%s4760 + $0x87c] sm:$0xf] %v5079
                  %v5081 = vld [vmem:[%s4759 + $0x280] sm:$0xf]
                  %5082 = vst [vmem:[%s4760 + $0x880] sm:$0xf] %v5081
                  %v5083 = vld [vmem:[%s4759 + $0x284] sm:$0xf]
                  %5084 = vst [vmem:[%s4760 + $0x884] sm:$0xf] %v5083
                  %v5085 = vld [vmem:[%s4759 + $0x288] sm:$0xf]
                  %5086 = vst [vmem:[%s4760 + $0x888] sm:$0xf] %v5085
                  %v5087 = vld [vmem:[%s4759 + $0x28c] sm:$0xf]
                  %5088 = vst [vmem:[%s4760 + $0x88c] sm:$0xf] %v5087
                  %v5089 = vld [vmem:[%s4759 + $0x290] sm:$0xf]
                  %5090 = vst [vmem:[%s4760 + $0x890] sm:$0xf] %v5089
                  %v5091 = vld [vmem:[%s4759 + $0x294] sm:$0xf]
                  %5092 = vst [vmem:[%s4760 + $0x894] sm:$0xf] %v5091
                  %v5093 = vld [vmem:[%s4759 + $0x298] sm:$0xf]
                  %5094 = vst [vmem:[%s4760 + $0x898] sm:$0xf] %v5093
                  %v5095 = vld [vmem:[%s4759 + $0x29c] sm:$0xf]
                  %5096 = vst [vmem:[%s4760 + $0x89c] sm:$0xf] %v5095
                  %v5097 = vld [vmem:[%s4759 + $0x2a0] sm:$0xf]
                  %5098 = vst [vmem:[%s4760 + $0x8a0] sm:$0xf] %v5097
                  %v5099 = vld [vmem:[%s4759 + $0x2a4] sm:$0xf]
                  %5100 = vst [vmem:[%s4760 + $0x8a4] sm:$0xf] %v5099
                  %v5101 = vld [vmem:[%s4759 + $0x2a8] sm:$0xf]
                  %5102 = vst [vmem:[%s4760 + $0x8a8] sm:$0xf] %v5101
                  %v5103 = vld [vmem:[%s4759 + $0x2ac] sm:$0xf]
                  %5104 = vst [vmem:[%s4760 + $0x8ac] sm:$0xf] %v5103
                  %v5105 = vld [vmem:[%s4759 + $0x2b0] sm:$0xf]
                  %5106 = vst [vmem:[%s4760 + $0x8b0] sm:$0xf] %v5105
                  %v5107 = vld [vmem:[%s4759 + $0x2b4] sm:$0xf]
                  %5108 = vst [vmem:[%s4760 + $0x8b4] sm:$0xf] %v5107
                  %v5109 = vld [vmem:[%s4759 + $0x2b8] sm:$0xf]
                  %5110 = vst [vmem:[%s4760 + $0x8b8] sm:$0xf] %v5109
                  %v5111 = vld [vmem:[%s4759 + $0x2bc] sm:$0xf]
                  %5112 = vst [vmem:[%s4760 + $0x8bc] sm:$0xf] %v5111
                  %v5113 = vld [vmem:[%s4759 + $0x2c0] sm:$0xf]
                  %5114 = vst [vmem:[%s4760 + $0x8c0] sm:$0xf] %v5113
                  %v5115 = vld [vmem:[%s4759 + $0x2c4] sm:$0xf]
                  %5116 = vst [vmem:[%s4760 + $0x8c4] sm:$0xf] %v5115
                  %v5117 = vld [vmem:[%s4759 + $0x2c8] sm:$0xf]
                  %5118 = vst [vmem:[%s4760 + $0x8c8] sm:$0xf] %v5117
                  %v5119 = vld [vmem:[%s4759 + $0x2cc] sm:$0xf]
                  %5120 = vst [vmem:[%s4760 + $0x8cc] sm:$0xf] %v5119
                  %v5121 = vld [vmem:[%s4759 + $0x2d0] sm:$0xf]
                  %5122 = vst [vmem:[%s4760 + $0x8d0] sm:$0xf] %v5121
                  %v5123 = vld [vmem:[%s4759 + $0x2d4] sm:$0xf]
                  %5124 = vst [vmem:[%s4760 + $0x8d4] sm:$0xf] %v5123
                  %v5125 = vld [vmem:[%s4759 + $0x2d8] sm:$0xf]
                  %5126 = vst [vmem:[%s4760 + $0x8d8] sm:$0xf] %v5125
                  %v5127 = vld [vmem:[%s4759 + $0x2dc] sm:$0xf]
                  %5128 = vst [vmem:[%s4760 + $0x8dc] sm:$0xf] %v5127
                  %v5129 = vld [vmem:[%s4759 + $0x2e0] sm:$0xf]
                  %5130 = vst [vmem:[%s4760 + $0x8e0] sm:$0xf] %v5129
                  %v5131 = vld [vmem:[%s4759 + $0x2e4] sm:$0xf]
                  %5132 = vst [vmem:[%s4760 + $0x8e4] sm:$0xf] %v5131
                  %v5133 = vld [vmem:[%s4759 + $0x2e8] sm:$0xf]
                  %5134 = vst [vmem:[%s4760 + $0x8e8] sm:$0xf] %v5133
                  %v5135 = vld [vmem:[%s4759 + $0x2ec] sm:$0xf]
                  %5136 = vst [vmem:[%s4760 + $0x8ec] sm:$0xf] %v5135
                  %v5137 = vld [vmem:[%s4759 + $0x2f0] sm:$0xf]
                  %5138 = vst [vmem:[%s4760 + $0x8f0] sm:$0xf] %v5137
                  %v5139 = vld [vmem:[%s4759 + $0x2f4] sm:$0xf]
                  %5140 = vst [vmem:[%s4760 + $0x8f4] sm:$0xf] %v5139
                  %v5141 = vld [vmem:[%s4759 + $0x2f8] sm:$0xf]
                  %5142 = vst [vmem:[%s4760 + $0x8f8] sm:$0xf] %v5141
                  %v5143 = vld [vmem:[%s4759 + $0x2fc] sm:$0xf]
                  %5144 = vst [vmem:[%s4760 + $0x8fc] sm:$0xf] %v5143
                  %v5145 = vld [vmem:[%s4759 + $0x300] sm:$0xf]
                  %5146 = vst [vmem:[%s4760 + $0xc00] sm:$0xf] %v5145
                  %v5147 = vld [vmem:[%s4759 + $0x304] sm:$0xf]
                  %5148 = vst [vmem:[%s4760 + $0xc04] sm:$0xf] %v5147
                  %v5149 = vld [vmem:[%s4759 + $0x308] sm:$0xf]
                  %5150 = vst [vmem:[%s4760 + $0xc08] sm:$0xf] %v5149
                  %v5151 = vld [vmem:[%s4759 + $0x30c] sm:$0xf]
                  %5152 = vst [vmem:[%s4760 + $0xc0c] sm:$0xf] %v5151
                  %v5153 = vld [vmem:[%s4759 + $0x310] sm:$0xf]
                  %5154 = vst [vmem:[%s4760 + $0xc10] sm:$0xf] %v5153
                  %v5155 = vld [vmem:[%s4759 + $0x314] sm:$0xf]
                  %5156 = vst [vmem:[%s4760 + $0xc14] sm:$0xf] %v5155
                  %v5157 = vld [vmem:[%s4759 + $0x318] sm:$0xf]
                  %5158 = vst [vmem:[%s4760 + $0xc18] sm:$0xf] %v5157
                  %v5159 = vld [vmem:[%s4759 + $0x31c] sm:$0xf]
                  %5160 = vst [vmem:[%s4760 + $0xc1c] sm:$0xf] %v5159
                  %v5161 = vld [vmem:[%s4759 + $0x320] sm:$0xf]
                  %5162 = vst [vmem:[%s4760 + $0xc20] sm:$0xf] %v5161
                  %v5163 = vld [vmem:[%s4759 + $0x324] sm:$0xf]
                  %5164 = vst [vmem:[%s4760 + $0xc24] sm:$0xf] %v5163
                  %v5165 = vld [vmem:[%s4759 + $0x328] sm:$0xf]
                  %5166 = vst [vmem:[%s4760 + $0xc28] sm:$0xf] %v5165
                  %v5167 = vld [vmem:[%s4759 + $0x32c] sm:$0xf]
                  %5168 = vst [vmem:[%s4760 + $0xc2c] sm:$0xf] %v5167
                  %v5169 = vld [vmem:[%s4759 + $0x330] sm:$0xf]
                  %5170 = vst [vmem:[%s4760 + $0xc30] sm:$0xf] %v5169
                  %v5171 = vld [vmem:[%s4759 + $0x334] sm:$0xf]
                  %5172 = vst [vmem:[%s4760 + $0xc34] sm:$0xf] %v5171
                  %v5173 = vld [vmem:[%s4759 + $0x338] sm:$0xf]
                  %5174 = vst [vmem:[%s4760 + $0xc38] sm:$0xf] %v5173
                  %v5175 = vld [vmem:[%s4759 + $0x33c] sm:$0xf]
                  %5176 = vst [vmem:[%s4760 + $0xc3c] sm:$0xf] %v5175
                  %v5177 = vld [vmem:[%s4759 + $0x340] sm:$0xf]
                  %5178 = vst [vmem:[%s4760 + $0xc40] sm:$0xf] %v5177
                  %v5179 = vld [vmem:[%s4759 + $0x344] sm:$0xf]
                  %5180 = vst [vmem:[%s4760 + $0xc44] sm:$0xf] %v5179
                  %v5181 = vld [vmem:[%s4759 + $0x348] sm:$0xf]
                  %5182 = vst [vmem:[%s4760 + $0xc48] sm:$0xf] %v5181
                  %v5183 = vld [vmem:[%s4759 + $0x34c] sm:$0xf]
                  %5184 = vst [vmem:[%s4760 + $0xc4c] sm:$0xf] %v5183
                  %v5185 = vld [vmem:[%s4759 + $0x350] sm:$0xf]
                  %5186 = vst [vmem:[%s4760 + $0xc50] sm:$0xf] %v5185
                  %v5187 = vld [vmem:[%s4759 + $0x354] sm:$0xf]
                  %5188 = vst [vmem:[%s4760 + $0xc54] sm:$0xf] %v5187
                  %v5189 = vld [vmem:[%s4759 + $0x358] sm:$0xf]
                  %5190 = vst [vmem:[%s4760 + $0xc58] sm:$0xf] %v5189
                  %v5191 = vld [vmem:[%s4759 + $0x35c] sm:$0xf]
                  %5192 = vst [vmem:[%s4760 + $0xc5c] sm:$0xf] %v5191
                  %v5193 = vld [vmem:[%s4759 + $0x360] sm:$0xf]
                  %5194 = vst [vmem:[%s4760 + $0xc60] sm:$0xf] %v5193
                  %v5195 = vld [vmem:[%s4759 + $0x364] sm:$0xf]
                  %5196 = vst [vmem:[%s4760 + $0xc64] sm:$0xf] %v5195
                  %v5197 = vld [vmem:[%s4759 + $0x368] sm:$0xf]
                  %5198 = vst [vmem:[%s4760 + $0xc68] sm:$0xf] %v5197
                  %v5199 = vld [vmem:[%s4759 + $0x36c] sm:$0xf]
                  %5200 = vst [vmem:[%s4760 + $0xc6c] sm:$0xf] %v5199
                  %v5201 = vld [vmem:[%s4759 + $0x370] sm:$0xf]
                  %5202 = vst [vmem:[%s4760 + $0xc70] sm:$0xf] %v5201
                  %v5203 = vld [vmem:[%s4759 + $0x374] sm:$0xf]
                  %5204 = vst [vmem:[%s4760 + $0xc74] sm:$0xf] %v5203
                  %v5205 = vld [vmem:[%s4759 + $0x378] sm:$0xf]
                  %5206 = vst [vmem:[%s4760 + $0xc78] sm:$0xf] %v5205
                  %v5207 = vld [vmem:[%s4759 + $0x37c] sm:$0xf]
                  %5208 = vst [vmem:[%s4760 + $0xc7c] sm:$0xf] %v5207
                  %v5209 = vld [vmem:[%s4759 + $0x380] sm:$0xf]
                  %5210 = vst [vmem:[%s4760 + $0xc80] sm:$0xf] %v5209
                  %v5211 = vld [vmem:[%s4759 + $0x384] sm:$0xf]
                  %5212 = vst [vmem:[%s4760 + $0xc84] sm:$0xf] %v5211
                  %v5213 = vld [vmem:[%s4759 + $0x388] sm:$0xf]
                  %5214 = vst [vmem:[%s4760 + $0xc88] sm:$0xf] %v5213
                  %v5215 = vld [vmem:[%s4759 + $0x38c] sm:$0xf]
                  %5216 = vst [vmem:[%s4760 + $0xc8c] sm:$0xf] %v5215
                  %v5217 = vld [vmem:[%s4759 + $0x390] sm:$0xf]
                  %5218 = vst [vmem:[%s4760 + $0xc90] sm:$0xf] %v5217
                  %v5219 = vld [vmem:[%s4759 + $0x394] sm:$0xf]
                  %5220 = vst [vmem:[%s4760 + $0xc94] sm:$0xf] %v5219
                  %v5221 = vld [vmem:[%s4759 + $0x398] sm:$0xf]
                  %5222 = vst [vmem:[%s4760 + $0xc98] sm:$0xf] %v5221
                  %v5223 = vld [vmem:[%s4759 + $0x39c] sm:$0xf]
                  %5224 = vst [vmem:[%s4760 + $0xc9c] sm:$0xf] %v5223
                  %v5225 = vld [vmem:[%s4759 + $0x3a0] sm:$0xf]
                  %5226 = vst [vmem:[%s4760 + $0xca0] sm:$0xf] %v5225
                  %v5227 = vld [vmem:[%s4759 + $0x3a4] sm:$0xf]
                  %5228 = vst [vmem:[%s4760 + $0xca4] sm:$0xf] %v5227
                  %v5229 = vld [vmem:[%s4759 + $0x3a8] sm:$0xf]
                  %5230 = vst [vmem:[%s4760 + $0xca8] sm:$0xf] %v5229
                  %v5231 = vld [vmem:[%s4759 + $0x3ac] sm:$0xf]
                  %5232 = vst [vmem:[%s4760 + $0xcac] sm:$0xf] %v5231
                  %v5233 = vld [vmem:[%s4759 + $0x3b0] sm:$0xf]
                  %5234 = vst [vmem:[%s4760 + $0xcb0] sm:$0xf] %v5233
                  %v5235 = vld [vmem:[%s4759 + $0x3b4] sm:$0xf]
                  %5236 = vst [vmem:[%s4760 + $0xcb4] sm:$0xf] %v5235
                  %v5237 = vld [vmem:[%s4759 + $0x3b8] sm:$0xf]
                  %5238 = vst [vmem:[%s4760 + $0xcb8] sm:$0xf] %v5237
                  %v5239 = vld [vmem:[%s4759 + $0x3bc] sm:$0xf]
                  %5240 = vst [vmem:[%s4760 + $0xcbc] sm:$0xf] %v5239
                  %v5241 = vld [vmem:[%s4759 + $0x3c0] sm:$0xf]
                  %5242 = vst [vmem:[%s4760 + $0xcc0] sm:$0xf] %v5241
                  %v5243 = vld [vmem:[%s4759 + $0x3c4] sm:$0xf]
                  %5244 = vst [vmem:[%s4760 + $0xcc4] sm:$0xf] %v5243
                  %v5245 = vld [vmem:[%s4759 + $0x3c8] sm:$0xf]
                  %5246 = vst [vmem:[%s4760 + $0xcc8] sm:$0xf] %v5245
                  %v5247 = vld [vmem:[%s4759 + $0x3cc] sm:$0xf]
                  %5248 = vst [vmem:[%s4760 + $0xccc] sm:$0xf] %v5247
                  %v5249 = vld [vmem:[%s4759 + $0x3d0] sm:$0xf]
                  %5250 = vst [vmem:[%s4760 + $0xcd0] sm:$0xf] %v5249
                  %v5251 = vld [vmem:[%s4759 + $0x3d4] sm:$0xf]
                  %5252 = vst [vmem:[%s4760 + $0xcd4] sm:$0xf] %v5251
                  %v5253 = vld [vmem:[%s4759 + $0x3d8] sm:$0xf]
                  %5254 = vst [vmem:[%s4760 + $0xcd8] sm:$0xf] %v5253
                  %v5255 = vld [vmem:[%s4759 + $0x3dc] sm:$0xf]
                  %5256 = vst [vmem:[%s4760 + $0xcdc] sm:$0xf] %v5255
                  %v5257 = vld [vmem:[%s4759 + $0x3e0] sm:$0xf]
                  %5258 = vst [vmem:[%s4760 + $0xce0] sm:$0xf] %v5257
                  %v5259 = vld [vmem:[%s4759 + $0x3e4] sm:$0xf]
                  %5260 = vst [vmem:[%s4760 + $0xce4] sm:$0xf] %v5259
                  %v5261 = vld [vmem:[%s4759 + $0x3e8] sm:$0xf]
                  %5262 = vst [vmem:[%s4760 + $0xce8] sm:$0xf] %v5261
                  %v5263 = vld [vmem:[%s4759 + $0x3ec] sm:$0xf]
                  %5264 = vst [vmem:[%s4760 + $0xcec] sm:$0xf] %v5263
                  %v5265 = vld [vmem:[%s4759 + $0x3f0] sm:$0xf]
                  %5266 = vst [vmem:[%s4760 + $0xcf0] sm:$0xf] %v5265
                  %v5267 = vld [vmem:[%s4759 + $0x3f4] sm:$0xf]
                  %5268 = vst [vmem:[%s4760 + $0xcf4] sm:$0xf] %v5267
                  %v5269 = vld [vmem:[%s4759 + $0x3f8] sm:$0xf]
                  %5270 = vst [vmem:[%s4760 + $0xcf8] sm:$0xf] %v5269
                  %v5271 = vld [vmem:[%s4759 + $0x3fc] sm:$0xf]
                  %5272 = vst [vmem:[%s4760 + $0xcfc] sm:$0xf] %v5271
                $region95: #{_lambda_.11} parent=82 // loop_footer
                  %s4758 = sadd.s32 1, %s4754
                $region96: #{_lambda_.11} parent=82 // loop_footer_branch
                  %4753 = sbr.rel target = $region92
                $region97: #{_lambda_.11} parent=82 // loop_exit
                  _
              $region83: #{_lambda_.11} parent=67 // pred_fallthru
                _
            $region68: #{_lambda_.11} parent=63 // pred_fallthru
              _
            // Predicated region
            $region69: #{_lambda_.11} parent=63 // pred_check
              _
            $region70: #{_lambda_.11} parent=63 // pred_check_branch
              %4220 = sbr.rel (0) target = $region72
            $region71: #{_lambda_.11} parent=63 // pred_region
              loop: start=0, step=1, limit=1
              $region73: #{_lambda_.11} parent=71 // loop_pre_header
                _
              $region74: #{_lambda_.11} parent=71 // loop_header
                %s4223 = sphi 0, %s4227
                %p4224 = scmp.ge.s32.totalorder %s4223, 1
                %s4228 = sphi %s4208, %s4208
                %s4229 = sphi %s4214, %s4214
              $region75: #{_lambda_.11} parent=71 // loop_header_branch
                %4226 = sbr.rel (%p4224) target = $region79
              $region76: #{_lambda_.11} parent=71 // loop_body
                %v4230 = vld [vmem:[%s4228] sm:$0xf]
                %4231 = vst [vmem:[%s4229] sm:$0xf] %v4230
                %v4232 = vld [vmem:[%s4228 + $0x4] sm:$0xf]
                %4233 = vst [vmem:[%s4229 + $0x4] sm:$0xf] %v4232
                %v4234 = vld [vmem:[%s4228 + $0x8] sm:$0xf]
                %4235 = vst [vmem:[%s4229 + $0x8] sm:$0xf] %v4234
                %v4236 = vld [vmem:[%s4228 + $0xc] sm:$0xf]
                %4237 = vst [vmem:[%s4229 + $0xc] sm:$0xf] %v4236
                %v4238 = vld [vmem:[%s4228 + $0x10] sm:$0xf]
                %4239 = vst [vmem:[%s4229 + $0x10] sm:$0xf] %v4238
                %v4240 = vld [vmem:[%s4228 + $0x14] sm:$0xf]
                %4241 = vst [vmem:[%s4229 + $0x14] sm:$0xf] %v4240
                %v4242 = vld [vmem:[%s4228 + $0x18] sm:$0xf]
                %4243 = vst [vmem:[%s4229 + $0x18] sm:$0xf] %v4242
                %v4244 = vld [vmem:[%s4228 + $0x1c] sm:$0xf]
                %4245 = vst [vmem:[%s4229 + $0x1c] sm:$0xf] %v4244
                %v4246 = vld [vmem:[%s4228 + $0x20] sm:$0xf]
                %4247 = vst [vmem:[%s4229 + $0x20] sm:$0xf] %v4246
                %v4248 = vld [vmem:[%s4228 + $0x24] sm:$0xf]
                %4249 = vst [vmem:[%s4229 + $0x24] sm:$0xf] %v4248
                %v4250 = vld [vmem:[%s4228 + $0x28] sm:$0xf]
                %4251 = vst [vmem:[%s4229 + $0x28] sm:$0xf] %v4250
                %v4252 = vld [vmem:[%s4228 + $0x2c] sm:$0xf]
                %4253 = vst [vmem:[%s4229 + $0x2c] sm:$0xf] %v4252
                %v4254 = vld [vmem:[%s4228 + $0x30] sm:$0xf]
                %4255 = vst [vmem:[%s4229 + $0x30] sm:$0xf] %v4254
                %v4256 = vld [vmem:[%s4228 + $0x34] sm:$0xf]
                %4257 = vst [vmem:[%s4229 + $0x34] sm:$0xf] %v4256
                %v4258 = vld [vmem:[%s4228 + $0x38] sm:$0xf]
                %4259 = vst [vmem:[%s4229 + $0x38] sm:$0xf] %v4258
                %v4260 = vld [vmem:[%s4228 + $0x3c] sm:$0xf]
                %4261 = vst [vmem:[%s4229 + $0x3c] sm:$0xf] %v4260
                %v4262 = vld [vmem:[%s4228 + $0x40] sm:$0xf]
                %4263 = vst [vmem:[%s4229 + $0x40] sm:$0xf] %v4262
                %v4264 = vld [vmem:[%s4228 + $0x44] sm:$0xf]
                %4265 = vst [vmem:[%s4229 + $0x44] sm:$0xf] %v4264
                %v4266 = vld [vmem:[%s4228 + $0x48] sm:$0xf]
                %4267 = vst [vmem:[%s4229 + $0x48] sm:$0xf] %v4266
                %v4268 = vld [vmem:[%s4228 + $0x4c] sm:$0xf]
                %4269 = vst [vmem:[%s4229 + $0x4c] sm:$0xf] %v4268
                %v4270 = vld [vmem:[%s4228 + $0x50] sm:$0xf]
                %4271 = vst [vmem:[%s4229 + $0x50] sm:$0xf] %v4270
                %v4272 = vld [vmem:[%s4228 + $0x54] sm:$0xf]
                %4273 = vst [vmem:[%s4229 + $0x54] sm:$0xf] %v4272
                %v4274 = vld [vmem:[%s4228 + $0x58] sm:$0xf]
                %4275 = vst [vmem:[%s4229 + $0x58] sm:$0xf] %v4274
                %v4276 = vld [vmem:[%s4228 + $0x5c] sm:$0xf]
                %4277 = vst [vmem:[%s4229 + $0x5c] sm:$0xf] %v4276
                %v4278 = vld [vmem:[%s4228 + $0x60] sm:$0xf]
                %4279 = vst [vmem:[%s4229 + $0x60] sm:$0xf] %v4278
                %v4280 = vld [vmem:[%s4228 + $0x64] sm:$0xf]
                %4281 = vst [vmem:[%s4229 + $0x64] sm:$0xf] %v4280
                %v4282 = vld [vmem:[%s4228 + $0x68] sm:$0xf]
                %4283 = vst [vmem:[%s4229 + $0x68] sm:$0xf] %v4282
                %v4284 = vld [vmem:[%s4228 + $0x6c] sm:$0xf]
                %4285 = vst [vmem:[%s4229 + $0x6c] sm:$0xf] %v4284
                %v4286 = vld [vmem:[%s4228 + $0x70] sm:$0xf]
                %4287 = vst [vmem:[%s4229 + $0x70] sm:$0xf] %v4286
                %v4288 = vld [vmem:[%s4228 + $0x74] sm:$0xf]
                %4289 = vst [vmem:[%s4229 + $0x74] sm:$0xf] %v4288
                %v4290 = vld [vmem:[%s4228 + $0x78] sm:$0xf]
                %4291 = vst [vmem:[%s4229 + $0x78] sm:$0xf] %v4290
                %v4292 = vld [vmem:[%s4228 + $0x7c] sm:$0xf]
                %4293 = vst [vmem:[%s4229 + $0x7c] sm:$0xf] %v4292
                %v4294 = vld [vmem:[%s4228 + $0x80] sm:$0xf]
                %4295 = vst [vmem:[%s4229 + $0x80] sm:$0xf] %v4294
                %v4296 = vld [vmem:[%s4228 + $0x84] sm:$0xf]
                %4297 = vst [vmem:[%s4229 + $0x84] sm:$0xf] %v4296
                %v4298 = vld [vmem:[%s4228 + $0x88] sm:$0xf]
                %4299 = vst [vmem:[%s4229 + $0x88] sm:$0xf] %v4298
                %v4300 = vld [vmem:[%s4228 + $0x8c] sm:$0xf]
                %4301 = vst [vmem:[%s4229 + $0x8c] sm:$0xf] %v4300
                %v4302 = vld [vmem:[%s4228 + $0x90] sm:$0xf]
                %4303 = vst [vmem:[%s4229 + $0x90] sm:$0xf] %v4302
                %v4304 = vld [vmem:[%s4228 + $0x94] sm:$0xf]
                %4305 = vst [vmem:[%s4229 + $0x94] sm:$0xf] %v4304
                %v4306 = vld [vmem:[%s4228 + $0x98] sm:$0xf]
                %4307 = vst [vmem:[%s4229 + $0x98] sm:$0xf] %v4306
                %v4308 = vld [vmem:[%s4228 + $0x9c] sm:$0xf]
                %4309 = vst [vmem:[%s4229 + $0x9c] sm:$0xf] %v4308
                %v4310 = vld [vmem:[%s4228 + $0xa0] sm:$0xf]
                %4311 = vst [vmem:[%s4229 + $0xa0] sm:$0xf] %v4310
                %v4312 = vld [vmem:[%s4228 + $0xa4] sm:$0xf]
                %4313 = vst [vmem:[%s4229 + $0xa4] sm:$0xf] %v4312
                %v4314 = vld [vmem:[%s4228 + $0xa8] sm:$0xf]
                %4315 = vst [vmem:[%s4229 + $0xa8] sm:$0xf] %v4314
                %v4316 = vld [vmem:[%s4228 + $0xac] sm:$0xf]
                %4317 = vst [vmem:[%s4229 + $0xac] sm:$0xf] %v4316
                %v4318 = vld [vmem:[%s4228 + $0xb0] sm:$0xf]
                %4319 = vst [vmem:[%s4229 + $0xb0] sm:$0xf] %v4318
                %v4320 = vld [vmem:[%s4228 + $0xb4] sm:$0xf]
                %4321 = vst [vmem:[%s4229 + $0xb4] sm:$0xf] %v4320
                %v4322 = vld [vmem:[%s4228 + $0xb8] sm:$0xf]
                %4323 = vst [vmem:[%s4229 + $0xb8] sm:$0xf] %v4322
                %v4324 = vld [vmem:[%s4228 + $0xbc] sm:$0xf]
                %4325 = vst [vmem:[%s4229 + $0xbc] sm:$0xf] %v4324
                %v4326 = vld [vmem:[%s4228 + $0xc0] sm:$0xf]
                %4327 = vst [vmem:[%s4229 + $0xc0] sm:$0xf] %v4326
                %v4328 = vld [vmem:[%s4228 + $0xc4] sm:$0xf]
                %4329 = vst [vmem:[%s4229 + $0xc4] sm:$0xf] %v4328
                %v4330 = vld [vmem:[%s4228 + $0xc8] sm:$0xf]
                %4331 = vst [vmem:[%s4229 + $0xc8] sm:$0xf] %v4330
                %v4332 = vld [vmem:[%s4228 + $0xcc] sm:$0xf]
                %4333 = vst [vmem:[%s4229 + $0xcc] sm:$0xf] %v4332
                %v4334 = vld [vmem:[%s4228 + $0xd0] sm:$0xf]
                %4335 = vst [vmem:[%s4229 + $0xd0] sm:$0xf] %v4334
                %v4336 = vld [vmem:[%s4228 + $0xd4] sm:$0xf]
                %4337 = vst [vmem:[%s4229 + $0xd4] sm:$0xf] %v4336
                %v4338 = vld [vmem:[%s4228 + $0xd8] sm:$0xf]
                %4339 = vst [vmem:[%s4229 + $0xd8] sm:$0xf] %v4338
                %v4340 = vld [vmem:[%s4228 + $0xdc] sm:$0xf]
                %4341 = vst [vmem:[%s4229 + $0xdc] sm:$0xf] %v4340
                %v4342 = vld [vmem:[%s4228 + $0xe0] sm:$0xf]
                %4343 = vst [vmem:[%s4229 + $0xe0] sm:$0xf] %v4342
                %v4344 = vld [vmem:[%s4228 + $0xe4] sm:$0xf]
                %4345 = vst [vmem:[%s4229 + $0xe4] sm:$0xf] %v4344
                %v4346 = vld [vmem:[%s4228 + $0xe8] sm:$0xf]
                %4347 = vst [vmem:[%s4229 + $0xe8] sm:$0xf] %v4346
                %v4348 = vld [vmem:[%s4228 + $0xec] sm:$0xf]
                %4349 = vst [vmem:[%s4229 + $0xec] sm:$0xf] %v4348
                %v4350 = vld [vmem:[%s4228 + $0xf0] sm:$0xf]
                %4351 = vst [vmem:[%s4229 + $0xf0] sm:$0xf] %v4350
                %v4352 = vld [vmem:[%s4228 + $0xf4] sm:$0xf]
                %4353 = vst [vmem:[%s4229 + $0xf4] sm:$0xf] %v4352
                %v4354 = vld [vmem:[%s4228 + $0xf8] sm:$0xf]
                %4355 = vst [vmem:[%s4229 + $0xf8] sm:$0xf] %v4354
                %v4356 = vld [vmem:[%s4228 + $0xfc] sm:$0xf]
                %4357 = vst [vmem:[%s4229 + $0xfc] sm:$0xf] %v4356
                %v4358 = vld [vmem:[%s4228 + $0x100] sm:$0xf]
                %4359 = vst [vmem:[%s4229 + $0x400] sm:$0xf] %v4358
                %v4360 = vld [vmem:[%s4228 + $0x104] sm:$0xf]
                %4361 = vst [vmem:[%s4229 + $0x404] sm:$0xf] %v4360
                %v4362 = vld [vmem:[%s4228 + $0x108] sm:$0xf]
                %4363 = vst [vmem:[%s4229 + $0x408] sm:$0xf] %v4362
                %v4364 = vld [vmem:[%s4228 + $0x10c] sm:$0xf]
                %4365 = vst [vmem:[%s4229 + $0x40c] sm:$0xf] %v4364
                %v4366 = vld [vmem:[%s4228 + $0x110] sm:$0xf]
                %4367 = vst [vmem:[%s4229 + $0x410] sm:$0xf] %v4366
                %v4368 = vld [vmem:[%s4228 + $0x114] sm:$0xf]
                %4369 = vst [vmem:[%s4229 + $0x414] sm:$0xf] %v4368
                %v4370 = vld [vmem:[%s4228 + $0x118] sm:$0xf]
                %4371 = vst [vmem:[%s4229 + $0x418] sm:$0xf] %v4370
                %v4372 = vld [vmem:[%s4228 + $0x11c] sm:$0xf]
                %4373 = vst [vmem:[%s4229 + $0x41c] sm:$0xf] %v4372
                %v4374 = vld [vmem:[%s4228 + $0x120] sm:$0xf]
                %4375 = vst [vmem:[%s4229 + $0x420] sm:$0xf] %v4374
                %v4376 = vld [vmem:[%s4228 + $0x124] sm:$0xf]
                %4377 = vst [vmem:[%s4229 + $0x424] sm:$0xf] %v4376
                %v4378 = vld [vmem:[%s4228 + $0x128] sm:$0xf]
                %4379 = vst [vmem:[%s4229 + $0x428] sm:$0xf] %v4378
                %v4380 = vld [vmem:[%s4228 + $0x12c] sm:$0xf]
                %4381 = vst [vmem:[%s4229 + $0x42c] sm:$0xf] %v4380
                %v4382 = vld [vmem:[%s4228 + $0x130] sm:$0xf]
                %4383 = vst [vmem:[%s4229 + $0x430] sm:$0xf] %v4382
                %v4384 = vld [vmem:[%s4228 + $0x134] sm:$0xf]
                %4385 = vst [vmem:[%s4229 + $0x434] sm:$0xf] %v4384
                %v4386 = vld [vmem:[%s4228 + $0x138] sm:$0xf]
                %4387 = vst [vmem:[%s4229 + $0x438] sm:$0xf] %v4386
                %v4388 = vld [vmem:[%s4228 + $0x13c] sm:$0xf]
                %4389 = vst [vmem:[%s4229 + $0x43c] sm:$0xf] %v4388
                %v4390 = vld [vmem:[%s4228 + $0x140] sm:$0xf]
                %4391 = vst [vmem:[%s4229 + $0x440] sm:$0xf] %v4390
                %v4392 = vld [vmem:[%s4228 + $0x144] sm:$0xf]
                %4393 = vst [vmem:[%s4229 + $0x444] sm:$0xf] %v4392
                %v4394 = vld [vmem:[%s4228 + $0x148] sm:$0xf]
                %4395 = vst [vmem:[%s4229 + $0x448] sm:$0xf] %v4394
                %v4396 = vld [vmem:[%s4228 + $0x14c] sm:$0xf]
                %4397 = vst [vmem:[%s4229 + $0x44c] sm:$0xf] %v4396
                %v4398 = vld [vmem:[%s4228 + $0x150] sm:$0xf]
                %4399 = vst [vmem:[%s4229 + $0x450] sm:$0xf] %v4398
                %v4400 = vld [vmem:[%s4228 + $0x154] sm:$0xf]
                %4401 = vst [vmem:[%s4229 + $0x454] sm:$0xf] %v4400
                %v4402 = vld [vmem:[%s4228 + $0x158] sm:$0xf]
                %4403 = vst [vmem:[%s4229 + $0x458] sm:$0xf] %v4402
                %v4404 = vld [vmem:[%s4228 + $0x15c] sm:$0xf]
                %4405 = vst [vmem:[%s4229 + $0x45c] sm:$0xf] %v4404
                %v4406 = vld [vmem:[%s4228 + $0x160] sm:$0xf]
                %4407 = vst [vmem:[%s4229 + $0x460] sm:$0xf] %v4406
                %v4408 = vld [vmem:[%s4228 + $0x164] sm:$0xf]
                %4409 = vst [vmem:[%s4229 + $0x464] sm:$0xf] %v4408
                %v4410 = vld [vmem:[%s4228 + $0x168] sm:$0xf]
                %4411 = vst [vmem:[%s4229 + $0x468] sm:$0xf] %v4410
                %v4412 = vld [vmem:[%s4228 + $0x16c] sm:$0xf]
                %4413 = vst [vmem:[%s4229 + $0x46c] sm:$0xf] %v4412
                %v4414 = vld [vmem:[%s4228 + $0x170] sm:$0xf]
                %4415 = vst [vmem:[%s4229 + $0x470] sm:$0xf] %v4414
                %v4416 = vld [vmem:[%s4228 + $0x174] sm:$0xf]
                %4417 = vst [vmem:[%s4229 + $0x474] sm:$0xf] %v4416
                %v4418 = vld [vmem:[%s4228 + $0x178] sm:$0xf]
                %4419 = vst [vmem:[%s4229 + $0x478] sm:$0xf] %v4418
                %v4420 = vld [vmem:[%s4228 + $0x17c] sm:$0xf]
                %4421 = vst [vmem:[%s4229 + $0x47c] sm:$0xf] %v4420
                %v4422 = vld [vmem:[%s4228 + $0x180] sm:$0xf]
                %4423 = vst [vmem:[%s4229 + $0x480] sm:$0xf] %v4422
                %v4424 = vld [vmem:[%s4228 + $0x184] sm:$0xf]
                %4425 = vst [vmem:[%s4229 + $0x484] sm:$0xf] %v4424
                %v4426 = vld [vmem:[%s4228 + $0x188] sm:$0xf]
                %4427 = vst [vmem:[%s4229 + $0x488] sm:$0xf] %v4426
                %v4428 = vld [vmem:[%s4228 + $0x18c] sm:$0xf]
                %4429 = vst [vmem:[%s4229 + $0x48c] sm:$0xf] %v4428
                %v4430 = vld [vmem:[%s4228 + $0x190] sm:$0xf]
                %4431 = vst [vmem:[%s4229 + $0x490] sm:$0xf] %v4430
                %v4432 = vld [vmem:[%s4228 + $0x194] sm:$0xf]
                %4433 = vst [vmem:[%s4229 + $0x494] sm:$0xf] %v4432
                %v4434 = vld [vmem:[%s4228 + $0x198] sm:$0xf]
                %4435 = vst [vmem:[%s4229 + $0x498] sm:$0xf] %v4434
                %v4436 = vld [vmem:[%s4228 + $0x19c] sm:$0xf]
                %4437 = vst [vmem:[%s4229 + $0x49c] sm:$0xf] %v4436
                %v4438 = vld [vmem:[%s4228 + $0x1a0] sm:$0xf]
                %4439 = vst [vmem:[%s4229 + $0x4a0] sm:$0xf] %v4438
                %v4440 = vld [vmem:[%s4228 + $0x1a4] sm:$0xf]
                %4441 = vst [vmem:[%s4229 + $0x4a4] sm:$0xf] %v4440
                %v4442 = vld [vmem:[%s4228 + $0x1a8] sm:$0xf]
                %4443 = vst [vmem:[%s4229 + $0x4a8] sm:$0xf] %v4442
                %v4444 = vld [vmem:[%s4228 + $0x1ac] sm:$0xf]
                %4445 = vst [vmem:[%s4229 + $0x4ac] sm:$0xf] %v4444
                %v4446 = vld [vmem:[%s4228 + $0x1b0] sm:$0xf]
                %4447 = vst [vmem:[%s4229 + $0x4b0] sm:$0xf] %v4446
                %v4448 = vld [vmem:[%s4228 + $0x1b4] sm:$0xf]
                %4449 = vst [vmem:[%s4229 + $0x4b4] sm:$0xf] %v4448
                %v4450 = vld [vmem:[%s4228 + $0x1b8] sm:$0xf]
                %4451 = vst [vmem:[%s4229 + $0x4b8] sm:$0xf] %v4450
                %v4452 = vld [vmem:[%s4228 + $0x1bc] sm:$0xf]
                %4453 = vst [vmem:[%s4229 + $0x4bc] sm:$0xf] %v4452
                %v4454 = vld [vmem:[%s4228 + $0x1c0] sm:$0xf]
                %4455 = vst [vmem:[%s4229 + $0x4c0] sm:$0xf] %v4454
                %v4456 = vld [vmem:[%s4228 + $0x1c4] sm:$0xf]
                %4457 = vst [vmem:[%s4229 + $0x4c4] sm:$0xf] %v4456
                %v4458 = vld [vmem:[%s4228 + $0x1c8] sm:$0xf]
                %4459 = vst [vmem:[%s4229 + $0x4c8] sm:$0xf] %v4458
                %v4460 = vld [vmem:[%s4228 + $0x1cc] sm:$0xf]
                %4461 = vst [vmem:[%s4229 + $0x4cc] sm:$0xf] %v4460
                %v4462 = vld [vmem:[%s4228 + $0x1d0] sm:$0xf]
                %4463 = vst [vmem:[%s4229 + $0x4d0] sm:$0xf] %v4462
                %v4464 = vld [vmem:[%s4228 + $0x1d4] sm:$0xf]
                %4465 = vst [vmem:[%s4229 + $0x4d4] sm:$0xf] %v4464
                %v4466 = vld [vmem:[%s4228 + $0x1d8] sm:$0xf]
                %4467 = vst [vmem:[%s4229 + $0x4d8] sm:$0xf] %v4466
                %v4468 = vld [vmem:[%s4228 + $0x1dc] sm:$0xf]
                %4469 = vst [vmem:[%s4229 + $0x4dc] sm:$0xf] %v4468
                %v4470 = vld [vmem:[%s4228 + $0x1e0] sm:$0xf]
                %4471 = vst [vmem:[%s4229 + $0x4e0] sm:$0xf] %v4470
                %v4472 = vld [vmem:[%s4228 + $0x1e4] sm:$0xf]
                %4473 = vst [vmem:[%s4229 + $0x4e4] sm:$0xf] %v4472
                %v4474 = vld [vmem:[%s4228 + $0x1e8] sm:$0xf]
                %4475 = vst [vmem:[%s4229 + $0x4e8] sm:$0xf] %v4474
                %v4476 = vld [vmem:[%s4228 + $0x1ec] sm:$0xf]
                %4477 = vst [vmem:[%s4229 + $0x4ec] sm:$0xf] %v4476
                %v4478 = vld [vmem:[%s4228 + $0x1f0] sm:$0xf]
                %4479 = vst [vmem:[%s4229 + $0x4f0] sm:$0xf] %v4478
                %v4480 = vld [vmem:[%s4228 + $0x1f4] sm:$0xf]
                %4481 = vst [vmem:[%s4229 + $0x4f4] sm:$0xf] %v4480
                %v4482 = vld [vmem:[%s4228 + $0x1f8] sm:$0xf]
                %4483 = vst [vmem:[%s4229 + $0x4f8] sm:$0xf] %v4482
                %v4484 = vld [vmem:[%s4228 + $0x1fc] sm:$0xf]
                %4485 = vst [vmem:[%s4229 + $0x4fc] sm:$0xf] %v4484
                %v4486 = vld [vmem:[%s4228 + $0x200] sm:$0xf]
                %4487 = vst [vmem:[%s4229 + $0x800] sm:$0xf] %v4486
                %v4488 = vld [vmem:[%s4228 + $0x204] sm:$0xf]
                %4489 = vst [vmem:[%s4229 + $0x804] sm:$0xf] %v4488
                %v4490 = vld [vmem:[%s4228 + $0x208] sm:$0xf]
                %4491 = vst [vmem:[%s4229 + $0x808] sm:$0xf] %v4490
                %v4492 = vld [vmem:[%s4228 + $0x20c] sm:$0xf]
                %4493 = vst [vmem:[%s4229 + $0x80c] sm:$0xf] %v4492
                %v4494 = vld [vmem:[%s4228 + $0x210] sm:$0xf]
                %4495 = vst [vmem:[%s4229 + $0x810] sm:$0xf] %v4494
                %v4496 = vld [vmem:[%s4228 + $0x214] sm:$0xf]
                %4497 = vst [vmem:[%s4229 + $0x814] sm:$0xf] %v4496
                %v4498 = vld [vmem:[%s4228 + $0x218] sm:$0xf]
                %4499 = vst [vmem:[%s4229 + $0x818] sm:$0xf] %v4498
                %v4500 = vld [vmem:[%s4228 + $0x21c] sm:$0xf]
                %4501 = vst [vmem:[%s4229 + $0x81c] sm:$0xf] %v4500
                %v4502 = vld [vmem:[%s4228 + $0x220] sm:$0xf]
                %4503 = vst [vmem:[%s4229 + $0x820] sm:$0xf] %v4502
                %v4504 = vld [vmem:[%s4228 + $0x224] sm:$0xf]
                %4505 = vst [vmem:[%s4229 + $0x824] sm:$0xf] %v4504
                %v4506 = vld [vmem:[%s4228 + $0x228] sm:$0xf]
                %4507 = vst [vmem:[%s4229 + $0x828] sm:$0xf] %v4506
                %v4508 = vld [vmem:[%s4228 + $0x22c] sm:$0xf]
                %4509 = vst [vmem:[%s4229 + $0x82c] sm:$0xf] %v4508
                %v4510 = vld [vmem:[%s4228 + $0x230] sm:$0xf]
                %4511 = vst [vmem:[%s4229 + $0x830] sm:$0xf] %v4510
                %v4512 = vld [vmem:[%s4228 + $0x234] sm:$0xf]
                %4513 = vst [vmem:[%s4229 + $0x834] sm:$0xf] %v4512
                %v4514 = vld [vmem:[%s4228 + $0x238] sm:$0xf]
                %4515 = vst [vmem:[%s4229 + $0x838] sm:$0xf] %v4514
                %v4516 = vld [vmem:[%s4228 + $0x23c] sm:$0xf]
                %4517 = vst [vmem:[%s4229 + $0x83c] sm:$0xf] %v4516
                %v4518 = vld [vmem:[%s4228 + $0x240] sm:$0xf]
                %4519 = vst [vmem:[%s4229 + $0x840] sm:$0xf] %v4518
                %v4520 = vld [vmem:[%s4228 + $0x244] sm:$0xf]
                %4521 = vst [vmem:[%s4229 + $0x844] sm:$0xf] %v4520
                %v4522 = vld [vmem:[%s4228 + $0x248] sm:$0xf]
                %4523 = vst [vmem:[%s4229 + $0x848] sm:$0xf] %v4522
                %v4524 = vld [vmem:[%s4228 + $0x24c] sm:$0xf]
                %4525 = vst [vmem:[%s4229 + $0x84c] sm:$0xf] %v4524
                %v4526 = vld [vmem:[%s4228 + $0x250] sm:$0xf]
                %4527 = vst [vmem:[%s4229 + $0x850] sm:$0xf] %v4526
                %v4528 = vld [vmem:[%s4228 + $0x254] sm:$0xf]
                %4529 = vst [vmem:[%s4229 + $0x854] sm:$0xf] %v4528
                %v4530 = vld [vmem:[%s4228 + $0x258] sm:$0xf]
                %4531 = vst [vmem:[%s4229 + $0x858] sm:$0xf] %v4530
                %v4532 = vld [vmem:[%s4228 + $0x25c] sm:$0xf]
                %4533 = vst [vmem:[%s4229 + $0x85c] sm:$0xf] %v4532
                %v4534 = vld [vmem:[%s4228 + $0x260] sm:$0xf]
                %4535 = vst [vmem:[%s4229 + $0x860] sm:$0xf] %v4534
                %v4536 = vld [vmem:[%s4228 + $0x264] sm:$0xf]
                %4537 = vst [vmem:[%s4229 + $0x864] sm:$0xf] %v4536
                %v4538 = vld [vmem:[%s4228 + $0x268] sm:$0xf]
                %4539 = vst [vmem:[%s4229 + $0x868] sm:$0xf] %v4538
                %v4540 = vld [vmem:[%s4228 + $0x26c] sm:$0xf]
                %4541 = vst [vmem:[%s4229 + $0x86c] sm:$0xf] %v4540
                %v4542 = vld [vmem:[%s4228 + $0x270] sm:$0xf]
                %4543 = vst [vmem:[%s4229 + $0x870] sm:$0xf] %v4542
                %v4544 = vld [vmem:[%s4228 + $0x274] sm:$0xf]
                %4545 = vst [vmem:[%s4229 + $0x874] sm:$0xf] %v4544
                %v4546 = vld [vmem:[%s4228 + $0x278] sm:$0xf]
                %4547 = vst [vmem:[%s4229 + $0x878] sm:$0xf] %v4546
                %v4548 = vld [vmem:[%s4228 + $0x27c] sm:$0xf]
                %4549 = vst [vmem:[%s4229 + $0x87c] sm:$0xf] %v4548
                %v4550 = vld [vmem:[%s4228 + $0x280] sm:$0xf]
                %4551 = vst [vmem:[%s4229 + $0x880] sm:$0xf] %v4550
                %v4552 = vld [vmem:[%s4228 + $0x284] sm:$0xf]
                %4553 = vst [vmem:[%s4229 + $0x884] sm:$0xf] %v4552
                %v4554 = vld [vmem:[%s4228 + $0x288] sm:$0xf]
                %4555 = vst [vmem:[%s4229 + $0x888] sm:$0xf] %v4554
                %v4556 = vld [vmem:[%s4228 + $0x28c] sm:$0xf]
                %4557 = vst [vmem:[%s4229 + $0x88c] sm:$0xf] %v4556
                %v4558 = vld [vmem:[%s4228 + $0x290] sm:$0xf]
                %4559 = vst [vmem:[%s4229 + $0x890] sm:$0xf] %v4558
                %v4560 = vld [vmem:[%s4228 + $0x294] sm:$0xf]
                %4561 = vst [vmem:[%s4229 + $0x894] sm:$0xf] %v4560
                %v4562 = vld [vmem:[%s4228 + $0x298] sm:$0xf]
                %4563 = vst [vmem:[%s4229 + $0x898] sm:$0xf] %v4562
                %v4564 = vld [vmem:[%s4228 + $0x29c] sm:$0xf]
                %4565 = vst [vmem:[%s4229 + $0x89c] sm:$0xf] %v4564
                %v4566 = vld [vmem:[%s4228 + $0x2a0] sm:$0xf]
                %4567 = vst [vmem:[%s4229 + $0x8a0] sm:$0xf] %v4566
                %v4568 = vld [vmem:[%s4228 + $0x2a4] sm:$0xf]
                %4569 = vst [vmem:[%s4229 + $0x8a4] sm:$0xf] %v4568
                %v4570 = vld [vmem:[%s4228 + $0x2a8] sm:$0xf]
                %4571 = vst [vmem:[%s4229 + $0x8a8] sm:$0xf] %v4570
                %v4572 = vld [vmem:[%s4228 + $0x2ac] sm:$0xf]
                %4573 = vst [vmem:[%s4229 + $0x8ac] sm:$0xf] %v4572
                %v4574 = vld [vmem:[%s4228 + $0x2b0] sm:$0xf]
                %4575 = vst [vmem:[%s4229 + $0x8b0] sm:$0xf] %v4574
                %v4576 = vld [vmem:[%s4228 + $0x2b4] sm:$0xf]
                %4577 = vst [vmem:[%s4229 + $0x8b4] sm:$0xf] %v4576
                %v4578 = vld [vmem:[%s4228 + $0x2b8] sm:$0xf]
                %4579 = vst [vmem:[%s4229 + $0x8b8] sm:$0xf] %v4578
                %v4580 = vld [vmem:[%s4228 + $0x2bc] sm:$0xf]
                %4581 = vst [vmem:[%s4229 + $0x8bc] sm:$0xf] %v4580
                %v4582 = vld [vmem:[%s4228 + $0x2c0] sm:$0xf]
                %4583 = vst [vmem:[%s4229 + $0x8c0] sm:$0xf] %v4582
                %v4584 = vld [vmem:[%s4228 + $0x2c4] sm:$0xf]
                %4585 = vst [vmem:[%s4229 + $0x8c4] sm:$0xf] %v4584
                %v4586 = vld [vmem:[%s4228 + $0x2c8] sm:$0xf]
                %4587 = vst [vmem:[%s4229 + $0x8c8] sm:$0xf] %v4586
                %v4588 = vld [vmem:[%s4228 + $0x2cc] sm:$0xf]
                %4589 = vst [vmem:[%s4229 + $0x8cc] sm:$0xf] %v4588
                %v4590 = vld [vmem:[%s4228 + $0x2d0] sm:$0xf]
                %4591 = vst [vmem:[%s4229 + $0x8d0] sm:$0xf] %v4590
                %v4592 = vld [vmem:[%s4228 + $0x2d4] sm:$0xf]
                %4593 = vst [vmem:[%s4229 + $0x8d4] sm:$0xf] %v4592
                %v4594 = vld [vmem:[%s4228 + $0x2d8] sm:$0xf]
                %4595 = vst [vmem:[%s4229 + $0x8d8] sm:$0xf] %v4594
                %v4596 = vld [vmem:[%s4228 + $0x2dc] sm:$0xf]
                %4597 = vst [vmem:[%s4229 + $0x8dc] sm:$0xf] %v4596
                %v4598 = vld [vmem:[%s4228 + $0x2e0] sm:$0xf]
                %4599 = vst [vmem:[%s4229 + $0x8e0] sm:$0xf] %v4598
                %v4600 = vld [vmem:[%s4228 + $0x2e4] sm:$0xf]
                %4601 = vst [vmem:[%s4229 + $0x8e4] sm:$0xf] %v4600
                %v4602 = vld [vmem:[%s4228 + $0x2e8] sm:$0xf]
                %4603 = vst [vmem:[%s4229 + $0x8e8] sm:$0xf] %v4602
                %v4604 = vld [vmem:[%s4228 + $0x2ec] sm:$0xf]
                %4605 = vst [vmem:[%s4229 + $0x8ec] sm:$0xf] %v4604
                %v4606 = vld [vmem:[%s4228 + $0x2f0] sm:$0xf]
                %4607 = vst [vmem:[%s4229 + $0x8f0] sm:$0xf] %v4606
                %v4608 = vld [vmem:[%s4228 + $0x2f4] sm:$0xf]
                %4609 = vst [vmem:[%s4229 + $0x8f4] sm:$0xf] %v4608
                %v4610 = vld [vmem:[%s4228 + $0x2f8] sm:$0xf]
                %4611 = vst [vmem:[%s4229 + $0x8f8] sm:$0xf] %v4610
                %v4612 = vld [vmem:[%s4228 + $0x2fc] sm:$0xf]
                %4613 = vst [vmem:[%s4229 + $0x8fc] sm:$0xf] %v4612
                %v4614 = vld [vmem:[%s4228 + $0x300] sm:$0xf]
                %4615 = vst [vmem:[%s4229 + $0xc00] sm:$0xf] %v4614
                %v4616 = vld [vmem:[%s4228 + $0x304] sm:$0xf]
                %4617 = vst [vmem:[%s4229 + $0xc04] sm:$0xf] %v4616
                %v4618 = vld [vmem:[%s4228 + $0x308] sm:$0xf]
                %4619 = vst [vmem:[%s4229 + $0xc08] sm:$0xf] %v4618
                %v4620 = vld [vmem:[%s4228 + $0x30c] sm:$0xf]
                %4621 = vst [vmem:[%s4229 + $0xc0c] sm:$0xf] %v4620
                %v4622 = vld [vmem:[%s4228 + $0x310] sm:$0xf]
                %4623 = vst [vmem:[%s4229 + $0xc10] sm:$0xf] %v4622
                %v4624 = vld [vmem:[%s4228 + $0x314] sm:$0xf]
                %4625 = vst [vmem:[%s4229 + $0xc14] sm:$0xf] %v4624
                %v4626 = vld [vmem:[%s4228 + $0x318] sm:$0xf]
                %4627 = vst [vmem:[%s4229 + $0xc18] sm:$0xf] %v4626
                %v4628 = vld [vmem:[%s4228 + $0x31c] sm:$0xf]
                %4629 = vst [vmem:[%s4229 + $0xc1c] sm:$0xf] %v4628
                %v4630 = vld [vmem:[%s4228 + $0x320] sm:$0xf]
                %4631 = vst [vmem:[%s4229 + $0xc20] sm:$0xf] %v4630
                %v4632 = vld [vmem:[%s4228 + $0x324] sm:$0xf]
                %4633 = vst [vmem:[%s4229 + $0xc24] sm:$0xf] %v4632
                %v4634 = vld [vmem:[%s4228 + $0x328] sm:$0xf]
                %4635 = vst [vmem:[%s4229 + $0xc28] sm:$0xf] %v4634
                %v4636 = vld [vmem:[%s4228 + $0x32c] sm:$0xf]
                %4637 = vst [vmem:[%s4229 + $0xc2c] sm:$0xf] %v4636
                %v4638 = vld [vmem:[%s4228 + $0x330] sm:$0xf]
                %4639 = vst [vmem:[%s4229 + $0xc30] sm:$0xf] %v4638
                %v4640 = vld [vmem:[%s4228 + $0x334] sm:$0xf]
                %4641 = vst [vmem:[%s4229 + $0xc34] sm:$0xf] %v4640
                %v4642 = vld [vmem:[%s4228 + $0x338] sm:$0xf]
                %4643 = vst [vmem:[%s4229 + $0xc38] sm:$0xf] %v4642
                %v4644 = vld [vmem:[%s4228 + $0x33c] sm:$0xf]
                %4645 = vst [vmem:[%s4229 + $0xc3c] sm:$0xf] %v4644
                %v4646 = vld [vmem:[%s4228 + $0x340] sm:$0xf]
                %4647 = vst [vmem:[%s4229 + $0xc40] sm:$0xf] %v4646
                %v4648 = vld [vmem:[%s4228 + $0x344] sm:$0xf]
                %4649 = vst [vmem:[%s4229 + $0xc44] sm:$0xf] %v4648
                %v4650 = vld [vmem:[%s4228 + $0x348] sm:$0xf]
                %4651 = vst [vmem:[%s4229 + $0xc48] sm:$0xf] %v4650
                %v4652 = vld [vmem:[%s4228 + $0x34c] sm:$0xf]
                %4653 = vst [vmem:[%s4229 + $0xc4c] sm:$0xf] %v4652
                %v4654 = vld [vmem:[%s4228 + $0x350] sm:$0xf]
                %4655 = vst [vmem:[%s4229 + $0xc50] sm:$0xf] %v4654
                %v4656 = vld [vmem:[%s4228 + $0x354] sm:$0xf]
                %4657 = vst [vmem:[%s4229 + $0xc54] sm:$0xf] %v4656
                %v4658 = vld [vmem:[%s4228 + $0x358] sm:$0xf]
                %4659 = vst [vmem:[%s4229 + $0xc58] sm:$0xf] %v4658
                %v4660 = vld [vmem:[%s4228 + $0x35c] sm:$0xf]
                %4661 = vst [vmem:[%s4229 + $0xc5c] sm:$0xf] %v4660
                %v4662 = vld [vmem:[%s4228 + $0x360] sm:$0xf]
                %4663 = vst [vmem:[%s4229 + $0xc60] sm:$0xf] %v4662
                %v4664 = vld [vmem:[%s4228 + $0x364] sm:$0xf]
                %4665 = vst [vmem:[%s4229 + $0xc64] sm:$0xf] %v4664
                %v4666 = vld [vmem:[%s4228 + $0x368] sm:$0xf]
                %4667 = vst [vmem:[%s4229 + $0xc68] sm:$0xf] %v4666
                %v4668 = vld [vmem:[%s4228 + $0x36c] sm:$0xf]
                %4669 = vst [vmem:[%s4229 + $0xc6c] sm:$0xf] %v4668
                %v4670 = vld [vmem:[%s4228 + $0x370] sm:$0xf]
                %4671 = vst [vmem:[%s4229 + $0xc70] sm:$0xf] %v4670
                %v4672 = vld [vmem:[%s4228 + $0x374] sm:$0xf]
                %4673 = vst [vmem:[%s4229 + $0xc74] sm:$0xf] %v4672
                %v4674 = vld [vmem:[%s4228 + $0x378] sm:$0xf]
                %4675 = vst [vmem:[%s4229 + $0xc78] sm:$0xf] %v4674
                %v4676 = vld [vmem:[%s4228 + $0x37c] sm:$0xf]
                %4677 = vst [vmem:[%s4229 + $0xc7c] sm:$0xf] %v4676
                %v4678 = vld [vmem:[%s4228 + $0x380] sm:$0xf]
                %4679 = vst [vmem:[%s4229 + $0xc80] sm:$0xf] %v4678
                %v4680 = vld [vmem:[%s4228 + $0x384] sm:$0xf]
                %4681 = vst [vmem:[%s4229 + $0xc84] sm:$0xf] %v4680
                %v4682 = vld [vmem:[%s4228 + $0x388] sm:$0xf]
                %4683 = vst [vmem:[%s4229 + $0xc88] sm:$0xf] %v4682
                %v4684 = vld [vmem:[%s4228 + $0x38c] sm:$0xf]
                %4685 = vst [vmem:[%s4229 + $0xc8c] sm:$0xf] %v4684
                %v4686 = vld [vmem:[%s4228 + $0x390] sm:$0xf]
                %4687 = vst [vmem:[%s4229 + $0xc90] sm:$0xf] %v4686
                %v4688 = vld [vmem:[%s4228 + $0x394] sm:$0xf]
                %4689 = vst [vmem:[%s4229 + $0xc94] sm:$0xf] %v4688
                %v4690 = vld [vmem:[%s4228 + $0x398] sm:$0xf]
                %4691 = vst [vmem:[%s4229 + $0xc98] sm:$0xf] %v4690
                %v4692 = vld [vmem:[%s4228 + $0x39c] sm:$0xf]
                %4693 = vst [vmem:[%s4229 + $0xc9c] sm:$0xf] %v4692
                %v4694 = vld [vmem:[%s4228 + $0x3a0] sm:$0xf]
                %4695 = vst [vmem:[%s4229 + $0xca0] sm:$0xf] %v4694
                %v4696 = vld [vmem:[%s4228 + $0x3a4] sm:$0xf]
                %4697 = vst [vmem:[%s4229 + $0xca4] sm:$0xf] %v4696
                %v4698 = vld [vmem:[%s4228 + $0x3a8] sm:$0xf]
                %4699 = vst [vmem:[%s4229 + $0xca8] sm:$0xf] %v4698
                %v4700 = vld [vmem:[%s4228 + $0x3ac] sm:$0xf]
                %4701 = vst [vmem:[%s4229 + $0xcac] sm:$0xf] %v4700
                %v4702 = vld [vmem:[%s4228 + $0x3b0] sm:$0xf]
                %4703 = vst [vmem:[%s4229 + $0xcb0] sm:$0xf] %v4702
                %v4704 = vld [vmem:[%s4228 + $0x3b4] sm:$0xf]
                %4705 = vst [vmem:[%s4229 + $0xcb4] sm:$0xf] %v4704
                %v4706 = vld [vmem:[%s4228 + $0x3b8] sm:$0xf]
                %4707 = vst [vmem:[%s4229 + $0xcb8] sm:$0xf] %v4706
                %v4708 = vld [vmem:[%s4228 + $0x3bc] sm:$0xf]
                %4709 = vst [vmem:[%s4229 + $0xcbc] sm:$0xf] %v4708
                %v4710 = vld [vmem:[%s4228 + $0x3c0] sm:$0xf]
                %4711 = vst [vmem:[%s4229 + $0xcc0] sm:$0xf] %v4710
                %v4712 = vld [vmem:[%s4228 + $0x3c4] sm:$0xf]
                %4713 = vst [vmem:[%s4229 + $0xcc4] sm:$0xf] %v4712
                %v4714 = vld [vmem:[%s4228 + $0x3c8] sm:$0xf]
                %4715 = vst [vmem:[%s4229 + $0xcc8] sm:$0xf] %v4714
                %v4716 = vld [vmem:[%s4228 + $0x3cc] sm:$0xf]
                %4717 = vst [vmem:[%s4229 + $0xccc] sm:$0xf] %v4716
                %v4718 = vld [vmem:[%s4228 + $0x3d0] sm:$0xf]
                %4719 = vst [vmem:[%s4229 + $0xcd0] sm:$0xf] %v4718
                %v4720 = vld [vmem:[%s4228 + $0x3d4] sm:$0xf]
                %4721 = vst [vmem:[%s4229 + $0xcd4] sm:$0xf] %v4720
                %v4722 = vld [vmem:[%s4228 + $0x3d8] sm:$0xf]
                %4723 = vst [vmem:[%s4229 + $0xcd8] sm:$0xf] %v4722
                %v4724 = vld [vmem:[%s4228 + $0x3dc] sm:$0xf]
                %4725 = vst [vmem:[%s4229 + $0xcdc] sm:$0xf] %v4724
                %v4726 = vld [vmem:[%s4228 + $0x3e0] sm:$0xf]
                %4727 = vst [vmem:[%s4229 + $0xce0] sm:$0xf] %v4726
                %v4728 = vld [vmem:[%s4228 + $0x3e4] sm:$0xf]
                %4729 = vst [vmem:[%s4229 + $0xce4] sm:$0xf] %v4728
                %v4730 = vld [vmem:[%s4228 + $0x3e8] sm:$0xf]
                %4731 = vst [vmem:[%s4229 + $0xce8] sm:$0xf] %v4730
                %v4732 = vld [vmem:[%s4228 + $0x3ec] sm:$0xf]
                %4733 = vst [vmem:[%s4229 + $0xcec] sm:$0xf] %v4732
                %v4734 = vld [vmem:[%s4228 + $0x3f0] sm:$0xf]
                %4735 = vst [vmem:[%s4229 + $0xcf0] sm:$0xf] %v4734
                %v4736 = vld [vmem:[%s4228 + $0x3f4] sm:$0xf]
                %4737 = vst [vmem:[%s4229 + $0xcf4] sm:$0xf] %v4736
                %v4738 = vld [vmem:[%s4228 + $0x3f8] sm:$0xf]
                %4739 = vst [vmem:[%s4229 + $0xcf8] sm:$0xf] %v4738
                %v4740 = vld [vmem:[%s4228 + $0x3fc] sm:$0xf]
                %4741 = vst [vmem:[%s4229 + $0xcfc] sm:$0xf] %v4740
              $region77: #{_lambda_.11} parent=71 // loop_footer
                %s4227 = sadd.s32 1, %s4223
              $region78: #{_lambda_.11} parent=71 // loop_footer_branch
                %4222 = sbr.rel target = $region74
              $region79: #{_lambda_.11} parent=71 // loop_exit
                _
            $region72: #{_lambda_.11} parent=63 // pred_fallthru
              _
          $region64: #{_lambda_.11} parent=59 // pred_fallthru
            _
          %5273 = vnop
        $region60: #{_lambda_.11} parent=55 // pred_fallthru
          _
      $region56: #{_lambda_.11} parent=5 // pred_fallthru
        _
      %p5274 = scmp.le.s32.totalorder 2, %s15
      // Predicated region
      $region98: #{_lambda_.11} parent=5 // pred_check
        %p5275 = pneg %p5274
      $region99: #{_lambda_.11} parent=5 // pred_check_branch
        %5277 = sbr.rel (%p5275) target = $region101
      $region100: #{_lambda_.11} parent=5 // pred_region
        %s5278 = ssub.s32 %s15, 2
        // Predicated region
        $region102: #{_lambda_.11} parent=100 // pred_check
          %p5279 = pneg %p253
        $region103: #{_lambda_.11} parent=100 // pred_check_branch
          %5281 = sbr.rel (%p5279) target = $region105
        $region104: #{_lambda_.11} parent=100 // pred_region
          %s5282 = sand.u32 %s238, 1
          %s5283 = sand.u32 %s238, 1
          %s5284 = smul.addr %s5283, 1024
          %s5285 = scalar_lea.vmem [#allocation2], %s5284
        $region105: #{_lambda_.11} parent=100 // pred_fallthru
          _
      $region101: #{_lambda_.11} parent=5 // pred_fallthru
        _
    $region6: #{_lambda_.11} parent=1 // loop_footer
      %s19 = sadd.s32 1, %s15
    $region7: #{_lambda_.11} parent=1 // loop_footer_branch
      %14 = sbr.rel target = $region3
    $region8: #{_lambda_.11} parent=1 // loop_exit
      _

</llo_original>
